<compile_context>
chip_gen: v5e
topology: v5e:2x2
jax: 0.10.0
libtpu: 0.0.40
codegen_flags: <defaults>
</compile_context>

<pallas_src>
import functools
import math

import jax
import jax.numpy as jnp
from jax.experimental import pallas as pl
from jax.experimental.pallas import tpu as pltpu


# ----------------------------------------------------------------------------
# Fused Slice + Affine Pallas kernel
# ----------------------------------------------------------------------------
def _slice_affine_kernel(grid_ref, m_ref, guide_ref, xpad_ref, o_ref, *,
                         n_in_p1, n_out, q_bins):
    """One (batch, pixel-tile) grid step.

    grid_ref : (1, n_out*n_in_p1*Q, Hg*Wg)  bilateral grid, rows ordered (j, c, q)
    m_ref    : (Hg*Wg, P)  fixed spatial bilinear interpolation weights
    guide_ref: (1, 1, P)   learned guide in (-1, 1)
    xpad_ref : (1, n_in_p1, P)  input pixels with trailing all-ones channel
    o_ref    : (1, n_out, P)
    """
    # Spatial (x, y) interpolation of every (j, c, q) grid plane: one MXU matmul.
    up = jnp.dot(grid_ref[0], m_ref[...],
                 preferred_element_type=jnp.float32)              # (rows, P)
    npix = up.shape[1]

    # Guide (z) tent weights over the Q bins: w_q = max(0, 1 - |iz - q|).
    iz = (guide_ref[0] + 1.0) * (0.5 * (q_bins - 1))              # (1, P)
    q_idx = jax.lax.broadcasted_iota(jnp.int32, (q_bins, npix), 0)
    q_idx = q_idx.astype(jnp.float32)
    zhat = jnp.maximum(0.0, 1.0 - jnp.abs(iz - q_idx))            # (Q, P)

    # Fold the affine input channels into the weights:
    #   w_flat[c*Q + q, p] = xpad[c, p] * zhat[q, p]
    xp = xpad_ref[0]                                              # (n_in_p1, P)
    w_flat = jnp.concatenate(
        [zhat * xp[c:c + 1, :] for c in range(n_in_p1)], axis=0)  # (n_in_p1*Q, P)

    rows_per_out = n_in_p1 * q_bins
    for j in range(n_out):
        up_j = up[j * rows_per_out:(j + 1) * rows_per_out, :]     # (n_in_p1*Q, P)
        o_ref[0, pl.ds(j, 1), :] = jnp.sum(
            w_flat * up_j, axis=0, keepdims=True).astype(o_ref.dtype)


def _tent_matrix(n_out_pos, n_in_pos):
    """(n_out_pos, n_in_pos) align_corners=True linear interpolation weights."""
    if n_in_pos == 1:
        return jnp.ones((n_out_pos, 1), jnp.float32)
    scale = (n_in_pos - 1) / (n_out_pos - 1) if n_out_pos > 1 else 0.0
    pos = jnp.arange(n_out_pos, dtype=jnp.float32) * scale
    idx = jnp.arange(n_in_pos, dtype=jnp.float32)
    return jnp.maximum(0.0, 1.0 - jnp.abs(pos[:, None] - idx[None, :]))


def slice_affine_pallas(grid5, guide, x):
    """Fused Slice (trilinear grid sample) + Affine (per-pixel matrix apply).

    grid5: (B, D, Q, Hg, Wg) with D = out_ch * (in_ch + 1)
    guide: (B, H, W) in (-1, 1)
    x    : (B, in_ch, H, W)
    returns (B, out_ch, H, W)
    """
    B, D, Q, Hg, Wg = grid5.shape
    _, C, H, W = x.shape
    n_in_p1 = C + 1
    assert D % n_in_p1 == 0
    n_out = D // n_in_p1
    HW, G = H * W, Hg * Wg

    # Lane-dense pixel tiling: largest divisor of H*W that is a multiple of 128
    # and <= 2048 -> a few MiB per step, fits v5e/v6e/v7x VMEM budgets.
    blk = HW
    for cand in (2048, 1024, 512, 256, 128):
        if HW % cand == 0:
            blk = cand
            break
    n_tiles = HW // blk

    # Reorder grid rows to (j, c, q) so the kernel reduces contiguous slabs.
    grid_rows = grid5.astype(jnp.float32).reshape(B, n_in_p1, n_out, Q, G)
    grid_rows = jnp.transpose(grid_rows, (0, 2, 1, 3, 4)).reshape(B, D * Q, G)

    # Fixed spatial interpolation matrix, hoisted out of the kernel.
    # (For very large H*W this would be built per-tile / separably instead.)
    wy = _tent_matrix(H, Hg)                                      # (H, Hg)
    wx = _tent_matrix(W, Wg)                                      # (W, Wg)
    m = jnp.einsum('hy,wx->yxhw', wy, wx).reshape(G, HW)          # (G, HW)

    xpad = jnp.concatenate(
        [x.astype(jnp.float32), jnp.ones((B, 1, H, W), jnp.float32)],
        axis=1).reshape(B, n_in_p1, HW)
    guide_r = guide.astype(jnp.float32).reshape(B, 1, HW)

    kernel = functools.partial(_slice_affine_kernel, n_in_p1=n_in_p1,
                               n_out=n_out, q_bins=Q)
    out_flat = pl.pallas_call(
        kernel,
        out_shape=jax.ShapeDtypeStruct((B, n_out, HW), jnp.float32),
        grid_spec=pltpu.PrefetchScalarGridSpec(
            num_scalar_prefetch=0,
            grid=(B, n_tiles),
            in_specs=[
                pl.BlockSpec((1, D * Q, G), lambda b, t: (b, 0, 0)),
                pl.BlockSpec((G, blk), lambda b, t: (0, t)),
                pl.BlockSpec((1, 1, blk), lambda b, t: (b, 0, t)),
                pl.BlockSpec((1, n_in_p1, blk), lambda b, t: (b, 0, t)),
            ],
            out_specs=pl.BlockSpec((1, n_out, blk), lambda b, t: (b, 0, t)),
        ),
        compiler_params=pltpu.CompilerParams(
            dimension_semantics=("parallel", "parallel"),
            vmem_limit_bytes=32 * 1024 * 1024),
    )(grid_rows, m, guide_r, xpad)
    return out_flat.reshape(B, n_out, H, W).astype(x.dtype)


# ----------------------------------------------------------------------------
# Backbone (plain JAX / XLA) -- splat, glob, loc, proj, guidefn
# ----------------------------------------------------------------------------
def _silu(v):
    return v * jax.nn.sigmoid(v)


def _conv2d(v, w, b=None, stride=1, pad=0):
    out = jax.lax.conv_general_dilated(
        v, w, window_strides=(stride, stride),
        padding=[(pad, pad), (pad, pad)],
        dimension_numbers=('NCHW', 'OIHW', 'NCHW'))
    if b is not None:
        out = out + b.reshape(1, -1, 1, 1)
    return out


def _bn2d(v, p, eps=1e-5):
    s = (1, -1, 1, 1)
    return ((v - p['mean'].reshape(s)) * jax.lax.rsqrt(p['var'].reshape(s) + eps)
            * p['gamma'].reshape(s) + p['beta'].reshape(s))


def _bn1d(v, p, eps=1e-5):
    return (v - p['mean']) * jax.lax.rsqrt(p['var'] + eps) * p['gamma'] + p['beta']


def _downsample(p, v):
    v = _silu(_conv2d(v, p['w1'], None, stride=2, pad=0))
    v = _silu(_conv2d(v, p['w2'], None, stride=1, pad=1))
    return v


def _upsample_bilinear_ac(v, size):
    ho, wo = size
    _, _, h, w = v.shape
    uy = _tent_matrix(ho, h)
    ux = _tent_matrix(wo, w)
    v = jnp.einsum('oh,bchw->bcow', uy, v)
    v = jnp.einsum('pw,bchw->bchp', ux, v)
    return v


def init_params(key, in_ch=3, out_ch=3, q_bins=16, guide_hidden=16):
    d_coeff = out_ch * (in_ch + 1)
    it = iter(jax.random.split(key, 40))

    def conv_w(o, i, k):
        s = 1.0 / math.sqrt(i * k * k)
        return jax.random.uniform(next(it), (o, i, k, k), jnp.float32, -s, s)

    def vec(o, fan_in):
        s = 1.0 / math.sqrt(fan_in)
        return jax.random.uniform(next(it), (o,), jnp.float32, -s, s)

    def lin_w(o, i):
        s = 1.0 / math.sqrt(i)
        return jax.random.uniform(next(it), (o, i), jnp.float32, -s, s)

    def bn(c):
        return dict(gamma=jnp.ones((c,), jnp.float32),
                    beta=jnp.zeros((c,), jnp.float32),
                    mean=jnp.zeros((c,), jnp.float32),
                    var=jnp.ones((c,), jnp.float32))

    def down(i, o):
        return dict(w1=conv_w(i, i, 2), w2=conv_w(o, i, 3))

    return dict(
        splat=[down(in_ch, 8), down(8, 16), down(16, 32), down(32, 64)],
        glob_ds=[down(64, 64), down(64, 64)],
        fc1=dict(w=lin_w(256, 1024), b=vec(256, 1024), bn=bn(256)),
        fc2=dict(w=lin_w(128, 256), b=vec(128, 256), bn=bn(128)),
        fc3=dict(w=lin_w(64, 128), b=vec(64, 128)),
        loc1=dict(w=conv_w(64, 64, 3), b=vec(64, 64 * 9), bn=bn(64)),
        loc2=dict(w=conv_w(64, 64, 3)),
        proj=dict(w=conv_w(d_coeff * q_bins, 64, 1), b=vec(d_coeff * q_bins, 64)),
        guide1=dict(w=conv_w(guide_hidden, in_ch, 1), b=vec(guide_hidden, in_ch),
                    bn=bn(guide_hidden)),
        guide2=dict(w=conv_w(1, guide_hidden, 1), b=vec(1, guide_hidden)),
    )


def bilateral_forward(params, x, *, out_ch=3, q_bins=16, ds_size=(256, 256)):
    b, c, _, _ = x.shape

    # splat
    s = _upsample_bilinear_ac(x, ds_size)
    for p in params['splat']:
        s = _downsample(p, s)
    spl = s                                                      # (B, 64, 16, 16)

    # glob
    g = spl
    for p in params['glob_ds']:
        g = _downsample(p, g)                                    # (B, 64, 4, 4)
    g = g.reshape(b, -1)
    g = _silu(_bn1d(g @ params['fc1']['w'].T + params['fc1']['b'], params['fc1']['bn']))
    g = _silu(_bn1d(g @ params['fc2']['w'].T + params['fc2']['b'], params['fc2']['bn']))
    g = g @ params['fc3']['w'].T + params['fc3']['b']
    g = g.reshape(b, 64, 1, 1)

    # loc
    loc = _silu(_bn2d(_conv2d(spl, params['loc1']['w'], params['loc1']['b'], 1, 1),
                      params['loc1']['bn']))
    loc = _conv2d(loc, params['loc2']['w'], None, 1, 1)

    # proj -> bilateral grid (B, D, Q, Hg, Wg)
    fused = _silu(g + loc)
    pr = _conv2d(fused, params['proj']['w'], params['proj']['b'], 1, 0)
    d_coeff = out_ch * (c + 1)
    hg, wg = pr.shape[2], pr.shape[3]
    grid5 = pr.reshape(b, d_coeff, q_bins, hg, wg)

    # guide (B, H, W) in (-1, 1)
    gd = _silu(_bn2d(_conv2d(x, params['guide1']['w'], params['guide1']['b'], 1, 0),
                     params['guide1']['bn']))
    gd = jnp.tanh(_conv2d(gd, params['guide2']['w'], params['guide2']['b'], 1, 0))
    guide = gd[:, 0]

    # fused Pallas slice + affine
    out = slice_affine_pallas(grid5, guide, x)
    return out, grid5, guide


# ----------------------------------------------------------------------------
# Pure-JAX reference for the Pallas stage (grid_sample trilinear + affine)
# ----------------------------------------------------------------------------
def slice_affine_ref(grid5, guide, x):
    B, D, Q, Hg, Wg = grid5.shape
    _, C, H, W = x.shape
    n_out = D // (C + 1)

    fy = jnp.arange(H, dtype=jnp.float32) * ((Hg - 1) / (H - 1))
    fx = jnp.arange(W, dtype=jnp.float32) * ((Wg - 1) / (W - 1))
    fz = (guide.astype(jnp.float32) + 1.0) * 0.5 * (Q - 1)

    y0 = jnp.clip(jnp.floor(fy).astype(jnp.int32), 0, Hg - 1)
    y1 = jnp.minimum(y0 + 1, Hg - 1)
    ty = fy - y0.astype(jnp.float32)
    x0 = jnp.clip(jnp.floor(fx).astype(jnp.int32), 0, Wg - 1)
    x1 = jnp.minimum(x0 + 1, Wg - 1)
    tx = fx - x0.astype(jnp.float32)
    z0 = jnp.clip(jnp.floor(fz).astype(jnp.int32), 0, Q - 1)
    z1 = jnp.minimum(z0 + 1, Q - 1)
    tz = fz - z0.astype(jnp.float32)

    g = grid5.astype(jnp.float32)
    gy = (g[:, :, :, y0, :] * (1.0 - ty)[None, None, None, :, None]
          + g[:, :, :, y1, :] * ty[None, None, None, :, None])
    gxy = gy[:, :, :, :, x0] * (1.0 - tx) + gy[:, :, :, :, x1] * tx     # (B,D,Q,H,W)

    i0 = jnp.broadcast_to(z0[:, None, None, :, :], (B, D, 1, H, W))
    i1 = jnp.broadcast_to(z1[:, None, None, :, :], (B, D, 1, H, W))
    g0 = jnp.take_along_axis(gxy, i0, axis=2)[:, :, 0]
    g1 = jnp.take_along_axis(gxy, i1, axis=2)[:, :, 0]
    coeff = g0 * (1.0 - tz)[:, None] + g1 * tz[:, None]                 # (B,D,H,W)

    xpad = jnp.concatenate([x.astype(jnp.float32),
                            jnp.ones((B, 1, H, W), jnp.float32)], axis=1)
    coeff5 = coeff.reshape(B, C + 1, n_out, H, W)
    return jnp.einsum('bchw,bcdhw->bdhw', xpad, coeff5)


if __name__ == "__main__":
    key = jax.random.PRNGKey(0)
    k_params, k_x = jax.random.split(key)

    B, IN_CH, H, W = 2, 3, 64, 64        # Pointwise guide hardcodes 3 input channels
    OUT_CH, Q = 3, 16

    params = init_params(k_params, in_ch=IN_CH, out_ch=OUT_CH, q_bins=Q)
    x = jax.random.normal(k_x, (B, IN_CH, H, W), dtype=jnp.float32)

    fwd = jax.jit(functools.partial(bilateral_forward, out_ch=OUT_CH, q_bins=Q))
    out, grid5, guide = fwd(params, x)
    out = jax.block_until_ready(out)

    assert out.shape == (B, OUT_CH, H, W) and out.dtype == x.dtype
    assert bool(jnp.all(jnp.isfinite(out)))

    # Check the fused Pallas slice+affine kernel against a gather-based reference.
    # (Scale-aware tolerance: robust to MXU f32 accumulation-mode differences,
    # while any indexing/semantics error would produce errors of order `scale`.)
    ref = slice_affine_ref(grid5, guide, x)
    err = float(jnp.max(jnp.abs(out - ref)))
    scale = float(jnp.max(jnp.abs(ref))) + 1e-6
    assert err <= 3e-2 * scale + 1e-5, f"mismatch vs reference: err={err}, scale={scale}"

    print("KERNEL_OK")
</pallas_src>

<mosaic_0001>
module attributes {stable_mosaic.version = 11 : i64} {
  func.func @_slice_affine_kernel(%arg0: i32, %arg1: i32, %arg2: memref<1x192x256xf32, #tpu.memory_space<vmem>>, %arg3: memref<256x2048xf32, #tpu.memory_space<vmem>>, %arg4: memref<1x1x2048xf32, #tpu.memory_space<vmem>>, %arg5: memref<1x4x2048xf32, #tpu.memory_space<vmem>>, %arg6: memref<1x3x2048xf32, #tpu.memory_space<vmem>>) attributes {dimension_semantics = [#tpu.dimension_semantics<parallel>, #tpu.dimension_semantics<parallel>], iteration_bounds = array<i64: 2, 2>, scalar_prefetch = 0 : i64, scratch_operands = 0 : i64, tpu.core_type = #tpu.core_type<tc>, window_params = [{transform_indices = @transform_0, window_bounds = array<i64: 1, 192, 256>}, {transform_indices = @transform_1, window_bounds = array<i64: 256, 2048>}, {transform_indices = @transform_2, window_bounds = array<i64: 1, 1, 2048>}, {transform_indices = @transform_3, window_bounds = array<i64: 1, 4, 2048>}, {transform_indices = @transform_4, window_bounds = array<i64: 1, 3, 2048>}]} {
    %c0 = arith.constant 0 : index
    %c0_0 = arith.constant 0 : index
    %c0_1 = arith.constant 0 : index
    %0 = vector.load %arg2[%c0, %c0_0, %c0_1] : memref<1x192x256xf32, #tpu.memory_space<vmem>>, vector<1x192x256xf32>
    %1 = vector.shape_cast %0 : vector<1x192x256xf32> to vector<192x256xf32>
    %c0_2 = arith.constant 0 : index
    %c0_3 = arith.constant 0 : index
    %2 = vector.load %arg3[%c0_2, %c0_3] : memref<256x2048xf32, #tpu.memory_space<vmem>>, vector<256x2048xf32>
    %cst = arith.constant dense<0.000000e+00> : vector<192x2048xf32>
    %3 = tpu.matmul %1, %2, %cst {dimension_numbers = #tpu.dot_dimension_numbers<[1], [0], [0], [1], [0, 0, 1, 1], [], []>} : vector<192x256xf32>, vector<256x2048xf32>, vector<192x2048xf32> -> vector<192x2048xf32>
    %c0_4 = arith.constant 0 : index
    %c0_5 = arith.constant 0 : index
    %c0_6 = arith.constant 0 : index
    %4 = vector.load %arg4[%c0_4, %c0_5, %c0_6] : memref<1x1x2048xf32, #tpu.memory_space<vmem>>, vector<1x1x2048xf32>
    %5 = vector.shape_cast %4 : vector<1x1x2048xf32> to vector<1x2048xf32>
    %cst_7 = arith.constant 1.000000e+00 : f32
    %6 = vector.broadcast %cst_7 : f32 to vector<1x2048xf32>
    %7 = arith.addf %5, %6 : vector<1x2048xf32>
    %cst_8 = arith.constant 7.500000e+00 : f32
    %8 = vector.broadcast %cst_8 : f32 to vector<1x2048xf32>
    %9 = arith.mulf %7, %8 : vector<1x2048xf32>
    %10 = tpu.iota {dimensions = array<i32: 0>} : vector<16x2048xi32>
    %11 = arith.sitofp %10 : vector<16x2048xi32> to vector<16x2048xf32>
    %12 = vector.broadcast %9 : vector<1x2048xf32> to vector<16x2048xf32>
    %13 = arith.subf %12, %11 : vector<16x2048xf32>
    %14 = math.absf %13 : vector<16x2048xf32>
    %cst_9 = arith.constant 1.000000e+00 : f32
    %15 = vector.broadcast %cst_9 : f32 to vector<16x2048xf32>
    %16 = arith.subf %15, %14 : vector<16x2048xf32>
    %cst_10 = arith.constant 0.000000e+00 : f32
    %17 = vector.broadcast %cst_10 : f32 to vector<16x2048xf32>
    %18 = arith.maximumf %17, %16 : vector<16x2048xf32>
    %c0_11 = arith.constant 0 : index
    %c0_12 = arith.constant 0 : index
    %c0_13 = arith.constant 0 : index
    %19 = vector.load %arg5[%c0_11, %c0_12, %c0_13] : memref<1x4x2048xf32, #tpu.memory_space<vmem>>, vector<1x4x2048xf32>
    %20 = vector.shape_cast %19 : vector<1x4x2048xf32> to vector<4x2048xf32>
    %21 = vector.extract_strided_slice %20 {offsets = [0, 0], sizes = [1, 2048], strides = [1, 1]} : vector<4x2048xf32> to vector<1x2048xf32>
    %22 = vector.broadcast %21 : vector<1x2048xf32> to vector<16x2048xf32>
    %23 = arith.mulf %18, %22 : vector<16x2048xf32>
    %24 = vector.extract_strided_slice %20 {offsets = [1, 0], sizes = [1, 2048], strides = [1, 1]} : vector<4x2048xf32> to vector<1x2048xf32>
    %25 = vector.broadcast %24 : vector<1x2048xf32> to vector<16x2048xf32>
    %26 = arith.mulf %18, %25 : vector<16x2048xf32>
    %27 = vector.extract_strided_slice %20 {offsets = [2, 0], sizes = [1, 2048], strides = [1, 1]} : vector<4x2048xf32> to vector<1x2048xf32>
    %28 = vector.broadcast %27 : vector<1x2048xf32> to vector<16x2048xf32>
    %29 = arith.mulf %18, %28 : vector<16x2048xf32>
    %30 = vector.extract_strided_slice %20 {offsets = [3, 0], sizes = [1, 2048], strides = [1, 1]} : vector<4x2048xf32> to vector<1x2048xf32>
    %31 = vector.broadcast %30 : vector<1x2048xf32> to vector<16x2048xf32>
    %32 = arith.mulf %18, %31 : vector<16x2048xf32>
    %33 = tpu.concatenate %23, %26, %29, %32 in 0 : vector<16x2048xf32>, vector<16x2048xf32>, vector<16x2048xf32>, vector<16x2048xf32> -> vector<64x2048xf32>
    %34 = vector.extract_strided_slice %3 {offsets = [0, 0], sizes = [64, 2048], strides = [1, 1]} : vector<192x2048xf32> to vector<64x2048xf32>
    %35 = arith.mulf %33, %34 : vector<64x2048xf32>
    %cst_14 = arith.constant dense<0.000000e+00> : vector<2048xf32>
    %36 = vector.multi_reduction <add>, %35, %cst_14 [0] : vector<64x2048xf32> to vector<2048xf32>
    %37 = vector.shape_cast %36 : vector<2048xf32> to vector<1x2048xf32>
    %c0_15 = arith.constant 0 : index
    %c0_16 = arith.constant 0 : index
    %c0_17 = arith.constant 0 : index
    %38 = vector.load %arg6[%c0_15, %c0_16, %c0_17] : memref<1x3x2048xf32, #tpu.memory_space<vmem>>, vector<1x1x2048xf32>
    %39 = vector.shape_cast %38 : vector<1x1x2048xf32> to vector<1x2048xf32>
    %40 = vector.shape_cast %37 : vector<1x2048xf32> to vector<1x1x2048xf32>
    tpu.vector_store %arg6[%c0_15, %c0_16, %c0_17], %40 {strides = array<i32>} : memref<1x3x2048xf32, #tpu.memory_space<vmem>>, vector<1x1x2048xf32>,
    %41 = vector.extract_strided_slice %3 {offsets = [64, 0], sizes = [64, 2048], strides = [1, 1]} : vector<192x2048xf32> to vector<64x2048xf32>
    %42 = arith.mulf %33, %41 : vector<64x2048xf32>
    %cst_18 = arith.constant dense<0.000000e+00> : vector<2048xf32>
    %43 = vector.multi_reduction <add>, %42, %cst_18 [0] : vector<64x2048xf32> to vector<2048xf32>
    %44 = vector.shape_cast %43 : vector<2048xf32> to vector<1x2048xf32>
    %c0_19 = arith.constant 0 : index
    %c1 = arith.constant 1 : index
    %c0_20 = arith.constant 0 : index
    %45 = vector.load %arg6[%c0_19, %c1, %c0_20] : memref<1x3x2048xf32, #tpu.memory_space<vmem>>, vector<1x1x2048xf32>
    %46 = vector.shape_cast %45 : vector<1x1x2048xf32> to vector<1x2048xf32>
    %47 = vector.shape_cast %44 : vector<1x2048xf32> to vector<1x1x2048xf32>
    tpu.vector_store %arg6[%c0_19, %c1, %c0_20], %47 {strides = array<i32>} : memref<1x3x2048xf32, #tpu.memory_space<vmem>>, vector<1x1x2048xf32>,
    %48 = vector.extract_strided_slice %3 {offsets = [128, 0], sizes = [64, 2048], strides = [1, 1]} : vector<192x2048xf32> to vector<64x2048xf32>
    %49 = arith.mulf %33, %48 : vector<64x2048xf32>
    %cst_21 = arith.constant dense<0.000000e+00> : vector<2048xf32>
    %50 = vector.multi_reduction <add>, %49, %cst_21 [0] : vector<64x2048xf32> to vector<2048xf32>
    %51 = vector.shape_cast %50 : vector<2048xf32> to vector<1x2048xf32>
    %c0_22 = arith.constant 0 : index
    %c2 = arith.constant 2 : index
    %c0_23 = arith.constant 0 : index
    %52 = vector.load %arg6[%c0_22, %c2, %c0_23] : memref<1x3x2048xf32, #tpu.memory_space<vmem>>, vector<1x1x2048xf32>
    %53 = vector.shape_cast %52 : vector<1x1x2048xf32> to vector<1x2048xf32>
    %54 = vector.shape_cast %51 : vector<1x2048xf32> to vector<1x1x2048xf32>
    tpu.vector_store %arg6[%c0_22, %c2, %c0_23], %54 {strides = array<i32>} : memref<1x3x2048xf32, #tpu.memory_space<vmem>>, vector<1x1x2048xf32>,
    return
  }
  func.func @transform_0(%arg0: i32, %arg1: i32) -> (i32, i32, i32) {
    %c0_i32 = arith.constant 0 : i32
    %c0_i32_0 = arith.constant 0 : i32
    %c0_i32_1 = arith.constant 0 : i32
    return %arg0, %c0_i32, %c0_i32_0 : i32, i32, i32
  }
  func.func @transform_1(%arg0: i32, %arg1: i32) -> (i32, i32) {
    %c0_i32 = arith.constant 0 : i32
    %c0_i32_0 = arith.constant 0 : i32
    return %c0_i32, %arg1 : i32, i32
  }
  func.func @transform_2(%arg0: i32, %arg1: i32) -> (i32, i32, i32) {
    %c0_i32 = arith.constant 0 : i32
    %c0_i32_0 = arith.constant 0 : i32
    return %arg0, %c0_i32, %arg1 : i32, i32, i32
  }
  func.func @transform_3(%arg0: i32, %arg1: i32) -> (i32, i32, i32) {
    %c0_i32 = arith.constant 0 : i32
    %c0_i32_0 = arith.constant 0 : i32
    return %arg0, %c0_i32, %arg1 : i32, i32, i32
  }
  func.func @transform_4(%arg0: i32, %arg1: i32) -> (i32, i32, i32) {
    %c0_i32 = arith.constant 0 : i32
    %c0_i32_0 = arith.constant 0 : i32
    return %arg0, %c0_i32, %arg1 : i32, i32, i32
  }
}

</mosaic_0001>

<llo_original>
// kernel: bilateral_forward.1
$region0: #{bilateral_forward.1}
  #allocation0 [shape = 'u32[]', space=smem, size = 0x4, offset = 0x4, fixed_abs, tag = 'smem constant byte address 0x4 - core index']
  #allocation1 [shape = 'u32[72,128]{1,0:T(1,128)}', space=vmem, size = 0x9000, scoped, tag = 'internal scratch']
  %s0 = inlined_call_operand.vmem [shape: f32[2,192,256], index: 0, kind: input, shape index: {}]
  %s1 = inlined_call_operand.vmem [shape: f32[256,4096], index: 1, kind: input, shape index: {}]
  %s2 = inlined_call_operand.vmem [shape: f32[2,1,4096], index: 2, kind: input, shape index: {}]
  %s3 = inlined_call_operand.vmem [shape: f32[2,4,4096], index: 3, kind: input, shape index: {}]
  %s4 = inlined_call_operand.vmem [shape: f32[2,3,4096], index: 4, kind: output, shape index: {}]
  %s5 = sld [smem:[#allocation0]]
  $region72: #{bilateral_forward.1} parent=0
    _
  %s7 = ssub.s32 1, %s5
  %s8 = scalar_select 0, %s7, %s5
  $region1: #{bilateral_forward.1} parent=0
    #allocation2 [shape = 'u8[4194304]{0}', space=vmem, size = 0x400000, scoped, tag = 'input window, operand 1']
    loop: start=0, step=1, limit=6
    $region2: #{bilateral_forward.1} parent=1 // loop_pre_header
      _
    $region3: #{bilateral_forward.1} parent=1 // loop_header
      %s10 = sphi 0, %s14
      %p11 = scmp.ge.s32.totalorder %s10, 6
      %s17 = sphi 0, %s29
      %s18 = sphi 0, %s25
      %s19 = sphi 0, %s17
      %s20 = sphi 0, %s18
      %s21 = sphi 0, %s19
      %s22 = sphi 0, %s20
      %s32 = sphi 0, %s34
      %s35 = sphi 0, %s32
      %s36 = sphi 0, %s35
      %s52 = sphi 0, %s36
      %s58 = sphi 0, %s60
      %s61 = sphi 0, %s58
      %s62 = sphi 0, %s61
      %s78 = sphi 0, %s62
      %s86 = sphi 0, %s88
      %s89 = sphi 0, %s86
      %s90 = sphi 0, %s89
      %s106 = sphi 0, %s90
      %s114 = sphi 0, %s116
      %s117 = sphi 0, %s114
      %s118 = sphi 0, %s117
      %s134 = sphi 0, %s118
      %s142 = sphi 0, %s144
      %s145 = sphi 0, %s142
      %s146 = sphi 0, %s145
      %s162 = sphi 0, %s146
    $region4: #{bilateral_forward.1} parent=1 // loop_header_branch
      %13 = sbr.rel (%p11) target = $region8
    $region5: #{bilateral_forward.1} parent=1 // loop_body
      %s15 = ssub.s32 %s10, 1
      %s16 = ssub.s32 %s10, 2
      %s23 = sadd.s32 1, %s18
      %p24 = scmp.ge.s32.totalorder %s23, 2
      %s25 = scalar_select %p24, 0, %s23
      %s26 = sadd.s32 1, %s17
      %s27 = scalar_select %p24, %s26, %s17
      %p28 = scmp.ge.s32.totalorder %s27, 2
      %s29 = scalar_select %p28, 0, %s27
      %s30 = ssub.s32 %s17, %s29
      %p31 = scmp.eq.s32.totalorder %s30, 0
      %s33 = sadd.s32 %s32, 1
      %s34 = scalar_select %p31, %s32, %s33
      %p37 = pneg %p31
      %p38 = scmp.eq.s32.totalorder %s10, 3
      %p39 = por %p37, %p38
      %p40 = scmp.ne.s32.totalorder %s32, %s35
      %p41 = scmp.eq.s32.totalorder %s10, 0
      %p42 = por %p40, %p41
      %p43 = scmp.ne.s32.totalorder %s32, %s35
      %p44 = scmp.eq.s32.totalorder %s15, 3
      %p45 = por %p43, %p44
      %p46 = scmp.ne.s32.totalorder %s35, %s36
      %p47 = scmp.eq.s32.totalorder %s15, 0
      %p48 = por %p46, %p47
      %p49 = scmp.ne.s32.totalorder %s35, %s36
      %p50 = scmp.eq.s32.totalorder %s16, 3
      %p51 = por %p49, %p50
      %p53 = scmp.ne.s32.totalorder %s36, %s52
      %p54 = scmp.eq.s32.totalorder %s16, 0
      %p55 = por %p53, %p54
      %s56 = ssub.s32 %s18, %s25
      %p57 = scmp.eq.s32.totalorder %s56, 0
      %s59 = sadd.s32 %s58, 1
      %s60 = scalar_select %p57, %s58, %s59
      %p63 = pneg %p57
      %p64 = scmp.eq.s32.totalorder %s10, 3
      %p65 = por %p63, %p64
      %p66 = scmp.ne.s32.totalorder %s58, %s61
      %p67 = scmp.eq.s32.totalorder %s10, 0
      %p68 = por %p66, %p67
      %p69 = scmp.ne.s32.totalorder %s58, %s61
      %p70 = scmp.eq.s32.totalorder %s15, 3
      %p71 = por %p69, %p70
      %p72 = scmp.ne.s32.totalorder %s61, %s62
      %p73 = scmp.eq.s32.totalorder %s15, 0
      %p74 = por %p72, %p73
      %p75 = scmp.ne.s32.totalorder %s61, %s62
      %p76 = scmp.eq.s32.totalorder %s16, 3
      %p77 = por %p75, %p76
      %p79 = scmp.ne.s32.totalorder %s62, %s78
      %p80 = scmp.eq.s32.totalorder %s16, 0
      %p81 = por %p79, %p80
      %s82 = ssub.s32 %s17, %s29
      %s83 = ssub.s32 %s18, %s25
      %s84 = sor.u32 %s82, %s83
      %p85 = scmp.eq.s32.totalorder %s84, 0
      %s87 = sadd.s32 %s86, 1
      %s88 = scalar_select %p85, %s86, %s87
      %p91 = pneg %p85
      %p92 = scmp.eq.s32.totalorder %s10, 3
      %p93 = por %p91, %p92
      %p94 = scmp.ne.s32.totalorder %s86, %s89
      %p95 = scmp.eq.s32.totalorder %s10, 0
      %p96 = por %p94, %p95
      %p97 = scmp.ne.s32.totalorder %s86, %s89
      %p98 = scmp.eq.s32.totalorder %s15, 3
      %p99 = por %p97, %p98
      %p100 = scmp.ne.s32.totalorder %s89, %s90
      %p101 = scmp.eq.s32.totalorder %s15, 0
      %p102 = por %p100, %p101
      %p103 = scmp.ne.s32.totalorder %s89, %s90
      %p104 = scmp.eq.s32.totalorder %s16, 3
      %p105 = por %p103, %p104
      %p107 = scmp.ne.s32.totalorder %s90, %s106
      %p108 = scmp.eq.s32.totalorder %s16, 0
      %p109 = por %p107, %p108
      %s110 = ssub.s32 %s17, %s29
      %s111 = ssub.s32 %s18, %s25
      %s112 = sor.u32 %s110, %s111
      %p113 = scmp.eq.s32.totalorder %s112, 0
      %s115 = sadd.s32 %s114, 1
      %s116 = scalar_select %p113, %s114, %s115
      %p119 = pneg %p113
      %p120 = scmp.eq.s32.totalorder %s10, 3
      %p121 = por %p119, %p120
      %p122 = scmp.ne.s32.totalorder %s114, %s117
      %p123 = scmp.eq.s32.totalorder %s10, 0
      %p124 = por %p122, %p123
      %p125 = scmp.ne.s32.totalorder %s114, %s117
      %p126 = scmp.eq.s32.totalorder %s15, 3
      %p127 = por %p125, %p126
      %p128 = scmp.ne.s32.totalorder %s117, %s118
      %p129 = scmp.eq.s32.totalorder %s15, 0
      %p130 = por %p128, %p129
      %p131 = scmp.ne.s32.totalorder %s117, %s118
      %p132 = scmp.eq.s32.totalorder %s16, 3
      %p133 = por %p131, %p132
      %p135 = scmp.ne.s32.totalorder %s118, %s134
      %p136 = scmp.eq.s32.totalorder %s16, 0
      %p137 = por %p135, %p136
      %s138 = ssub.s32 %s17, %s29
      %s139 = ssub.s32 %s18, %s25
      %s140 = sor.u32 %s138, %s139
      %p141 = scmp.eq.s32.totalorder %s140, 0
      %s143 = sadd.s32 %s142, 1
      %s144 = scalar_select %p141, %s142, %s143
      %p147 = pneg %p141
      %p148 = scmp.eq.s32.totalorder %s10, 3
      %p149 = por %p147, %p148
      %p150 = scmp.ne.s32.totalorder %s142, %s145
      %p151 = scmp.eq.s32.totalorder %s10, 0
      %p152 = por %p150, %p151
      %p153 = scmp.ne.s32.totalorder %s142, %s145
      %p154 = scmp.eq.s32.totalorder %s15, 3
      %p155 = por %p153, %p154
      %p156 = scmp.ne.s32.totalorder %s145, %s146
      %p157 = scmp.eq.s32.totalorder %s15, 0
      %p158 = por %p156, %p157
      %p159 = scmp.ne.s32.totalorder %s145, %s146
      %p160 = scmp.eq.s32.totalorder %s16, 3
      %p161 = por %p159, %p160
      %p163 = scmp.ne.s32.totalorder %s146, %s162
      %p164 = scmp.eq.s32.totalorder %s16, 0
      %p165 = por %p163, %p164
      %p166 = scmp.le.s32.totalorder 1, %s10
      %p167 = scmp.lt.s32.totalorder %s10, 5
      %p168 = pnand %p166, %p167
      %p169 = pneg %p168
      // Predicated region
      $region9: #{bilateral_forward.1} parent=5 // pred_check
        _
      $region10: #{bilateral_forward.1} parent=5 // pred_check_branch
        %171 = sbr.rel (%p168) target = $region12
      $region11: #{bilateral_forward.1} parent=5 // pred_region
        %s172 = ssub.s32 %s10, 1
      $region12: #{bilateral_forward.1} parent=5 // pred_fallthru
        _
      %p173 = scmp.lt.s32.totalorder %s10, 4
      // Predicated region
      $region13: #{bilateral_forward.1} parent=5 // pred_check
        %p174 = pneg %p173
      $region14: #{bilateral_forward.1} parent=5 // pred_check_branch
        %176 = sbr.rel (%p174) target = $region16
      $region15: #{bilateral_forward.1} parent=5 // pred_region
        // Predicated region
        $region17: #{bilateral_forward.1} parent=15 // pred_check
          %p177 = pneg %p42
        $region18: #{bilateral_forward.1} parent=15 // pred_check_branch
          %179 = sbr.rel (%p177) target = $region20
        $region19: #{bilateral_forward.1} parent=15 // pred_region
          %p180 = scmp.lt.s32.totalorder %s17, 1
          %s181 = scalar_select %p180, %s17, 1
          %s182 = smul.addr %s181, 48
          %s183 = smul.addr %s182, 8
          %s184 = scalar_lea.vmem %s0, %s183
        $region20: #{bilateral_forward.1} parent=15 // pred_fallthru
          _
        // Predicated region
        $region21: #{bilateral_forward.1} parent=15 // pred_check
          %p185 = pneg %p68
        $region22: #{bilateral_forward.1} parent=15 // pred_check_branch
          %187 = sbr.rel (%p185) target = $region24
        $region23: #{bilateral_forward.1} parent=15 // pred_region
          %s188 = sand.u32 %s58, 1
          %s189 = sand.u32 %s58, 1
          %s190 = smul.addr %s189, 4096
          %s191 = scalar_lea.vmem [#allocation2], %s190
          %s192 = smul.u32 16, %s18
          %s193 = smul.addr %s192, 8
          %s194 = scalar_lea.vmem %s1, %s193
          // Predicated region
          $region25: #{bilateral_forward.1} parent=23 // pred_check
            _
          $region26: #{bilateral_forward.1} parent=23 // pred_check_branch
            %196 = sbr.rel (0) target = $region28
          $region27: #{bilateral_forward.1} parent=23 // pred_region
            // Predicated region
            $region29: #{bilateral_forward.1} parent=27 // pred_check
              _
            $region30: #{bilateral_forward.1} parent=27 // pred_check_branch
              %198 = sbr.rel (0) target = $region32
            $region31: #{bilateral_forward.1} parent=27 // pred_region
              loop: start=0, step=1, limit=1
              $region33: #{bilateral_forward.1} parent=31 // loop_pre_header
                _
              $region34: #{bilateral_forward.1} parent=31 // loop_header
                %s200 = sphi 0, %s204
                %p201 = scmp.ge.s32.totalorder %s200, 1
                %s205 = sphi %s194, %s194
                %s206 = sphi %s191, %s191
              $region35: #{bilateral_forward.1} parent=31 // loop_header_branch
                %203 = sbr.rel (%p201) target = $region39
              $region36: #{bilateral_forward.1} parent=31 // loop_body
                %v207 = vld [vmem:[%s205] sm:$0xff]
                %208 = vst [vmem:[%s206] sm:$0xff] %v207
                %v209 = vld [vmem:[%s205 + $0x8] sm:$0xff]
                %210 = vst [vmem:[%s206 + $0x8] sm:$0xff] %v209
                %v211 = vld [vmem:[%s205 + $0x10] sm:$0xff]
                %212 = vst [vmem:[%s206 + $0x10] sm:$0xff] %v211
                %v213 = vld [vmem:[%s205 + $0x18] sm:$0xff]
                %214 = vst [vmem:[%s206 + $0x18] sm:$0xff] %v213
                %v215 = vld [vmem:[%s205 + $0x20] sm:$0xff]
                %216 = vst [vmem:[%s206 + $0x20] sm:$0xff] %v215
                %v217 = vld [vmem:[%s205 + $0x28] sm:$0xff]
                %218 = vst [vmem:[%s206 + $0x28] sm:$0xff] %v217
                %v219 = vld [vmem:[%s205 + $0x30] sm:$0xff]
                %220 = vst [vmem:[%s206 + $0x30] sm:$0xff] %v219
                %v221 = vld [vmem:[%s205 + $0x38] sm:$0xff]
                %222 = vst [vmem:[%s206 + $0x38] sm:$0xff] %v221
                %v223 = vld [vmem:[%s205 + $0x40] sm:$0xff]
                %224 = vst [vmem:[%s206 + $0x40] sm:$0xff] %v223
                %v225 = vld [vmem:[%s205 + $0x48] sm:$0xff]
                %226 = vst [vmem:[%s206 + $0x48] sm:$0xff] %v225
                %v227 = vld [vmem:[%s205 + $0x50] sm:$0xff]
                %228 = vst [vmem:[%s206 + $0x50] sm:$0xff] %v227
                %v229 = vld [vmem:[%s205 + $0x58] sm:$0xff]
                %230 = vst [vmem:[%s206 + $0x58] sm:$0xff] %v229
                %v231 = vld [vmem:[%s205 + $0x60] sm:$0xff]
                %232 = vst [vmem:[%s206 + $0x60] sm:$0xff] %v231
                %v233 = vld [vmem:[%s205 + $0x68] sm:$0xff]
                %234 = vst [vmem:[%s206 + $0x68] sm:$0xff] %v233
                %v235 = vld [vmem:[%s205 + $0x70] sm:$0xff]
                %236 = vst [vmem:[%s206 + $0x70] sm:$0xff] %v235
                %v237 = vld [vmem:[%s205 + $0x78] sm:$0xff]
                %238 = vst [vmem:[%s206 + $0x78] sm:$0xff] %v237
                %v239 = vld [vmem:[%s205 + $0x100] sm:$0xff]
                %240 = vst [vmem:[%s206 + $0x80] sm:$0xff] %v239
                %v241 = vld [vmem:[%s205 + $0x108] sm:$0xff]
                %242 = vst [vmem:[%s206 + $0x88] sm:$0xff] %v241
                %v243 = vld [vmem:[%s205 + $0x110] sm:$0xff]
                %244 = vst [vmem:[%s206 + $0x90] sm:$0xff] %v243
                %v245 = vld [vmem:[%s205 + $0x118] sm:$0xff]
                %246 = vst [vmem:[%s206 + $0x98] sm:$0xff] %v245
                %v247 = vld [vmem:[%s205 + $0x120] sm:$0xff]
                %248 = vst [vmem:[%s206 + $0xa0] sm:$0xff] %v247
                %v249 = vld [vmem:[%s205 + $0x128] sm:$0xff]
                %250 = vst [vmem:[%s206 + $0xa8] sm:$0xff] %v249
                %v251 = vld [vmem:[%s205 + $0x130] sm:$0xff]
                %252 = vst [vmem:[%s206 + $0xb0] sm:$0xff] %v251
                %v253 = vld [vmem:[%s205 + $0x138] sm:$0xff]
                %254 = vst [vmem:[%s206 + $0xb8] sm:$0xff] %v253
                %v255 = vld [vmem:[%s205 + $0x140] sm:$0xff]
                %256 = vst [vmem:[%s206 + $0xc0] sm:$0xff] %v255
                %v257 = vld [vmem:[%s205 + $0x148] sm:$0xff]
                %258 = vst [vmem:[%s206 + $0xc8] sm:$0xff] %v257
                %v259 = vld [vmem:[%s205 + $0x150] sm:$0xff]
                %260 = vst [vmem:[%s206 + $0xd0] sm:$0xff] %v259
                %v261 = vld [vmem:[%s205 + $0x158] sm:$0xff]
                %262 = vst [vmem:[%s206 + $0xd8] sm:$0xff] %v261
                %v263 = vld [vmem:[%s205 + $0x160] sm:$0xff]
                %264 = vst [vmem:[%s206 + $0xe0] sm:$0xff] %v263
                %v265 = vld [vmem:[%s205 + $0x168] sm:$0xff]
                %266 = vst [vmem:[%s206 + $0xe8] sm:$0xff] %v265
                %v267 = vld [vmem:[%s205 + $0x170] sm:$0xff]
                %268 = vst [vmem:[%s206 + $0xf0] sm:$0xff] %v267
                %v269 = vld [vmem:[%s205 + $0x178] sm:$0xff]
                %270 = vst [vmem:[%s206 + $0xf8] sm:$0xff] %v269
                %v271 = vld [vmem:[%s205 + $0x200] sm:$0xff]
                %272 = vst [vmem:[%s206 + $0x100] sm:$0xff] %v271
                %v273 = vld [vmem:[%s205 + $0x208] sm:$0xff]
                %274 = vst [vmem:[%s206 + $0x108] sm:$0xff] %v273
                %v275 = vld [vmem:[%s205 + $0x210] sm:$0xff]
                %276 = vst [vmem:[%s206 + $0x110] sm:$0xff] %v275
                %v277 = vld [vmem:[%s205 + $0x218] sm:$0xff]
                %278 = vst [vmem:[%s206 + $0x118] sm:$0xff] %v277
                %v279 = vld [vmem:[%s205 + $0x220] sm:$0xff]
                %280 = vst [vmem:[%s206 + $0x120] sm:$0xff] %v279
                %v281 = vld [vmem:[%s205 + $0x228] sm:$0xff]
                %282 = vst [vmem:[%s206 + $0x128] sm:$0xff] %v281
                %v283 = vld [vmem:[%s205 + $0x230] sm:$0xff]
                %284 = vst [vmem:[%s206 + $0x130] sm:$0xff] %v283
                %v285 = vld [vmem:[%s205 + $0x238] sm:$0xff]
                %286 = vst [vmem:[%s206 + $0x138] sm:$0xff] %v285
                %v287 = vld [vmem:[%s205 + $0x240] sm:$0xff]
                %288 = vst [vmem:[%s206 + $0x140] sm:$0xff] %v287
                %v289 = vld [vmem:[%s205 + $0x248] sm:$0xff]
                %290 = vst [vmem:[%s206 + $0x148] sm:$0xff] %v289
                %v291 = vld [vmem:[%s205 + $0x250] sm:$0xff]
                %292 = vst [vmem:[%s206 + $0x150] sm:$0xff] %v291
                %v293 = vld [vmem:[%s205 + $0x258] sm:$0xff]
                %294 = vst [vmem:[%s206 + $0x158] sm:$0xff] %v293
                %v295 = vld [vmem:[%s205 + $0x260] sm:$0xff]
                %296 = vst [vmem:[%s206 + $0x160] sm:$0xff] %v295
                %v297 = vld [vmem:[%s205 + $0x268] sm:$0xff]
                %298 = vst [vmem:[%s206 + $0x168] sm:$0xff] %v297
                %v299 = vld [vmem:[%s205 + $0x270] sm:$0xff]
                %300 = vst [vmem:[%s206 + $0x170] sm:$0xff] %v299
                %v301 = vld [vmem:[%s205 + $0x278] sm:$0xff]
                %302 = vst [vmem:[%s206 + $0x178] sm:$0xff] %v301
                %v303 = vld [vmem:[%s205 + $0x300] sm:$0xff]
                %304 = vst [vmem:[%s206 + $0x180] sm:$0xff] %v303
                %v305 = vld [vmem:[%s205 + $0x308] sm:$0xff]
                %306 = vst [vmem:[%s206 + $0x188] sm:$0xff] %v305
                %v307 = vld [vmem:[%s205 + $0x310] sm:$0xff]
                %308 = vst [vmem:[%s206 + $0x190] sm:$0xff] %v307
                %v309 = vld [vmem:[%s205 + $0x318] sm:$0xff]
                %310 = vst [vmem:[%s206 + $0x198] sm:$0xff] %v309
                %v311 = vld [vmem:[%s205 + $0x320] sm:$0xff]
                %312 = vst [vmem:[%s206 + $0x1a0] sm:$0xff] %v311
                %v313 = vld [vmem:[%s205 + $0x328] sm:$0xff]
                %314 = vst [vmem:[%s206 + $0x1a8] sm:$0xff] %v313
                %v315 = vld [vmem:[%s205 + $0x330] sm:$0xff]
                %316 = vst [vmem:[%s206 + $0x1b0] sm:$0xff] %v315
                %v317 = vld [vmem:[%s205 + $0x338] sm:$0xff]
                %318 = vst [vmem:[%s206 + $0x1b8] sm:$0xff] %v317
                %v319 = vld [vmem:[%s205 + $0x340] sm:$0xff]
                %320 = vst [vmem:[%s206 + $0x1c0] sm:$0xff] %v319
                %v321 = vld [vmem:[%s205 + $0x348] sm:$0xff]
                %322 = vst [vmem:[%s206 + $0x1c8] sm:$0xff] %v321
                %v323 = vld [vmem:[%s205 + $0x350] sm:$0xff]
                %324 = vst [vmem:[%s206 + $0x1d0] sm:$0xff] %v323
                %v325 = vld [vmem:[%s205 + $0x358] sm:$0xff]
                %326 = vst [vmem:[%s206 + $0x1d8] sm:$0xff] %v325
                %v327 = vld [vmem:[%s205 + $0x360] sm:$0xff]
                %328 = vst [vmem:[%s206 + $0x1e0] sm:$0xff] %v327
                %v329 = vld [vmem:[%s205 + $0x368] sm:$0xff]
                %330 = vst [vmem:[%s206 + $0x1e8] sm:$0xff] %v329
                %v331 = vld [vmem:[%s205 + $0x370] sm:$0xff]
                %332 = vst [vmem:[%s206 + $0x1f0] sm:$0xff] %v331
                %v333 = vld [vmem:[%s205 + $0x378] sm:$0xff]
                %334 = vst [vmem:[%s206 + $0x1f8] sm:$0xff] %v333
                %v335 = vld [vmem:[%s205 + $0x400] sm:$0xff]
                %336 = vst [vmem:[%s206 + $0x200] sm:$0xff] %v335
                %v337 = vld [vmem:[%s205 + $0x408] sm:$0xff]
                %338 = vst [vmem:[%s206 + $0x208] sm:$0xff] %v337
                %v339 = vld [vmem:[%s205 + $0x410] sm:$0xff]
                %340 = vst [vmem:[%s206 + $0x210] sm:$0xff] %v339
                %v341 = vld [vmem:[%s205 + $0x418] sm:$0xff]
                %342 = vst [vmem:[%s206 + $0x218] sm:$0xff] %v341
                %v343 = vld [vmem:[%s205 + $0x420] sm:$0xff]
                %344 = vst [vmem:[%s206 + $0x220] sm:$0xff] %v343
                %v345 = vld [vmem:[%s205 + $0x428] sm:$0xff]
                %346 = vst [vmem:[%s206 + $0x228] sm:$0xff] %v345
                %v347 = vld [vmem:[%s205 + $0x430] sm:$0xff]
                %348 = vst [vmem:[%s206 + $0x230] sm:$0xff] %v347
                %v349 = vld [vmem:[%s205 + $0x438] sm:$0xff]
                %350 = vst [vmem:[%s206 + $0x238] sm:$0xff] %v349
                %v351 = vld [vmem:[%s205 + $0x440] sm:$0xff]
                %352 = vst [vmem:[%s206 + $0x240] sm:$0xff] %v351
                %v353 = vld [vmem:[%s205 + $0x448] sm:$0xff]
                %354 = vst [vmem:[%s206 + $0x248] sm:$0xff] %v353
                %v355 = vld [vmem:[%s205 + $0x450] sm:$0xff]
                %356 = vst [vmem:[%s206 + $0x250] sm:$0xff] %v355
                %v357 = vld [vmem:[%s205 + $0x458] sm:$0xff]
                %358 = vst [vmem:[%s206 + $0x258] sm:$0xff] %v357
                %v359 = vld [vmem:[%s205 + $0x460] sm:$0xff]
                %360 = vst [vmem:[%s206 + $0x260] sm:$0xff] %v359
                %v361 = vld [vmem:[%s205 + $0x468] sm:$0xff]
                %362 = vst [vmem:[%s206 + $0x268] sm:$0xff] %v361
                %v363 = vld [vmem:[%s205 + $0x470] sm:$0xff]
                %364 = vst [vmem:[%s206 + $0x270] sm:$0xff] %v363
                %v365 = vld [vmem:[%s205 + $0x478] sm:$0xff]
                %366 = vst [vmem:[%s206 + $0x278] sm:$0xff] %v365
                %v367 = vld [vmem:[%s205 + $0x500] sm:$0xff]
                %368 = vst [vmem:[%s206 + $0x280] sm:$0xff] %v367
                %v369 = vld [vmem:[%s205 + $0x508] sm:$0xff]
                %370 = vst [vmem:[%s206 + $0x288] sm:$0xff] %v369
                %v371 = vld [vmem:[%s205 + $0x510] sm:$0xff]
                %372 = vst [vmem:[%s206 + $0x290] sm:$0xff] %v371
                %v373 = vld [vmem:[%s205 + $0x518] sm:$0xff]
                %374 = vst [vmem:[%s206 + $0x298] sm:$0xff] %v373
                %v375 = vld [vmem:[%s205 + $0x520] sm:$0xff]
                %376 = vst [vmem:[%s206 + $0x2a0] sm:$0xff] %v375
                %v377 = vld [vmem:[%s205 + $0x528] sm:$0xff]
                %378 = vst [vmem:[%s206 + $0x2a8] sm:$0xff] %v377
                %v379 = vld [vmem:[%s205 + $0x530] sm:$0xff]
                %380 = vst [vmem:[%s206 + $0x2b0] sm:$0xff] %v379
                %v381 = vld [vmem:[%s205 + $0x538] sm:$0xff]
                %382 = vst [vmem:[%s206 + $0x2b8] sm:$0xff] %v381
                %v383 = vld [vmem:[%s205 + $0x540] sm:$0xff]
                %384 = vst [vmem:[%s206 + $0x2c0] sm:$0xff] %v383
                %v385 = vld [vmem:[%s205 + $0x548] sm:$0xff]
                %386 = vst [vmem:[%s206 + $0x2c8] sm:$0xff] %v385
                %v387 = vld [vmem:[%s205 + $0x550] sm:$0xff]
                %388 = vst [vmem:[%s206 + $0x2d0] sm:$0xff] %v387
                %v389 = vld [vmem:[%s205 + $0x558] sm:$0xff]
                %390 = vst [vmem:[%s206 + $0x2d8] sm:$0xff] %v389
                %v391 = vld [vmem:[%s205 + $0x560] sm:$0xff]
                %392 = vst [vmem:[%s206 + $0x2e0] sm:$0xff] %v391
                %v393 = vld [vmem:[%s205 + $0x568] sm:$0xff]
                %394 = vst [vmem:[%s206 + $0x2e8] sm:$0xff] %v393
                %v395 = vld [vmem:[%s205 + $0x570] sm:$0xff]
                %396 = vst [vmem:[%s206 + $0x2f0] sm:$0xff] %v395
                %v397 = vld [vmem:[%s205 + $0x578] sm:$0xff]
                %398 = vst [vmem:[%s206 + $0x2f8] sm:$0xff] %v397
                %v399 = vld [vmem:[%s205 + $0x600] sm:$0xff]
                %400 = vst [vmem:[%s206 + $0x300] sm:$0xff] %v399
                %v401 = vld [vmem:[%s205 + $0x608] sm:$0xff]
                %402 = vst [vmem:[%s206 + $0x308] sm:$0xff] %v401
                %v403 = vld [vmem:[%s205 + $0x610] sm:$0xff]
                %404 = vst [vmem:[%s206 + $0x310] sm:$0xff] %v403
                %v405 = vld [vmem:[%s205 + $0x618] sm:$0xff]
                %406 = vst [vmem:[%s206 + $0x318] sm:$0xff] %v405
                %v407 = vld [vmem:[%s205 + $0x620] sm:$0xff]
                %408 = vst [vmem:[%s206 + $0x320] sm:$0xff] %v407
                %v409 = vld [vmem:[%s205 + $0x628] sm:$0xff]
                %410 = vst [vmem:[%s206 + $0x328] sm:$0xff] %v409
                %v411 = vld [vmem:[%s205 + $0x630] sm:$0xff]
                %412 = vst [vmem:[%s206 + $0x330] sm:$0xff] %v411
                %v413 = vld [vmem:[%s205 + $0x638] sm:$0xff]
                %414 = vst [vmem:[%s206 + $0x338] sm:$0xff] %v413
                %v415 = vld [vmem:[%s205 + $0x640] sm:$0xff]
                %416 = vst [vmem:[%s206 + $0x340] sm:$0xff] %v415
                %v417 = vld [vmem:[%s205 + $0x648] sm:$0xff]
                %418 = vst [vmem:[%s206 + $0x348] sm:$0xff] %v417
                %v419 = vld [vmem:[%s205 + $0x650] sm:$0xff]
                %420 = vst [vmem:[%s206 + $0x350] sm:$0xff] %v419
                %v421 = vld [vmem:[%s205 + $0x658] sm:$0xff]
                %422 = vst [vmem:[%s206 + $0x358] sm:$0xff] %v421
                %v423 = vld [vmem:[%s205 + $0x660] sm:$0xff]
                %424 = vst [vmem:[%s206 + $0x360] sm:$0xff] %v423
                %v425 = vld [vmem:[%s205 + $0x668] sm:$0xff]
                %426 = vst [vmem:[%s206 + $0x368] sm:$0xff] %v425
                %v427 = vld [vmem:[%s205 + $0x670] sm:$0xff]
                %428 = vst [vmem:[%s206 + $0x370] sm:$0xff] %v427
                %v429 = vld [vmem:[%s205 + $0x678] sm:$0xff]
                %430 = vst [vmem:[%s206 + $0x378] sm:$0xff] %v429
                %v431 = vld [vmem:[%s205 + $0x700] sm:$0xff]
                %432 = vst [vmem:[%s206 + $0x380] sm:$0xff] %v431
                %v433 = vld [vmem:[%s205 + $0x708] sm:$0xff]
                %434 = vst [vmem:[%s206 + $0x388] sm:$0xff] %v433
                %v435 = vld [vmem:[%s205 + $0x710] sm:$0xff]
                %436 = vst [vmem:[%s206 + $0x390] sm:$0xff] %v435
                %v437 = vld [vmem:[%s205 + $0x718] sm:$0xff]
                %438 = vst [vmem:[%s206 + $0x398] sm:$0xff] %v437
                %v439 = vld [vmem:[%s205 + $0x720] sm:$0xff]
                %440 = vst [vmem:[%s206 + $0x3a0] sm:$0xff] %v439
                %v441 = vld [vmem:[%s205 + $0x728] sm:$0xff]
                %442 = vst [vmem:[%s206 + $0x3a8] sm:$0xff] %v441
                %v443 = vld [vmem:[%s205 + $0x730] sm:$0xff]
                %444 = vst [vmem:[%s206 + $0x3b0] sm:$0xff] %v443
                %v445 = vld [vmem:[%s205 + $0x738] sm:$0xff]
                %446 = vst [vmem:[%s206 + $0x3b8] sm:$0xff] %v445
                %v447 = vld [vmem:[%s205 + $0x740] sm:$0xff]
                %448 = vst [vmem:[%s206 + $0x3c0] sm:$0xff] %v447
                %v449 = vld [vmem:[%s205 + $0x748] sm:$0xff]
                %450 = vst [vmem:[%s206 + $0x3c8] sm:$0xff] %v449
                %v451 = vld [vmem:[%s205 + $0x750] sm:$0xff]
                %452 = vst [vmem:[%s206 + $0x3d0] sm:$0xff] %v451
                %v453 = vld [vmem:[%s205 + $0x758] sm:$0xff]
                %454 = vst [vmem:[%s206 + $0x3d8] sm:$0xff] %v453
                %v455 = vld [vmem:[%s205 + $0x760] sm:$0xff]
                %456 = vst [vmem:[%s206 + $0x3e0] sm:$0xff] %v455
                %v457 = vld [vmem:[%s205 + $0x768] sm:$0xff]
                %458 = vst [vmem:[%s206 + $0x3e8] sm:$0xff] %v457
                %v459 = vld [vmem:[%s205 + $0x770] sm:$0xff]
                %460 = vst [vmem:[%s206 + $0x3f0] sm:$0xff] %v459
                %v461 = vld [vmem:[%s205 + $0x778] sm:$0xff]
                %462 = vst [vmem:[%s206 + $0x3f8] sm:$0xff] %v461
                %v463 = vld [vmem:[%s205 + $0x800] sm:$0xff]
                %464 = vst [vmem:[%s206 + $0x400] sm:$0xff] %v463
                %v465 = vld [vmem:[%s205 + $0x808] sm:$0xff]
                %466 = vst [vmem:[%s206 + $0x408] sm:$0xff] %v465
                %v467 = vld [vmem:[%s205 + $0x810] sm:$0xff]
                %468 = vst [vmem:[%s206 + $0x410] sm:$0xff] %v467
                %v469 = vld [vmem:[%s205 + $0x818] sm:$0xff]
                %470 = vst [vmem:[%s206 + $0x418] sm:$0xff] %v469
                %v471 = vld [vmem:[%s205 + $0x820] sm:$0xff]
                %472 = vst [vmem:[%s206 + $0x420] sm:$0xff] %v471
                %v473 = vld [vmem:[%s205 + $0x828] sm:$0xff]
                %474 = vst [vmem:[%s206 + $0x428] sm:$0xff] %v473
                %v475 = vld [vmem:[%s205 + $0x830] sm:$0xff]
                %476 = vst [vmem:[%s206 + $0x430] sm:$0xff] %v475
                %v477 = vld [vmem:[%s205 + $0x838] sm:$0xff]
                %478 = vst [vmem:[%s206 + $0x438] sm:$0xff] %v477
                %v479 = vld [vmem:[%s205 + $0x840] sm:$0xff]
                %480 = vst [vmem:[%s206 + $0x440] sm:$0xff] %v479
                %v481 = vld [vmem:[%s205 + $0x848] sm:$0xff]
                %482 = vst [vmem:[%s206 + $0x448] sm:$0xff] %v481
                %v483 = vld [vmem:[%s205 + $0x850] sm:$0xff]
                %484 = vst [vmem:[%s206 + $0x450] sm:$0xff] %v483
                %v485 = vld [vmem:[%s205 + $0x858] sm:$0xff]
                %486 = vst [vmem:[%s206 + $0x458] sm:$0xff] %v485
                %v487 = vld [vmem:[%s205 + $0x860] sm:$0xff]
                %488 = vst [vmem:[%s206 + $0x460] sm:$0xff] %v487
                %v489 = vld [vmem:[%s205 + $0x868] sm:$0xff]
                %490 = vst [vmem:[%s206 + $0x468] sm:$0xff] %v489
                %v491 = vld [vmem:[%s205 + $0x870] sm:$0xff]
                %492 = vst [vmem:[%s206 + $0x470] sm:$0xff] %v491
                %v493 = vld [vmem:[%s205 + $0x878] sm:$0xff]
                %494 = vst [vmem:[%s206 + $0x478] sm:$0xff] %v493
                %v495 = vld [vmem:[%s205 + $0x900] sm:$0xff]
                %496 = vst [vmem:[%s206 + $0x480] sm:$0xff] %v495
                %v497 = vld [vmem:[%s205 + $0x908] sm:$0xff]
                %498 = vst [vmem:[%s206 + $0x488] sm:$0xff] %v497
                %v499 = vld [vmem:[%s205 + $0x910] sm:$0xff]
                %500 = vst [vmem:[%s206 + $0x490] sm:$0xff] %v499
                %v501 = vld [vmem:[%s205 + $0x918] sm:$0xff]
                %502 = vst [vmem:[%s206 + $0x498] sm:$0xff] %v501
                %v503 = vld [vmem:[%s205 + $0x920] sm:$0xff]
                %504 = vst [vmem:[%s206 + $0x4a0] sm:$0xff] %v503
                %v505 = vld [vmem:[%s205 + $0x928] sm:$0xff]
                %506 = vst [vmem:[%s206 + $0x4a8] sm:$0xff] %v505
                %v507 = vld [vmem:[%s205 + $0x930] sm:$0xff]
                %508 = vst [vmem:[%s206 + $0x4b0] sm:$0xff] %v507
                %v509 = vld [vmem:[%s205 + $0x938] sm:$0xff]
                %510 = vst [vmem:[%s206 + $0x4b8] sm:$0xff] %v509
                %v511 = vld [vmem:[%s205 + $0x940] sm:$0xff]
                %512 = vst [vmem:[%s206 + $0x4c0] sm:$0xff] %v511
                %v513 = vld [vmem:[%s205 + $0x948] sm:$0xff]
                %514 = vst [vmem:[%s206 + $0x4c8] sm:$0xff] %v513
                %v515 = vld [vmem:[%s205 + $0x950] sm:$0xff]
                %516 = vst [vmem:[%s206 + $0x4d0] sm:$0xff] %v515
                %v517 = vld [vmem:[%s205 + $0x958] sm:$0xff]
                %518 = vst [vmem:[%s206 + $0x4d8] sm:$0xff] %v517
                %v519 = vld [vmem:[%s205 + $0x960] sm:$0xff]
                %520 = vst [vmem:[%s206 + $0x4e0] sm:$0xff] %v519
                %v521 = vld [vmem:[%s205 + $0x968] sm:$0xff]
                %522 = vst [vmem:[%s206 + $0x4e8] sm:$0xff] %v521
                %v523 = vld [vmem:[%s205 + $0x970] sm:$0xff]
                %524 = vst [vmem:[%s206 + $0x4f0] sm:$0xff] %v523
                %v525 = vld [vmem:[%s205 + $0x978] sm:$0xff]
                %526 = vst [vmem:[%s206 + $0x4f8] sm:$0xff] %v525
                %v527 = vld [vmem:[%s205 + $0xa00] sm:$0xff]
                %528 = vst [vmem:[%s206 + $0x500] sm:$0xff] %v527
                %v529 = vld [vmem:[%s205 + $0xa08] sm:$0xff]
                %530 = vst [vmem:[%s206 + $0x508] sm:$0xff] %v529
                %v531 = vld [vmem:[%s205 + $0xa10] sm:$0xff]
                %532 = vst [vmem:[%s206 + $0x510] sm:$0xff] %v531
                %v533 = vld [vmem:[%s205 + $0xa18] sm:$0xff]
                %534 = vst [vmem:[%s206 + $0x518] sm:$0xff] %v533
                %v535 = vld [vmem:[%s205 + $0xa20] sm:$0xff]
                %536 = vst [vmem:[%s206 + $0x520] sm:$0xff] %v535
                %v537 = vld [vmem:[%s205 + $0xa28] sm:$0xff]
                %538 = vst [vmem:[%s206 + $0x528] sm:$0xff] %v537
                %v539 = vld [vmem:[%s205 + $0xa30] sm:$0xff]
                %540 = vst [vmem:[%s206 + $0x530] sm:$0xff] %v539
                %v541 = vld [vmem:[%s205 + $0xa38] sm:$0xff]
                %542 = vst [vmem:[%s206 + $0x538] sm:$0xff] %v541
                %v543 = vld [vmem:[%s205 + $0xa40] sm:$0xff]
                %544 = vst [vmem:[%s206 + $0x540] sm:$0xff] %v543
                %v545 = vld [vmem:[%s205 + $0xa48] sm:$0xff]
                %546 = vst [vmem:[%s206 + $0x548] sm:$0xff] %v545
                %v547 = vld [vmem:[%s205 + $0xa50] sm:$0xff]
                %548 = vst [vmem:[%s206 + $0x550] sm:$0xff] %v547
                %v549 = vld [vmem:[%s205 + $0xa58] sm:$0xff]
                %550 = vst [vmem:[%s206 + $0x558] sm:$0xff] %v549
                %v551 = vld [vmem:[%s205 + $0xa60] sm:$0xff]
                %552 = vst [vmem:[%s206 + $0x560] sm:$0xff] %v551
                %v553 = vld [vmem:[%s205 + $0xa68] sm:$0xff]
                %554 = vst [vmem:[%s206 + $0x568] sm:$0xff] %v553
                %v555 = vld [vmem:[%s205 + $0xa70] sm:$0xff]
                %556 = vst [vmem:[%s206 + $0x570] sm:$0xff] %v555
                %v557 = vld [vmem:[%s205 + $0xa78] sm:$0xff]
                %558 = vst [vmem:[%s206 + $0x578] sm:$0xff] %v557
                %v559 = vld [vmem:[%s205 + $0xb00] sm:$0xff]
                %560 = vst [vmem:[%s206 + $0x580] sm:$0xff] %v559
                %v561 = vld [vmem:[%s205 + $0xb08] sm:$0xff]
                %562 = vst [vmem:[%s206 + $0x588] sm:$0xff] %v561
                %v563 = vld [vmem:[%s205 + $0xb10] sm:$0xff]
                %564 = vst [vmem:[%s206 + $0x590] sm:$0xff] %v563
                %v565 = vld [vmem:[%s205 + $0xb18] sm:$0xff]
                %566 = vst [vmem:[%s206 + $0x598] sm:$0xff] %v565
                %v567 = vld [vmem:[%s205 + $0xb20] sm:$0xff]
                %568 = vst [vmem:[%s206 + $0x5a0] sm:$0xff] %v567
                %v569 = vld [vmem:[%s205 + $0xb28] sm:$0xff]
                %570 = vst [vmem:[%s206 + $0x5a8] sm:$0xff] %v569
                %v571 = vld [vmem:[%s205 + $0xb30] sm:$0xff]
                %572 = vst [vmem:[%s206 + $0x5b0] sm:$0xff] %v571
                %v573 = vld [vmem:[%s205 + $0xb38] sm:$0xff]
                %574 = vst [vmem:[%s206 + $0x5b8] sm:$0xff] %v573
                %v575 = vld [vmem:[%s205 + $0xb40] sm:$0xff]
                %576 = vst [vmem:[%s206 + $0x5c0] sm:$0xff] %v575
                %v577 = vld [vmem:[%s205 + $0xb48] sm:$0xff]
                %578 = vst [vmem:[%s206 + $0x5c8] sm:$0xff] %v577
                %v579 = vld [vmem:[%s205 + $0xb50] sm:$0xff]
                %580 = vst [vmem:[%s206 + $0x5d0] sm:$0xff] %v579
                %v581 = vld [vmem:[%s205 + $0xb58] sm:$0xff]
                %582 = vst [vmem:[%s206 + $0x5d8] sm:$0xff] %v581
                %v583 = vld [vmem:[%s205 + $0xb60] sm:$0xff]
                %584 = vst [vmem:[%s206 + $0x5e0] sm:$0xff] %v583
                %v585 = vld [vmem:[%s205 + $0xb68] sm:$0xff]
                %586 = vst [vmem:[%s206 + $0x5e8] sm:$0xff] %v585
                %v587 = vld [vmem:[%s205 + $0xb70] sm:$0xff]
                %588 = vst [vmem:[%s206 + $0x5f0] sm:$0xff] %v587
                %v589 = vld [vmem:[%s205 + $0xb78] sm:$0xff]
                %590 = vst [vmem:[%s206 + $0x5f8] sm:$0xff] %v589
                %v591 = vld [vmem:[%s205 + $0xc00] sm:$0xff]
                %592 = vst [vmem:[%s206 + $0x600] sm:$0xff] %v591
                %v593 = vld [vmem:[%s205 + $0xc08] sm:$0xff]
                %594 = vst [vmem:[%s206 + $0x608] sm:$0xff] %v593
                %v595 = vld [vmem:[%s205 + $0xc10] sm:$0xff]
                %596 = vst [vmem:[%s206 + $0x610] sm:$0xff] %v595
                %v597 = vld [vmem:[%s205 + $0xc18] sm:$0xff]
                %598 = vst [vmem:[%s206 + $0x618] sm:$0xff] %v597
                %v599 = vld [vmem:[%s205 + $0xc20] sm:$0xff]
                %600 = vst [vmem:[%s206 + $0x620] sm:$0xff] %v599
                %v601 = vld [vmem:[%s205 + $0xc28] sm:$0xff]
                %602 = vst [vmem:[%s206 + $0x628] sm:$0xff] %v601
                %v603 = vld [vmem:[%s205 + $0xc30] sm:$0xff]
                %604 = vst [vmem:[%s206 + $0x630] sm:$0xff] %v603
                %v605 = vld [vmem:[%s205 + $0xc38] sm:$0xff]
                %606 = vst [vmem:[%s206 + $0x638] sm:$0xff] %v605
                %v607 = vld [vmem:[%s205 + $0xc40] sm:$0xff]
                %608 = vst [vmem:[%s206 + $0x640] sm:$0xff] %v607
                %v609 = vld [vmem:[%s205 + $0xc48] sm:$0xff]
                %610 = vst [vmem:[%s206 + $0x648] sm:$0xff] %v609
                %v611 = vld [vmem:[%s205 + $0xc50] sm:$0xff]
                %612 = vst [vmem:[%s206 + $0x650] sm:$0xff] %v611
                %v613 = vld [vmem:[%s205 + $0xc58] sm:$0xff]
                %614 = vst [vmem:[%s206 + $0x658] sm:$0xff] %v613
                %v615 = vld [vmem:[%s205 + $0xc60] sm:$0xff]
                %616 = vst [vmem:[%s206 + $0x660] sm:$0xff] %v615
                %v617 = vld [vmem:[%s205 + $0xc68] sm:$0xff]
                %618 = vst [vmem:[%s206 + $0x668] sm:$0xff] %v617
                %v619 = vld [vmem:[%s205 + $0xc70] sm:$0xff]
                %620 = vst [vmem:[%s206 + $0x670] sm:$0xff] %v619
                %v621 = vld [vmem:[%s205 + $0xc78] sm:$0xff]
                %622 = vst [vmem:[%s206 + $0x678] sm:$0xff] %v621
                %v623 = vld [vmem:[%s205 + $0xd00] sm:$0xff]
                %624 = vst [vmem:[%s206 + $0x680] sm:$0xff] %v623
                %v625 = vld [vmem:[%s205 + $0xd08] sm:$0xff]
                %626 = vst [vmem:[%s206 + $0x688] sm:$0xff] %v625
                %v627 = vld [vmem:[%s205 + $0xd10] sm:$0xff]
                %628 = vst [vmem:[%s206 + $0x690] sm:$0xff] %v627
                %v629 = vld [vmem:[%s205 + $0xd18] sm:$0xff]
                %630 = vst [vmem:[%s206 + $0x698] sm:$0xff] %v629
                %v631 = vld [vmem:[%s205 + $0xd20] sm:$0xff]
                %632 = vst [vmem:[%s206 + $0x6a0] sm:$0xff] %v631
                %v633 = vld [vmem:[%s205 + $0xd28] sm:$0xff]
                %634 = vst [vmem:[%s206 + $0x6a8] sm:$0xff] %v633
                %v635 = vld [vmem:[%s205 + $0xd30] sm:$0xff]
                %636 = vst [vmem:[%s206 + $0x6b0] sm:$0xff] %v635
                %v637 = vld [vmem:[%s205 + $0xd38] sm:$0xff]
                %638 = vst [vmem:[%s206 + $0x6b8] sm:$0xff] %v637
                %v639 = vld [vmem:[%s205 + $0xd40] sm:$0xff]
                %640 = vst [vmem:[%s206 + $0x6c0] sm:$0xff] %v639
                %v641 = vld [vmem:[%s205 + $0xd48] sm:$0xff]
                %642 = vst [vmem:[%s206 + $0x6c8] sm:$0xff] %v641
                %v643 = vld [vmem:[%s205 + $0xd50] sm:$0xff]
                %644 = vst [vmem:[%s206 + $0x6d0] sm:$0xff] %v643
                %v645 = vld [vmem:[%s205 + $0xd58] sm:$0xff]
                %646 = vst [vmem:[%s206 + $0x6d8] sm:$0xff] %v645
                %v647 = vld [vmem:[%s205 + $0xd60] sm:$0xff]
                %648 = vst [vmem:[%s206 + $0x6e0] sm:$0xff] %v647
                %v649 = vld [vmem:[%s205 + $0xd68] sm:$0xff]
                %650 = vst [vmem:[%s206 + $0x6e8] sm:$0xff] %v649
                %v651 = vld [vmem:[%s205 + $0xd70] sm:$0xff]
                %652 = vst [vmem:[%s206 + $0x6f0] sm:$0xff] %v651
                %v653 = vld [vmem:[%s205 + $0xd78] sm:$0xff]
                %654 = vst [vmem:[%s206 + $0x6f8] sm:$0xff] %v653
                %v655 = vld [vmem:[%s205 + $0xe00] sm:$0xff]
                %656 = vst [vmem:[%s206 + $0x700] sm:$0xff] %v655
                %v657 = vld [vmem:[%s205 + $0xe08] sm:$0xff]
                %658 = vst [vmem:[%s206 + $0x708] sm:$0xff] %v657
                %v659 = vld [vmem:[%s205 + $0xe10] sm:$0xff]
                %660 = vst [vmem:[%s206 + $0x710] sm:$0xff] %v659
                %v661 = vld [vmem:[%s205 + $0xe18] sm:$0xff]
                %662 = vst [vmem:[%s206 + $0x718] sm:$0xff] %v661
                %v663 = vld [vmem:[%s205 + $0xe20] sm:$0xff]
                %664 = vst [vmem:[%s206 + $0x720] sm:$0xff] %v663
                %v665 = vld [vmem:[%s205 + $0xe28] sm:$0xff]
                %666 = vst [vmem:[%s206 + $0x728] sm:$0xff] %v665
                %v667 = vld [vmem:[%s205 + $0xe30] sm:$0xff]
                %668 = vst [vmem:[%s206 + $0x730] sm:$0xff] %v667
                %v669 = vld [vmem:[%s205 + $0xe38] sm:$0xff]
                %670 = vst [vmem:[%s206 + $0x738] sm:$0xff] %v669
                %v671 = vld [vmem:[%s205 + $0xe40] sm:$0xff]
                %672 = vst [vmem:[%s206 + $0x740] sm:$0xff] %v671
                %v673 = vld [vmem:[%s205 + $0xe48] sm:$0xff]
                %674 = vst [vmem:[%s206 + $0x748] sm:$0xff] %v673
                %v675 = vld [vmem:[%s205 + $0xe50] sm:$0xff]
                %676 = vst [vmem:[%s206 + $0x750] sm:$0xff] %v675
                %v677 = vld [vmem:[%s205 + $0xe58] sm:$0xff]
                %678 = vst [vmem:[%s206 + $0x758] sm:$0xff] %v677
                %v679 = vld [vmem:[%s205 + $0xe60] sm:$0xff]
                %680 = vst [vmem:[%s206 + $0x760] sm:$0xff] %v679
                %v681 = vld [vmem:[%s205 + $0xe68] sm:$0xff]
                %682 = vst [vmem:[%s206 + $0x768] sm:$0xff] %v681
                %v683 = vld [vmem:[%s205 + $0xe70] sm:$0xff]
                %684 = vst [vmem:[%s206 + $0x770] sm:$0xff] %v683
                %v685 = vld [vmem:[%s205 + $0xe78] sm:$0xff]
                %686 = vst [vmem:[%s206 + $0x778] sm:$0xff] %v685
                %v687 = vld [vmem:[%s205 + $0xf00] sm:$0xff]
                %688 = vst [vmem:[%s206 + $0x780] sm:$0xff] %v687
                %v689 = vld [vmem:[%s205 + $0xf08] sm:$0xff]
                %690 = vst [vmem:[%s206 + $0x788] sm:$0xff] %v689
                %v691 = vld [vmem:[%s205 + $0xf10] sm:$0xff]
                %692 = vst [vmem:[%s206 + $0x790] sm:$0xff] %v691
                %v693 = vld [vmem:[%s205 + $0xf18] sm:$0xff]
                %694 = vst [vmem:[%s206 + $0x798] sm:$0xff] %v693
                %v695 = vld [vmem:[%s205 + $0xf20] sm:$0xff]
                %696 = vst [vmem:[%s206 + $0x7a0] sm:$0xff] %v695
                %v697 = vld [vmem:[%s205 + $0xf28] sm:$0xff]
                %698 = vst [vmem:[%s206 + $0x7a8] sm:$0xff] %v697
                %v699 = vld [vmem:[%s205 + $0xf30] sm:$0xff]
                %700 = vst [vmem:[%s206 + $0x7b0] sm:$0xff] %v699
                %v701 = vld [vmem:[%s205 + $0xf38] sm:$0xff]
                %702 = vst [vmem:[%s206 + $0x7b8] sm:$0xff] %v701
                %v703 = vld [vmem:[%s205 + $0xf40] sm:$0xff]
                %704 = vst [vmem:[%s206 + $0x7c0] sm:$0xff] %v703
                %v705 = vld [vmem:[%s205 + $0xf48] sm:$0xff]
                %706 = vst [vmem:[%s206 + $0x7c8] sm:$0xff] %v705
                %v707 = vld [vmem:[%s205 + $0xf50] sm:$0xff]
                %708 = vst [vmem:[%s206 + $0x7d0] sm:$0xff] %v707
                %v709 = vld [vmem:[%s205 + $0xf58] sm:$0xff]
                %710 = vst [vmem:[%s206 + $0x7d8] sm:$0xff] %v709
                %v711 = vld [vmem:[%s205 + $0xf60] sm:$0xff]
                %712 = vst [vmem:[%s206 + $0x7e0] sm:$0xff] %v711
                %v713 = vld [vmem:[%s205 + $0xf68] sm:$0xff]
                %714 = vst [vmem:[%s206 + $0x7e8] sm:$0xff] %v713
                %v715 = vld [vmem:[%s205 + $0xf70] sm:$0xff]
                %716 = vst [vmem:[%s206 + $0x7f0] sm:$0xff] %v715
                %v717 = vld [vmem:[%s205 + $0xf78] sm:$0xff]
                %718 = vst [vmem:[%s206 + $0x7f8] sm:$0xff] %v717
                %v719 = vld [vmem:[%s205 + $0x1000] sm:$0xff]
                %720 = vst [vmem:[%s206 + $0x800] sm:$0xff] %v719
                %v721 = vld [vmem:[%s205 + $0x1008] sm:$0xff]
                %722 = vst [vmem:[%s206 + $0x808] sm:$0xff] %v721
                %v723 = vld [vmem:[%s205 + $0x1010] sm:$0xff]
                %724 = vst [vmem:[%s206 + $0x810] sm:$0xff] %v723
                %v725 = vld [vmem:[%s205 + $0x1018] sm:$0xff]
                %726 = vst [vmem:[%s206 + $0x818] sm:$0xff] %v725
                %v727 = vld [vmem:[%s205 + $0x1020] sm:$0xff]
                %728 = vst [vmem:[%s206 + $0x820] sm:$0xff] %v727
                %v729 = vld [vmem:[%s205 + $0x1028] sm:$0xff]
                %730 = vst [vmem:[%s206 + $0x828] sm:$0xff] %v729
                %v731 = vld [vmem:[%s205 + $0x1030] sm:$0xff]
                %732 = vst [vmem:[%s206 + $0x830] sm:$0xff] %v731
                %v733 = vld [vmem:[%s205 + $0x1038] sm:$0xff]
                %734 = vst [vmem:[%s206 + $0x838] sm:$0xff] %v733
                %v735 = vld [vmem:[%s205 + $0x1040] sm:$0xff]
                %736 = vst [vmem:[%s206 + $0x840] sm:$0xff] %v735
                %v737 = vld [vmem:[%s205 + $0x1048] sm:$0xff]
                %738 = vst [vmem:[%s206 + $0x848] sm:$0xff] %v737
                %v739 = vld [vmem:[%s205 + $0x1050] sm:$0xff]
                %740 = vst [vmem:[%s206 + $0x850] sm:$0xff] %v739
                %v741 = vld [vmem:[%s205 + $0x1058] sm:$0xff]
                %742 = vst [vmem:[%s206 + $0x858] sm:$0xff] %v741
                %v743 = vld [vmem:[%s205 + $0x1060] sm:$0xff]
                %744 = vst [vmem:[%s206 + $0x860] sm:$0xff] %v743
                %v745 = vld [vmem:[%s205 + $0x1068] sm:$0xff]
                %746 = vst [vmem:[%s206 + $0x868] sm:$0xff] %v745
                %v747 = vld [vmem:[%s205 + $0x1070] sm:$0xff]
                %748 = vst [vmem:[%s206 + $0x870] sm:$0xff] %v747
                %v749 = vld [vmem:[%s205 + $0x1078] sm:$0xff]
                %750 = vst [vmem:[%s206 + $0x878] sm:$0xff] %v749
                %v751 = vld [vmem:[%s205 + $0x1100] sm:$0xff]
                %752 = vst [vmem:[%s206 + $0x880] sm:$0xff] %v751
                %v753 = vld [vmem:[%s205 + $0x1108] sm:$0xff]
                %754 = vst [vmem:[%s206 + $0x888] sm:$0xff] %v753
                %v755 = vld [vmem:[%s205 + $0x1110] sm:$0xff]
                %756 = vst [vmem:[%s206 + $0x890] sm:$0xff] %v755
                %v757 = vld [vmem:[%s205 + $0x1118] sm:$0xff]
                %758 = vst [vmem:[%s206 + $0x898] sm:$0xff] %v757
                %v759 = vld [vmem:[%s205 + $0x1120] sm:$0xff]
                %760 = vst [vmem:[%s206 + $0x8a0] sm:$0xff] %v759
                %v761 = vld [vmem:[%s205 + $0x1128] sm:$0xff]
                %762 = vst [vmem:[%s206 + $0x8a8] sm:$0xff] %v761
                %v763 = vld [vmem:[%s205 + $0x1130] sm:$0xff]
                %764 = vst [vmem:[%s206 + $0x8b0] sm:$0xff] %v763
                %v765 = vld [vmem:[%s205 + $0x1138] sm:$0xff]
                %766 = vst [vmem:[%s206 + $0x8b8] sm:$0xff] %v765
                %v767 = vld [vmem:[%s205 + $0x1140] sm:$0xff]
                %768 = vst [vmem:[%s206 + $0x8c0] sm:$0xff] %v767
                %v769 = vld [vmem:[%s205 + $0x1148] sm:$0xff]
                %770 = vst [vmem:[%s206 + $0x8c8] sm:$0xff] %v769
                %v771 = vld [vmem:[%s205 + $0x1150] sm:$0xff]
                %772 = vst [vmem:[%s206 + $0x8d0] sm:$0xff] %v771
                %v773 = vld [vmem:[%s205 + $0x1158] sm:$0xff]
                %774 = vst [vmem:[%s206 + $0x8d8] sm:$0xff] %v773
                %v775 = vld [vmem:[%s205 + $0x1160] sm:$0xff]
                %776 = vst [vmem:[%s206 + $0x8e0] sm:$0xff] %v775
                %v777 = vld [vmem:[%s205 + $0x1168] sm:$0xff]
                %778 = vst [vmem:[%s206 + $0x8e8] sm:$0xff] %v777
                %v779 = vld [vmem:[%s205 + $0x1170] sm:$0xff]
                %780 = vst [vmem:[%s206 + $0x8f0] sm:$0xff] %v779
                %v781 = vld [vmem:[%s205 + $0x1178] sm:$0xff]
                %782 = vst [vmem:[%s206 + $0x8f8] sm:$0xff] %v781
                %v783 = vld [vmem:[%s205 + $0x1200] sm:$0xff]
                %784 = vst [vmem:[%s206 + $0x900] sm:$0xff] %v783
                %v785 = vld [vmem:[%s205 + $0x1208] sm:$0xff]
                %786 = vst [vmem:[%s206 + $0x908] sm:$0xff] %v785
                %v787 = vld [vmem:[%s205 + $0x1210] sm:$0xff]
                %788 = vst [vmem:[%s206 + $0x910] sm:$0xff] %v787
                %v789 = vld [vmem:[%s205 + $0x1218] sm:$0xff]
                %790 = vst [vmem:[%s206 + $0x918] sm:$0xff] %v789
                %v791 = vld [vmem:[%s205 + $0x1220] sm:$0xff]
                %792 = vst [vmem:[%s206 + $0x920] sm:$0xff] %v791
                %v793 = vld [vmem:[%s205 + $0x1228] sm:$0xff]
                %794 = vst [vmem:[%s206 + $0x928] sm:$0xff] %v793
                %v795 = vld [vmem:[%s205 + $0x1230] sm:$0xff]
                %796 = vst [vmem:[%s206 + $0x930] sm:$0xff] %v795
                %v797 = vld [vmem:[%s205 + $0x1238] sm:$0xff]
                %798 = vst [vmem:[%s206 + $0x938] sm:$0xff] %v797
                %v799 = vld [vmem:[%s205 + $0x1240] sm:$0xff]
                %800 = vst [vmem:[%s206 + $0x940] sm:$0xff] %v799
                %v801 = vld [vmem:[%s205 + $0x1248] sm:$0xff]
                %802 = vst [vmem:[%s206 + $0x948] sm:$0xff] %v801
                %v803 = vld [vmem:[%s205 + $0x1250] sm:$0xff]
                %804 = vst [vmem:[%s206 + $0x950] sm:$0xff] %v803
                %v805 = vld [vmem:[%s205 + $0x1258] sm:$0xff]
                %806 = vst [vmem:[%s206 + $0x958] sm:$0xff] %v805
                %v807 = vld [vmem:[%s205 + $0x1260] sm:$0xff]
                %808 = vst [vmem:[%s206 + $0x960] sm:$0xff] %v807
                %v809 = vld [vmem:[%s205 + $0x1268] sm:$0xff]
                %810 = vst [vmem:[%s206 + $0x968] sm:$0xff] %v809
                %v811 = vld [vmem:[%s205 + $0x1270] sm:$0xff]
                %812 = vst [vmem:[%s206 + $0x970] sm:$0xff] %v811
                %v813 = vld [vmem:[%s205 + $0x1278] sm:$0xff]
                %814 = vst [vmem:[%s206 + $0x978] sm:$0xff] %v813
                %v815 = vld [vmem:[%s205 + $0x1300] sm:$0xff]
                %816 = vst [vmem:[%s206 + $0x980] sm:$0xff] %v815
                %v817 = vld [vmem:[%s205 + $0x1308] sm:$0xff]
                %818 = vst [vmem:[%s206 + $0x988] sm:$0xff] %v817
                %v819 = vld [vmem:[%s205 + $0x1310] sm:$0xff]
                %820 = vst [vmem:[%s206 + $0x990] sm:$0xff] %v819
                %v821 = vld [vmem:[%s205 + $0x1318] sm:$0xff]
                %822 = vst [vmem:[%s206 + $0x998] sm:$0xff] %v821
                %v823 = vld [vmem:[%s205 + $0x1320] sm:$0xff]
                %824 = vst [vmem:[%s206 + $0x9a0] sm:$0xff] %v823
                %v825 = vld [vmem:[%s205 + $0x1328] sm:$0xff]
                %826 = vst [vmem:[%s206 + $0x9a8] sm:$0xff] %v825
                %v827 = vld [vmem:[%s205 + $0x1330] sm:$0xff]
                %828 = vst [vmem:[%s206 + $0x9b0] sm:$0xff] %v827
                %v829 = vld [vmem:[%s205 + $0x1338] sm:$0xff]
                %830 = vst [vmem:[%s206 + $0x9b8] sm:$0xff] %v829
                %v831 = vld [vmem:[%s205 + $0x1340] sm:$0xff]
                %832 = vst [vmem:[%s206 + $0x9c0] sm:$0xff] %v831
                %v833 = vld [vmem:[%s205 + $0x1348] sm:$0xff]
                %834 = vst [vmem:[%s206 + $0x9c8] sm:$0xff] %v833
                %v835 = vld [vmem:[%s205 + $0x1350] sm:$0xff]
                %836 = vst [vmem:[%s206 + $0x9d0] sm:$0xff] %v835
                %v837 = vld [vmem:[%s205 + $0x1358] sm:$0xff]
                %838 = vst [vmem:[%s206 + $0x9d8] sm:$0xff] %v837
                %v839 = vld [vmem:[%s205 + $0x1360] sm:$0xff]
                %840 = vst [vmem:[%s206 + $0x9e0] sm:$0xff] %v839
                %v841 = vld [vmem:[%s205 + $0x1368] sm:$0xff]
                %842 = vst [vmem:[%s206 + $0x9e8] sm:$0xff] %v841
                %v843 = vld [vmem:[%s205 + $0x1370] sm:$0xff]
                %844 = vst [vmem:[%s206 + $0x9f0] sm:$0xff] %v843
                %v845 = vld [vmem:[%s205 + $0x1378] sm:$0xff]
                %846 = vst [vmem:[%s206 + $0x9f8] sm:$0xff] %v845
                %v847 = vld [vmem:[%s205 + $0x1400] sm:$0xff]
                %848 = vst [vmem:[%s206 + $0xa00] sm:$0xff] %v847
                %v849 = vld [vmem:[%s205 + $0x1408] sm:$0xff]
                %850 = vst [vmem:[%s206 + $0xa08] sm:$0xff] %v849
                %v851 = vld [vmem:[%s205 + $0x1410] sm:$0xff]
                %852 = vst [vmem:[%s206 + $0xa10] sm:$0xff] %v851
                %v853 = vld [vmem:[%s205 + $0x1418] sm:$0xff]
                %854 = vst [vmem:[%s206 + $0xa18] sm:$0xff] %v853
                %v855 = vld [vmem:[%s205 + $0x1420] sm:$0xff]
                %856 = vst [vmem:[%s206 + $0xa20] sm:$0xff] %v855
                %v857 = vld [vmem:[%s205 + $0x1428] sm:$0xff]
                %858 = vst [vmem:[%s206 + $0xa28] sm:$0xff] %v857
                %v859 = vld [vmem:[%s205 + $0x1430] sm:$0xff]
                %860 = vst [vmem:[%s206 + $0xa30] sm:$0xff] %v859
                %v861 = vld [vmem:[%s205 + $0x1438] sm:$0xff]
                %862 = vst [vmem:[%s206 + $0xa38] sm:$0xff] %v861
                %v863 = vld [vmem:[%s205 + $0x1440] sm:$0xff]
                %864 = vst [vmem:[%s206 + $0xa40] sm:$0xff] %v863
                %v865 = vld [vmem:[%s205 + $0x1448] sm:$0xff]
                %866 = vst [vmem:[%s206 + $0xa48] sm:$0xff] %v865
                %v867 = vld [vmem:[%s205 + $0x1450] sm:$0xff]
                %868 = vst [vmem:[%s206 + $0xa50] sm:$0xff] %v867
                %v869 = vld [vmem:[%s205 + $0x1458] sm:$0xff]
                %870 = vst [vmem:[%s206 + $0xa58] sm:$0xff] %v869
                %v871 = vld [vmem:[%s205 + $0x1460] sm:$0xff]
                %872 = vst [vmem:[%s206 + $0xa60] sm:$0xff] %v871
                %v873 = vld [vmem:[%s205 + $0x1468] sm:$0xff]
                %874 = vst [vmem:[%s206 + $0xa68] sm:$0xff] %v873
                %v875 = vld [vmem:[%s205 + $0x1470] sm:$0xff]
                %876 = vst [vmem:[%s206 + $0xa70] sm:$0xff] %v875
                %v877 = vld [vmem:[%s205 + $0x1478] sm:$0xff]
                %878 = vst [vmem:[%s206 + $0xa78] sm:$0xff] %v877
                %v879 = vld [vmem:[%s205 + $0x1500] sm:$0xff]
                %880 = vst [vmem:[%s206 + $0xa80] sm:$0xff] %v879
                %v881 = vld [vmem:[%s205 + $0x1508] sm:$0xff]
                %882 = vst [vmem:[%s206 + $0xa88] sm:$0xff] %v881
                %v883 = vld [vmem:[%s205 + $0x1510] sm:$0xff]
                %884 = vst [vmem:[%s206 + $0xa90] sm:$0xff] %v883
                %v885 = vld [vmem:[%s205 + $0x1518] sm:$0xff]
                %886 = vst [vmem:[%s206 + $0xa98] sm:$0xff] %v885
                %v887 = vld [vmem:[%s205 + $0x1520] sm:$0xff]
                %888 = vst [vmem:[%s206 + $0xaa0] sm:$0xff] %v887
                %v889 = vld [vmem:[%s205 + $0x1528] sm:$0xff]
                %890 = vst [vmem:[%s206 + $0xaa8] sm:$0xff] %v889
                %v891 = vld [vmem:[%s205 + $0x1530] sm:$0xff]
                %892 = vst [vmem:[%s206 + $0xab0] sm:$0xff] %v891
                %v893 = vld [vmem:[%s205 + $0x1538] sm:$0xff]
                %894 = vst [vmem:[%s206 + $0xab8] sm:$0xff] %v893
                %v895 = vld [vmem:[%s205 + $0x1540] sm:$0xff]
                %896 = vst [vmem:[%s206 + $0xac0] sm:$0xff] %v895
                %v897 = vld [vmem:[%s205 + $0x1548] sm:$0xff]
                %898 = vst [vmem:[%s206 + $0xac8] sm:$0xff] %v897
                %v899 = vld [vmem:[%s205 + $0x1550] sm:$0xff]
                %900 = vst [vmem:[%s206 + $0xad0] sm:$0xff] %v899
                %v901 = vld [vmem:[%s205 + $0x1558] sm:$0xff]
                %902 = vst [vmem:[%s206 + $0xad8] sm:$0xff] %v901
                %v903 = vld [vmem:[%s205 + $0x1560] sm:$0xff]
                %904 = vst [vmem:[%s206 + $0xae0] sm:$0xff] %v903
                %v905 = vld [vmem:[%s205 + $0x1568] sm:$0xff]
                %906 = vst [vmem:[%s206 + $0xae8] sm:$0xff] %v905
                %v907 = vld [vmem:[%s205 + $0x1570] sm:$0xff]
                %908 = vst [vmem:[%s206 + $0xaf0] sm:$0xff] %v907
                %v909 = vld [vmem:[%s205 + $0x1578] sm:$0xff]
                %910 = vst [vmem:[%s206 + $0xaf8] sm:$0xff] %v909
                %v911 = vld [vmem:[%s205 + $0x1600] sm:$0xff]
                %912 = vst [vmem:[%s206 + $0xb00] sm:$0xff] %v911
                %v913 = vld [vmem:[%s205 + $0x1608] sm:$0xff]
                %914 = vst [vmem:[%s206 + $0xb08] sm:$0xff] %v913
                %v915 = vld [vmem:[%s205 + $0x1610] sm:$0xff]
                %916 = vst [vmem:[%s206 + $0xb10] sm:$0xff] %v915
                %v917 = vld [vmem:[%s205 + $0x1618] sm:$0xff]
                %918 = vst [vmem:[%s206 + $0xb18] sm:$0xff] %v917
                %v919 = vld [vmem:[%s205 + $0x1620] sm:$0xff]
                %920 = vst [vmem:[%s206 + $0xb20] sm:$0xff] %v919
                %v921 = vld [vmem:[%s205 + $0x1628] sm:$0xff]
                %922 = vst [vmem:[%s206 + $0xb28] sm:$0xff] %v921
                %v923 = vld [vmem:[%s205 + $0x1630] sm:$0xff]
                %924 = vst [vmem:[%s206 + $0xb30] sm:$0xff] %v923
                %v925 = vld [vmem:[%s205 + $0x1638] sm:$0xff]
                %926 = vst [vmem:[%s206 + $0xb38] sm:$0xff] %v925
                %v927 = vld [vmem:[%s205 + $0x1640] sm:$0xff]
                %928 = vst [vmem:[%s206 + $0xb40] sm:$0xff] %v927
                %v929 = vld [vmem:[%s205 + $0x1648] sm:$0xff]
                %930 = vst [vmem:[%s206 + $0xb48] sm:$0xff] %v929
                %v931 = vld [vmem:[%s205 + $0x1650] sm:$0xff]
                %932 = vst [vmem:[%s206 + $0xb50] sm:$0xff] %v931
                %v933 = vld [vmem:[%s205 + $0x1658] sm:$0xff]
                %934 = vst [vmem:[%s206 + $0xb58] sm:$0xff] %v933
                %v935 = vld [vmem:[%s205 + $0x1660] sm:$0xff]
                %936 = vst [vmem:[%s206 + $0xb60] sm:$0xff] %v935
                %v937 = vld [vmem:[%s205 + $0x1668] sm:$0xff]
                %938 = vst [vmem:[%s206 + $0xb68] sm:$0xff] %v937
                %v939 = vld [vmem:[%s205 + $0x1670] sm:$0xff]
                %940 = vst [vmem:[%s206 + $0xb70] sm:$0xff] %v939
                %v941 = vld [vmem:[%s205 + $0x1678] sm:$0xff]
                %942 = vst [vmem:[%s206 + $0xb78] sm:$0xff] %v941
                %v943 = vld [vmem:[%s205 + $0x1700] sm:$0xff]
                %944 = vst [vmem:[%s206 + $0xb80] sm:$0xff] %v943
                %v945 = vld [vmem:[%s205 + $0x1708] sm:$0xff]
                %946 = vst [vmem:[%s206 + $0xb88] sm:$0xff] %v945
                %v947 = vld [vmem:[%s205 + $0x1710] sm:$0xff]
                %948 = vst [vmem:[%s206 + $0xb90] sm:$0xff] %v947
                %v949 = vld [vmem:[%s205 + $0x1718] sm:$0xff]
                %950 = vst [vmem:[%s206 + $0xb98] sm:$0xff] %v949
                %v951 = vld [vmem:[%s205 + $0x1720] sm:$0xff]
                %952 = vst [vmem:[%s206 + $0xba0] sm:$0xff] %v951
                %v953 = vld [vmem:[%s205 + $0x1728] sm:$0xff]
                %954 = vst [vmem:[%s206 + $0xba8] sm:$0xff] %v953
                %v955 = vld [vmem:[%s205 + $0x1730] sm:$0xff]
                %956 = vst [vmem:[%s206 + $0xbb0] sm:$0xff] %v955
                %v957 = vld [vmem:[%s205 + $0x1738] sm:$0xff]
                %958 = vst [vmem:[%s206 + $0xbb8] sm:$0xff] %v957
                %v959 = vld [vmem:[%s205 + $0x1740] sm:$0xff]
                %960 = vst [vmem:[%s206 + $0xbc0] sm:$0xff] %v959
                %v961 = vld [vmem:[%s205 + $0x1748] sm:$0xff]
                %962 = vst [vmem:[%s206 + $0xbc8] sm:$0xff] %v961
                %v963 = vld [vmem:[%s205 + $0x1750] sm:$0xff]
                %964 = vst [vmem:[%s206 + $0xbd0] sm:$0xff] %v963
                %v965 = vld [vmem:[%s205 + $0x1758] sm:$0xff]
                %966 = vst [vmem:[%s206 + $0xbd8] sm:$0xff] %v965
                %v967 = vld [vmem:[%s205 + $0x1760] sm:$0xff]
                %968 = vst [vmem:[%s206 + $0xbe0] sm:$0xff] %v967
                %v969 = vld [vmem:[%s205 + $0x1768] sm:$0xff]
                %970 = vst [vmem:[%s206 + $0xbe8] sm:$0xff] %v969
                %v971 = vld [vmem:[%s205 + $0x1770] sm:$0xff]
                %972 = vst [vmem:[%s206 + $0xbf0] sm:$0xff] %v971
                %v973 = vld [vmem:[%s205 + $0x1778] sm:$0xff]
                %974 = vst [vmem:[%s206 + $0xbf8] sm:$0xff] %v973
                %v975 = vld [vmem:[%s205 + $0x1800] sm:$0xff]
                %976 = vst [vmem:[%s206 + $0xc00] sm:$0xff] %v975
                %v977 = vld [vmem:[%s205 + $0x1808] sm:$0xff]
                %978 = vst [vmem:[%s206 + $0xc08] sm:$0xff] %v977
                %v979 = vld [vmem:[%s205 + $0x1810] sm:$0xff]
                %980 = vst [vmem:[%s206 + $0xc10] sm:$0xff] %v979
                %v981 = vld [vmem:[%s205 + $0x1818] sm:$0xff]
                %982 = vst [vmem:[%s206 + $0xc18] sm:$0xff] %v981
                %v983 = vld [vmem:[%s205 + $0x1820] sm:$0xff]
                %984 = vst [vmem:[%s206 + $0xc20] sm:$0xff] %v983
                %v985 = vld [vmem:[%s205 + $0x1828] sm:$0xff]
                %986 = vst [vmem:[%s206 + $0xc28] sm:$0xff] %v985
                %v987 = vld [vmem:[%s205 + $0x1830] sm:$0xff]
                %988 = vst [vmem:[%s206 + $0xc30] sm:$0xff] %v987
                %v989 = vld [vmem:[%s205 + $0x1838] sm:$0xff]
                %990 = vst [vmem:[%s206 + $0xc38] sm:$0xff] %v989
                %v991 = vld [vmem:[%s205 + $0x1840] sm:$0xff]
                %992 = vst [vmem:[%s206 + $0xc40] sm:$0xff] %v991
                %v993 = vld [vmem:[%s205 + $0x1848] sm:$0xff]
                %994 = vst [vmem:[%s206 + $0xc48] sm:$0xff] %v993
                %v995 = vld [vmem:[%s205 + $0x1850] sm:$0xff]
                %996 = vst [vmem:[%s206 + $0xc50] sm:$0xff] %v995
                %v997 = vld [vmem:[%s205 + $0x1858] sm:$0xff]
                %998 = vst [vmem:[%s206 + $0xc58] sm:$0xff] %v997
                %v999 = vld [vmem:[%s205 + $0x1860] sm:$0xff]
                %1000 = vst [vmem:[%s206 + $0xc60] sm:$0xff] %v999
                %v1001 = vld [vmem:[%s205 + $0x1868] sm:$0xff]
                %1002 = vst [vmem:[%s206 + $0xc68] sm:$0xff] %v1001
                %v1003 = vld [vmem:[%s205 + $0x1870] sm:$0xff]
                %1004 = vst [vmem:[%s206 + $0xc70] sm:$0xff] %v1003
                %v1005 = vld [vmem:[%s205 + $0x1878] sm:$0xff]
                %1006 = vst [vmem:[%s206 + $0xc78] sm:$0xff] %v1005
                %v1007 = vld [vmem:[%s205 + $0x1900] sm:$0xff]
                %1008 = vst [vmem:[%s206 + $0xc80] sm:$0xff] %v1007
                %v1009 = vld [vmem:[%s205 + $0x1908] sm:$0xff]
                %1010 = vst [vmem:[%s206 + $0xc88] sm:$0xff] %v1009
                %v1011 = vld [vmem:[%s205 + $0x1910] sm:$0xff]
                %1012 = vst [vmem:[%s206 + $0xc90] sm:$0xff] %v1011
                %v1013 = vld [vmem:[%s205 + $0x1918] sm:$0xff]
                %1014 = vst [vmem:[%s206 + $0xc98] sm:$0xff] %v1013
                %v1015 = vld [vmem:[%s205 + $0x1920] sm:$0xff]
                %1016 = vst [vmem:[%s206 + $0xca0] sm:$0xff] %v1015
                %v1017 = vld [vmem:[%s205 + $0x1928] sm:$0xff]
                %1018 = vst [vmem:[%s206 + $0xca8] sm:$0xff] %v1017
                %v1019 = vld [vmem:[%s205 + $0x1930] sm:$0xff]
                %1020 = vst [vmem:[%s206 + $0xcb0] sm:$0xff] %v1019
                %v1021 = vld [vmem:[%s205 + $0x1938] sm:$0xff]
                %1022 = vst [vmem:[%s206 + $0xcb8] sm:$0xff] %v1021
                %v1023 = vld [vmem:[%s205 + $0x1940] sm:$0xff]
                %1024 = vst [vmem:[%s206 + $0xcc0] sm:$0xff] %v1023
                %v1025 = vld [vmem:[%s205 + $0x1948] sm:$0xff]
                %1026 = vst [vmem:[%s206 + $0xcc8] sm:$0xff] %v1025
                %v1027 = vld [vmem:[%s205 + $0x1950] sm:$0xff]
                %1028 = vst [vmem:[%s206 + $0xcd0] sm:$0xff] %v1027
                %v1029 = vld [vmem:[%s205 + $0x1958] sm:$0xff]
                %1030 = vst [vmem:[%s206 + $0xcd8] sm:$0xff] %v1029
                %v1031 = vld [vmem:[%s205 + $0x1960] sm:$0xff]
                %1032 = vst [vmem:[%s206 + $0xce0] sm:$0xff] %v1031
                %v1033 = vld [vmem:[%s205 + $0x1968] sm:$0xff]
                %1034 = vst [vmem:[%s206 + $0xce8] sm:$0xff] %v1033
                %v1035 = vld [vmem:[%s205 + $0x1970] sm:$0xff]
                %1036 = vst [vmem:[%s206 + $0xcf0] sm:$0xff] %v1035
                %v1037 = vld [vmem:[%s205 + $0x1978] sm:$0xff]
                %1038 = vst [vmem:[%s206 + $0xcf8] sm:$0xff] %v1037
                %v1039 = vld [vmem:[%s205 + $0x1a00] sm:$0xff]
                %1040 = vst [vmem:[%s206 + $0xd00] sm:$0xff] %v1039
                %v1041 = vld [vmem:[%s205 + $0x1a08] sm:$0xff]
                %1042 = vst [vmem:[%s206 + $0xd08] sm:$0xff] %v1041
                %v1043 = vld [vmem:[%s205 + $0x1a10] sm:$0xff]
                %1044 = vst [vmem:[%s206 + $0xd10] sm:$0xff] %v1043
                %v1045 = vld [vmem:[%s205 + $0x1a18] sm:$0xff]
                %1046 = vst [vmem:[%s206 + $0xd18] sm:$0xff] %v1045
                %v1047 = vld [vmem:[%s205 + $0x1a20] sm:$0xff]
                %1048 = vst [vmem:[%s206 + $0xd20] sm:$0xff] %v1047
                %v1049 = vld [vmem:[%s205 + $0x1a28] sm:$0xff]
                %1050 = vst [vmem:[%s206 + $0xd28] sm:$0xff] %v1049
                %v1051 = vld [vmem:[%s205 + $0x1a30] sm:$0xff]
                %1052 = vst [vmem:[%s206 + $0xd30] sm:$0xff] %v1051
                %v1053 = vld [vmem:[%s205 + $0x1a38] sm:$0xff]
                %1054 = vst [vmem:[%s206 + $0xd38] sm:$0xff] %v1053
                %v1055 = vld [vmem:[%s205 + $0x1a40] sm:$0xff]
                %1056 = vst [vmem:[%s206 + $0xd40] sm:$0xff] %v1055
                %v1057 = vld [vmem:[%s205 + $0x1a48] sm:$0xff]
                %1058 = vst [vmem:[%s206 + $0xd48] sm:$0xff] %v1057
                %v1059 = vld [vmem:[%s205 + $0x1a50] sm:$0xff]
                %1060 = vst [vmem:[%s206 + $0xd50] sm:$0xff] %v1059
                %v1061 = vld [vmem:[%s205 + $0x1a58] sm:$0xff]
                %1062 = vst [vmem:[%s206 + $0xd58] sm:$0xff] %v1061
                %v1063 = vld [vmem:[%s205 + $0x1a60] sm:$0xff]
                %1064 = vst [vmem:[%s206 + $0xd60] sm:$0xff] %v1063
                %v1065 = vld [vmem:[%s205 + $0x1a68] sm:$0xff]
                %1066 = vst [vmem:[%s206 + $0xd68] sm:$0xff] %v1065
                %v1067 = vld [vmem:[%s205 + $0x1a70] sm:$0xff]
                %1068 = vst [vmem:[%s206 + $0xd70] sm:$0xff] %v1067
                %v1069 = vld [vmem:[%s205 + $0x1a78] sm:$0xff]
                %1070 = vst [vmem:[%s206 + $0xd78] sm:$0xff] %v1069
                %v1071 = vld [vmem:[%s205 + $0x1b00] sm:$0xff]
                %1072 = vst [vmem:[%s206 + $0xd80] sm:$0xff] %v1071
                %v1073 = vld [vmem:[%s205 + $0x1b08] sm:$0xff]
                %1074 = vst [vmem:[%s206 + $0xd88] sm:$0xff] %v1073
                %v1075 = vld [vmem:[%s205 + $0x1b10] sm:$0xff]
                %1076 = vst [vmem:[%s206 + $0xd90] sm:$0xff] %v1075
                %v1077 = vld [vmem:[%s205 + $0x1b18] sm:$0xff]
                %1078 = vst [vmem:[%s206 + $0xd98] sm:$0xff] %v1077
                %v1079 = vld [vmem:[%s205 + $0x1b20] sm:$0xff]
                %1080 = vst [vmem:[%s206 + $0xda0] sm:$0xff] %v1079
                %v1081 = vld [vmem:[%s205 + $0x1b28] sm:$0xff]
                %1082 = vst [vmem:[%s206 + $0xda8] sm:$0xff] %v1081
                %v1083 = vld [vmem:[%s205 + $0x1b30] sm:$0xff]
                %1084 = vst [vmem:[%s206 + $0xdb0] sm:$0xff] %v1083
                %v1085 = vld [vmem:[%s205 + $0x1b38] sm:$0xff]
                %1086 = vst [vmem:[%s206 + $0xdb8] sm:$0xff] %v1085
                %v1087 = vld [vmem:[%s205 + $0x1b40] sm:$0xff]
                %1088 = vst [vmem:[%s206 + $0xdc0] sm:$0xff] %v1087
                %v1089 = vld [vmem:[%s205 + $0x1b48] sm:$0xff]
                %1090 = vst [vmem:[%s206 + $0xdc8] sm:$0xff] %v1089
                %v1091 = vld [vmem:[%s205 + $0x1b50] sm:$0xff]
                %1092 = vst [vmem:[%s206 + $0xdd0] sm:$0xff] %v1091
                %v1093 = vld [vmem:[%s205 + $0x1b58] sm:$0xff]
                %1094 = vst [vmem:[%s206 + $0xdd8] sm:$0xff] %v1093
                %v1095 = vld [vmem:[%s205 + $0x1b60] sm:$0xff]
                %1096 = vst [vmem:[%s206 + $0xde0] sm:$0xff] %v1095
                %v1097 = vld [vmem:[%s205 + $0x1b68] sm:$0xff]
                %1098 = vst [vmem:[%s206 + $0xde8] sm:$0xff] %v1097
                %v1099 = vld [vmem:[%s205 + $0x1b70] sm:$0xff]
                %1100 = vst [vmem:[%s206 + $0xdf0] sm:$0xff] %v1099
                %v1101 = vld [vmem:[%s205 + $0x1b78] sm:$0xff]
                %1102 = vst [vmem:[%s206 + $0xdf8] sm:$0xff] %v1101
                %v1103 = vld [vmem:[%s205 + $0x1c00] sm:$0xff]
                %1104 = vst [vmem:[%s206 + $0xe00] sm:$0xff] %v1103
                %v1105 = vld [vmem:[%s205 + $0x1c08] sm:$0xff]
                %1106 = vst [vmem:[%s206 + $0xe08] sm:$0xff] %v1105
                %v1107 = vld [vmem:[%s205 + $0x1c10] sm:$0xff]
                %1108 = vst [vmem:[%s206 + $0xe10] sm:$0xff] %v1107
                %v1109 = vld [vmem:[%s205 + $0x1c18] sm:$0xff]
                %1110 = vst [vmem:[%s206 + $0xe18] sm:$0xff] %v1109
                %v1111 = vld [vmem:[%s205 + $0x1c20] sm:$0xff]
                %1112 = vst [vmem:[%s206 + $0xe20] sm:$0xff] %v1111
                %v1113 = vld [vmem:[%s205 + $0x1c28] sm:$0xff]
                %1114 = vst [vmem:[%s206 + $0xe28] sm:$0xff] %v1113
                %v1115 = vld [vmem:[%s205 + $0x1c30] sm:$0xff]
                %1116 = vst [vmem:[%s206 + $0xe30] sm:$0xff] %v1115
                %v1117 = vld [vmem:[%s205 + $0x1c38] sm:$0xff]
                %1118 = vst [vmem:[%s206 + $0xe38] sm:$0xff] %v1117
                %v1119 = vld [vmem:[%s205 + $0x1c40] sm:$0xff]
                %1120 = vst [vmem:[%s206 + $0xe40] sm:$0xff] %v1119
                %v1121 = vld [vmem:[%s205 + $0x1c48] sm:$0xff]
                %1122 = vst [vmem:[%s206 + $0xe48] sm:$0xff] %v1121
                %v1123 = vld [vmem:[%s205 + $0x1c50] sm:$0xff]
                %1124 = vst [vmem:[%s206 + $0xe50] sm:$0xff] %v1123
                %v1125 = vld [vmem:[%s205 + $0x1c58] sm:$0xff]
                %1126 = vst [vmem:[%s206 + $0xe58] sm:$0xff] %v1125
                %v1127 = vld [vmem:[%s205 + $0x1c60] sm:$0xff]
                %1128 = vst [vmem:[%s206 + $0xe60] sm:$0xff] %v1127
                %v1129 = vld [vmem:[%s205 + $0x1c68] sm:$0xff]
                %1130 = vst [vmem:[%s206 + $0xe68] sm:$0xff] %v1129
                %v1131 = vld [vmem:[%s205 + $0x1c70] sm:$0xff]
                %1132 = vst [vmem:[%s206 + $0xe70] sm:$0xff] %v1131
                %v1133 = vld [vmem:[%s205 + $0x1c78] sm:$0xff]
                %1134 = vst [vmem:[%s206 + $0xe78] sm:$0xff] %v1133
                %v1135 = vld [vmem:[%s205 + $0x1d00] sm:$0xff]
                %1136 = vst [vmem:[%s206 + $0xe80] sm:$0xff] %v1135
                %v1137 = vld [vmem:[%s205 + $0x1d08] sm:$0xff]
                %1138 = vst [vmem:[%s206 + $0xe88] sm:$0xff] %v1137
                %v1139 = vld [vmem:[%s205 + $0x1d10] sm:$0xff]
                %1140 = vst [vmem:[%s206 + $0xe90] sm:$0xff] %v1139
                %v1141 = vld [vmem:[%s205 + $0x1d18] sm:$0xff]
                %1142 = vst [vmem:[%s206 + $0xe98] sm:$0xff] %v1141
                %v1143 = vld [vmem:[%s205 + $0x1d20] sm:$0xff]
                %1144 = vst [vmem:[%s206 + $0xea0] sm:$0xff] %v1143
                %v1145 = vld [vmem:[%s205 + $0x1d28] sm:$0xff]
                %1146 = vst [vmem:[%s206 + $0xea8] sm:$0xff] %v1145
                %v1147 = vld [vmem:[%s205 + $0x1d30] sm:$0xff]
                %1148 = vst [vmem:[%s206 + $0xeb0] sm:$0xff] %v1147
                %v1149 = vld [vmem:[%s205 + $0x1d38] sm:$0xff]
                %1150 = vst [vmem:[%s206 + $0xeb8] sm:$0xff] %v1149
                %v1151 = vld [vmem:[%s205 + $0x1d40] sm:$0xff]
                %1152 = vst [vmem:[%s206 + $0xec0] sm:$0xff] %v1151
                %v1153 = vld [vmem:[%s205 + $0x1d48] sm:$0xff]
                %1154 = vst [vmem:[%s206 + $0xec8] sm:$0xff] %v1153
                %v1155 = vld [vmem:[%s205 + $0x1d50] sm:$0xff]
                %1156 = vst [vmem:[%s206 + $0xed0] sm:$0xff] %v1155
                %v1157 = vld [vmem:[%s205 + $0x1d58] sm:$0xff]
                %1158 = vst [vmem:[%s206 + $0xed8] sm:$0xff] %v1157
                %v1159 = vld [vmem:[%s205 + $0x1d60] sm:$0xff]
                %1160 = vst [vmem:[%s206 + $0xee0] sm:$0xff] %v1159
                %v1161 = vld [vmem:[%s205 + $0x1d68] sm:$0xff]
                %1162 = vst [vmem:[%s206 + $0xee8] sm:$0xff] %v1161
                %v1163 = vld [vmem:[%s205 + $0x1d70] sm:$0xff]
                %1164 = vst [vmem:[%s206 + $0xef0] sm:$0xff] %v1163
                %v1165 = vld [vmem:[%s205 + $0x1d78] sm:$0xff]
                %1166 = vst [vmem:[%s206 + $0xef8] sm:$0xff] %v1165
                %v1167 = vld [vmem:[%s205 + $0x1e00] sm:$0xff]
                %1168 = vst [vmem:[%s206 + $0xf00] sm:$0xff] %v1167
                %v1169 = vld [vmem:[%s205 + $0x1e08] sm:$0xff]
                %1170 = vst [vmem:[%s206 + $0xf08] sm:$0xff] %v1169
                %v1171 = vld [vmem:[%s205 + $0x1e10] sm:$0xff]
                %1172 = vst [vmem:[%s206 + $0xf10] sm:$0xff] %v1171
                %v1173 = vld [vmem:[%s205 + $0x1e18] sm:$0xff]
                %1174 = vst [vmem:[%s206 + $0xf18] sm:$0xff] %v1173
                %v1175 = vld [vmem:[%s205 + $0x1e20] sm:$0xff]
                %1176 = vst [vmem:[%s206 + $0xf20] sm:$0xff] %v1175
                %v1177 = vld [vmem:[%s205 + $0x1e28] sm:$0xff]
                %1178 = vst [vmem:[%s206 + $0xf28] sm:$0xff] %v1177
                %v1179 = vld [vmem:[%s205 + $0x1e30] sm:$0xff]
                %1180 = vst [vmem:[%s206 + $0xf30] sm:$0xff] %v1179
                %v1181 = vld [vmem:[%s205 + $0x1e38] sm:$0xff]
                %1182 = vst [vmem:[%s206 + $0xf38] sm:$0xff] %v1181
                %v1183 = vld [vmem:[%s205 + $0x1e40] sm:$0xff]
                %1184 = vst [vmem:[%s206 + $0xf40] sm:$0xff] %v1183
                %v1185 = vld [vmem:[%s205 + $0x1e48] sm:$0xff]
                %1186 = vst [vmem:[%s206 + $0xf48] sm:$0xff] %v1185
                %v1187 = vld [vmem:[%s205 + $0x1e50] sm:$0xff]
                %1188 = vst [vmem:[%s206 + $0xf50] sm:$0xff] %v1187
                %v1189 = vld [vmem:[%s205 + $0x1e58] sm:$0xff]
                %1190 = vst [vmem:[%s206 + $0xf58] sm:$0xff] %v1189
                %v1191 = vld [vmem:[%s205 + $0x1e60] sm:$0xff]
                %1192 = vst [vmem:[%s206 + $0xf60] sm:$0xff] %v1191
                %v1193 = vld [vmem:[%s205 + $0x1e68] sm:$0xff]
                %1194 = vst [vmem:[%s206 + $0xf68] sm:$0xff] %v1193
                %v1195 = vld [vmem:[%s205 + $0x1e70] sm:$0xff]
                %1196 = vst [vmem:[%s206 + $0xf70] sm:$0xff] %v1195
                %v1197 = vld [vmem:[%s205 + $0x1e78] sm:$0xff]
                %1198 = vst [vmem:[%s206 + $0xf78] sm:$0xff] %v1197
                %v1199 = vld [vmem:[%s205 + $0x1f00] sm:$0xff]
                %1200 = vst [vmem:[%s206 + $0xf80] sm:$0xff] %v1199
                %v1201 = vld [vmem:[%s205 + $0x1f08] sm:$0xff]
                %1202 = vst [vmem:[%s206 + $0xf88] sm:$0xff] %v1201
                %v1203 = vld [vmem:[%s205 + $0x1f10] sm:$0xff]
                %1204 = vst [vmem:[%s206 + $0xf90] sm:$0xff] %v1203
                %v1205 = vld [vmem:[%s205 + $0x1f18] sm:$0xff]
                %1206 = vst [vmem:[%s206 + $0xf98] sm:$0xff] %v1205
                %v1207 = vld [vmem:[%s205 + $0x1f20] sm:$0xff]
                %1208 = vst [vmem:[%s206 + $0xfa0] sm:$0xff] %v1207
                %v1209 = vld [vmem:[%s205 + $0x1f28] sm:$0xff]
                %1210 = vst [vmem:[%s206 + $0xfa8] sm:$0xff] %v1209
                %v1211 = vld [vmem:[%s205 + $0x1f30] sm:$0xff]
                %1212 = vst [vmem:[%s206 + $0xfb0] sm:$0xff] %v1211
                %v1213 = vld [vmem:[%s205 + $0x1f38] sm:$0xff]
                %1214 = vst [vmem:[%s206 + $0xfb8] sm:$0xff] %v1213
                %v1215 = vld [vmem:[%s205 + $0x1f40] sm:$0xff]
                %1216 = vst [vmem:[%s206 + $0xfc0] sm:$0xff] %v1215
                %v1217 = vld [vmem:[%s205 + $0x1f48] sm:$0xff]
                %1218 = vst [vmem:[%s206 + $0xfc8] sm:$0xff] %v1217
                %v1219 = vld [vmem:[%s205 + $0x1f50] sm:$0xff]
                %1220 = vst [vmem:[%s206 + $0xfd0] sm:$0xff] %v1219
                %v1221 = vld [vmem:[%s205 + $0x1f58] sm:$0xff]
                %1222 = vst [vmem:[%s206 + $0xfd8] sm:$0xff] %v1221
                %v1223 = vld [vmem:[%s205 + $0x1f60] sm:$0xff]
                %1224 = vst [vmem:[%s206 + $0xfe0] sm:$0xff] %v1223
                %v1225 = vld [vmem:[%s205 + $0x1f68] sm:$0xff]
                %1226 = vst [vmem:[%s206 + $0xfe8] sm:$0xff] %v1225
                %v1227 = vld [vmem:[%s205 + $0x1f70] sm:$0xff]
                %1228 = vst [vmem:[%s206 + $0xff0] sm:$0xff] %v1227
                %v1229 = vld [vmem:[%s205 + $0x1f78] sm:$0xff]
                %1230 = vst [vmem:[%s206 + $0xff8] sm:$0xff] %v1229
              $region37: #{bilateral_forward.1} parent=31 // loop_footer
                %s204 = sadd.s32 1, %s200
              $region38: #{bilateral_forward.1} parent=31 // loop_footer_branch
                %199 = sbr.rel target = $region34
              $region39: #{bilateral_forward.1} parent=31 // loop_exit
                _
            $region32: #{bilateral_forward.1} parent=27 // pred_fallthru
              _
            // Predicated region
            $region40: #{bilateral_forward.1} parent=27 // pred_check
              _
            $region41: #{bilateral_forward.1} parent=27 // pred_check_branch
              %1232 = sbr.rel target = $region43
            $region42: #{bilateral_forward.1} parent=27 // pred_region
              _
            $region43: #{bilateral_forward.1} parent=27 // pred_fallthru
              _
          $region28: #{bilateral_forward.1} parent=23 // pred_fallthru
            _
          %1233 = vnop
        $region24: #{bilateral_forward.1} parent=15 // pred_fallthru
          _
        // Predicated region
        $region44: #{bilateral_forward.1} parent=15 // pred_check
          %p1234 = pneg %p96
        $region45: #{bilateral_forward.1} parent=15 // pred_check_branch
          %1236 = sbr.rel (%p1234) target = $region47
        $region46: #{bilateral_forward.1} parent=15 // pred_region
          %s1237 = smul.u32 16, %s18
          %p1238 = scmp.lt.s32.totalorder %s17, 1
          %s1239 = scalar_select %p1238, %s17, 1
          %p1240 = scmp.lt.s32.totalorder %s1237, 31
          %s1241 = scalar_select %p1240, %s1237, 31
          %s1242 = smul.addr %s1239, 32
          %s1243 = sadd.s32 %s1241, %s1242
          %s1244 = scalar_lea.vmem %s2, %s1243
          %s1245 = smul.u32 16, %s18
        $region47: #{bilateral_forward.1} parent=15 // pred_fallthru
          _
        // Predicated region
        $region48: #{bilateral_forward.1} parent=15 // pred_check
          %p1246 = pneg %p124
        $region49: #{bilateral_forward.1} parent=15 // pred_check_branch
          %1248 = sbr.rel (%p1246) target = $region51
        $region50: #{bilateral_forward.1} parent=15 // pred_region
          %s1249 = smul.u32 16, %s18
          %p1250 = scmp.lt.s32.totalorder %s17, 1
          %s1251 = scalar_select %p1250, %s17, 1
          %p1252 = scmp.lt.s32.totalorder %s1249, 31
          %s1253 = scalar_select %p1252, %s1249, 31
          %s1254 = smul.addr %s1251, 32
          %s1255 = sadd.s32 %s1253, %s1254
          %s1256 = smul.addr %s1255, 4
          %s1257 = scalar_lea.vmem %s3, %s1256
          %s1258 = smul.u32 16, %s18
        $region51: #{bilateral_forward.1} parent=15 // pred_fallthru
          _
      $region16: #{bilateral_forward.1} parent=5 // pred_fallthru
        _
      %p1259 = scmp.le.s32.totalorder 1, %s10
      %p1260 = scmp.lt.s32.totalorder %s10, 5
      %p1261 = pnand %p1259, %p1260
      %p1262 = pneg %p1261
      // Predicated region
      $region52: #{bilateral_forward.1} parent=5 // pred_check
        _
      $region53: #{bilateral_forward.1} parent=5 // pred_check_branch
        %1264 = sbr.rel (%p1261) target = $region55
      $region54: #{bilateral_forward.1} parent=5 // pred_region
        %s1265 = ssub.s32 %s10, 1
        %s1266 = sand.u32 %s61, 1
        %s1267 = sand.u32 %s61, 1
        %s1268 = smul.addr %s1267, 4096
        %s1269 = scalar_lea.vmem [#allocation2], %s1268
        // Predicated region
        $region56: #{bilateral_forward.1} parent=54 // pred_check
          %p1270 = pneg %p74
        $region57: #{bilateral_forward.1} parent=54 // pred_check_branch
          %1272 = sbr.rel (%p1270) target = $region59
        $region58: #{bilateral_forward.1} parent=54 // pred_region
          _
        $region59: #{bilateral_forward.1} parent=54 // pred_fallthru
          _
        %p1273 = scmp.lt.s32.totalorder %s19, 1
        %s1274 = scalar_select %p1273, %s19, 1
        %s1275 = smul.addr %s1274, 48
        %s1276 = smul.addr %s1275, 8
        %s1277 = scalar_lea.vmem %s0, %s1276
        %p1278 = pneg %p48
        %p1279 = pneg %p45
        %s1280 = sand.u32 %s61, 1
        %s1281 = sand.u32 %s61, 1
        %s1282 = smul.addr %s1281, 4096
        %s1283 = scalar_lea.vmem [#allocation2], %s1282
        %p1284 = pneg %p74
        %p1285 = pneg %p71
        %s1286 = smul.u32 16, %s20
        %p1287 = scmp.lt.s32.totalorder %s19, 1
        %s1288 = scalar_select %p1287, %s19, 1
        %p1289 = scmp.lt.s32.totalorder %s1286, 31
        %s1290 = scalar_select %p1289, %s1286, 31
        %s1291 = smul.addr %s1288, 32
        %s1292 = sadd.s32 %s1290, %s1291
        %s1293 = scalar_lea.vmem %s2, %s1292
        %p1294 = pneg %p102
        %p1295 = pneg %p99
        %s1296 = smul.u32 16, %s20
        %p1297 = scmp.lt.s32.totalorder %s19, 1
        %s1298 = scalar_select %p1297, %s19, 1
        %p1299 = scmp.lt.s32.totalorder %s1296, 31
        %s1300 = scalar_select %p1299, %s1296, 31
        %s1301 = smul.addr %s1298, 32
        %s1302 = sadd.s32 %s1300, %s1301
        %s1303 = smul.addr %s1302, 4
        %s1304 = scalar_lea.vmem %s3, %s1303
        %p1305 = pneg %p130
        %p1306 = pneg %p127
        %p1307 = pneg %p158
        %p1308 = pneg %p155
        %s1309 = smul.u32 16, %s20
        %p1310 = scmp.lt.s32.totalorder %s19, 1
        %s1311 = scalar_select %p1310, %s19, 1
        %p1312 = scmp.lt.s32.totalorder %s1309, 31
        %s1313 = scalar_select %p1312, %s1309, 31
        %s1314 = smul.addr %s1311, 32
        %s1315 = sadd.s32 %s1313, %s1314
        %s1316 = smul.addr %s1315, 4
        %s1317 = scalar_lea.vmem %s4, %s1316
        %p1318 = scmp.lt.s32.totalorder %s19, 1
        %s1319 = scalar_select %p1318, %s19, 1
        %s1320 = smul.addr %s1319, 48
        %s1321 = smul.addr %s1320, 8
        %s1322 = scalar_lea.vmem %s0, %s1321
        %s1323 = smul.u32 16, %s20
        %s1324 = smul.u32 16, %s20
        %p1325 = scmp.lt.s32.totalorder %s19, 1
        %s1326 = scalar_select %p1325, %s19, 1
        %p1327 = scmp.lt.s32.totalorder %s1324, 31
        %s1328 = scalar_select %p1327, %s1324, 31
        %s1329 = smul.addr %s1326, 32
        %s1330 = sadd.s32 %s1328, %s1329
        %s1331 = scalar_lea.vmem %s2, %s1330
        %s1332 = smul.u32 16, %s20
        %s1333 = smul.u32 16, %s20
        %p1334 = scmp.lt.s32.totalorder %s19, 1
        %s1335 = scalar_select %p1334, %s19, 1
        %p1336 = scmp.lt.s32.totalorder %s1333, 31
        %s1337 = scalar_select %p1336, %s1333, 31
        %s1338 = smul.addr %s1335, 32
        %s1339 = sadd.s32 %s1337, %s1338
        %s1340 = smul.addr %s1339, 4
        %s1341 = scalar_lea.vmem %s3, %s1340
        %s1342 = smul.u32 16, %s20
        %s1343 = smul.u32 16, %s20
        %p1344 = scmp.lt.s32.totalorder %s19, 1
        %s1345 = scalar_select %p1344, %s19, 1
        %p1346 = scmp.lt.s32.totalorder %s1343, 31
        %s1347 = scalar_select %p1346, %s1343, 31
        %s1348 = smul.addr %s1345, 32
        %s1349 = sadd.s32 %s1347, %s1348
        %s1350 = smul.addr %s1349, 4
        %s1351 = scalar_lea.vmem %s4, %s1350
        %s1352 = smul.u32 16, %s20
        %v1353 = vld [vmem:[%s1322] sm:$0xff]
        %v1354 = vld [vmem:[%s1322 + $0x8] sm:$0xff]
        %v1355 = vld [vmem:[%s1322 + $0x10] sm:$0xff]
        %v1356 = vld [vmem:[%s1322 + $0x18] sm:$0xff]
        %v1357 = vld [vmem:[%s1322 + $0x20] sm:$0xff]
        %v1358 = vld [vmem:[%s1322 + $0x28] sm:$0xff]
        %v1359 = vld [vmem:[%s1322 + $0x30] sm:$0xff]
        %v1360 = vld [vmem:[%s1322 + $0x38] sm:$0xff]
        %v1361 = vld [vmem:[%s1322 + $0x40] sm:$0xff]
        %v1362 = vld [vmem:[%s1322 + $0x48] sm:$0xff]
        %v1363 = vld [vmem:[%s1322 + $0x50] sm:$0xff]
        %v1364 = vld [vmem:[%s1322 + $0x58] sm:$0xff]
        %v1365 = vld [vmem:[%s1322 + $0x60] sm:$0xff]
        %v1366 = vld [vmem:[%s1322 + $0x68] sm:$0xff]
        %v1367 = vld [vmem:[%s1322 + $0x70] sm:$0xff]
        %v1368 = vld [vmem:[%s1322 + $0x78] sm:$0xff]
        %v1369 = vld [vmem:[%s1322 + $0x80] sm:$0xff]
        %v1370 = vld [vmem:[%s1322 + $0x88] sm:$0xff]
        %v1371 = vld [vmem:[%s1322 + $0x90] sm:$0xff]
        %v1372 = vld [vmem:[%s1322 + $0x98] sm:$0xff]
        %v1373 = vld [vmem:[%s1322 + $0xa0] sm:$0xff]
        %v1374 = vld [vmem:[%s1322 + $0xa8] sm:$0xff]
        %v1375 = vld [vmem:[%s1322 + $0xb0] sm:$0xff]
        %v1376 = vld [vmem:[%s1322 + $0xb8] sm:$0xff]
        %v1377 = vld [vmem:[%s1322 + $0xc0] sm:$0xff]
        %v1378 = vld [vmem:[%s1322 + $0xc8] sm:$0xff]
        %v1379 = vld [vmem:[%s1322 + $0xd0] sm:$0xff]
        %v1380 = vld [vmem:[%s1322 + $0xd8] sm:$0xff]
        %v1381 = vld [vmem:[%s1322 + $0xe0] sm:$0xff]
        %v1382 = vld [vmem:[%s1322 + $0xe8] sm:$0xff]
        %v1383 = vld [vmem:[%s1322 + $0xf0] sm:$0xff]
        %v1384 = vld [vmem:[%s1322 + $0xf8] sm:$0xff]
        %v1385 = vld [vmem:[%s1322 + $0x100] sm:$0xff]
        %v1386 = vld [vmem:[%s1322 + $0x108] sm:$0xff]
        %v1387 = vld [vmem:[%s1322 + $0x110] sm:$0xff]
        %v1388 = vld [vmem:[%s1322 + $0x118] sm:$0xff]
        %v1389 = vld [vmem:[%s1322 + $0x120] sm:$0xff]
        %v1390 = vld [vmem:[%s1322 + $0x128] sm:$0xff]
        %v1391 = vld [vmem:[%s1322 + $0x130] sm:$0xff]
        %v1392 = vld [vmem:[%s1322 + $0x138] sm:$0xff]
        %v1393 = vld [vmem:[%s1322 + $0x140] sm:$0xff]
        %v1394 = vld [vmem:[%s1322 + $0x148] sm:$0xff]
        %v1395 = vld [vmem:[%s1322 + $0x150] sm:$0xff]
        %v1396 = vld [vmem:[%s1322 + $0x158] sm:$0xff]
        %v1397 = vld [vmem:[%s1322 + $0x160] sm:$0xff]
        %v1398 = vld [vmem:[%s1322 + $0x168] sm:$0xff]
        %v1399 = vld [vmem:[%s1322 + $0x170] sm:$0xff]
        %v1400 = vld [vmem:[%s1322 + $0x178] sm:$0xff]
        %v1401 = vld [vmem:[%s1269] sm:$0xff]
        %v1402 = vld [vmem:[%s1269 + $0x8] sm:$0xff]
        %v1403 = vld [vmem:[%s1269 + $0x10] sm:$0xff]
        %v1404 = vld [vmem:[%s1269 + $0x18] sm:$0xff]
        %v1405 = vld [vmem:[%s1269 + $0x20] sm:$0xff]
        %v1406 = vld [vmem:[%s1269 + $0x28] sm:$0xff]
        %v1407 = vld [vmem:[%s1269 + $0x30] sm:$0xff]
        %v1408 = vld [vmem:[%s1269 + $0x38] sm:$0xff]
        %v1409 = vld [vmem:[%s1269 + $0x40] sm:$0xff]
        %v1410 = vld [vmem:[%s1269 + $0x48] sm:$0xff]
        %v1411 = vld [vmem:[%s1269 + $0x50] sm:$0xff]
        %v1412 = vld [vmem:[%s1269 + $0x58] sm:$0xff]
        %v1413 = vld [vmem:[%s1269 + $0x60] sm:$0xff]
        %v1414 = vld [vmem:[%s1269 + $0x68] sm:$0xff]
        %v1415 = vld [vmem:[%s1269 + $0x70] sm:$0xff]
        %v1416 = vld [vmem:[%s1269 + $0x78] sm:$0xff]
        %v1417 = vld [vmem:[%s1269 + $0x80] sm:$0xff]
        %v1418 = vld [vmem:[%s1269 + $0x88] sm:$0xff]
        %v1419 = vld [vmem:[%s1269 + $0x90] sm:$0xff]
        %v1420 = vld [vmem:[%s1269 + $0x98] sm:$0xff]
        %v1421 = vld [vmem:[%s1269 + $0xa0] sm:$0xff]
        %v1422 = vld [vmem:[%s1269 + $0xa8] sm:$0xff]
        %v1423 = vld [vmem:[%s1269 + $0xb0] sm:$0xff]
        %v1424 = vld [vmem:[%s1269 + $0xb8] sm:$0xff]
        %v1425 = vld [vmem:[%s1269 + $0xc0] sm:$0xff]
        %v1426 = vld [vmem:[%s1269 + $0xc8] sm:$0xff]
        %v1427 = vld [vmem:[%s1269 + $0xd0] sm:$0xff]
        %v1428 = vld [vmem:[%s1269 + $0xd8] sm:$0xff]
        %v1429 = vld [vmem:[%s1269 + $0xe0] sm:$0xff]
        %v1430 = vld [vmem:[%s1269 + $0xe8] sm:$0xff]
        %v1431 = vld [vmem:[%s1269 + $0xf0] sm:$0xff]
        %v1432 = vld [vmem:[%s1269 + $0xf8] sm:$0xff]
        %v1433 = vld [vmem:[%s1269 + $0x100] sm:$0xff]
        %v1434 = vld [vmem:[%s1269 + $0x108] sm:$0xff]
        %v1435 = vld [vmem:[%s1269 + $0x110] sm:$0xff]
        %v1436 = vld [vmem:[%s1269 + $0x118] sm:$0xff]
        %v1437 = vld [vmem:[%s1269 + $0x120] sm:$0xff]
        %v1438 = vld [vmem:[%s1269 + $0x128] sm:$0xff]
        %v1439 = vld [vmem:[%s1269 + $0x130] sm:$0xff]
        %v1440 = vld [vmem:[%s1269 + $0x138] sm:$0xff]
        %v1441 = vld [vmem:[%s1269 + $0x140] sm:$0xff]
        %v1442 = vld [vmem:[%s1269 + $0x148] sm:$0xff]
        %v1443 = vld [vmem:[%s1269 + $0x150] sm:$0xff]
        %v1444 = vld [vmem:[%s1269 + $0x158] sm:$0xff]
        %v1445 = vld [vmem:[%s1269 + $0x160] sm:$0xff]
        %v1446 = vld [vmem:[%s1269 + $0x168] sm:$0xff]
        %v1447 = vld [vmem:[%s1269 + $0x170] sm:$0xff]
        %v1448 = vld [vmem:[%s1269 + $0x178] sm:$0xff]
        %v1449 = vld [vmem:[%s1269 + $0x180] sm:$0xff]
        %v1450 = vld [vmem:[%s1269 + $0x188] sm:$0xff]
        %v1451 = vld [vmem:[%s1269 + $0x190] sm:$0xff]
        %v1452 = vld [vmem:[%s1269 + $0x198] sm:$0xff]
        %v1453 = vld [vmem:[%s1269 + $0x1a0] sm:$0xff]
        %v1454 = vld [vmem:[%s1269 + $0x1a8] sm:$0xff]
        %v1455 = vld [vmem:[%s1269 + $0x1b0] sm:$0xff]
        %v1456 = vld [vmem:[%s1269 + $0x1b8] sm:$0xff]
        %v1457 = vld [vmem:[%s1269 + $0x1c0] sm:$0xff]
        %v1458 = vld [vmem:[%s1269 + $0x1c8] sm:$0xff]
        %v1459 = vld [vmem:[%s1269 + $0x1d0] sm:$0xff]
        %v1460 = vld [vmem:[%s1269 + $0x1d8] sm:$0xff]
        %v1461 = vld [vmem:[%s1269 + $0x1e0] sm:$0xff]
        %v1462 = vld [vmem:[%s1269 + $0x1e8] sm:$0xff]
        %v1463 = vld [vmem:[%s1269 + $0x1f0] sm:$0xff]
        %v1464 = vld [vmem:[%s1269 + $0x1f8] sm:$0xff]
        %v1465 = vld [vmem:[%s1269 + $0x200] sm:$0xff]
        %v1466 = vld [vmem:[%s1269 + $0x208] sm:$0xff]
        %v1467 = vld [vmem:[%s1269 + $0x210] sm:$0xff]
        %v1468 = vld [vmem:[%s1269 + $0x218] sm:$0xff]
        %v1469 = vld [vmem:[%s1269 + $0x220] sm:$0xff]
        %v1470 = vld [vmem:[%s1269 + $0x228] sm:$0xff]
        %v1471 = vld [vmem:[%s1269 + $0x230] sm:$0xff]
        %v1472 = vld [vmem:[%s1269 + $0x238] sm:$0xff]
        %v1473 = vld [vmem:[%s1269 + $0x240] sm:$0xff]
        %v1474 = vld [vmem:[%s1269 + $0x248] sm:$0xff]
        %v1475 = vld [vmem:[%s1269 + $0x250] sm:$0xff]
        %v1476 = vld [vmem:[%s1269 + $0x258] sm:$0xff]
        %v1477 = vld [vmem:[%s1269 + $0x260] sm:$0xff]
        %v1478 = vld [vmem:[%s1269 + $0x268] sm:$0xff]
        %v1479 = vld [vmem:[%s1269 + $0x270] sm:$0xff]
        %v1480 = vld [vmem:[%s1269 + $0x278] sm:$0xff]
        %v1481 = vld [vmem:[%s1269 + $0x280] sm:$0xff]
        %v1482 = vld [vmem:[%s1269 + $0x288] sm:$0xff]
        %v1483 = vld [vmem:[%s1269 + $0x290] sm:$0xff]
        %v1484 = vld [vmem:[%s1269 + $0x298] sm:$0xff]
        %v1485 = vld [vmem:[%s1269 + $0x2a0] sm:$0xff]
        %v1486 = vld [vmem:[%s1269 + $0x2a8] sm:$0xff]
        %v1487 = vld [vmem:[%s1269 + $0x2b0] sm:$0xff]
        %v1488 = vld [vmem:[%s1269 + $0x2b8] sm:$0xff]
        %v1489 = vld [vmem:[%s1269 + $0x2c0] sm:$0xff]
        %v1490 = vld [vmem:[%s1269 + $0x2c8] sm:$0xff]
        %v1491 = vld [vmem:[%s1269 + $0x2d0] sm:$0xff]
        %v1492 = vld [vmem:[%s1269 + $0x2d8] sm:$0xff]
        %v1493 = vld [vmem:[%s1269 + $0x2e0] sm:$0xff]
        %v1494 = vld [vmem:[%s1269 + $0x2e8] sm:$0xff]
        %v1495 = vld [vmem:[%s1269 + $0x2f0] sm:$0xff]
        %v1496 = vld [vmem:[%s1269 + $0x2f8] sm:$0xff]
        %v1497 = vld [vmem:[%s1269 + $0x300] sm:$0xff]
        %v1498 = vld [vmem:[%s1269 + $0x308] sm:$0xff]
        %v1499 = vld [vmem:[%s1269 + $0x310] sm:$0xff]
        %v1500 = vld [vmem:[%s1269 + $0x318] sm:$0xff]
        %v1501 = vld [vmem:[%s1269 + $0x320] sm:$0xff]
        %v1502 = vld [vmem:[%s1269 + $0x328] sm:$0xff]
        %v1503 = vld [vmem:[%s1269 + $0x330] sm:$0xff]
        %v1504 = vld [vmem:[%s1269 + $0x338] sm:$0xff]
        %v1505 = vld [vmem:[%s1269 + $0x340] sm:$0xff]
        %v1506 = vld [vmem:[%s1269 + $0x348] sm:$0xff]
        %v1507 = vld [vmem:[%s1269 + $0x350] sm:$0xff]
        %v1508 = vld [vmem:[%s1269 + $0x358] sm:$0xff]
        %v1509 = vld [vmem:[%s1269 + $0x360] sm:$0xff]
        %v1510 = vld [vmem:[%s1269 + $0x368] sm:$0xff]
        %v1511 = vld [vmem:[%s1269 + $0x370] sm:$0xff]
        %v1512 = vld [vmem:[%s1269 + $0x378] sm:$0xff]
        %v1513 = vld [vmem:[%s1269 + $0x380] sm:$0xff]
        %v1514 = vld [vmem:[%s1269 + $0x388] sm:$0xff]
        %v1515 = vld [vmem:[%s1269 + $0x390] sm:$0xff]
        %v1516 = vld [vmem:[%s1269 + $0x398] sm:$0xff]
        %v1517 = vld [vmem:[%s1269 + $0x3a0] sm:$0xff]
        %v1518 = vld [vmem:[%s1269 + $0x3a8] sm:$0xff]
        %v1519 = vld [vmem:[%s1269 + $0x3b0] sm:$0xff]
        %v1520 = vld [vmem:[%s1269 + $0x3b8] sm:$0xff]
        %v1521 = vld [vmem:[%s1269 + $0x3c0] sm:$0xff]
        %v1522 = vld [vmem:[%s1269 + $0x3c8] sm:$0xff]
        %v1523 = vld [vmem:[%s1269 + $0x3d0] sm:$0xff]
        %v1524 = vld [vmem:[%s1269 + $0x3d8] sm:$0xff]
        %v1525 = vld [vmem:[%s1269 + $0x3e0] sm:$0xff]
        %v1526 = vld [vmem:[%s1269 + $0x3e8] sm:$0xff]
        %v1527 = vld [vmem:[%s1269 + $0x3f0] sm:$0xff]
        %v1528 = vld [vmem:[%s1269 + $0x3f8] sm:$0xff]
        %v1529 = vld [vmem:[%s1269 + $0x400] sm:$0xff]
        %v1530 = vld [vmem:[%s1269 + $0x408] sm:$0xff]
        %v1531 = vld [vmem:[%s1269 + $0x410] sm:$0xff]
        %v1532 = vld [vmem:[%s1269 + $0x418] sm:$0xff]
        %v1533 = vld [vmem:[%s1269 + $0x420] sm:$0xff]
        %v1534 = vld [vmem:[%s1269 + $0x428] sm:$0xff]
        %v1535 = vld [vmem:[%s1269 + $0x430] sm:$0xff]
        %v1536 = vld [vmem:[%s1269 + $0x438] sm:$0xff]
        %v1537 = vld [vmem:[%s1269 + $0x440] sm:$0xff]
        %v1538 = vld [vmem:[%s1269 + $0x448] sm:$0xff]
        %v1539 = vld [vmem:[%s1269 + $0x450] sm:$0xff]
        %v1540 = vld [vmem:[%s1269 + $0x458] sm:$0xff]
        %v1541 = vld [vmem:[%s1269 + $0x460] sm:$0xff]
        %v1542 = vld [vmem:[%s1269 + $0x468] sm:$0xff]
        %v1543 = vld [vmem:[%s1269 + $0x470] sm:$0xff]
        %v1544 = vld [vmem:[%s1269 + $0x478] sm:$0xff]
        %v1545 = vld [vmem:[%s1269 + $0x480] sm:$0xff]
        %v1546 = vld [vmem:[%s1269 + $0x488] sm:$0xff]
        %v1547 = vld [vmem:[%s1269 + $0x490] sm:$0xff]
        %v1548 = vld [vmem:[%s1269 + $0x498] sm:$0xff]
        %v1549 = vld [vmem:[%s1269 + $0x4a0] sm:$0xff]
        %v1550 = vld [vmem:[%s1269 + $0x4a8] sm:$0xff]
        %v1551 = vld [vmem:[%s1269 + $0x4b0] sm:$0xff]
        %v1552 = vld [vmem:[%s1269 + $0x4b8] sm:$0xff]
        %v1553 = vld [vmem:[%s1269 + $0x4c0] sm:$0xff]
        %v1554 = vld [vmem:[%s1269 + $0x4c8] sm:$0xff]
        %v1555 = vld [vmem:[%s1269 + $0x4d0] sm:$0xff]
        %v1556 = vld [vmem:[%s1269 + $0x4d8] sm:$0xff]
        %v1557 = vld [vmem:[%s1269 + $0x4e0] sm:$0xff]
        %v1558 = vld [vmem:[%s1269 + $0x4e8] sm:$0xff]
        %v1559 = vld [vmem:[%s1269 + $0x4f0] sm:$0xff]
        %v1560 = vld [vmem:[%s1269 + $0x4f8] sm:$0xff]
        %v1561 = vld [vmem:[%s1269 + $0x500] sm:$0xff]
        %v1562 = vld [vmem:[%s1269 + $0x508] sm:$0xff]
        %v1563 = vld [vmem:[%s1269 + $0x510] sm:$0xff]
        %v1564 = vld [vmem:[%s1269 + $0x518] sm:$0xff]
        %v1565 = vld [vmem:[%s1269 + $0x520] sm:$0xff]
        %v1566 = vld [vmem:[%s1269 + $0x528] sm:$0xff]
        %v1567 = vld [vmem:[%s1269 + $0x530] sm:$0xff]
        %v1568 = vld [vmem:[%s1269 + $0x538] sm:$0xff]
        %v1569 = vld [vmem:[%s1269 + $0x540] sm:$0xff]
        %v1570 = vld [vmem:[%s1269 + $0x548] sm:$0xff]
        %v1571 = vld [vmem:[%s1269 + $0x550] sm:$0xff]
        %v1572 = vld [vmem:[%s1269 + $0x558] sm:$0xff]
        %v1573 = vld [vmem:[%s1269 + $0x560] sm:$0xff]
        %v1574 = vld [vmem:[%s1269 + $0x568] sm:$0xff]
        %v1575 = vld [vmem:[%s1269 + $0x570] sm:$0xff]
        %v1576 = vld [vmem:[%s1269 + $0x578] sm:$0xff]
        %v1577 = vld [vmem:[%s1269 + $0x580] sm:$0xff]
        %v1578 = vld [vmem:[%s1269 + $0x588] sm:$0xff]
        %v1579 = vld [vmem:[%s1269 + $0x590] sm:$0xff]
        %v1580 = vld [vmem:[%s1269 + $0x598] sm:$0xff]
        %v1581 = vld [vmem:[%s1269 + $0x5a0] sm:$0xff]
        %v1582 = vld [vmem:[%s1269 + $0x5a8] sm:$0xff]
        %v1583 = vld [vmem:[%s1269 + $0x5b0] sm:$0xff]
        %v1584 = vld [vmem:[%s1269 + $0x5b8] sm:$0xff]
        %v1585 = vld [vmem:[%s1269 + $0x5c0] sm:$0xff]
        %v1586 = vld [vmem:[%s1269 + $0x5c8] sm:$0xff]
        %v1587 = vld [vmem:[%s1269 + $0x5d0] sm:$0xff]
        %v1588 = vld [vmem:[%s1269 + $0x5d8] sm:$0xff]
        %v1589 = vld [vmem:[%s1269 + $0x5e0] sm:$0xff]
        %v1590 = vld [vmem:[%s1269 + $0x5e8] sm:$0xff]
        %v1591 = vld [vmem:[%s1269 + $0x5f0] sm:$0xff]
        %v1592 = vld [vmem:[%s1269 + $0x5f8] sm:$0xff]
        %v1593 = vld [vmem:[%s1269 + $0x600] sm:$0xff]
        %v1594 = vld [vmem:[%s1269 + $0x608] sm:$0xff]
        %v1595 = vld [vmem:[%s1269 + $0x610] sm:$0xff]
        %v1596 = vld [vmem:[%s1269 + $0x618] sm:$0xff]
        %v1597 = vld [vmem:[%s1269 + $0x620] sm:$0xff]
        %v1598 = vld [vmem:[%s1269 + $0x628] sm:$0xff]
        %v1599 = vld [vmem:[%s1269 + $0x630] sm:$0xff]
        %v1600 = vld [vmem:[%s1269 + $0x638] sm:$0xff]
        %v1601 = vld [vmem:[%s1269 + $0x640] sm:$0xff]
        %v1602 = vld [vmem:[%s1269 + $0x648] sm:$0xff]
        %v1603 = vld [vmem:[%s1269 + $0x650] sm:$0xff]
        %v1604 = vld [vmem:[%s1269 + $0x658] sm:$0xff]
        %v1605 = vld [vmem:[%s1269 + $0x660] sm:$0xff]
        %v1606 = vld [vmem:[%s1269 + $0x668] sm:$0xff]
        %v1607 = vld [vmem:[%s1269 + $0x670] sm:$0xff]
        %v1608 = vld [vmem:[%s1269 + $0x678] sm:$0xff]
        %v1609 = vld [vmem:[%s1269 + $0x680] sm:$0xff]
        %v1610 = vld [vmem:[%s1269 + $0x688] sm:$0xff]
        %v1611 = vld [vmem:[%s1269 + $0x690] sm:$0xff]
        %v1612 = vld [vmem:[%s1269 + $0x698] sm:$0xff]
        %v1613 = vld [vmem:[%s1269 + $0x6a0] sm:$0xff]
        %v1614 = vld [vmem:[%s1269 + $0x6a8] sm:$0xff]
        %v1615 = vld [vmem:[%s1269 + $0x6b0] sm:$0xff]
        %v1616 = vld [vmem:[%s1269 + $0x6b8] sm:$0xff]
        %v1617 = vld [vmem:[%s1269 + $0x6c0] sm:$0xff]
        %v1618 = vld [vmem:[%s1269 + $0x6c8] sm:$0xff]
        %v1619 = vld [vmem:[%s1269 + $0x6d0] sm:$0xff]
        %v1620 = vld [vmem:[%s1269 + $0x6d8] sm:$0xff]
        %v1621 = vld [vmem:[%s1269 + $0x6e0] sm:$0xff]
        %v1622 = vld [vmem:[%s1269 + $0x6e8] sm:$0xff]
        %v1623 = vld [vmem:[%s1269 + $0x6f0] sm:$0xff]
        %v1624 = vld [vmem:[%s1269 + $0x6f8] sm:$0xff]
        %v1625 = vld [vmem:[%s1269 + $0x700] sm:$0xff]
        %v1626 = vld [vmem:[%s1269 + $0x708] sm:$0xff]
        %v1627 = vld [vmem:[%s1269 + $0x710] sm:$0xff]
        %v1628 = vld [vmem:[%s1269 + $0x718] sm:$0xff]
        %v1629 = vld [vmem:[%s1269 + $0x720] sm:$0xff]
        %v1630 = vld [vmem:[%s1269 + $0x728] sm:$0xff]
        %v1631 = vld [vmem:[%s1269 + $0x730] sm:$0xff]
        %v1632 = vld [vmem:[%s1269 + $0x738] sm:$0xff]
        %v1633 = vld [vmem:[%s1269 + $0x740] sm:$0xff]
        %v1634 = vld [vmem:[%s1269 + $0x748] sm:$0xff]
        %v1635 = vld [vmem:[%s1269 + $0x750] sm:$0xff]
        %v1636 = vld [vmem:[%s1269 + $0x758] sm:$0xff]
        %v1637 = vld [vmem:[%s1269 + $0x760] sm:$0xff]
        %v1638 = vld [vmem:[%s1269 + $0x768] sm:$0xff]
        %v1639 = vld [vmem:[%s1269 + $0x770] sm:$0xff]
        %v1640 = vld [vmem:[%s1269 + $0x778] sm:$0xff]
        %v1641 = vld [vmem:[%s1269 + $0x780] sm:$0xff]
        %v1642 = vld [vmem:[%s1269 + $0x788] sm:$0xff]
        %v1643 = vld [vmem:[%s1269 + $0x790] sm:$0xff]
        %v1644 = vld [vmem:[%s1269 + $0x798] sm:$0xff]
        %v1645 = vld [vmem:[%s1269 + $0x7a0] sm:$0xff]
        %v1646 = vld [vmem:[%s1269 + $0x7a8] sm:$0xff]
        %v1647 = vld [vmem:[%s1269 + $0x7b0] sm:$0xff]
        %v1648 = vld [vmem:[%s1269 + $0x7b8] sm:$0xff]
        %v1649 = vld [vmem:[%s1269 + $0x7c0] sm:$0xff]
        %v1650 = vld [vmem:[%s1269 + $0x7c8] sm:$0xff]
        %v1651 = vld [vmem:[%s1269 + $0x7d0] sm:$0xff]
        %v1652 = vld [vmem:[%s1269 + $0x7d8] sm:$0xff]
        %v1653 = vld [vmem:[%s1269 + $0x7e0] sm:$0xff]
        %v1654 = vld [vmem:[%s1269 + $0x7e8] sm:$0xff]
        %v1655 = vld [vmem:[%s1269 + $0x7f0] sm:$0xff]
        %v1656 = vld [vmem:[%s1269 + $0x7f8] sm:$0xff]
        %v1657 = vld [vmem:[%s1269 + $0x800] sm:$0xff]
        %v1658 = vld [vmem:[%s1269 + $0x808] sm:$0xff]
        %v1659 = vld [vmem:[%s1269 + $0x810] sm:$0xff]
        %v1660 = vld [vmem:[%s1269 + $0x818] sm:$0xff]
        %v1661 = vld [vmem:[%s1269 + $0x820] sm:$0xff]
        %v1662 = vld [vmem:[%s1269 + $0x828] sm:$0xff]
        %v1663 = vld [vmem:[%s1269 + $0x830] sm:$0xff]
        %v1664 = vld [vmem:[%s1269 + $0x838] sm:$0xff]
        %v1665 = vld [vmem:[%s1269 + $0x840] sm:$0xff]
        %v1666 = vld [vmem:[%s1269 + $0x848] sm:$0xff]
        %v1667 = vld [vmem:[%s1269 + $0x850] sm:$0xff]
        %v1668 = vld [vmem:[%s1269 + $0x858] sm:$0xff]
        %v1669 = vld [vmem:[%s1269 + $0x860] sm:$0xff]
        %v1670 = vld [vmem:[%s1269 + $0x868] sm:$0xff]
        %v1671 = vld [vmem:[%s1269 + $0x870] sm:$0xff]
        %v1672 = vld [vmem:[%s1269 + $0x878] sm:$0xff]
        %v1673 = vld [vmem:[%s1269 + $0x880] sm:$0xff]
        %v1674 = vld [vmem:[%s1269 + $0x888] sm:$0xff]
        %v1675 = vld [vmem:[%s1269 + $0x890] sm:$0xff]
        %v1676 = vld [vmem:[%s1269 + $0x898] sm:$0xff]
        %v1677 = vld [vmem:[%s1269 + $0x8a0] sm:$0xff]
        %v1678 = vld [vmem:[%s1269 + $0x8a8] sm:$0xff]
        %v1679 = vld [vmem:[%s1269 + $0x8b0] sm:$0xff]
        %v1680 = vld [vmem:[%s1269 + $0x8b8] sm:$0xff]
        %v1681 = vld [vmem:[%s1269 + $0x8c0] sm:$0xff]
        %v1682 = vld [vmem:[%s1269 + $0x8c8] sm:$0xff]
        %v1683 = vld [vmem:[%s1269 + $0x8d0] sm:$0xff]
        %v1684 = vld [vmem:[%s1269 + $0x8d8] sm:$0xff]
        %v1685 = vld [vmem:[%s1269 + $0x8e0] sm:$0xff]
        %v1686 = vld [vmem:[%s1269 + $0x8e8] sm:$0xff]
        %v1687 = vld [vmem:[%s1269 + $0x8f0] sm:$0xff]
        %v1688 = vld [vmem:[%s1269 + $0x8f8] sm:$0xff]
        %v1689 = vld [vmem:[%s1269 + $0x900] sm:$0xff]
        %v1690 = vld [vmem:[%s1269 + $0x908] sm:$0xff]
        %v1691 = vld [vmem:[%s1269 + $0x910] sm:$0xff]
        %v1692 = vld [vmem:[%s1269 + $0x918] sm:$0xff]
        %v1693 = vld [vmem:[%s1269 + $0x920] sm:$0xff]
        %v1694 = vld [vmem:[%s1269 + $0x928] sm:$0xff]
        %v1695 = vld [vmem:[%s1269 + $0x930] sm:$0xff]
        %v1696 = vld [vmem:[%s1269 + $0x938] sm:$0xff]
        %v1697 = vld [vmem:[%s1269 + $0x940] sm:$0xff]
        %v1698 = vld [vmem:[%s1269 + $0x948] sm:$0xff]
        %v1699 = vld [vmem:[%s1269 + $0x950] sm:$0xff]
        %v1700 = vld [vmem:[%s1269 + $0x958] sm:$0xff]
        %v1701 = vld [vmem:[%s1269 + $0x960] sm:$0xff]
        %v1702 = vld [vmem:[%s1269 + $0x968] sm:$0xff]
        %v1703 = vld [vmem:[%s1269 + $0x970] sm:$0xff]
        %v1704 = vld [vmem:[%s1269 + $0x978] sm:$0xff]
        %v1705 = vld [vmem:[%s1269 + $0x980] sm:$0xff]
        %v1706 = vld [vmem:[%s1269 + $0x988] sm:$0xff]
        %v1707 = vld [vmem:[%s1269 + $0x990] sm:$0xff]
        %v1708 = vld [vmem:[%s1269 + $0x998] sm:$0xff]
        %v1709 = vld [vmem:[%s1269 + $0x9a0] sm:$0xff]
        %v1710 = vld [vmem:[%s1269 + $0x9a8] sm:$0xff]
        %v1711 = vld [vmem:[%s1269 + $0x9b0] sm:$0xff]
        %v1712 = vld [vmem:[%s1269 + $0x9b8] sm:$0xff]
        %v1713 = vld [vmem:[%s1269 + $0x9c0] sm:$0xff]
        %v1714 = vld [vmem:[%s1269 + $0x9c8] sm:$0xff]
        %v1715 = vld [vmem:[%s1269 + $0x9d0] sm:$0xff]
        %v1716 = vld [vmem:[%s1269 + $0x9d8] sm:$0xff]
        %v1717 = vld [vmem:[%s1269 + $0x9e0] sm:$0xff]
        %v1718 = vld [vmem:[%s1269 + $0x9e8] sm:$0xff]
        %v1719 = vld [vmem:[%s1269 + $0x9f0] sm:$0xff]
        %v1720 = vld [vmem:[%s1269 + $0x9f8] sm:$0xff]
        %v1721 = vld [vmem:[%s1269 + $0xa00] sm:$0xff]
        %v1722 = vld [vmem:[%s1269 + $0xa08] sm:$0xff]
        %v1723 = vld [vmem:[%s1269 + $0xa10] sm:$0xff]
        %v1724 = vld [vmem:[%s1269 + $0xa18] sm:$0xff]
        %v1725 = vld [vmem:[%s1269 + $0xa20] sm:$0xff]
        %v1726 = vld [vmem:[%s1269 + $0xa28] sm:$0xff]
        %v1727 = vld [vmem:[%s1269 + $0xa30] sm:$0xff]
        %v1728 = vld [vmem:[%s1269 + $0xa38] sm:$0xff]
        %v1729 = vld [vmem:[%s1269 + $0xa40] sm:$0xff]
        %v1730 = vld [vmem:[%s1269 + $0xa48] sm:$0xff]
        %v1731 = vld [vmem:[%s1269 + $0xa50] sm:$0xff]
        %v1732 = vld [vmem:[%s1269 + $0xa58] sm:$0xff]
        %v1733 = vld [vmem:[%s1269 + $0xa60] sm:$0xff]
        %v1734 = vld [vmem:[%s1269 + $0xa68] sm:$0xff]
        %v1735 = vld [vmem:[%s1269 + $0xa70] sm:$0xff]
        %v1736 = vld [vmem:[%s1269 + $0xa78] sm:$0xff]
        %v1737 = vld [vmem:[%s1269 + $0xa80] sm:$0xff]
        %v1738 = vld [vmem:[%s1269 + $0xa88] sm:$0xff]
        %v1739 = vld [vmem:[%s1269 + $0xa90] sm:$0xff]
        %v1740 = vld [vmem:[%s1269 + $0xa98] sm:$0xff]
        %v1741 = vld [vmem:[%s1269 + $0xaa0] sm:$0xff]
        %v1742 = vld [vmem:[%s1269 + $0xaa8] sm:$0xff]
        %v1743 = vld [vmem:[%s1269 + $0xab0] sm:$0xff]
        %v1744 = vld [vmem:[%s1269 + $0xab8] sm:$0xff]
        %v1745 = vld [vmem:[%s1269 + $0xac0] sm:$0xff]
        %v1746 = vld [vmem:[%s1269 + $0xac8] sm:$0xff]
        %v1747 = vld [vmem:[%s1269 + $0xad0] sm:$0xff]
        %v1748 = vld [vmem:[%s1269 + $0xad8] sm:$0xff]
        %v1749 = vld [vmem:[%s1269 + $0xae0] sm:$0xff]
        %v1750 = vld [vmem:[%s1269 + $0xae8] sm:$0xff]
        %v1751 = vld [vmem:[%s1269 + $0xaf0] sm:$0xff]
        %v1752 = vld [vmem:[%s1269 + $0xaf8] sm:$0xff]
        %v1753 = vld [vmem:[%s1269 + $0xb00] sm:$0xff]
        %v1754 = vld [vmem:[%s1269 + $0xb08] sm:$0xff]
        %v1755 = vld [vmem:[%s1269 + $0xb10] sm:$0xff]
        %v1756 = vld [vmem:[%s1269 + $0xb18] sm:$0xff]
        %v1757 = vld [vmem:[%s1269 + $0xb20] sm:$0xff]
        %v1758 = vld [vmem:[%s1269 + $0xb28] sm:$0xff]
        %v1759 = vld [vmem:[%s1269 + $0xb30] sm:$0xff]
        %v1760 = vld [vmem:[%s1269 + $0xb38] sm:$0xff]
        %v1761 = vld [vmem:[%s1269 + $0xb40] sm:$0xff]
        %v1762 = vld [vmem:[%s1269 + $0xb48] sm:$0xff]
        %v1763 = vld [vmem:[%s1269 + $0xb50] sm:$0xff]
        %v1764 = vld [vmem:[%s1269 + $0xb58] sm:$0xff]
        %v1765 = vld [vmem:[%s1269 + $0xb60] sm:$0xff]
        %v1766 = vld [vmem:[%s1269 + $0xb68] sm:$0xff]
        %v1767 = vld [vmem:[%s1269 + $0xb70] sm:$0xff]
        %v1768 = vld [vmem:[%s1269 + $0xb78] sm:$0xff]
        %v1769 = vld [vmem:[%s1269 + $0xb80] sm:$0xff]
        %v1770 = vld [vmem:[%s1269 + $0xb88] sm:$0xff]
        %v1771 = vld [vmem:[%s1269 + $0xb90] sm:$0xff]
        %v1772 = vld [vmem:[%s1269 + $0xb98] sm:$0xff]
        %v1773 = vld [vmem:[%s1269 + $0xba0] sm:$0xff]
        %v1774 = vld [vmem:[%s1269 + $0xba8] sm:$0xff]
        %v1775 = vld [vmem:[%s1269 + $0xbb0] sm:$0xff]
        %v1776 = vld [vmem:[%s1269 + $0xbb8] sm:$0xff]
        %v1777 = vld [vmem:[%s1269 + $0xbc0] sm:$0xff]
        %v1778 = vld [vmem:[%s1269 + $0xbc8] sm:$0xff]
        %v1779 = vld [vmem:[%s1269 + $0xbd0] sm:$0xff]
        %v1780 = vld [vmem:[%s1269 + $0xbd8] sm:$0xff]
        %v1781 = vld [vmem:[%s1269 + $0xbe0] sm:$0xff]
        %v1782 = vld [vmem:[%s1269 + $0xbe8] sm:$0xff]
        %v1783 = vld [vmem:[%s1269 + $0xbf0] sm:$0xff]
        %v1784 = vld [vmem:[%s1269 + $0xbf8] sm:$0xff]
        %v1785 = vld [vmem:[%s1269 + $0xc00] sm:$0xff]
        %v1786 = vld [vmem:[%s1269 + $0xc08] sm:$0xff]
        %v1787 = vld [vmem:[%s1269 + $0xc10] sm:$0xff]
        %v1788 = vld [vmem:[%s1269 + $0xc18] sm:$0xff]
        %v1789 = vld [vmem:[%s1269 + $0xc20] sm:$0xff]
        %v1790 = vld [vmem:[%s1269 + $0xc28] sm:$0xff]
        %v1791 = vld [vmem:[%s1269 + $0xc30] sm:$0xff]
        %v1792 = vld [vmem:[%s1269 + $0xc38] sm:$0xff]
        %v1793 = vld [vmem:[%s1269 + $0xc40] sm:$0xff]
        %v1794 = vld [vmem:[%s1269 + $0xc48] sm:$0xff]
        %v1795 = vld [vmem:[%s1269 + $0xc50] sm:$0xff]
        %v1796 = vld [vmem:[%s1269 + $0xc58] sm:$0xff]
        %v1797 = vld [vmem:[%s1269 + $0xc60] sm:$0xff]
        %v1798 = vld [vmem:[%s1269 + $0xc68] sm:$0xff]
        %v1799 = vld [vmem:[%s1269 + $0xc70] sm:$0xff]
        %v1800 = vld [vmem:[%s1269 + $0xc78] sm:$0xff]
        %v1801 = vld [vmem:[%s1269 + $0xc80] sm:$0xff]
        %v1802 = vld [vmem:[%s1269 + $0xc88] sm:$0xff]
        %v1803 = vld [vmem:[%s1269 + $0xc90] sm:$0xff]
        %v1804 = vld [vmem:[%s1269 + $0xc98] sm:$0xff]
        %v1805 = vld [vmem:[%s1269 + $0xca0] sm:$0xff]
        %v1806 = vld [vmem:[%s1269 + $0xca8] sm:$0xff]
        %v1807 = vld [vmem:[%s1269 + $0xcb0] sm:$0xff]
        %v1808 = vld [vmem:[%s1269 + $0xcb8] sm:$0xff]
        %v1809 = vld [vmem:[%s1269 + $0xcc0] sm:$0xff]
        %v1810 = vld [vmem:[%s1269 + $0xcc8] sm:$0xff]
        %v1811 = vld [vmem:[%s1269 + $0xcd0] sm:$0xff]
        %v1812 = vld [vmem:[%s1269 + $0xcd8] sm:$0xff]
        %v1813 = vld [vmem:[%s1269 + $0xce0] sm:$0xff]
        %v1814 = vld [vmem:[%s1269 + $0xce8] sm:$0xff]
        %v1815 = vld [vmem:[%s1269 + $0xcf0] sm:$0xff]
        %v1816 = vld [vmem:[%s1269 + $0xcf8] sm:$0xff]
        %v1817 = vld [vmem:[%s1269 + $0xd00] sm:$0xff]
        %v1818 = vld [vmem:[%s1269 + $0xd08] sm:$0xff]
        %v1819 = vld [vmem:[%s1269 + $0xd10] sm:$0xff]
        %v1820 = vld [vmem:[%s1269 + $0xd18] sm:$0xff]
        %v1821 = vld [vmem:[%s1269 + $0xd20] sm:$0xff]
        %v1822 = vld [vmem:[%s1269 + $0xd28] sm:$0xff]
        %v1823 = vld [vmem:[%s1269 + $0xd30] sm:$0xff]
        %v1824 = vld [vmem:[%s1269 + $0xd38] sm:$0xff]
        %v1825 = vld [vmem:[%s1269 + $0xd40] sm:$0xff]
        %v1826 = vld [vmem:[%s1269 + $0xd48] sm:$0xff]
        %v1827 = vld [vmem:[%s1269 + $0xd50] sm:$0xff]
        %v1828 = vld [vmem:[%s1269 + $0xd58] sm:$0xff]
        %v1829 = vld [vmem:[%s1269 + $0xd60] sm:$0xff]
        %v1830 = vld [vmem:[%s1269 + $0xd68] sm:$0xff]
        %v1831 = vld [vmem:[%s1269 + $0xd70] sm:$0xff]
        %v1832 = vld [vmem:[%s1269 + $0xd78] sm:$0xff]
        %v1833 = vld [vmem:[%s1269 + $0xd80] sm:$0xff]
        %v1834 = vld [vmem:[%s1269 + $0xd88] sm:$0xff]
        %v1835 = vld [vmem:[%s1269 + $0xd90] sm:$0xff]
        %v1836 = vld [vmem:[%s1269 + $0xd98] sm:$0xff]
        %v1837 = vld [vmem:[%s1269 + $0xda0] sm:$0xff]
        %v1838 = vld [vmem:[%s1269 + $0xda8] sm:$0xff]
        %v1839 = vld [vmem:[%s1269 + $0xdb0] sm:$0xff]
        %v1840 = vld [vmem:[%s1269 + $0xdb8] sm:$0xff]
        %v1841 = vld [vmem:[%s1269 + $0xdc0] sm:$0xff]
        %v1842 = vld [vmem:[%s1269 + $0xdc8] sm:$0xff]
        %v1843 = vld [vmem:[%s1269 + $0xdd0] sm:$0xff]
        %v1844 = vld [vmem:[%s1269 + $0xdd8] sm:$0xff]
        %v1845 = vld [vmem:[%s1269 + $0xde0] sm:$0xff]
        %v1846 = vld [vmem:[%s1269 + $0xde8] sm:$0xff]
        %v1847 = vld [vmem:[%s1269 + $0xdf0] sm:$0xff]
        %v1848 = vld [vmem:[%s1269 + $0xdf8] sm:$0xff]
        %v1849 = vld [vmem:[%s1269 + $0xe00] sm:$0xff]
        %v1850 = vld [vmem:[%s1269 + $0xe08] sm:$0xff]
        %v1851 = vld [vmem:[%s1269 + $0xe10] sm:$0xff]
        %v1852 = vld [vmem:[%s1269 + $0xe18] sm:$0xff]
        %v1853 = vld [vmem:[%s1269 + $0xe20] sm:$0xff]
        %v1854 = vld [vmem:[%s1269 + $0xe28] sm:$0xff]
        %v1855 = vld [vmem:[%s1269 + $0xe30] sm:$0xff]
        %v1856 = vld [vmem:[%s1269 + $0xe38] sm:$0xff]
        %v1857 = vld [vmem:[%s1269 + $0xe40] sm:$0xff]
        %v1858 = vld [vmem:[%s1269 + $0xe48] sm:$0xff]
        %v1859 = vld [vmem:[%s1269 + $0xe50] sm:$0xff]
        %v1860 = vld [vmem:[%s1269 + $0xe58] sm:$0xff]
        %v1861 = vld [vmem:[%s1269 + $0xe60] sm:$0xff]
        %v1862 = vld [vmem:[%s1269 + $0xe68] sm:$0xff]
        %v1863 = vld [vmem:[%s1269 + $0xe70] sm:$0xff]
        %v1864 = vld [vmem:[%s1269 + $0xe78] sm:$0xff]
        %v1865 = vld [vmem:[%s1269 + $0xe80] sm:$0xff]
        %v1866 = vld [vmem:[%s1269 + $0xe88] sm:$0xff]
        %v1867 = vld [vmem:[%s1269 + $0xe90] sm:$0xff]
        %v1868 = vld [vmem:[%s1269 + $0xe98] sm:$0xff]
        %v1869 = vld [vmem:[%s1269 + $0xea0] sm:$0xff]
        %v1870 = vld [vmem:[%s1269 + $0xea8] sm:$0xff]
        %v1871 = vld [vmem:[%s1269 + $0xeb0] sm:$0xff]
        %v1872 = vld [vmem:[%s1269 + $0xeb8] sm:$0xff]
        %v1873 = vld [vmem:[%s1269 + $0xec0] sm:$0xff]
        %v1874 = vld [vmem:[%s1269 + $0xec8] sm:$0xff]
        %v1875 = vld [vmem:[%s1269 + $0xed0] sm:$0xff]
        %v1876 = vld [vmem:[%s1269 + $0xed8] sm:$0xff]
        %v1877 = vld [vmem:[%s1269 + $0xee0] sm:$0xff]
        %v1878 = vld [vmem:[%s1269 + $0xee8] sm:$0xff]
        %v1879 = vld [vmem:[%s1269 + $0xef0] sm:$0xff]
        %v1880 = vld [vmem:[%s1269 + $0xef8] sm:$0xff]
        %v1881 = vld [vmem:[%s1269 + $0xf00] sm:$0xff]
        %v1882 = vld [vmem:[%s1269 + $0xf08] sm:$0xff]
        %v1883 = vld [vmem:[%s1269 + $0xf10] sm:$0xff]
        %v1884 = vld [vmem:[%s1269 + $0xf18] sm:$0xff]
        %v1885 = vld [vmem:[%s1269 + $0xf20] sm:$0xff]
        %v1886 = vld [vmem:[%s1269 + $0xf28] sm:$0xff]
        %v1887 = vld [vmem:[%s1269 + $0xf30] sm:$0xff]
        %v1888 = vld [vmem:[%s1269 + $0xf38] sm:$0xff]
        %v1889 = vld [vmem:[%s1269 + $0xf40] sm:$0xff]
        %v1890 = vld [vmem:[%s1269 + $0xf48] sm:$0xff]
        %v1891 = vld [vmem:[%s1269 + $0xf50] sm:$0xff]
        %v1892 = vld [vmem:[%s1269 + $0xf58] sm:$0xff]
        %v1893 = vld [vmem:[%s1269 + $0xf60] sm:$0xff]
        %v1894 = vld [vmem:[%s1269 + $0xf68] sm:$0xff]
        %v1895 = vld [vmem:[%s1269 + $0xf70] sm:$0xff]
        %v1896 = vld [vmem:[%s1269 + $0xf78] sm:$0xff]
        %v1897 = vld [vmem:[%s1269 + $0xf80] sm:$0xff]
        %v1898 = vld [vmem:[%s1269 + $0xf88] sm:$0xff]
        %v1899 = vld [vmem:[%s1269 + $0xf90] sm:$0xff]
        %v1900 = vld [vmem:[%s1269 + $0xf98] sm:$0xff]
        %v1901 = vld [vmem:[%s1269 + $0xfa0] sm:$0xff]
        %v1902 = vld [vmem:[%s1269 + $0xfa8] sm:$0xff]
        %v1903 = vld [vmem:[%s1269 + $0xfb0] sm:$0xff]
        %v1904 = vld [vmem:[%s1269 + $0xfb8] sm:$0xff]
        %v1905 = vld [vmem:[%s1269 + $0xfc0] sm:$0xff]
        %v1906 = vld [vmem:[%s1269 + $0xfc8] sm:$0xff]
        %v1907 = vld [vmem:[%s1269 + $0xfd0] sm:$0xff]
        %v1908 = vld [vmem:[%s1269 + $0xfd8] sm:$0xff]
        %v1909 = vld [vmem:[%s1269 + $0xfe0] sm:$0xff]
        %v1910 = vld [vmem:[%s1269 + $0xfe8] sm:$0xff]
        %v1911 = vld [vmem:[%s1269 + $0xff0] sm:$0xff]
        %v1912 = vld [vmem:[%s1269 + $0xff8] sm:$0xff]
        %1913 = vmatpush.msra.mxu0 %v1641
        %1914 = vmatpush.msra.mxu0 %v1625
        %1915 = vmatpush.msra.mxu0 %v1609
        %1916 = vmatpush.msra.mxu0 %v1593
        %1917 = vmatpush.msra.mxu0 %v1577
        %1918 = vmatpush.msra.mxu0 %v1561
        %1919 = vmatpush.msra.mxu0 %v1545
        %1920 = vmatpush.msra.mxu0 %v1529
        %1921 = vmatpush.msra.mxu0 %v1513
        %1922 = vmatpush.msra.mxu0 %v1497
        %1923 = vmatpush.msra.mxu0 %v1481
        %1924 = vmatpush.msra.mxu0 %v1465
        %1925 = vmatpush.msra.mxu0 %v1449
        %1926 = vmatpush.msra.mxu0 %v1433
        %1927 = vmatpush.msra.mxu0 %v1417
        %1928 = vmatpush.msra.mxu0 %v1401
        %1929 = vmatmul.f32.gmra.mxu0 %v1353
        %v1930 = vpop.f32.mrf.mxu0
        %v1931 = vadd.f32 0.0, %v1930
        %1932 = vmatmul.f32.gmra.mxu0 %v1355
        %v1933 = vpop.f32.mrf.mxu0
        %v1934 = vadd.f32 0.0, %v1933
        %1935 = vmatmul.f32.gmra.mxu0 %v1357
        %v1936 = vpop.f32.mrf.mxu0
        %v1937 = vadd.f32 0.0, %v1936
        %1938 = vmatmul.f32.gmra.mxu0 %v1359
        %v1939 = vpop.f32.mrf.mxu0
        %v1940 = vadd.f32 0.0, %v1939
        %1941 = vmatmul.f32.gmra.mxu0 %v1361
        %v1942 = vpop.f32.mrf.mxu0
        %v1943 = vadd.f32 0.0, %v1942
        %1944 = vmatmul.f32.gmra.mxu0 %v1363
        %v1945 = vpop.f32.mrf.mxu0
        %v1946 = vadd.f32 0.0, %v1945
        %1947 = vmatmul.f32.gmra.mxu0 %v1365
        %v1948 = vpop.f32.mrf.mxu0
        %v1949 = vadd.f32 0.0, %v1948
        %1950 = vmatmul.f32.gmra.mxu0 %v1367
        %v1951 = vpop.f32.mrf.mxu0
        %v1952 = vadd.f32 0.0, %v1951
        %1953 = vmatmul.f32.gmra.mxu0 %v1369
        %v1954 = vpop.f32.mrf.mxu0
        %v1955 = vadd.f32 0.0, %v1954
        %1956 = vmatmul.f32.gmra.mxu0 %v1371
        %v1957 = vpop.f32.mrf.mxu0
        %v1958 = vadd.f32 0.0, %v1957
        %1959 = vmatmul.f32.gmra.mxu0 %v1373
        %v1960 = vpop.f32.mrf.mxu0
        %v1961 = vadd.f32 0.0, %v1960
        %1962 = vmatmul.f32.gmra.mxu0 %v1375
        %v1963 = vpop.f32.mrf.mxu0
        %v1964 = vadd.f32 0.0, %v1963
        %1965 = vmatmul.f32.gmra.mxu0 %v1377
        %v1966 = vpop.f32.mrf.mxu0
        %v1967 = vadd.f32 0.0, %v1966
        %1968 = vmatmul.f32.gmra.mxu0 %v1379
        %v1969 = vpop.f32.mrf.mxu0
        %v1970 = vadd.f32 0.0, %v1969
        %1971 = vmatmul.f32.gmra.mxu0 %v1381
        %v1972 = vpop.f32.mrf.mxu0
        %v1973 = vadd.f32 0.0, %v1972
        %1974 = vmatmul.f32.gmra.mxu0 %v1383
        %v1975 = vpop.f32.mrf.mxu0
        %v1976 = vadd.f32 0.0, %v1975
        %1977 = vmatmul.f32.gmra.mxu0 %v1385
        %v1978 = vpop.f32.mrf.mxu0
        %v1979 = vadd.f32 0.0, %v1978
        %1980 = vmatmul.f32.gmra.mxu0 %v1387
        %v1981 = vpop.f32.mrf.mxu0
        %v1982 = vadd.f32 0.0, %v1981
        %1983 = vmatmul.f32.gmra.mxu0 %v1389
        %v1984 = vpop.f32.mrf.mxu0
        %v1985 = vadd.f32 0.0, %v1984
        %1986 = vmatmul.f32.gmra.mxu0 %v1391
        %v1987 = vpop.f32.mrf.mxu0
        %v1988 = vadd.f32 0.0, %v1987
        %1989 = vmatmul.f32.gmra.mxu0 %v1393
        %v1990 = vpop.f32.mrf.mxu0
        %v1991 = vadd.f32 0.0, %v1990
        %1992 = vmatmul.f32.gmra.mxu0 %v1395
        %v1993 = vpop.f32.mrf.mxu0
        %v1994 = vadd.f32 0.0, %v1993
        %1995 = vmatmul.f32.gmra.mxu0 %v1397
        %v1996 = vpop.f32.mrf.mxu0
        %v1997 = vadd.f32 0.0, %v1996
        %1998 = vmatmul.f32.gmra.mxu0 %v1399
        %v1999 = vpop.f32.mrf.mxu0
        %v2000 = vadd.f32 0.0, %v1999
        %2001 = vdwg.mxu0
        %2002 = vmatpush.msra.mxu0 %v1897
        %2003 = vmatpush.msra.mxu0 %v1881
        %2004 = vmatpush.msra.mxu0 %v1865
        %2005 = vmatpush.msra.mxu0 %v1849
        %2006 = vmatpush.msra.mxu0 %v1833
        %2007 = vmatpush.msra.mxu0 %v1817
        %2008 = vmatpush.msra.mxu0 %v1801
        %2009 = vmatpush.msra.mxu0 %v1785
        %2010 = vmatpush.msra.mxu0 %v1769
        %2011 = vmatpush.msra.mxu0 %v1753
        %2012 = vmatpush.msra.mxu0 %v1737
        %2013 = vmatpush.msra.mxu0 %v1721
        %2014 = vmatpush.msra.mxu0 %v1705
        %2015 = vmatpush.msra.mxu0 %v1689
        %2016 = vmatpush.msra.mxu0 %v1673
        %2017 = vmatpush.msra.mxu0 %v1657
        %2018 = vmatmul.f32.gmra.mxu0 %v1354
        %v2019 = vpop.f32.mrf.mxu0
        %v2020 = vadd.f32 %v1931, %v2019
        %2021 = vmatmul.f32.gmra.mxu0 %v1356
        %v2022 = vpop.f32.mrf.mxu0
        %v2023 = vadd.f32 %v1934, %v2022
        %2024 = vmatmul.f32.gmra.mxu0 %v1358
        %v2025 = vpop.f32.mrf.mxu0
        %v2026 = vadd.f32 %v1937, %v2025
        %2027 = vmatmul.f32.gmra.mxu0 %v1360
        %v2028 = vpop.f32.mrf.mxu0
        %v2029 = vadd.f32 %v1940, %v2028
        %2030 = vmatmul.f32.gmra.mxu0 %v1362
        %v2031 = vpop.f32.mrf.mxu0
        %v2032 = vadd.f32 %v1943, %v2031
        %2033 = vmatmul.f32.gmra.mxu0 %v1364
        %v2034 = vpop.f32.mrf.mxu0
        %v2035 = vadd.f32 %v1946, %v2034
        %2036 = vmatmul.f32.gmra.mxu0 %v1366
        %v2037 = vpop.f32.mrf.mxu0
        %v2038 = vadd.f32 %v1949, %v2037
        %2039 = vmatmul.f32.gmra.mxu0 %v1368
        %v2040 = vpop.f32.mrf.mxu0
        %v2041 = vadd.f32 %v1952, %v2040
        %2042 = vmatmul.f32.gmra.mxu0 %v1370
        %v2043 = vpop.f32.mrf.mxu0
        %v2044 = vadd.f32 %v1955, %v2043
        %2045 = vmatmul.f32.gmra.mxu0 %v1372
        %v2046 = vpop.f32.mrf.mxu0
        %v2047 = vadd.f32 %v1958, %v2046
        %2048 = vmatmul.f32.gmra.mxu0 %v1374
        %v2049 = vpop.f32.mrf.mxu0
        %v2050 = vadd.f32 %v1961, %v2049
        %2051 = vmatmul.f32.gmra.mxu0 %v1376
        %v2052 = vpop.f32.mrf.mxu0
        %v2053 = vadd.f32 %v1964, %v2052
        %2054 = vmatmul.f32.gmra.mxu0 %v1378
        %v2055 = vpop.f32.mrf.mxu0
        %v2056 = vadd.f32 %v1967, %v2055
        %2057 = vmatmul.f32.gmra.mxu0 %v1380
        %v2058 = vpop.f32.mrf.mxu0
        %v2059 = vadd.f32 %v1970, %v2058
        %2060 = vmatmul.f32.gmra.mxu0 %v1382
        %v2061 = vpop.f32.mrf.mxu0
        %v2062 = vadd.f32 %v1973, %v2061
        %2063 = vmatmul.f32.gmra.mxu0 %v1384
        %v2064 = vpop.f32.mrf.mxu0
        %v2065 = vadd.f32 %v1976, %v2064
        %2066 = vmatmul.f32.gmra.mxu0 %v1386
        %v2067 = vpop.f32.mrf.mxu0
        %v2068 = vadd.f32 %v1979, %v2067
        %2069 = vmatmul.f32.gmra.mxu0 %v1388
        %v2070 = vpop.f32.mrf.mxu0
        %v2071 = vadd.f32 %v1982, %v2070
        %2072 = vmatmul.f32.gmra.mxu0 %v1390
        %v2073 = vpop.f32.mrf.mxu0
        %v2074 = vadd.f32 %v1985, %v2073
        %2075 = vmatmul.f32.gmra.mxu0 %v1392
        %v2076 = vpop.f32.mrf.mxu0
        %v2077 = vadd.f32 %v1988, %v2076
        %2078 = vmatmul.f32.gmra.mxu0 %v1394
        %v2079 = vpop.f32.mrf.mxu0
        %v2080 = vadd.f32 %v1991, %v2079
        %2081 = vmatmul.f32.gmra.mxu0 %v1396
        %v2082 = vpop.f32.mrf.mxu0
        %v2083 = vadd.f32 %v1994, %v2082
        %2084 = vmatmul.f32.gmra.mxu0 %v1398
        %v2085 = vpop.f32.mrf.mxu0
        %v2086 = vadd.f32 %v1997, %v2085
        %2087 = vmatmul.f32.gmra.mxu0 %v1400
        %v2088 = vpop.f32.mrf.mxu0
        %v2089 = vadd.f32 %v2000, %v2088
        %2090 = vdwg.mxu0
        %2091 = vmatpush.msra.mxu0 %v1642
        %2092 = vmatpush.msra.mxu0 %v1626
        %2093 = vmatpush.msra.mxu0 %v1610
        %2094 = vmatpush.msra.mxu0 %v1594
        %2095 = vmatpush.msra.mxu0 %v1578
        %2096 = vmatpush.msra.mxu0 %v1562
        %2097 = vmatpush.msra.mxu0 %v1546
        %2098 = vmatpush.msra.mxu0 %v1530
        %2099 = vmatpush.msra.mxu0 %v1514
        %2100 = vmatpush.msra.mxu0 %v1498
        %2101 = vmatpush.msra.mxu0 %v1482
        %2102 = vmatpush.msra.mxu0 %v1466
        %2103 = vmatpush.msra.mxu0 %v1450
        %2104 = vmatpush.msra.mxu0 %v1434
        %2105 = vmatpush.msra.mxu0 %v1418
        %2106 = vmatpush.msra.mxu0 %v1402
        %2107 = vmatmul.f32.gmra.mxu0 %v1353
        %v2108 = vpop.f32.mrf.mxu0
        %v2109 = vadd.f32 0.0, %v2108
        %2110 = vmatmul.f32.gmra.mxu0 %v1355
        %v2111 = vpop.f32.mrf.mxu0
        %v2112 = vadd.f32 0.0, %v2111
        %2113 = vmatmul.f32.gmra.mxu0 %v1357
        %v2114 = vpop.f32.mrf.mxu0
        %v2115 = vadd.f32 0.0, %v2114
        %2116 = vmatmul.f32.gmra.mxu0 %v1359
        %v2117 = vpop.f32.mrf.mxu0
        %v2118 = vadd.f32 0.0, %v2117
        %2119 = vmatmul.f32.gmra.mxu0 %v1361
        %v2120 = vpop.f32.mrf.mxu0
        %v2121 = vadd.f32 0.0, %v2120
        %2122 = vmatmul.f32.gmra.mxu0 %v1363
        %v2123 = vpop.f32.mrf.mxu0
        %v2124 = vadd.f32 0.0, %v2123
        %2125 = vmatmul.f32.gmra.mxu0 %v1365
        %v2126 = vpop.f32.mrf.mxu0
        %v2127 = vadd.f32 0.0, %v2126
        %2128 = vmatmul.f32.gmra.mxu0 %v1367
        %v2129 = vpop.f32.mrf.mxu0
        %v2130 = vadd.f32 0.0, %v2129
        %2131 = vmatmul.f32.gmra.mxu0 %v1369
        %v2132 = vpop.f32.mrf.mxu0
        %v2133 = vadd.f32 0.0, %v2132
        %2134 = vmatmul.f32.gmra.mxu0 %v1371
        %v2135 = vpop.f32.mrf.mxu0
        %v2136 = vadd.f32 0.0, %v2135
        %2137 = vmatmul.f32.gmra.mxu0 %v1373
        %v2138 = vpop.f32.mrf.mxu0
        %v2139 = vadd.f32 0.0, %v2138
        %2140 = vmatmul.f32.gmra.mxu0 %v1375
        %v2141 = vpop.f32.mrf.mxu0
        %v2142 = vadd.f32 0.0, %v2141
        %2143 = vmatmul.f32.gmra.mxu0 %v1377
        %v2144 = vpop.f32.mrf.mxu0
        %v2145 = vadd.f32 0.0, %v2144
        %2146 = vmatmul.f32.gmra.mxu0 %v1379
        %v2147 = vpop.f32.mrf.mxu0
        %v2148 = vadd.f32 0.0, %v2147
        %2149 = vmatmul.f32.gmra.mxu0 %v1381
        %v2150 = vpop.f32.mrf.mxu0
        %v2151 = vadd.f32 0.0, %v2150
        %2152 = vmatmul.f32.gmra.mxu0 %v1383
        %v2153 = vpop.f32.mrf.mxu0
        %v2154 = vadd.f32 0.0, %v2153
        %2155 = vmatmul.f32.gmra.mxu0 %v1385
        %v2156 = vpop.f32.mrf.mxu0
        %v2157 = vadd.f32 0.0, %v2156
        %2158 = vmatmul.f32.gmra.mxu0 %v1387
        %v2159 = vpop.f32.mrf.mxu0
        %v2160 = vadd.f32 0.0, %v2159
        %2161 = vmatmul.f32.gmra.mxu0 %v1389
        %v2162 = vpop.f32.mrf.mxu0
        %v2163 = vadd.f32 0.0, %v2162
        %2164 = vmatmul.f32.gmra.mxu0 %v1391
        %v2165 = vpop.f32.mrf.mxu0
        %v2166 = vadd.f32 0.0, %v2165
        %2167 = vmatmul.f32.gmra.mxu0 %v1393
        %v2168 = vpop.f32.mrf.mxu0
        %v2169 = vadd.f32 0.0, %v2168
        %2170 = vmatmul.f32.gmra.mxu0 %v1395
        %v2171 = vpop.f32.mrf.mxu0
        %v2172 = vadd.f32 0.0, %v2171
        %2173 = vmatmul.f32.gmra.mxu0 %v1397
        %v2174 = vpop.f32.mrf.mxu0
        %v2175 = vadd.f32 0.0, %v2174
        %2176 = vmatmul.f32.gmra.mxu0 %v1399
        %v2177 = vpop.f32.mrf.mxu0
        %v2178 = vadd.f32 0.0, %v2177
        %2179 = vdwg.mxu0
        %2180 = vmatpush.msra.mxu0 %v1898
        %2181 = vmatpush.msra.mxu0 %v1882
        %2182 = vmatpush.msra.mxu0 %v1866
        %2183 = vmatpush.msra.mxu0 %v1850
        %2184 = vmatpush.msra.mxu0 %v1834
        %2185 = vmatpush.msra.mxu0 %v1818
        %2186 = vmatpush.msra.mxu0 %v1802
        %2187 = vmatpush.msra.mxu0 %v1786
        %2188 = vmatpush.msra.mxu0 %v1770
        %2189 = vmatpush.msra.mxu0 %v1754
        %2190 = vmatpush.msra.mxu0 %v1738
        %2191 = vmatpush.msra.mxu0 %v1722
        %2192 = vmatpush.msra.mxu0 %v1706
        %2193 = vmatpush.msra.mxu0 %v1690
        %2194 = vmatpush.msra.mxu0 %v1674
        %2195 = vmatpush.msra.mxu0 %v1658
        %2196 = vmatmul.f32.gmra.mxu0 %v1354
        %v2197 = vpop.f32.mrf.mxu0
        %v2198 = vadd.f32 %v2109, %v2197
        %2199 = vmatmul.f32.gmra.mxu0 %v1356
        %v2200 = vpop.f32.mrf.mxu0
        %v2201 = vadd.f32 %v2112, %v2200
        %2202 = vmatmul.f32.gmra.mxu0 %v1358
        %v2203 = vpop.f32.mrf.mxu0
        %v2204 = vadd.f32 %v2115, %v2203
        %2205 = vmatmul.f32.gmra.mxu0 %v1360
        %v2206 = vpop.f32.mrf.mxu0
        %v2207 = vadd.f32 %v2118, %v2206
        %2208 = vmatmul.f32.gmra.mxu0 %v1362
        %v2209 = vpop.f32.mrf.mxu0
        %v2210 = vadd.f32 %v2121, %v2209
        %2211 = vmatmul.f32.gmra.mxu0 %v1364
        %v2212 = vpop.f32.mrf.mxu0
        %v2213 = vadd.f32 %v2124, %v2212
        %2214 = vmatmul.f32.gmra.mxu0 %v1366
        %v2215 = vpop.f32.mrf.mxu0
        %v2216 = vadd.f32 %v2127, %v2215
        %2217 = vmatmul.f32.gmra.mxu0 %v1368
        %v2218 = vpop.f32.mrf.mxu0
        %v2219 = vadd.f32 %v2130, %v2218
        %2220 = vmatmul.f32.gmra.mxu0 %v1370
        %v2221 = vpop.f32.mrf.mxu0
        %v2222 = vadd.f32 %v2133, %v2221
        %2223 = vmatmul.f32.gmra.mxu0 %v1372
        %v2224 = vpop.f32.mrf.mxu0
        %v2225 = vadd.f32 %v2136, %v2224
        %2226 = vmatmul.f32.gmra.mxu0 %v1374
        %v2227 = vpop.f32.mrf.mxu0
        %v2228 = vadd.f32 %v2139, %v2227
        %2229 = vmatmul.f32.gmra.mxu0 %v1376
        %v2230 = vpop.f32.mrf.mxu0
        %v2231 = vadd.f32 %v2142, %v2230
        %2232 = vmatmul.f32.gmra.mxu0 %v1378
        %v2233 = vpop.f32.mrf.mxu0
        %v2234 = vadd.f32 %v2145, %v2233
        %2235 = vmatmul.f32.gmra.mxu0 %v1380
        %v2236 = vpop.f32.mrf.mxu0
        %v2237 = vadd.f32 %v2148, %v2236
        %2238 = vmatmul.f32.gmra.mxu0 %v1382
        %v2239 = vpop.f32.mrf.mxu0
        %v2240 = vadd.f32 %v2151, %v2239
        %2241 = vmatmul.f32.gmra.mxu0 %v1384
        %v2242 = vpop.f32.mrf.mxu0
        %v2243 = vadd.f32 %v2154, %v2242
        %2244 = vmatmul.f32.gmra.mxu0 %v1386
        %v2245 = vpop.f32.mrf.mxu0
        %v2246 = vadd.f32 %v2157, %v2245
        %2247 = vmatmul.f32.gmra.mxu0 %v1388
        %v2248 = vpop.f32.mrf.mxu0
        %v2249 = vadd.f32 %v2160, %v2248
        %2250 = vmatmul.f32.gmra.mxu0 %v1390
        %v2251 = vpop.f32.mrf.mxu0
        %v2252 = vadd.f32 %v2163, %v2251
        %2253 = vmatmul.f32.gmra.mxu0 %v1392
        %v2254 = vpop.f32.mrf.mxu0
        %v2255 = vadd.f32 %v2166, %v2254
        %2256 = vmatmul.f32.gmra.mxu0 %v1394
        %v2257 = vpop.f32.mrf.mxu0
        %v2258 = vadd.f32 %v2169, %v2257
        %2259 = vmatmul.f32.gmra.mxu0 %v1396
        %v2260 = vpop.f32.mrf.mxu0
        %v2261 = vadd.f32 %v2172, %v2260
        %2262 = vmatmul.f32.gmra.mxu0 %v1398
        %v2263 = vpop.f32.mrf.mxu0
        %v2264 = vadd.f32 %v2175, %v2263
        %2265 = vmatmul.f32.gmra.mxu0 %v1400
        %v2266 = vpop.f32.mrf.mxu0
        %v2267 = vadd.f32 %v2178, %v2266
        %2268 = vdwg.mxu0
        %2269 = vmatpush.msra.mxu0 %v1643
        %2270 = vmatpush.msra.mxu0 %v1627
        %2271 = vmatpush.msra.mxu0 %v1611
        %2272 = vmatpush.msra.mxu0 %v1595
        %2273 = vmatpush.msra.mxu0 %v1579
        %2274 = vmatpush.msra.mxu0 %v1563
        %2275 = vmatpush.msra.mxu0 %v1547
        %2276 = vmatpush.msra.mxu0 %v1531
        %2277 = vmatpush.msra.mxu0 %v1515
        %2278 = vmatpush.msra.mxu0 %v1499
        %2279 = vmatpush.msra.mxu0 %v1483
        %2280 = vmatpush.msra.mxu0 %v1467
        %2281 = vmatpush.msra.mxu0 %v1451
        %2282 = vmatpush.msra.mxu0 %v1435
        %2283 = vmatpush.msra.mxu0 %v1419
        %2284 = vmatpush.msra.mxu0 %v1403
        %2285 = vmatmul.f32.gmra.mxu0 %v1353
        %v2286 = vpop.f32.mrf.mxu0
        %v2287 = vadd.f32 0.0, %v2286
        %2288 = vmatmul.f32.gmra.mxu0 %v1355
        %v2289 = vpop.f32.mrf.mxu0
        %v2290 = vadd.f32 0.0, %v2289
        %2291 = vmatmul.f32.gmra.mxu0 %v1357
        %v2292 = vpop.f32.mrf.mxu0
        %v2293 = vadd.f32 0.0, %v2292
        %2294 = vmatmul.f32.gmra.mxu0 %v1359
        %v2295 = vpop.f32.mrf.mxu0
        %v2296 = vadd.f32 0.0, %v2295
        %2297 = vmatmul.f32.gmra.mxu0 %v1361
        %v2298 = vpop.f32.mrf.mxu0
        %v2299 = vadd.f32 0.0, %v2298
        %2300 = vmatmul.f32.gmra.mxu0 %v1363
        %v2301 = vpop.f32.mrf.mxu0
        %v2302 = vadd.f32 0.0, %v2301
        %2303 = vmatmul.f32.gmra.mxu0 %v1365
        %v2304 = vpop.f32.mrf.mxu0
        %v2305 = vadd.f32 0.0, %v2304
        %2306 = vmatmul.f32.gmra.mxu0 %v1367
        %v2307 = vpop.f32.mrf.mxu0
        %v2308 = vadd.f32 0.0, %v2307
        %2309 = vmatmul.f32.gmra.mxu0 %v1369
        %v2310 = vpop.f32.mrf.mxu0
        %v2311 = vadd.f32 0.0, %v2310
        %2312 = vmatmul.f32.gmra.mxu0 %v1371
        %v2313 = vpop.f32.mrf.mxu0
        %v2314 = vadd.f32 0.0, %v2313
        %2315 = vmatmul.f32.gmra.mxu0 %v1373
        %v2316 = vpop.f32.mrf.mxu0
        %v2317 = vadd.f32 0.0, %v2316
        %2318 = vmatmul.f32.gmra.mxu0 %v1375
        %v2319 = vpop.f32.mrf.mxu0
        %v2320 = vadd.f32 0.0, %v2319
        %2321 = vmatmul.f32.gmra.mxu0 %v1377
        %v2322 = vpop.f32.mrf.mxu0
        %v2323 = vadd.f32 0.0, %v2322
        %2324 = vmatmul.f32.gmra.mxu0 %v1379
        %v2325 = vpop.f32.mrf.mxu0
        %v2326 = vadd.f32 0.0, %v2325
        %2327 = vmatmul.f32.gmra.mxu0 %v1381
        %v2328 = vpop.f32.mrf.mxu0
        %v2329 = vadd.f32 0.0, %v2328
        %2330 = vmatmul.f32.gmra.mxu0 %v1383
        %v2331 = vpop.f32.mrf.mxu0
        %v2332 = vadd.f32 0.0, %v2331
        %2333 = vmatmul.f32.gmra.mxu0 %v1385
        %v2334 = vpop.f32.mrf.mxu0
        %v2335 = vadd.f32 0.0, %v2334
        %2336 = vmatmul.f32.gmra.mxu0 %v1387
        %v2337 = vpop.f32.mrf.mxu0
        %v2338 = vadd.f32 0.0, %v2337
        %2339 = vmatmul.f32.gmra.mxu0 %v1389
        %v2340 = vpop.f32.mrf.mxu0
        %v2341 = vadd.f32 0.0, %v2340
        %2342 = vmatmul.f32.gmra.mxu0 %v1391
        %v2343 = vpop.f32.mrf.mxu0
        %v2344 = vadd.f32 0.0, %v2343
        %2345 = vmatmul.f32.gmra.mxu0 %v1393
        %v2346 = vpop.f32.mrf.mxu0
        %v2347 = vadd.f32 0.0, %v2346
        %2348 = vmatmul.f32.gmra.mxu0 %v1395
        %v2349 = vpop.f32.mrf.mxu0
        %v2350 = vadd.f32 0.0, %v2349
        %2351 = vmatmul.f32.gmra.mxu0 %v1397
        %v2352 = vpop.f32.mrf.mxu0
        %v2353 = vadd.f32 0.0, %v2352
        %2354 = vmatmul.f32.gmra.mxu0 %v1399
        %v2355 = vpop.f32.mrf.mxu0
        %v2356 = vadd.f32 0.0, %v2355
        %2357 = vdwg.mxu0
        %2358 = vmatpush.msra.mxu0 %v1899
        %2359 = vmatpush.msra.mxu0 %v1883
        %2360 = vmatpush.msra.mxu0 %v1867
        %2361 = vmatpush.msra.mxu0 %v1851
        %2362 = vmatpush.msra.mxu0 %v1835
        %2363 = vmatpush.msra.mxu0 %v1819
        %2364 = vmatpush.msra.mxu0 %v1803
        %2365 = vmatpush.msra.mxu0 %v1787
        %2366 = vmatpush.msra.mxu0 %v1771
        %2367 = vmatpush.msra.mxu0 %v1755
        %2368 = vmatpush.msra.mxu0 %v1739
        %2369 = vmatpush.msra.mxu0 %v1723
        %2370 = vmatpush.msra.mxu0 %v1707
        %2371 = vmatpush.msra.mxu0 %v1691
        %2372 = vmatpush.msra.mxu0 %v1675
        %2373 = vmatpush.msra.mxu0 %v1659
        %2374 = vmatmul.f32.gmra.mxu0 %v1354
        %v2375 = vpop.f32.mrf.mxu0
        %v2376 = vadd.f32 %v2287, %v2375
        %2377 = vmatmul.f32.gmra.mxu0 %v1356
        %v2378 = vpop.f32.mrf.mxu0
        %v2379 = vadd.f32 %v2290, %v2378
        %2380 = vmatmul.f32.gmra.mxu0 %v1358
        %v2381 = vpop.f32.mrf.mxu0
        %v2382 = vadd.f32 %v2293, %v2381
        %2383 = vmatmul.f32.gmra.mxu0 %v1360
        %v2384 = vpop.f32.mrf.mxu0
        %v2385 = vadd.f32 %v2296, %v2384
        %2386 = vmatmul.f32.gmra.mxu0 %v1362
        %v2387 = vpop.f32.mrf.mxu0
        %v2388 = vadd.f32 %v2299, %v2387
        %2389 = vmatmul.f32.gmra.mxu0 %v1364
        %v2390 = vpop.f32.mrf.mxu0
        %v2391 = vadd.f32 %v2302, %v2390
        %2392 = vmatmul.f32.gmra.mxu0 %v1366
        %v2393 = vpop.f32.mrf.mxu0
        %v2394 = vadd.f32 %v2305, %v2393
        %2395 = vmatmul.f32.gmra.mxu0 %v1368
        %v2396 = vpop.f32.mrf.mxu0
        %v2397 = vadd.f32 %v2308, %v2396
        %2398 = vmatmul.f32.gmra.mxu0 %v1370
        %v2399 = vpop.f32.mrf.mxu0
        %v2400 = vadd.f32 %v2311, %v2399
        %2401 = vmatmul.f32.gmra.mxu0 %v1372
        %v2402 = vpop.f32.mrf.mxu0
        %v2403 = vadd.f32 %v2314, %v2402
        %2404 = vmatmul.f32.gmra.mxu0 %v1374
        %v2405 = vpop.f32.mrf.mxu0
        %v2406 = vadd.f32 %v2317, %v2405
        %2407 = vmatmul.f32.gmra.mxu0 %v1376
        %v2408 = vpop.f32.mrf.mxu0
        %v2409 = vadd.f32 %v2320, %v2408
        %2410 = vmatmul.f32.gmra.mxu0 %v1378
        %v2411 = vpop.f32.mrf.mxu0
        %v2412 = vadd.f32 %v2323, %v2411
        %2413 = vmatmul.f32.gmra.mxu0 %v1380
        %v2414 = vpop.f32.mrf.mxu0
        %v2415 = vadd.f32 %v2326, %v2414
        %2416 = vmatmul.f32.gmra.mxu0 %v1382
        %v2417 = vpop.f32.mrf.mxu0
        %v2418 = vadd.f32 %v2329, %v2417
        %2419 = vmatmul.f32.gmra.mxu0 %v1384
        %v2420 = vpop.f32.mrf.mxu0
        %v2421 = vadd.f32 %v2332, %v2420
        %2422 = vmatmul.f32.gmra.mxu0 %v1386
        %v2423 = vpop.f32.mrf.mxu0
        %v2424 = vadd.f32 %v2335, %v2423
        %2425 = vmatmul.f32.gmra.mxu0 %v1388
        %v2426 = vpop.f32.mrf.mxu0
        %v2427 = vadd.f32 %v2338, %v2426
        %2428 = vmatmul.f32.gmra.mxu0 %v1390
        %v2429 = vpop.f32.mrf.mxu0
        %v2430 = vadd.f32 %v2341, %v2429
        %2431 = vmatmul.f32.gmra.mxu0 %v1392
        %v2432 = vpop.f32.mrf.mxu0
        %v2433 = vadd.f32 %v2344, %v2432
        %2434 = vmatmul.f32.gmra.mxu0 %v1394
        %v2435 = vpop.f32.mrf.mxu0
        %v2436 = vadd.f32 %v2347, %v2435
        %2437 = vmatmul.f32.gmra.mxu0 %v1396
        %v2438 = vpop.f32.mrf.mxu0
        %v2439 = vadd.f32 %v2350, %v2438
        %2440 = vmatmul.f32.gmra.mxu0 %v1398
        %v2441 = vpop.f32.mrf.mxu0
        %v2442 = vadd.f32 %v2353, %v2441
        %2443 = vmatmul.f32.gmra.mxu0 %v1400
        %v2444 = vpop.f32.mrf.mxu0
        %v2445 = vadd.f32 %v2356, %v2444
        %2446 = vdwg.mxu0
        %2447 = vmatpush.msra.mxu0 %v1644
        %2448 = vmatpush.msra.mxu0 %v1628
        %2449 = vmatpush.msra.mxu0 %v1612
        %2450 = vmatpush.msra.mxu0 %v1596
        %2451 = vmatpush.msra.mxu0 %v1580
        %2452 = vmatpush.msra.mxu0 %v1564
        %2453 = vmatpush.msra.mxu0 %v1548
        %2454 = vmatpush.msra.mxu0 %v1532
        %2455 = vmatpush.msra.mxu0 %v1516
        %2456 = vmatpush.msra.mxu0 %v1500
        %2457 = vmatpush.msra.mxu0 %v1484
        %2458 = vmatpush.msra.mxu0 %v1468
        %2459 = vmatpush.msra.mxu0 %v1452
        %2460 = vmatpush.msra.mxu0 %v1436
        %2461 = vmatpush.msra.mxu0 %v1420
        %2462 = vmatpush.msra.mxu0 %v1404
        %2463 = vmatmul.f32.gmra.mxu0 %v1353
        %v2464 = vpop.f32.mrf.mxu0
        %v2465 = vadd.f32 0.0, %v2464
        %2466 = vmatmul.f32.gmra.mxu0 %v1355
        %v2467 = vpop.f32.mrf.mxu0
        %v2468 = vadd.f32 0.0, %v2467
        %2469 = vmatmul.f32.gmra.mxu0 %v1357
        %v2470 = vpop.f32.mrf.mxu0
        %v2471 = vadd.f32 0.0, %v2470
        %2472 = vmatmul.f32.gmra.mxu0 %v1359
        %v2473 = vpop.f32.mrf.mxu0
        %v2474 = vadd.f32 0.0, %v2473
        %2475 = vmatmul.f32.gmra.mxu0 %v1361
        %v2476 = vpop.f32.mrf.mxu0
        %v2477 = vadd.f32 0.0, %v2476
        %2478 = vmatmul.f32.gmra.mxu0 %v1363
        %v2479 = vpop.f32.mrf.mxu0
        %v2480 = vadd.f32 0.0, %v2479
        %2481 = vmatmul.f32.gmra.mxu0 %v1365
        %v2482 = vpop.f32.mrf.mxu0
        %v2483 = vadd.f32 0.0, %v2482
        %2484 = vmatmul.f32.gmra.mxu0 %v1367
        %v2485 = vpop.f32.mrf.mxu0
        %v2486 = vadd.f32 0.0, %v2485
        %2487 = vmatmul.f32.gmra.mxu0 %v1369
        %v2488 = vpop.f32.mrf.mxu0
        %v2489 = vadd.f32 0.0, %v2488
        %2490 = vmatmul.f32.gmra.mxu0 %v1371
        %v2491 = vpop.f32.mrf.mxu0
        %v2492 = vadd.f32 0.0, %v2491
        %2493 = vmatmul.f32.gmra.mxu0 %v1373
        %v2494 = vpop.f32.mrf.mxu0
        %v2495 = vadd.f32 0.0, %v2494
        %2496 = vmatmul.f32.gmra.mxu0 %v1375
        %v2497 = vpop.f32.mrf.mxu0
        %v2498 = vadd.f32 0.0, %v2497
        %2499 = vmatmul.f32.gmra.mxu0 %v1377
        %v2500 = vpop.f32.mrf.mxu0
        %v2501 = vadd.f32 0.0, %v2500
        %2502 = vmatmul.f32.gmra.mxu0 %v1379
        %v2503 = vpop.f32.mrf.mxu0
        %v2504 = vadd.f32 0.0, %v2503
        %2505 = vmatmul.f32.gmra.mxu0 %v1381
        %v2506 = vpop.f32.mrf.mxu0
        %v2507 = vadd.f32 0.0, %v2506
        %2508 = vmatmul.f32.gmra.mxu0 %v1383
        %v2509 = vpop.f32.mrf.mxu0
        %v2510 = vadd.f32 0.0, %v2509
        %2511 = vmatmul.f32.gmra.mxu0 %v1385
        %v2512 = vpop.f32.mrf.mxu0
        %v2513 = vadd.f32 0.0, %v2512
        %2514 = vmatmul.f32.gmra.mxu0 %v1387
        %v2515 = vpop.f32.mrf.mxu0
        %v2516 = vadd.f32 0.0, %v2515
        %2517 = vmatmul.f32.gmra.mxu0 %v1389
        %v2518 = vpop.f32.mrf.mxu0
        %v2519 = vadd.f32 0.0, %v2518
        %2520 = vmatmul.f32.gmra.mxu0 %v1391
        %v2521 = vpop.f32.mrf.mxu0
        %v2522 = vadd.f32 0.0, %v2521
        %2523 = vmatmul.f32.gmra.mxu0 %v1393
        %v2524 = vpop.f32.mrf.mxu0
        %v2525 = vadd.f32 0.0, %v2524
        %2526 = vmatmul.f32.gmra.mxu0 %v1395
        %v2527 = vpop.f32.mrf.mxu0
        %v2528 = vadd.f32 0.0, %v2527
        %2529 = vmatmul.f32.gmra.mxu0 %v1397
        %v2530 = vpop.f32.mrf.mxu0
        %v2531 = vadd.f32 0.0, %v2530
        %2532 = vmatmul.f32.gmra.mxu0 %v1399
        %v2533 = vpop.f32.mrf.mxu0
        %v2534 = vadd.f32 0.0, %v2533
        %2535 = vdwg.mxu0
        %2536 = vmatpush.msra.mxu0 %v1900
        %2537 = vmatpush.msra.mxu0 %v1884
        %2538 = vmatpush.msra.mxu0 %v1868
        %2539 = vmatpush.msra.mxu0 %v1852
        %2540 = vmatpush.msra.mxu0 %v1836
        %2541 = vmatpush.msra.mxu0 %v1820
        %2542 = vmatpush.msra.mxu0 %v1804
        %2543 = vmatpush.msra.mxu0 %v1788
        %2544 = vmatpush.msra.mxu0 %v1772
        %2545 = vmatpush.msra.mxu0 %v1756
        %2546 = vmatpush.msra.mxu0 %v1740
        %2547 = vmatpush.msra.mxu0 %v1724
        %2548 = vmatpush.msra.mxu0 %v1708
        %2549 = vmatpush.msra.mxu0 %v1692
        %2550 = vmatpush.msra.mxu0 %v1676
        %2551 = vmatpush.msra.mxu0 %v1660
        %2552 = vmatmul.f32.gmra.mxu0 %v1354
        %v2553 = vpop.f32.mrf.mxu0
        %v2554 = vadd.f32 %v2465, %v2553
        %2555 = vmatmul.f32.gmra.mxu0 %v1356
        %v2556 = vpop.f32.mrf.mxu0
        %v2557 = vadd.f32 %v2468, %v2556
        %2558 = vmatmul.f32.gmra.mxu0 %v1358
        %v2559 = vpop.f32.mrf.mxu0
        %v2560 = vadd.f32 %v2471, %v2559
        %2561 = vmatmul.f32.gmra.mxu0 %v1360
        %v2562 = vpop.f32.mrf.mxu0
        %v2563 = vadd.f32 %v2474, %v2562
        %2564 = vmatmul.f32.gmra.mxu0 %v1362
        %v2565 = vpop.f32.mrf.mxu0
        %v2566 = vadd.f32 %v2477, %v2565
        %2567 = vmatmul.f32.gmra.mxu0 %v1364
        %v2568 = vpop.f32.mrf.mxu0
        %v2569 = vadd.f32 %v2480, %v2568
        %2570 = vmatmul.f32.gmra.mxu0 %v1366
        %v2571 = vpop.f32.mrf.mxu0
        %v2572 = vadd.f32 %v2483, %v2571
        %2573 = vmatmul.f32.gmra.mxu0 %v1368
        %v2574 = vpop.f32.mrf.mxu0
        %v2575 = vadd.f32 %v2486, %v2574
        %2576 = vmatmul.f32.gmra.mxu0 %v1370
        %v2577 = vpop.f32.mrf.mxu0
        %v2578 = vadd.f32 %v2489, %v2577
        %2579 = vmatmul.f32.gmra.mxu0 %v1372
        %v2580 = vpop.f32.mrf.mxu0
        %v2581 = vadd.f32 %v2492, %v2580
        %2582 = vmatmul.f32.gmra.mxu0 %v1374
        %v2583 = vpop.f32.mrf.mxu0
        %v2584 = vadd.f32 %v2495, %v2583
        %2585 = vmatmul.f32.gmra.mxu0 %v1376
        %v2586 = vpop.f32.mrf.mxu0
        %v2587 = vadd.f32 %v2498, %v2586
        %2588 = vmatmul.f32.gmra.mxu0 %v1378
        %v2589 = vpop.f32.mrf.mxu0
        %v2590 = vadd.f32 %v2501, %v2589
        %2591 = vmatmul.f32.gmra.mxu0 %v1380
        %v2592 = vpop.f32.mrf.mxu0
        %v2593 = vadd.f32 %v2504, %v2592
        %2594 = vmatmul.f32.gmra.mxu0 %v1382
        %v2595 = vpop.f32.mrf.mxu0
        %v2596 = vadd.f32 %v2507, %v2595
        %2597 = vmatmul.f32.gmra.mxu0 %v1384
        %v2598 = vpop.f32.mrf.mxu0
        %v2599 = vadd.f32 %v2510, %v2598
        %2600 = vmatmul.f32.gmra.mxu0 %v1386
        %v2601 = vpop.f32.mrf.mxu0
        %v2602 = vadd.f32 %v2513, %v2601
        %2603 = vmatmul.f32.gmra.mxu0 %v1388
        %v2604 = vpop.f32.mrf.mxu0
        %v2605 = vadd.f32 %v2516, %v2604
        %2606 = vmatmul.f32.gmra.mxu0 %v1390
        %v2607 = vpop.f32.mrf.mxu0
        %v2608 = vadd.f32 %v2519, %v2607
        %2609 = vmatmul.f32.gmra.mxu0 %v1392
        %v2610 = vpop.f32.mrf.mxu0
        %v2611 = vadd.f32 %v2522, %v2610
        %2612 = vmatmul.f32.gmra.mxu0 %v1394
        %v2613 = vpop.f32.mrf.mxu0
        %v2614 = vadd.f32 %v2525, %v2613
        %2615 = vmatmul.f32.gmra.mxu0 %v1396
        %v2616 = vpop.f32.mrf.mxu0
        %v2617 = vadd.f32 %v2528, %v2616
        %2618 = vmatmul.f32.gmra.mxu0 %v1398
        %v2619 = vpop.f32.mrf.mxu0
        %v2620 = vadd.f32 %v2531, %v2619
        %2621 = vmatmul.f32.gmra.mxu0 %v1400
        %v2622 = vpop.f32.mrf.mxu0
        %v2623 = vadd.f32 %v2534, %v2622
        %2624 = vdwg.mxu0
        %2625 = vmatpush.msra.mxu0 %v1645
        %2626 = vmatpush.msra.mxu0 %v1629
        %2627 = vmatpush.msra.mxu0 %v1613
        %2628 = vmatpush.msra.mxu0 %v1597
        %2629 = vmatpush.msra.mxu0 %v1581
        %2630 = vmatpush.msra.mxu0 %v1565
        %2631 = vmatpush.msra.mxu0 %v1549
        %2632 = vmatpush.msra.mxu0 %v1533
        %2633 = vmatpush.msra.mxu0 %v1517
        %2634 = vmatpush.msra.mxu0 %v1501
        %2635 = vmatpush.msra.mxu0 %v1485
        %2636 = vmatpush.msra.mxu0 %v1469
        %2637 = vmatpush.msra.mxu0 %v1453
        %2638 = vmatpush.msra.mxu0 %v1437
        %2639 = vmatpush.msra.mxu0 %v1421
        %2640 = vmatpush.msra.mxu0 %v1405
        %2641 = vmatmul.f32.gmra.mxu0 %v1353
        %v2642 = vpop.f32.mrf.mxu0
        %v2643 = vadd.f32 0.0, %v2642
        %2644 = vmatmul.f32.gmra.mxu0 %v1355
        %v2645 = vpop.f32.mrf.mxu0
        %v2646 = vadd.f32 0.0, %v2645
        %2647 = vmatmul.f32.gmra.mxu0 %v1357
        %v2648 = vpop.f32.mrf.mxu0
        %v2649 = vadd.f32 0.0, %v2648
        %2650 = vmatmul.f32.gmra.mxu0 %v1359
        %v2651 = vpop.f32.mrf.mxu0
        %v2652 = vadd.f32 0.0, %v2651
        %2653 = vmatmul.f32.gmra.mxu0 %v1361
        %v2654 = vpop.f32.mrf.mxu0
        %v2655 = vadd.f32 0.0, %v2654
        %2656 = vmatmul.f32.gmra.mxu0 %v1363
        %v2657 = vpop.f32.mrf.mxu0
        %v2658 = vadd.f32 0.0, %v2657
        %2659 = vmatmul.f32.gmra.mxu0 %v1365
        %v2660 = vpop.f32.mrf.mxu0
        %v2661 = vadd.f32 0.0, %v2660
        %2662 = vmatmul.f32.gmra.mxu0 %v1367
        %v2663 = vpop.f32.mrf.mxu0
        %v2664 = vadd.f32 0.0, %v2663
        %2665 = vmatmul.f32.gmra.mxu0 %v1369
        %v2666 = vpop.f32.mrf.mxu0
        %v2667 = vadd.f32 0.0, %v2666
        %2668 = vmatmul.f32.gmra.mxu0 %v1371
        %v2669 = vpop.f32.mrf.mxu0
        %v2670 = vadd.f32 0.0, %v2669
        %2671 = vmatmul.f32.gmra.mxu0 %v1373
        %v2672 = vpop.f32.mrf.mxu0
        %v2673 = vadd.f32 0.0, %v2672
        %2674 = vmatmul.f32.gmra.mxu0 %v1375
        %v2675 = vpop.f32.mrf.mxu0
        %v2676 = vadd.f32 0.0, %v2675
        %2677 = vmatmul.f32.gmra.mxu0 %v1377
        %v2678 = vpop.f32.mrf.mxu0
        %v2679 = vadd.f32 0.0, %v2678
        %2680 = vmatmul.f32.gmra.mxu0 %v1379
        %v2681 = vpop.f32.mrf.mxu0
        %v2682 = vadd.f32 0.0, %v2681
        %2683 = vmatmul.f32.gmra.mxu0 %v1381
        %v2684 = vpop.f32.mrf.mxu0
        %v2685 = vadd.f32 0.0, %v2684
        %2686 = vmatmul.f32.gmra.mxu0 %v1383
        %v2687 = vpop.f32.mrf.mxu0
        %v2688 = vadd.f32 0.0, %v2687
        %2689 = vmatmul.f32.gmra.mxu0 %v1385
        %v2690 = vpop.f32.mrf.mxu0
        %v2691 = vadd.f32 0.0, %v2690
        %2692 = vmatmul.f32.gmra.mxu0 %v1387
        %v2693 = vpop.f32.mrf.mxu0
        %v2694 = vadd.f32 0.0, %v2693
        %2695 = vmatmul.f32.gmra.mxu0 %v1389
        %v2696 = vpop.f32.mrf.mxu0
        %v2697 = vadd.f32 0.0, %v2696
        %2698 = vmatmul.f32.gmra.mxu0 %v1391
        %v2699 = vpop.f32.mrf.mxu0
        %v2700 = vadd.f32 0.0, %v2699
        %2701 = vmatmul.f32.gmra.mxu0 %v1393
        %v2702 = vpop.f32.mrf.mxu0
        %v2703 = vadd.f32 0.0, %v2702
        %2704 = vmatmul.f32.gmra.mxu0 %v1395
        %v2705 = vpop.f32.mrf.mxu0
        %v2706 = vadd.f32 0.0, %v2705
        %2707 = vmatmul.f32.gmra.mxu0 %v1397
        %v2708 = vpop.f32.mrf.mxu0
        %v2709 = vadd.f32 0.0, %v2708
        %2710 = vmatmul.f32.gmra.mxu0 %v1399
        %v2711 = vpop.f32.mrf.mxu0
        %v2712 = vadd.f32 0.0, %v2711
        %2713 = vdwg.mxu0
        %2714 = vmatpush.msra.mxu0 %v1901
        %2715 = vmatpush.msra.mxu0 %v1885
        %2716 = vmatpush.msra.mxu0 %v1869
        %2717 = vmatpush.msra.mxu0 %v1853
        %2718 = vmatpush.msra.mxu0 %v1837
        %2719 = vmatpush.msra.mxu0 %v1821
        %2720 = vmatpush.msra.mxu0 %v1805
        %2721 = vmatpush.msra.mxu0 %v1789
        %2722 = vmatpush.msra.mxu0 %v1773
        %2723 = vmatpush.msra.mxu0 %v1757
        %2724 = vmatpush.msra.mxu0 %v1741
        %2725 = vmatpush.msra.mxu0 %v1725
        %2726 = vmatpush.msra.mxu0 %v1709
        %2727 = vmatpush.msra.mxu0 %v1693
        %2728 = vmatpush.msra.mxu0 %v1677
        %2729 = vmatpush.msra.mxu0 %v1661
        %2730 = vmatmul.f32.gmra.mxu0 %v1354
        %v2731 = vpop.f32.mrf.mxu0
        %v2732 = vadd.f32 %v2643, %v2731
        %2733 = vmatmul.f32.gmra.mxu0 %v1356
        %v2734 = vpop.f32.mrf.mxu0
        %v2735 = vadd.f32 %v2646, %v2734
        %2736 = vmatmul.f32.gmra.mxu0 %v1358
        %v2737 = vpop.f32.mrf.mxu0
        %v2738 = vadd.f32 %v2649, %v2737
        %2739 = vmatmul.f32.gmra.mxu0 %v1360
        %v2740 = vpop.f32.mrf.mxu0
        %v2741 = vadd.f32 %v2652, %v2740
        %2742 = vmatmul.f32.gmra.mxu0 %v1362
        %v2743 = vpop.f32.mrf.mxu0
        %v2744 = vadd.f32 %v2655, %v2743
        %2745 = vmatmul.f32.gmra.mxu0 %v1364
        %v2746 = vpop.f32.mrf.mxu0
        %v2747 = vadd.f32 %v2658, %v2746
        %2748 = vmatmul.f32.gmra.mxu0 %v1366
        %v2749 = vpop.f32.mrf.mxu0
        %v2750 = vadd.f32 %v2661, %v2749
        %2751 = vmatmul.f32.gmra.mxu0 %v1368
        %v2752 = vpop.f32.mrf.mxu0
        %v2753 = vadd.f32 %v2664, %v2752
        %2754 = vmatmul.f32.gmra.mxu0 %v1370
        %v2755 = vpop.f32.mrf.mxu0
        %v2756 = vadd.f32 %v2667, %v2755
        %2757 = vmatmul.f32.gmra.mxu0 %v1372
        %v2758 = vpop.f32.mrf.mxu0
        %v2759 = vadd.f32 %v2670, %v2758
        %2760 = vmatmul.f32.gmra.mxu0 %v1374
        %v2761 = vpop.f32.mrf.mxu0
        %v2762 = vadd.f32 %v2673, %v2761
        %2763 = vmatmul.f32.gmra.mxu0 %v1376
        %v2764 = vpop.f32.mrf.mxu0
        %v2765 = vadd.f32 %v2676, %v2764
        %2766 = vmatmul.f32.gmra.mxu0 %v1378
        %v2767 = vpop.f32.mrf.mxu0
        %v2768 = vadd.f32 %v2679, %v2767
        %2769 = vmatmul.f32.gmra.mxu0 %v1380
        %v2770 = vpop.f32.mrf.mxu0
        %v2771 = vadd.f32 %v2682, %v2770
        %2772 = vmatmul.f32.gmra.mxu0 %v1382
        %v2773 = vpop.f32.mrf.mxu0
        %v2774 = vadd.f32 %v2685, %v2773
        %2775 = vmatmul.f32.gmra.mxu0 %v1384
        %v2776 = vpop.f32.mrf.mxu0
        %v2777 = vadd.f32 %v2688, %v2776
        %2778 = vmatmul.f32.gmra.mxu0 %v1386
        %v2779 = vpop.f32.mrf.mxu0
        %v2780 = vadd.f32 %v2691, %v2779
        %2781 = vmatmul.f32.gmra.mxu0 %v1388
        %v2782 = vpop.f32.mrf.mxu0
        %v2783 = vadd.f32 %v2694, %v2782
        %2784 = vmatmul.f32.gmra.mxu0 %v1390
        %v2785 = vpop.f32.mrf.mxu0
        %v2786 = vadd.f32 %v2697, %v2785
        %2787 = vmatmul.f32.gmra.mxu0 %v1392
        %v2788 = vpop.f32.mrf.mxu0
        %v2789 = vadd.f32 %v2700, %v2788
        %2790 = vmatmul.f32.gmra.mxu0 %v1394
        %v2791 = vpop.f32.mrf.mxu0
        %v2792 = vadd.f32 %v2703, %v2791
        %2793 = vmatmul.f32.gmra.mxu0 %v1396
        %v2794 = vpop.f32.mrf.mxu0
        %v2795 = vadd.f32 %v2706, %v2794
        %2796 = vmatmul.f32.gmra.mxu0 %v1398
        %v2797 = vpop.f32.mrf.mxu0
        %v2798 = vadd.f32 %v2709, %v2797
        %2799 = vmatmul.f32.gmra.mxu0 %v1400
        %v2800 = vpop.f32.mrf.mxu0
        %v2801 = vadd.f32 %v2712, %v2800
        %2802 = vdwg.mxu0
        %2803 = vmatpush.msra.mxu0 %v1646
        %2804 = vmatpush.msra.mxu0 %v1630
        %2805 = vmatpush.msra.mxu0 %v1614
        %2806 = vmatpush.msra.mxu0 %v1598
        %2807 = vmatpush.msra.mxu0 %v1582
        %2808 = vmatpush.msra.mxu0 %v1566
        %2809 = vmatpush.msra.mxu0 %v1550
        %2810 = vmatpush.msra.mxu0 %v1534
        %2811 = vmatpush.msra.mxu0 %v1518
        %2812 = vmatpush.msra.mxu0 %v1502
        %2813 = vmatpush.msra.mxu0 %v1486
        %2814 = vmatpush.msra.mxu0 %v1470
        %2815 = vmatpush.msra.mxu0 %v1454
        %2816 = vmatpush.msra.mxu0 %v1438
        %2817 = vmatpush.msra.mxu0 %v1422
        %2818 = vmatpush.msra.mxu0 %v1406
        %2819 = vmatmul.f32.gmra.mxu0 %v1353
        %v2820 = vpop.f32.mrf.mxu0
        %v2821 = vadd.f32 0.0, %v2820
        %2822 = vmatmul.f32.gmra.mxu0 %v1355
        %v2823 = vpop.f32.mrf.mxu0
        %v2824 = vadd.f32 0.0, %v2823
        %2825 = vmatmul.f32.gmra.mxu0 %v1357
        %v2826 = vpop.f32.mrf.mxu0
        %v2827 = vadd.f32 0.0, %v2826
        %2828 = vmatmul.f32.gmra.mxu0 %v1359
        %v2829 = vpop.f32.mrf.mxu0
        %v2830 = vadd.f32 0.0, %v2829
        %2831 = vmatmul.f32.gmra.mxu0 %v1361
        %v2832 = vpop.f32.mrf.mxu0
        %v2833 = vadd.f32 0.0, %v2832
        %2834 = vmatmul.f32.gmra.mxu0 %v1363
        %v2835 = vpop.f32.mrf.mxu0
        %v2836 = vadd.f32 0.0, %v2835
        %2837 = vmatmul.f32.gmra.mxu0 %v1365
        %v2838 = vpop.f32.mrf.mxu0
        %v2839 = vadd.f32 0.0, %v2838
        %2840 = vmatmul.f32.gmra.mxu0 %v1367
        %v2841 = vpop.f32.mrf.mxu0
        %v2842 = vadd.f32 0.0, %v2841
        %2843 = vmatmul.f32.gmra.mxu0 %v1369
        %v2844 = vpop.f32.mrf.mxu0
        %v2845 = vadd.f32 0.0, %v2844
        %2846 = vmatmul.f32.gmra.mxu0 %v1371
        %v2847 = vpop.f32.mrf.mxu0
        %v2848 = vadd.f32 0.0, %v2847
        %2849 = vmatmul.f32.gmra.mxu0 %v1373
        %v2850 = vpop.f32.mrf.mxu0
        %v2851 = vadd.f32 0.0, %v2850
        %2852 = vmatmul.f32.gmra.mxu0 %v1375
        %v2853 = vpop.f32.mrf.mxu0
        %v2854 = vadd.f32 0.0, %v2853
        %2855 = vmatmul.f32.gmra.mxu0 %v1377
        %v2856 = vpop.f32.mrf.mxu0
        %v2857 = vadd.f32 0.0, %v2856
        %2858 = vmatmul.f32.gmra.mxu0 %v1379
        %v2859 = vpop.f32.mrf.mxu0
        %v2860 = vadd.f32 0.0, %v2859
        %2861 = vmatmul.f32.gmra.mxu0 %v1381
        %v2862 = vpop.f32.mrf.mxu0
        %v2863 = vadd.f32 0.0, %v2862
        %2864 = vmatmul.f32.gmra.mxu0 %v1383
        %v2865 = vpop.f32.mrf.mxu0
        %v2866 = vadd.f32 0.0, %v2865
        %2867 = vmatmul.f32.gmra.mxu0 %v1385
        %v2868 = vpop.f32.mrf.mxu0
        %v2869 = vadd.f32 0.0, %v2868
        %2870 = vmatmul.f32.gmra.mxu0 %v1387
        %v2871 = vpop.f32.mrf.mxu0
        %v2872 = vadd.f32 0.0, %v2871
        %2873 = vmatmul.f32.gmra.mxu0 %v1389
        %v2874 = vpop.f32.mrf.mxu0
        %v2875 = vadd.f32 0.0, %v2874
        %2876 = vmatmul.f32.gmra.mxu0 %v1391
        %v2877 = vpop.f32.mrf.mxu0
        %v2878 = vadd.f32 0.0, %v2877
        %2879 = vmatmul.f32.gmra.mxu0 %v1393
        %v2880 = vpop.f32.mrf.mxu0
        %v2881 = vadd.f32 0.0, %v2880
        %2882 = vmatmul.f32.gmra.mxu0 %v1395
        %v2883 = vpop.f32.mrf.mxu0
        %v2884 = vadd.f32 0.0, %v2883
        %2885 = vmatmul.f32.gmra.mxu0 %v1397
        %v2886 = vpop.f32.mrf.mxu0
        %v2887 = vadd.f32 0.0, %v2886
        %2888 = vmatmul.f32.gmra.mxu0 %v1399
        %v2889 = vpop.f32.mrf.mxu0
        %v2890 = vadd.f32 0.0, %v2889
        %2891 = vdwg.mxu0
        %2892 = vmatpush.msra.mxu0 %v1902
        %2893 = vmatpush.msra.mxu0 %v1886
        %2894 = vmatpush.msra.mxu0 %v1870
        %2895 = vmatpush.msra.mxu0 %v1854
        %2896 = vmatpush.msra.mxu0 %v1838
        %2897 = vmatpush.msra.mxu0 %v1822
        %2898 = vmatpush.msra.mxu0 %v1806
        %2899 = vmatpush.msra.mxu0 %v1790
        %2900 = vmatpush.msra.mxu0 %v1774
        %2901 = vmatpush.msra.mxu0 %v1758
        %2902 = vmatpush.msra.mxu0 %v1742
        %2903 = vmatpush.msra.mxu0 %v1726
        %2904 = vmatpush.msra.mxu0 %v1710
        %2905 = vmatpush.msra.mxu0 %v1694
        %2906 = vmatpush.msra.mxu0 %v1678
        %2907 = vmatpush.msra.mxu0 %v1662
        %2908 = vmatmul.f32.gmra.mxu0 %v1354
        %v2909 = vpop.f32.mrf.mxu0
        %v2910 = vadd.f32 %v2821, %v2909
        %2911 = vmatmul.f32.gmra.mxu0 %v1356
        %v2912 = vpop.f32.mrf.mxu0
        %v2913 = vadd.f32 %v2824, %v2912
        %2914 = vmatmul.f32.gmra.mxu0 %v1358
        %v2915 = vpop.f32.mrf.mxu0
        %v2916 = vadd.f32 %v2827, %v2915
        %2917 = vmatmul.f32.gmra.mxu0 %v1360
        %v2918 = vpop.f32.mrf.mxu0
        %v2919 = vadd.f32 %v2830, %v2918
        %2920 = vmatmul.f32.gmra.mxu0 %v1362
        %v2921 = vpop.f32.mrf.mxu0
        %v2922 = vadd.f32 %v2833, %v2921
        %2923 = vmatmul.f32.gmra.mxu0 %v1364
        %v2924 = vpop.f32.mrf.mxu0
        %v2925 = vadd.f32 %v2836, %v2924
        %2926 = vmatmul.f32.gmra.mxu0 %v1366
        %v2927 = vpop.f32.mrf.mxu0
        %v2928 = vadd.f32 %v2839, %v2927
        %2929 = vmatmul.f32.gmra.mxu0 %v1368
        %v2930 = vpop.f32.mrf.mxu0
        %v2931 = vadd.f32 %v2842, %v2930
        %2932 = vmatmul.f32.gmra.mxu0 %v1370
        %v2933 = vpop.f32.mrf.mxu0
        %v2934 = vadd.f32 %v2845, %v2933
        %2935 = vmatmul.f32.gmra.mxu0 %v1372
        %v2936 = vpop.f32.mrf.mxu0
        %v2937 = vadd.f32 %v2848, %v2936
        %2938 = vmatmul.f32.gmra.mxu0 %v1374
        %v2939 = vpop.f32.mrf.mxu0
        %v2940 = vadd.f32 %v2851, %v2939
        %2941 = vmatmul.f32.gmra.mxu0 %v1376
        %v2942 = vpop.f32.mrf.mxu0
        %v2943 = vadd.f32 %v2854, %v2942
        %2944 = vmatmul.f32.gmra.mxu0 %v1378
        %v2945 = vpop.f32.mrf.mxu0
        %v2946 = vadd.f32 %v2857, %v2945
        %2947 = vmatmul.f32.gmra.mxu0 %v1380
        %v2948 = vpop.f32.mrf.mxu0
        %v2949 = vadd.f32 %v2860, %v2948
        %2950 = vmatmul.f32.gmra.mxu0 %v1382
        %v2951 = vpop.f32.mrf.mxu0
        %v2952 = vadd.f32 %v2863, %v2951
        %2953 = vmatmul.f32.gmra.mxu0 %v1384
        %v2954 = vpop.f32.mrf.mxu0
        %v2955 = vadd.f32 %v2866, %v2954
        %2956 = vmatmul.f32.gmra.mxu0 %v1386
        %v2957 = vpop.f32.mrf.mxu0
        %v2958 = vadd.f32 %v2869, %v2957
        %2959 = vmatmul.f32.gmra.mxu0 %v1388
        %v2960 = vpop.f32.mrf.mxu0
        %v2961 = vadd.f32 %v2872, %v2960
        %2962 = vmatmul.f32.gmra.mxu0 %v1390
        %v2963 = vpop.f32.mrf.mxu0
        %v2964 = vadd.f32 %v2875, %v2963
        %2965 = vmatmul.f32.gmra.mxu0 %v1392
        %v2966 = vpop.f32.mrf.mxu0
        %v2967 = vadd.f32 %v2878, %v2966
        %2968 = vmatmul.f32.gmra.mxu0 %v1394
        %v2969 = vpop.f32.mrf.mxu0
        %v2970 = vadd.f32 %v2881, %v2969
        %2971 = vmatmul.f32.gmra.mxu0 %v1396
        %v2972 = vpop.f32.mrf.mxu0
        %v2973 = vadd.f32 %v2884, %v2972
        %2974 = vmatmul.f32.gmra.mxu0 %v1398
        %v2975 = vpop.f32.mrf.mxu0
        %v2976 = vadd.f32 %v2887, %v2975
        %2977 = vmatmul.f32.gmra.mxu0 %v1400
        %v2978 = vpop.f32.mrf.mxu0
        %v2979 = vadd.f32 %v2890, %v2978
        %2980 = vdwg.mxu0
        %2981 = vmatpush.msra.mxu0 %v1647
        %2982 = vmatpush.msra.mxu0 %v1631
        %2983 = vmatpush.msra.mxu0 %v1615
        %2984 = vmatpush.msra.mxu0 %v1599
        %2985 = vmatpush.msra.mxu0 %v1583
        %2986 = vmatpush.msra.mxu0 %v1567
        %2987 = vmatpush.msra.mxu0 %v1551
        %2988 = vmatpush.msra.mxu0 %v1535
        %2989 = vmatpush.msra.mxu0 %v1519
        %2990 = vmatpush.msra.mxu0 %v1503
        %2991 = vmatpush.msra.mxu0 %v1487
        %2992 = vmatpush.msra.mxu0 %v1471
        %2993 = vmatpush.msra.mxu0 %v1455
        %2994 = vmatpush.msra.mxu0 %v1439
        %2995 = vmatpush.msra.mxu0 %v1423
        %2996 = vmatpush.msra.mxu0 %v1407
        %2997 = vmatmul.f32.gmra.mxu0 %v1353
        %v2998 = vpop.f32.mrf.mxu0
        %v2999 = vadd.f32 0.0, %v2998
        %3000 = vmatmul.f32.gmra.mxu0 %v1355
        %v3001 = vpop.f32.mrf.mxu0
        %v3002 = vadd.f32 0.0, %v3001
        %3003 = vmatmul.f32.gmra.mxu0 %v1357
        %v3004 = vpop.f32.mrf.mxu0
        %v3005 = vadd.f32 0.0, %v3004
        %3006 = vmatmul.f32.gmra.mxu0 %v1359
        %v3007 = vpop.f32.mrf.mxu0
        %v3008 = vadd.f32 0.0, %v3007
        %3009 = vmatmul.f32.gmra.mxu0 %v1361
        %v3010 = vpop.f32.mrf.mxu0
        %v3011 = vadd.f32 0.0, %v3010
        %3012 = vmatmul.f32.gmra.mxu0 %v1363
        %v3013 = vpop.f32.mrf.mxu0
        %v3014 = vadd.f32 0.0, %v3013
        %3015 = vmatmul.f32.gmra.mxu0 %v1365
        %v3016 = vpop.f32.mrf.mxu0
        %v3017 = vadd.f32 0.0, %v3016
        %3018 = vmatmul.f32.gmra.mxu0 %v1367
        %v3019 = vpop.f32.mrf.mxu0
        %v3020 = vadd.f32 0.0, %v3019
        %3021 = vmatmul.f32.gmra.mxu0 %v1369
        %v3022 = vpop.f32.mrf.mxu0
        %v3023 = vadd.f32 0.0, %v3022
        %3024 = vmatmul.f32.gmra.mxu0 %v1371
        %v3025 = vpop.f32.mrf.mxu0
        %v3026 = vadd.f32 0.0, %v3025
        %3027 = vmatmul.f32.gmra.mxu0 %v1373
        %v3028 = vpop.f32.mrf.mxu0
        %v3029 = vadd.f32 0.0, %v3028
        %3030 = vmatmul.f32.gmra.mxu0 %v1375
        %v3031 = vpop.f32.mrf.mxu0
        %v3032 = vadd.f32 0.0, %v3031
        %3033 = vmatmul.f32.gmra.mxu0 %v1377
        %v3034 = vpop.f32.mrf.mxu0
        %v3035 = vadd.f32 0.0, %v3034
        %3036 = vmatmul.f32.gmra.mxu0 %v1379
        %v3037 = vpop.f32.mrf.mxu0
        %v3038 = vadd.f32 0.0, %v3037
        %3039 = vmatmul.f32.gmra.mxu0 %v1381
        %v3040 = vpop.f32.mrf.mxu0
        %v3041 = vadd.f32 0.0, %v3040
        %3042 = vmatmul.f32.gmra.mxu0 %v1383
        %v3043 = vpop.f32.mrf.mxu0
        %v3044 = vadd.f32 0.0, %v3043
        %3045 = vmatmul.f32.gmra.mxu0 %v1385
        %v3046 = vpop.f32.mrf.mxu0
        %v3047 = vadd.f32 0.0, %v3046
        %3048 = vmatmul.f32.gmra.mxu0 %v1387
        %v3049 = vpop.f32.mrf.mxu0
        %v3050 = vadd.f32 0.0, %v3049
        %3051 = vmatmul.f32.gmra.mxu0 %v1389
        %v3052 = vpop.f32.mrf.mxu0
        %v3053 = vadd.f32 0.0, %v3052
        %3054 = vmatmul.f32.gmra.mxu0 %v1391
        %v3055 = vpop.f32.mrf.mxu0
        %v3056 = vadd.f32 0.0, %v3055
        %3057 = vmatmul.f32.gmra.mxu0 %v1393
        %v3058 = vpop.f32.mrf.mxu0
        %v3059 = vadd.f32 0.0, %v3058
        %3060 = vmatmul.f32.gmra.mxu0 %v1395
        %v3061 = vpop.f32.mrf.mxu0
        %v3062 = vadd.f32 0.0, %v3061
        %3063 = vmatmul.f32.gmra.mxu0 %v1397
        %v3064 = vpop.f32.mrf.mxu0
        %v3065 = vadd.f32 0.0, %v3064
        %3066 = vmatmul.f32.gmra.mxu0 %v1399
        %v3067 = vpop.f32.mrf.mxu0
        %v3068 = vadd.f32 0.0, %v3067
        %3069 = vdwg.mxu0
        %3070 = vmatpush.msra.mxu0 %v1903
        %3071 = vmatpush.msra.mxu0 %v1887
        %3072 = vmatpush.msra.mxu0 %v1871
        %3073 = vmatpush.msra.mxu0 %v1855
        %3074 = vmatpush.msra.mxu0 %v1839
        %3075 = vmatpush.msra.mxu0 %v1823
        %3076 = vmatpush.msra.mxu0 %v1807
        %3077 = vmatpush.msra.mxu0 %v1791
        %3078 = vmatpush.msra.mxu0 %v1775
        %3079 = vmatpush.msra.mxu0 %v1759
        %3080 = vmatpush.msra.mxu0 %v1743
        %3081 = vmatpush.msra.mxu0 %v1727
        %3082 = vmatpush.msra.mxu0 %v1711
        %3083 = vmatpush.msra.mxu0 %v1695
        %3084 = vmatpush.msra.mxu0 %v1679
        %3085 = vmatpush.msra.mxu0 %v1663
        %3086 = vmatmul.f32.gmra.mxu0 %v1354
        %v3087 = vpop.f32.mrf.mxu0
        %v3088 = vadd.f32 %v2999, %v3087
        %3089 = vmatmul.f32.gmra.mxu0 %v1356
        %v3090 = vpop.f32.mrf.mxu0
        %v3091 = vadd.f32 %v3002, %v3090
        %3092 = vmatmul.f32.gmra.mxu0 %v1358
        %v3093 = vpop.f32.mrf.mxu0
        %v3094 = vadd.f32 %v3005, %v3093
        %3095 = vmatmul.f32.gmra.mxu0 %v1360
        %v3096 = vpop.f32.mrf.mxu0
        %v3097 = vadd.f32 %v3008, %v3096
        %3098 = vmatmul.f32.gmra.mxu0 %v1362
        %v3099 = vpop.f32.mrf.mxu0
        %v3100 = vadd.f32 %v3011, %v3099
        %3101 = vmatmul.f32.gmra.mxu0 %v1364
        %v3102 = vpop.f32.mrf.mxu0
        %v3103 = vadd.f32 %v3014, %v3102
        %3104 = vmatmul.f32.gmra.mxu0 %v1366
        %v3105 = vpop.f32.mrf.mxu0
        %v3106 = vadd.f32 %v3017, %v3105
        %3107 = vmatmul.f32.gmra.mxu0 %v1368
        %v3108 = vpop.f32.mrf.mxu0
        %v3109 = vadd.f32 %v3020, %v3108
        %3110 = vmatmul.f32.gmra.mxu0 %v1370
        %v3111 = vpop.f32.mrf.mxu0
        %v3112 = vadd.f32 %v3023, %v3111
        %3113 = vmatmul.f32.gmra.mxu0 %v1372
        %v3114 = vpop.f32.mrf.mxu0
        %v3115 = vadd.f32 %v3026, %v3114
        %3116 = vmatmul.f32.gmra.mxu0 %v1374
        %v3117 = vpop.f32.mrf.mxu0
        %v3118 = vadd.f32 %v3029, %v3117
        %3119 = vmatmul.f32.gmra.mxu0 %v1376
        %v3120 = vpop.f32.mrf.mxu0
        %v3121 = vadd.f32 %v3032, %v3120
        %3122 = vmatmul.f32.gmra.mxu0 %v1378
        %v3123 = vpop.f32.mrf.mxu0
        %v3124 = vadd.f32 %v3035, %v3123
        %3125 = vmatmul.f32.gmra.mxu0 %v1380
        %v3126 = vpop.f32.mrf.mxu0
        %v3127 = vadd.f32 %v3038, %v3126
        %3128 = vmatmul.f32.gmra.mxu0 %v1382
        %v3129 = vpop.f32.mrf.mxu0
        %v3130 = vadd.f32 %v3041, %v3129
        %3131 = vmatmul.f32.gmra.mxu0 %v1384
        %v3132 = vpop.f32.mrf.mxu0
        %v3133 = vadd.f32 %v3044, %v3132
        %3134 = vmatmul.f32.gmra.mxu0 %v1386
        %v3135 = vpop.f32.mrf.mxu0
        %v3136 = vadd.f32 %v3047, %v3135
        %3137 = vmatmul.f32.gmra.mxu0 %v1388
        %v3138 = vpop.f32.mrf.mxu0
        %v3139 = vadd.f32 %v3050, %v3138
        %3140 = vmatmul.f32.gmra.mxu0 %v1390
        %v3141 = vpop.f32.mrf.mxu0
        %v3142 = vadd.f32 %v3053, %v3141
        %3143 = vmatmul.f32.gmra.mxu0 %v1392
        %v3144 = vpop.f32.mrf.mxu0
        %v3145 = vadd.f32 %v3056, %v3144
        %3146 = vmatmul.f32.gmra.mxu0 %v1394
        %v3147 = vpop.f32.mrf.mxu0
        %v3148 = vadd.f32 %v3059, %v3147
        %3149 = vmatmul.f32.gmra.mxu0 %v1396
        %v3150 = vpop.f32.mrf.mxu0
        %v3151 = vadd.f32 %v3062, %v3150
        %3152 = vmatmul.f32.gmra.mxu0 %v1398
        %v3153 = vpop.f32.mrf.mxu0
        %v3154 = vadd.f32 %v3065, %v3153
        %3155 = vmatmul.f32.gmra.mxu0 %v1400
        %v3156 = vpop.f32.mrf.mxu0
        %v3157 = vadd.f32 %v3068, %v3156
        %3158 = vdwg.mxu0
        %3159 = vmatpush.msra.mxu0 %v1648
        %3160 = vmatpush.msra.mxu0 %v1632
        %3161 = vmatpush.msra.mxu0 %v1616
        %3162 = vmatpush.msra.mxu0 %v1600
        %3163 = vmatpush.msra.mxu0 %v1584
        %3164 = vmatpush.msra.mxu0 %v1568
        %3165 = vmatpush.msra.mxu0 %v1552
        %3166 = vmatpush.msra.mxu0 %v1536
        %3167 = vmatpush.msra.mxu0 %v1520
        %3168 = vmatpush.msra.mxu0 %v1504
        %3169 = vmatpush.msra.mxu0 %v1488
        %3170 = vmatpush.msra.mxu0 %v1472
        %3171 = vmatpush.msra.mxu0 %v1456
        %3172 = vmatpush.msra.mxu0 %v1440
        %3173 = vmatpush.msra.mxu0 %v1424
        %3174 = vmatpush.msra.mxu0 %v1408
        %3175 = vmatmul.f32.gmra.mxu0 %v1353
        %v3176 = vpop.f32.mrf.mxu0
        %v3177 = vadd.f32 0.0, %v3176
        %3178 = vmatmul.f32.gmra.mxu0 %v1355
        %v3179 = vpop.f32.mrf.mxu0
        %v3180 = vadd.f32 0.0, %v3179
        %3181 = vmatmul.f32.gmra.mxu0 %v1357
        %v3182 = vpop.f32.mrf.mxu0
        %v3183 = vadd.f32 0.0, %v3182
        %3184 = vmatmul.f32.gmra.mxu0 %v1359
        %v3185 = vpop.f32.mrf.mxu0
        %v3186 = vadd.f32 0.0, %v3185
        %3187 = vmatmul.f32.gmra.mxu0 %v1361
        %v3188 = vpop.f32.mrf.mxu0
        %v3189 = vadd.f32 0.0, %v3188
        %3190 = vmatmul.f32.gmra.mxu0 %v1363
        %v3191 = vpop.f32.mrf.mxu0
        %v3192 = vadd.f32 0.0, %v3191
        %3193 = vmatmul.f32.gmra.mxu0 %v1365
        %v3194 = vpop.f32.mrf.mxu0
        %v3195 = vadd.f32 0.0, %v3194
        %3196 = vmatmul.f32.gmra.mxu0 %v1367
        %v3197 = vpop.f32.mrf.mxu0
        %v3198 = vadd.f32 0.0, %v3197
        %3199 = vmatmul.f32.gmra.mxu0 %v1369
        %v3200 = vpop.f32.mrf.mxu0
        %v3201 = vadd.f32 0.0, %v3200
        %3202 = vmatmul.f32.gmra.mxu0 %v1371
        %v3203 = vpop.f32.mrf.mxu0
        %v3204 = vadd.f32 0.0, %v3203
        %3205 = vmatmul.f32.gmra.mxu0 %v1373
        %v3206 = vpop.f32.mrf.mxu0
        %v3207 = vadd.f32 0.0, %v3206
        %3208 = vmatmul.f32.gmra.mxu0 %v1375
        %v3209 = vpop.f32.mrf.mxu0
        %v3210 = vadd.f32 0.0, %v3209
        %3211 = vmatmul.f32.gmra.mxu0 %v1377
        %v3212 = vpop.f32.mrf.mxu0
        %v3213 = vadd.f32 0.0, %v3212
        %3214 = vmatmul.f32.gmra.mxu0 %v1379
        %v3215 = vpop.f32.mrf.mxu0
        %v3216 = vadd.f32 0.0, %v3215
        %3217 = vmatmul.f32.gmra.mxu0 %v1381
        %v3218 = vpop.f32.mrf.mxu0
        %v3219 = vadd.f32 0.0, %v3218
        %3220 = vmatmul.f32.gmra.mxu0 %v1383
        %v3221 = vpop.f32.mrf.mxu0
        %v3222 = vadd.f32 0.0, %v3221
        %3223 = vmatmul.f32.gmra.mxu0 %v1385
        %v3224 = vpop.f32.mrf.mxu0
        %v3225 = vadd.f32 0.0, %v3224
        %3226 = vmatmul.f32.gmra.mxu0 %v1387
        %v3227 = vpop.f32.mrf.mxu0
        %v3228 = vadd.f32 0.0, %v3227
        %3229 = vmatmul.f32.gmra.mxu0 %v1389
        %v3230 = vpop.f32.mrf.mxu0
        %v3231 = vadd.f32 0.0, %v3230
        %3232 = vmatmul.f32.gmra.mxu0 %v1391
        %v3233 = vpop.f32.mrf.mxu0
        %v3234 = vadd.f32 0.0, %v3233
        %3235 = vmatmul.f32.gmra.mxu0 %v1393
        %v3236 = vpop.f32.mrf.mxu0
        %v3237 = vadd.f32 0.0, %v3236
        %3238 = vmatmul.f32.gmra.mxu0 %v1395
        %v3239 = vpop.f32.mrf.mxu0
        %v3240 = vadd.f32 0.0, %v3239
        %3241 = vmatmul.f32.gmra.mxu0 %v1397
        %v3242 = vpop.f32.mrf.mxu0
        %v3243 = vadd.f32 0.0, %v3242
        %3244 = vmatmul.f32.gmra.mxu0 %v1399
        %v3245 = vpop.f32.mrf.mxu0
        %v3246 = vadd.f32 0.0, %v3245
        %3247 = vdwg.mxu0
        %3248 = vmatpush.msra.mxu0 %v1904
        %3249 = vmatpush.msra.mxu0 %v1888
        %3250 = vmatpush.msra.mxu0 %v1872
        %3251 = vmatpush.msra.mxu0 %v1856
        %3252 = vmatpush.msra.mxu0 %v1840
        %3253 = vmatpush.msra.mxu0 %v1824
        %3254 = vmatpush.msra.mxu0 %v1808
        %3255 = vmatpush.msra.mxu0 %v1792
        %3256 = vmatpush.msra.mxu0 %v1776
        %3257 = vmatpush.msra.mxu0 %v1760
        %3258 = vmatpush.msra.mxu0 %v1744
        %3259 = vmatpush.msra.mxu0 %v1728
        %3260 = vmatpush.msra.mxu0 %v1712
        %3261 = vmatpush.msra.mxu0 %v1696
        %3262 = vmatpush.msra.mxu0 %v1680
        %3263 = vmatpush.msra.mxu0 %v1664
        %3264 = vmatmul.f32.gmra.mxu0 %v1354
        %v3265 = vpop.f32.mrf.mxu0
        %v3266 = vadd.f32 %v3177, %v3265
        %3267 = vmatmul.f32.gmra.mxu0 %v1356
        %v3268 = vpop.f32.mrf.mxu0
        %v3269 = vadd.f32 %v3180, %v3268
        %3270 = vmatmul.f32.gmra.mxu0 %v1358
        %v3271 = vpop.f32.mrf.mxu0
        %v3272 = vadd.f32 %v3183, %v3271
        %3273 = vmatmul.f32.gmra.mxu0 %v1360
        %v3274 = vpop.f32.mrf.mxu0
        %v3275 = vadd.f32 %v3186, %v3274
        %3276 = vmatmul.f32.gmra.mxu0 %v1362
        %v3277 = vpop.f32.mrf.mxu0
        %v3278 = vadd.f32 %v3189, %v3277
        %3279 = vmatmul.f32.gmra.mxu0 %v1364
        %v3280 = vpop.f32.mrf.mxu0
        %v3281 = vadd.f32 %v3192, %v3280
        %3282 = vmatmul.f32.gmra.mxu0 %v1366
        %v3283 = vpop.f32.mrf.mxu0
        %v3284 = vadd.f32 %v3195, %v3283
        %3285 = vmatmul.f32.gmra.mxu0 %v1368
        %v3286 = vpop.f32.mrf.mxu0
        %v3287 = vadd.f32 %v3198, %v3286
        %3288 = vmatmul.f32.gmra.mxu0 %v1370
        %v3289 = vpop.f32.mrf.mxu0
        %v3290 = vadd.f32 %v3201, %v3289
        %3291 = vmatmul.f32.gmra.mxu0 %v1372
        %v3292 = vpop.f32.mrf.mxu0
        %v3293 = vadd.f32 %v3204, %v3292
        %3294 = vmatmul.f32.gmra.mxu0 %v1374
        %v3295 = vpop.f32.mrf.mxu0
        %v3296 = vadd.f32 %v3207, %v3295
        %3297 = vmatmul.f32.gmra.mxu0 %v1376
        %v3298 = vpop.f32.mrf.mxu0
        %v3299 = vadd.f32 %v3210, %v3298
        %3300 = vmatmul.f32.gmra.mxu0 %v1378
        %v3301 = vpop.f32.mrf.mxu0
        %v3302 = vadd.f32 %v3213, %v3301
        %3303 = vmatmul.f32.gmra.mxu0 %v1380
        %v3304 = vpop.f32.mrf.mxu0
        %v3305 = vadd.f32 %v3216, %v3304
        %3306 = vmatmul.f32.gmra.mxu0 %v1382
        %v3307 = vpop.f32.mrf.mxu0
        %v3308 = vadd.f32 %v3219, %v3307
        %3309 = vmatmul.f32.gmra.mxu0 %v1384
        %v3310 = vpop.f32.mrf.mxu0
        %v3311 = vadd.f32 %v3222, %v3310
        %3312 = vmatmul.f32.gmra.mxu0 %v1386
        %v3313 = vpop.f32.mrf.mxu0
        %v3314 = vadd.f32 %v3225, %v3313
        %3315 = vmatmul.f32.gmra.mxu0 %v1388
        %v3316 = vpop.f32.mrf.mxu0
        %v3317 = vadd.f32 %v3228, %v3316
        %3318 = vmatmul.f32.gmra.mxu0 %v1390
        %v3319 = vpop.f32.mrf.mxu0
        %v3320 = vadd.f32 %v3231, %v3319
        %3321 = vmatmul.f32.gmra.mxu0 %v1392
        %v3322 = vpop.f32.mrf.mxu0
        %v3323 = vadd.f32 %v3234, %v3322
        %3324 = vmatmul.f32.gmra.mxu0 %v1394
        %v3325 = vpop.f32.mrf.mxu0
        %v3326 = vadd.f32 %v3237, %v3325
        %3327 = vmatmul.f32.gmra.mxu0 %v1396
        %v3328 = vpop.f32.mrf.mxu0
        %v3329 = vadd.f32 %v3240, %v3328
        %3330 = vmatmul.f32.gmra.mxu0 %v1398
        %v3331 = vpop.f32.mrf.mxu0
        %v3332 = vadd.f32 %v3243, %v3331
        %3333 = vmatmul.f32.gmra.mxu0 %v1400
        %v3334 = vpop.f32.mrf.mxu0
        %v3335 = vadd.f32 %v3246, %v3334
        %3336 = vdwg.mxu0
        %3337 = vmatpush.msra.mxu0 %v1649
        %3338 = vmatpush.msra.mxu0 %v1633
        %3339 = vmatpush.msra.mxu0 %v1617
        %3340 = vmatpush.msra.mxu0 %v1601
        %3341 = vmatpush.msra.mxu0 %v1585
        %3342 = vmatpush.msra.mxu0 %v1569
        %3343 = vmatpush.msra.mxu0 %v1553
        %3344 = vmatpush.msra.mxu0 %v1537
        %3345 = vmatpush.msra.mxu0 %v1521
        %3346 = vmatpush.msra.mxu0 %v1505
        %3347 = vmatpush.msra.mxu0 %v1489
        %3348 = vmatpush.msra.mxu0 %v1473
        %3349 = vmatpush.msra.mxu0 %v1457
        %3350 = vmatpush.msra.mxu0 %v1441
        %3351 = vmatpush.msra.mxu0 %v1425
        %3352 = vmatpush.msra.mxu0 %v1409
        %3353 = vmatmul.f32.gmra.mxu0 %v1353
        %v3354 = vpop.f32.mrf.mxu0
        %v3355 = vadd.f32 0.0, %v3354
        %3356 = vmatmul.f32.gmra.mxu0 %v1355
        %v3357 = vpop.f32.mrf.mxu0
        %v3358 = vadd.f32 0.0, %v3357
        %3359 = vmatmul.f32.gmra.mxu0 %v1357
        %v3360 = vpop.f32.mrf.mxu0
        %v3361 = vadd.f32 0.0, %v3360
        %3362 = vmatmul.f32.gmra.mxu0 %v1359
        %v3363 = vpop.f32.mrf.mxu0
        %v3364 = vadd.f32 0.0, %v3363
        %3365 = vmatmul.f32.gmra.mxu0 %v1361
        %v3366 = vpop.f32.mrf.mxu0
        %v3367 = vadd.f32 0.0, %v3366
        %3368 = vmatmul.f32.gmra.mxu0 %v1363
        %v3369 = vpop.f32.mrf.mxu0
        %v3370 = vadd.f32 0.0, %v3369
        %3371 = vmatmul.f32.gmra.mxu0 %v1365
        %v3372 = vpop.f32.mrf.mxu0
        %v3373 = vadd.f32 0.0, %v3372
        %3374 = vmatmul.f32.gmra.mxu0 %v1367
        %v3375 = vpop.f32.mrf.mxu0
        %v3376 = vadd.f32 0.0, %v3375
        %3377 = vmatmul.f32.gmra.mxu0 %v1369
        %v3378 = vpop.f32.mrf.mxu0
        %v3379 = vadd.f32 0.0, %v3378
        %3380 = vmatmul.f32.gmra.mxu0 %v1371
        %v3381 = vpop.f32.mrf.mxu0
        %v3382 = vadd.f32 0.0, %v3381
        %3383 = vmatmul.f32.gmra.mxu0 %v1373
        %v3384 = vpop.f32.mrf.mxu0
        %v3385 = vadd.f32 0.0, %v3384
        %3386 = vmatmul.f32.gmra.mxu0 %v1375
        %v3387 = vpop.f32.mrf.mxu0
        %v3388 = vadd.f32 0.0, %v3387
        %3389 = vmatmul.f32.gmra.mxu0 %v1377
        %v3390 = vpop.f32.mrf.mxu0
        %v3391 = vadd.f32 0.0, %v3390
        %3392 = vmatmul.f32.gmra.mxu0 %v1379
        %v3393 = vpop.f32.mrf.mxu0
        %v3394 = vadd.f32 0.0, %v3393
        %3395 = vmatmul.f32.gmra.mxu0 %v1381
        %v3396 = vpop.f32.mrf.mxu0
        %v3397 = vadd.f32 0.0, %v3396
        %3398 = vmatmul.f32.gmra.mxu0 %v1383
        %v3399 = vpop.f32.mrf.mxu0
        %v3400 = vadd.f32 0.0, %v3399
        %3401 = vmatmul.f32.gmra.mxu0 %v1385
        %v3402 = vpop.f32.mrf.mxu0
        %v3403 = vadd.f32 0.0, %v3402
        %3404 = vmatmul.f32.gmra.mxu0 %v1387
        %v3405 = vpop.f32.mrf.mxu0
        %v3406 = vadd.f32 0.0, %v3405
        %3407 = vmatmul.f32.gmra.mxu0 %v1389
        %v3408 = vpop.f32.mrf.mxu0
        %v3409 = vadd.f32 0.0, %v3408
        %3410 = vmatmul.f32.gmra.mxu0 %v1391
        %v3411 = vpop.f32.mrf.mxu0
        %v3412 = vadd.f32 0.0, %v3411
        %3413 = vmatmul.f32.gmra.mxu0 %v1393
        %v3414 = vpop.f32.mrf.mxu0
        %v3415 = vadd.f32 0.0, %v3414
        %3416 = vmatmul.f32.gmra.mxu0 %v1395
        %v3417 = vpop.f32.mrf.mxu0
        %v3418 = vadd.f32 0.0, %v3417
        %3419 = vmatmul.f32.gmra.mxu0 %v1397
        %v3420 = vpop.f32.mrf.mxu0
        %v3421 = vadd.f32 0.0, %v3420
        %3422 = vmatmul.f32.gmra.mxu0 %v1399
        %v3423 = vpop.f32.mrf.mxu0
        %v3424 = vadd.f32 0.0, %v3423
        %3425 = vdwg.mxu0
        %3426 = vmatpush.msra.mxu0 %v1905
        %3427 = vmatpush.msra.mxu0 %v1889
        %3428 = vmatpush.msra.mxu0 %v1873
        %3429 = vmatpush.msra.mxu0 %v1857
        %3430 = vmatpush.msra.mxu0 %v1841
        %3431 = vmatpush.msra.mxu0 %v1825
        %3432 = vmatpush.msra.mxu0 %v1809
        %3433 = vmatpush.msra.mxu0 %v1793
        %3434 = vmatpush.msra.mxu0 %v1777
        %3435 = vmatpush.msra.mxu0 %v1761
        %3436 = vmatpush.msra.mxu0 %v1745
        %3437 = vmatpush.msra.mxu0 %v1729
        %3438 = vmatpush.msra.mxu0 %v1713
        %3439 = vmatpush.msra.mxu0 %v1697
        %3440 = vmatpush.msra.mxu0 %v1681
        %3441 = vmatpush.msra.mxu0 %v1665
        %3442 = vmatmul.f32.gmra.mxu0 %v1354
        %v3443 = vpop.f32.mrf.mxu0
        %v3444 = vadd.f32 %v3355, %v3443
        %3445 = vmatmul.f32.gmra.mxu0 %v1356
        %v3446 = vpop.f32.mrf.mxu0
        %v3447 = vadd.f32 %v3358, %v3446
        %3448 = vmatmul.f32.gmra.mxu0 %v1358
        %v3449 = vpop.f32.mrf.mxu0
        %v3450 = vadd.f32 %v3361, %v3449
        %3451 = vmatmul.f32.gmra.mxu0 %v1360
        %v3452 = vpop.f32.mrf.mxu0
        %v3453 = vadd.f32 %v3364, %v3452
        %3454 = vmatmul.f32.gmra.mxu0 %v1362
        %v3455 = vpop.f32.mrf.mxu0
        %v3456 = vadd.f32 %v3367, %v3455
        %3457 = vmatmul.f32.gmra.mxu0 %v1364
        %v3458 = vpop.f32.mrf.mxu0
        %v3459 = vadd.f32 %v3370, %v3458
        %3460 = vmatmul.f32.gmra.mxu0 %v1366
        %v3461 = vpop.f32.mrf.mxu0
        %v3462 = vadd.f32 %v3373, %v3461
        %3463 = vmatmul.f32.gmra.mxu0 %v1368
        %v3464 = vpop.f32.mrf.mxu0
        %v3465 = vadd.f32 %v3376, %v3464
        %3466 = vmatmul.f32.gmra.mxu0 %v1370
        %v3467 = vpop.f32.mrf.mxu0
        %v3468 = vadd.f32 %v3379, %v3467
        %3469 = vmatmul.f32.gmra.mxu0 %v1372
        %v3470 = vpop.f32.mrf.mxu0
        %v3471 = vadd.f32 %v3382, %v3470
        %3472 = vmatmul.f32.gmra.mxu0 %v1374
        %v3473 = vpop.f32.mrf.mxu0
        %v3474 = vadd.f32 %v3385, %v3473
        %3475 = vmatmul.f32.gmra.mxu0 %v1376
        %v3476 = vpop.f32.mrf.mxu0
        %v3477 = vadd.f32 %v3388, %v3476
        %3478 = vmatmul.f32.gmra.mxu0 %v1378
        %v3479 = vpop.f32.mrf.mxu0
        %v3480 = vadd.f32 %v3391, %v3479
        %3481 = vmatmul.f32.gmra.mxu0 %v1380
        %v3482 = vpop.f32.mrf.mxu0
        %v3483 = vadd.f32 %v3394, %v3482
        %3484 = vmatmul.f32.gmra.mxu0 %v1382
        %v3485 = vpop.f32.mrf.mxu0
        %v3486 = vadd.f32 %v3397, %v3485
        %3487 = vmatmul.f32.gmra.mxu0 %v1384
        %v3488 = vpop.f32.mrf.mxu0
        %v3489 = vadd.f32 %v3400, %v3488
        %3490 = vmatmul.f32.gmra.mxu0 %v1386
        %v3491 = vpop.f32.mrf.mxu0
        %v3492 = vadd.f32 %v3403, %v3491
        %3493 = vmatmul.f32.gmra.mxu0 %v1388
        %v3494 = vpop.f32.mrf.mxu0
        %v3495 = vadd.f32 %v3406, %v3494
        %3496 = vmatmul.f32.gmra.mxu0 %v1390
        %v3497 = vpop.f32.mrf.mxu0
        %v3498 = vadd.f32 %v3409, %v3497
        %3499 = vmatmul.f32.gmra.mxu0 %v1392
        %v3500 = vpop.f32.mrf.mxu0
        %v3501 = vadd.f32 %v3412, %v3500
        %3502 = vmatmul.f32.gmra.mxu0 %v1394
        %v3503 = vpop.f32.mrf.mxu0
        %v3504 = vadd.f32 %v3415, %v3503
        %3505 = vmatmul.f32.gmra.mxu0 %v1396
        %v3506 = vpop.f32.mrf.mxu0
        %v3507 = vadd.f32 %v3418, %v3506
        %3508 = vmatmul.f32.gmra.mxu0 %v1398
        %v3509 = vpop.f32.mrf.mxu0
        %v3510 = vadd.f32 %v3421, %v3509
        %3511 = vmatmul.f32.gmra.mxu0 %v1400
        %v3512 = vpop.f32.mrf.mxu0
        %v3513 = vadd.f32 %v3424, %v3512
        %3514 = vdwg.mxu0
        %3515 = vmatpush.msra.mxu0 %v1650
        %3516 = vmatpush.msra.mxu0 %v1634
        %3517 = vmatpush.msra.mxu0 %v1618
        %3518 = vmatpush.msra.mxu0 %v1602
        %3519 = vmatpush.msra.mxu0 %v1586
        %3520 = vmatpush.msra.mxu0 %v1570
        %3521 = vmatpush.msra.mxu0 %v1554
        %3522 = vmatpush.msra.mxu0 %v1538
        %3523 = vmatpush.msra.mxu0 %v1522
        %3524 = vmatpush.msra.mxu0 %v1506
        %3525 = vmatpush.msra.mxu0 %v1490
        %3526 = vmatpush.msra.mxu0 %v1474
        %3527 = vmatpush.msra.mxu0 %v1458
        %3528 = vmatpush.msra.mxu0 %v1442
        %3529 = vmatpush.msra.mxu0 %v1426
        %3530 = vmatpush.msra.mxu0 %v1410
        %3531 = vmatmul.f32.gmra.mxu0 %v1353
        %v3532 = vpop.f32.mrf.mxu0
        %v3533 = vadd.f32 0.0, %v3532
        %3534 = vmatmul.f32.gmra.mxu0 %v1355
        %v3535 = vpop.f32.mrf.mxu0
        %v3536 = vadd.f32 0.0, %v3535
        %3537 = vmatmul.f32.gmra.mxu0 %v1357
        %v3538 = vpop.f32.mrf.mxu0
        %v3539 = vadd.f32 0.0, %v3538
        %3540 = vmatmul.f32.gmra.mxu0 %v1359
        %v3541 = vpop.f32.mrf.mxu0
        %v3542 = vadd.f32 0.0, %v3541
        %3543 = vmatmul.f32.gmra.mxu0 %v1361
        %v3544 = vpop.f32.mrf.mxu0
        %v3545 = vadd.f32 0.0, %v3544
        %3546 = vmatmul.f32.gmra.mxu0 %v1363
        %v3547 = vpop.f32.mrf.mxu0
        %v3548 = vadd.f32 0.0, %v3547
        %3549 = vmatmul.f32.gmra.mxu0 %v1365
        %v3550 = vpop.f32.mrf.mxu0
        %v3551 = vadd.f32 0.0, %v3550
        %3552 = vmatmul.f32.gmra.mxu0 %v1367
        %v3553 = vpop.f32.mrf.mxu0
        %v3554 = vadd.f32 0.0, %v3553
        %3555 = vmatmul.f32.gmra.mxu0 %v1369
        %v3556 = vpop.f32.mrf.mxu0
        %v3557 = vadd.f32 0.0, %v3556
        %3558 = vmatmul.f32.gmra.mxu0 %v1371
        %v3559 = vpop.f32.mrf.mxu0
        %v3560 = vadd.f32 0.0, %v3559
        %3561 = vmatmul.f32.gmra.mxu0 %v1373
        %v3562 = vpop.f32.mrf.mxu0
        %v3563 = vadd.f32 0.0, %v3562
        %3564 = vmatmul.f32.gmra.mxu0 %v1375
        %v3565 = vpop.f32.mrf.mxu0
        %v3566 = vadd.f32 0.0, %v3565
        %3567 = vmatmul.f32.gmra.mxu0 %v1377
        %v3568 = vpop.f32.mrf.mxu0
        %v3569 = vadd.f32 0.0, %v3568
        %3570 = vmatmul.f32.gmra.mxu0 %v1379
        %v3571 = vpop.f32.mrf.mxu0
        %v3572 = vadd.f32 0.0, %v3571
        %3573 = vmatmul.f32.gmra.mxu0 %v1381
        %v3574 = vpop.f32.mrf.mxu0
        %v3575 = vadd.f32 0.0, %v3574
        %3576 = vmatmul.f32.gmra.mxu0 %v1383
        %v3577 = vpop.f32.mrf.mxu0
        %v3578 = vadd.f32 0.0, %v3577
        %3579 = vmatmul.f32.gmra.mxu0 %v1385
        %v3580 = vpop.f32.mrf.mxu0
        %v3581 = vadd.f32 0.0, %v3580
        %3582 = vmatmul.f32.gmra.mxu0 %v1387
        %v3583 = vpop.f32.mrf.mxu0
        %v3584 = vadd.f32 0.0, %v3583
        %3585 = vmatmul.f32.gmra.mxu0 %v1389
        %v3586 = vpop.f32.mrf.mxu0
        %v3587 = vadd.f32 0.0, %v3586
        %3588 = vmatmul.f32.gmra.mxu0 %v1391
        %v3589 = vpop.f32.mrf.mxu0
        %v3590 = vadd.f32 0.0, %v3589
        %3591 = vmatmul.f32.gmra.mxu0 %v1393
        %v3592 = vpop.f32.mrf.mxu0
        %v3593 = vadd.f32 0.0, %v3592
        %3594 = vmatmul.f32.gmra.mxu0 %v1395
        %v3595 = vpop.f32.mrf.mxu0
        %v3596 = vadd.f32 0.0, %v3595
        %3597 = vmatmul.f32.gmra.mxu0 %v1397
        %v3598 = vpop.f32.mrf.mxu0
        %v3599 = vadd.f32 0.0, %v3598
        %3600 = vmatmul.f32.gmra.mxu0 %v1399
        %v3601 = vpop.f32.mrf.mxu0
        %v3602 = vadd.f32 0.0, %v3601
        %3603 = vdwg.mxu0
        %3604 = vmatpush.msra.mxu0 %v1906
        %3605 = vmatpush.msra.mxu0 %v1890
        %3606 = vmatpush.msra.mxu0 %v1874
        %3607 = vmatpush.msra.mxu0 %v1858
        %3608 = vmatpush.msra.mxu0 %v1842
        %3609 = vmatpush.msra.mxu0 %v1826
        %3610 = vmatpush.msra.mxu0 %v1810
        %3611 = vmatpush.msra.mxu0 %v1794
        %3612 = vmatpush.msra.mxu0 %v1778
        %3613 = vmatpush.msra.mxu0 %v1762
        %3614 = vmatpush.msra.mxu0 %v1746
        %3615 = vmatpush.msra.mxu0 %v1730
        %3616 = vmatpush.msra.mxu0 %v1714
        %3617 = vmatpush.msra.mxu0 %v1698
        %3618 = vmatpush.msra.mxu0 %v1682
        %3619 = vmatpush.msra.mxu0 %v1666
        %3620 = vmatmul.f32.gmra.mxu0 %v1354
        %v3621 = vpop.f32.mrf.mxu0
        %v3622 = vadd.f32 %v3533, %v3621
        %3623 = vmatmul.f32.gmra.mxu0 %v1356
        %v3624 = vpop.f32.mrf.mxu0
        %v3625 = vadd.f32 %v3536, %v3624
        %3626 = vmatmul.f32.gmra.mxu0 %v1358
        %v3627 = vpop.f32.mrf.mxu0
        %v3628 = vadd.f32 %v3539, %v3627
        %3629 = vmatmul.f32.gmra.mxu0 %v1360
        %v3630 = vpop.f32.mrf.mxu0
        %v3631 = vadd.f32 %v3542, %v3630
        %3632 = vmatmul.f32.gmra.mxu0 %v1362
        %v3633 = vpop.f32.mrf.mxu0
        %v3634 = vadd.f32 %v3545, %v3633
        %3635 = vmatmul.f32.gmra.mxu0 %v1364
        %v3636 = vpop.f32.mrf.mxu0
        %v3637 = vadd.f32 %v3548, %v3636
        %3638 = vmatmul.f32.gmra.mxu0 %v1366
        %v3639 = vpop.f32.mrf.mxu0
        %v3640 = vadd.f32 %v3551, %v3639
        %3641 = vmatmul.f32.gmra.mxu0 %v1368
        %v3642 = vpop.f32.mrf.mxu0
        %v3643 = vadd.f32 %v3554, %v3642
        %3644 = vmatmul.f32.gmra.mxu0 %v1370
        %v3645 = vpop.f32.mrf.mxu0
        %v3646 = vadd.f32 %v3557, %v3645
        %3647 = vmatmul.f32.gmra.mxu0 %v1372
        %v3648 = vpop.f32.mrf.mxu0
        %v3649 = vadd.f32 %v3560, %v3648
        %3650 = vmatmul.f32.gmra.mxu0 %v1374
        %v3651 = vpop.f32.mrf.mxu0
        %v3652 = vadd.f32 %v3563, %v3651
        %3653 = vmatmul.f32.gmra.mxu0 %v1376
        %v3654 = vpop.f32.mrf.mxu0
        %v3655 = vadd.f32 %v3566, %v3654
        %3656 = vmatmul.f32.gmra.mxu0 %v1378
        %v3657 = vpop.f32.mrf.mxu0
        %v3658 = vadd.f32 %v3569, %v3657
        %3659 = vmatmul.f32.gmra.mxu0 %v1380
        %v3660 = vpop.f32.mrf.mxu0
        %v3661 = vadd.f32 %v3572, %v3660
        %3662 = vmatmul.f32.gmra.mxu0 %v1382
        %v3663 = vpop.f32.mrf.mxu0
        %v3664 = vadd.f32 %v3575, %v3663
        %3665 = vmatmul.f32.gmra.mxu0 %v1384
        %v3666 = vpop.f32.mrf.mxu0
        %v3667 = vadd.f32 %v3578, %v3666
        %3668 = vmatmul.f32.gmra.mxu0 %v1386
        %v3669 = vpop.f32.mrf.mxu0
        %v3670 = vadd.f32 %v3581, %v3669
        %3671 = vmatmul.f32.gmra.mxu0 %v1388
        %v3672 = vpop.f32.mrf.mxu0
        %v3673 = vadd.f32 %v3584, %v3672
        %3674 = vmatmul.f32.gmra.mxu0 %v1390
        %v3675 = vpop.f32.mrf.mxu0
        %v3676 = vadd.f32 %v3587, %v3675
        %3677 = vmatmul.f32.gmra.mxu0 %v1392
        %v3678 = vpop.f32.mrf.mxu0
        %v3679 = vadd.f32 %v3590, %v3678
        %3680 = vmatmul.f32.gmra.mxu0 %v1394
        %v3681 = vpop.f32.mrf.mxu0
        %v3682 = vadd.f32 %v3593, %v3681
        %3683 = vmatmul.f32.gmra.mxu0 %v1396
        %v3684 = vpop.f32.mrf.mxu0
        %v3685 = vadd.f32 %v3596, %v3684
        %3686 = vmatmul.f32.gmra.mxu0 %v1398
        %v3687 = vpop.f32.mrf.mxu0
        %v3688 = vadd.f32 %v3599, %v3687
        %3689 = vmatmul.f32.gmra.mxu0 %v1400
        %v3690 = vpop.f32.mrf.mxu0
        %v3691 = vadd.f32 %v3602, %v3690
        %3692 = vdwg.mxu0
        %3693 = vmatpush.msra.mxu0 %v1651
        %3694 = vmatpush.msra.mxu0 %v1635
        %3695 = vmatpush.msra.mxu0 %v1619
        %3696 = vmatpush.msra.mxu0 %v1603
        %3697 = vmatpush.msra.mxu0 %v1587
        %3698 = vmatpush.msra.mxu0 %v1571
        %3699 = vmatpush.msra.mxu0 %v1555
        %3700 = vmatpush.msra.mxu0 %v1539
        %3701 = vmatpush.msra.mxu0 %v1523
        %3702 = vmatpush.msra.mxu0 %v1507
        %3703 = vmatpush.msra.mxu0 %v1491
        %3704 = vmatpush.msra.mxu0 %v1475
        %3705 = vmatpush.msra.mxu0 %v1459
        %3706 = vmatpush.msra.mxu0 %v1443
        %3707 = vmatpush.msra.mxu0 %v1427
        %3708 = vmatpush.msra.mxu0 %v1411
        %3709 = vmatmul.f32.gmra.mxu0 %v1353
        %v3710 = vpop.f32.mrf.mxu0
        %v3711 = vadd.f32 0.0, %v3710
        %3712 = vmatmul.f32.gmra.mxu0 %v1355
        %v3713 = vpop.f32.mrf.mxu0
        %v3714 = vadd.f32 0.0, %v3713
        %3715 = vmatmul.f32.gmra.mxu0 %v1357
        %v3716 = vpop.f32.mrf.mxu0
        %v3717 = vadd.f32 0.0, %v3716
        %3718 = vmatmul.f32.gmra.mxu0 %v1359
        %v3719 = vpop.f32.mrf.mxu0
        %v3720 = vadd.f32 0.0, %v3719
        %3721 = vmatmul.f32.gmra.mxu0 %v1361
        %v3722 = vpop.f32.mrf.mxu0
        %v3723 = vadd.f32 0.0, %v3722
        %3724 = vmatmul.f32.gmra.mxu0 %v1363
        %v3725 = vpop.f32.mrf.mxu0
        %v3726 = vadd.f32 0.0, %v3725
        %3727 = vmatmul.f32.gmra.mxu0 %v1365
        %v3728 = vpop.f32.mrf.mxu0
        %v3729 = vadd.f32 0.0, %v3728
        %3730 = vmatmul.f32.gmra.mxu0 %v1367
        %v3731 = vpop.f32.mrf.mxu0
        %v3732 = vadd.f32 0.0, %v3731
        %3733 = vmatmul.f32.gmra.mxu0 %v1369
        %v3734 = vpop.f32.mrf.mxu0
        %v3735 = vadd.f32 0.0, %v3734
        %3736 = vmatmul.f32.gmra.mxu0 %v1371
        %v3737 = vpop.f32.mrf.mxu0
        %v3738 = vadd.f32 0.0, %v3737
        %3739 = vmatmul.f32.gmra.mxu0 %v1373
        %v3740 = vpop.f32.mrf.mxu0
        %v3741 = vadd.f32 0.0, %v3740
        %3742 = vmatmul.f32.gmra.mxu0 %v1375
        %v3743 = vpop.f32.mrf.mxu0
        %v3744 = vadd.f32 0.0, %v3743
        %3745 = vmatmul.f32.gmra.mxu0 %v1377
        %v3746 = vpop.f32.mrf.mxu0
        %v3747 = vadd.f32 0.0, %v3746
        %3748 = vmatmul.f32.gmra.mxu0 %v1379
        %v3749 = vpop.f32.mrf.mxu0
        %v3750 = vadd.f32 0.0, %v3749
        %3751 = vmatmul.f32.gmra.mxu0 %v1381
        %v3752 = vpop.f32.mrf.mxu0
        %v3753 = vadd.f32 0.0, %v3752
        %3754 = vmatmul.f32.gmra.mxu0 %v1383
        %v3755 = vpop.f32.mrf.mxu0
        %v3756 = vadd.f32 0.0, %v3755
        %3757 = vmatmul.f32.gmra.mxu0 %v1385
        %v3758 = vpop.f32.mrf.mxu0
        %v3759 = vadd.f32 0.0, %v3758
        %3760 = vmatmul.f32.gmra.mxu0 %v1387
        %v3761 = vpop.f32.mrf.mxu0
        %v3762 = vadd.f32 0.0, %v3761
        %3763 = vmatmul.f32.gmra.mxu0 %v1389
        %v3764 = vpop.f32.mrf.mxu0
        %v3765 = vadd.f32 0.0, %v3764
        %3766 = vmatmul.f32.gmra.mxu0 %v1391
        %v3767 = vpop.f32.mrf.mxu0
        %v3768 = vadd.f32 0.0, %v3767
        %3769 = vmatmul.f32.gmra.mxu0 %v1393
        %v3770 = vpop.f32.mrf.mxu0
        %v3771 = vadd.f32 0.0, %v3770
        %3772 = vmatmul.f32.gmra.mxu0 %v1395
        %v3773 = vpop.f32.mrf.mxu0
        %v3774 = vadd.f32 0.0, %v3773
        %3775 = vmatmul.f32.gmra.mxu0 %v1397
        %v3776 = vpop.f32.mrf.mxu0
        %v3777 = vadd.f32 0.0, %v3776
        %3778 = vmatmul.f32.gmra.mxu0 %v1399
        %v3779 = vpop.f32.mrf.mxu0
        %v3780 = vadd.f32 0.0, %v3779
        %3781 = vdwg.mxu0
        %3782 = vmatpush.msra.mxu0 %v1907
        %3783 = vmatpush.msra.mxu0 %v1891
        %3784 = vmatpush.msra.mxu0 %v1875
        %3785 = vmatpush.msra.mxu0 %v1859
        %3786 = vmatpush.msra.mxu0 %v1843
        %3787 = vmatpush.msra.mxu0 %v1827
        %3788 = vmatpush.msra.mxu0 %v1811
        %3789 = vmatpush.msra.mxu0 %v1795
        %3790 = vmatpush.msra.mxu0 %v1779
        %3791 = vmatpush.msra.mxu0 %v1763
        %3792 = vmatpush.msra.mxu0 %v1747
        %3793 = vmatpush.msra.mxu0 %v1731
        %3794 = vmatpush.msra.mxu0 %v1715
        %3795 = vmatpush.msra.mxu0 %v1699
        %3796 = vmatpush.msra.mxu0 %v1683
        %3797 = vmatpush.msra.mxu0 %v1667
        %3798 = vmatmul.f32.gmra.mxu0 %v1354
        %v3799 = vpop.f32.mrf.mxu0
        %v3800 = vadd.f32 %v3711, %v3799
        %3801 = vmatmul.f32.gmra.mxu0 %v1356
        %v3802 = vpop.f32.mrf.mxu0
        %v3803 = vadd.f32 %v3714, %v3802
        %3804 = vmatmul.f32.gmra.mxu0 %v1358
        %v3805 = vpop.f32.mrf.mxu0
        %v3806 = vadd.f32 %v3717, %v3805
        %3807 = vmatmul.f32.gmra.mxu0 %v1360
        %v3808 = vpop.f32.mrf.mxu0
        %v3809 = vadd.f32 %v3720, %v3808
        %3810 = vmatmul.f32.gmra.mxu0 %v1362
        %v3811 = vpop.f32.mrf.mxu0
        %v3812 = vadd.f32 %v3723, %v3811
        %3813 = vmatmul.f32.gmra.mxu0 %v1364
        %v3814 = vpop.f32.mrf.mxu0
        %v3815 = vadd.f32 %v3726, %v3814
        %3816 = vmatmul.f32.gmra.mxu0 %v1366
        %v3817 = vpop.f32.mrf.mxu0
        %v3818 = vadd.f32 %v3729, %v3817
        %3819 = vmatmul.f32.gmra.mxu0 %v1368
        %v3820 = vpop.f32.mrf.mxu0
        %v3821 = vadd.f32 %v3732, %v3820
        %3822 = vmatmul.f32.gmra.mxu0 %v1370
        %v3823 = vpop.f32.mrf.mxu0
        %v3824 = vadd.f32 %v3735, %v3823
        %3825 = vmatmul.f32.gmra.mxu0 %v1372
        %v3826 = vpop.f32.mrf.mxu0
        %v3827 = vadd.f32 %v3738, %v3826
        %3828 = vmatmul.f32.gmra.mxu0 %v1374
        %v3829 = vpop.f32.mrf.mxu0
        %v3830 = vadd.f32 %v3741, %v3829
        %3831 = vmatmul.f32.gmra.mxu0 %v1376
        %v3832 = vpop.f32.mrf.mxu0
        %v3833 = vadd.f32 %v3744, %v3832
        %3834 = vmatmul.f32.gmra.mxu0 %v1378
        %v3835 = vpop.f32.mrf.mxu0
        %v3836 = vadd.f32 %v3747, %v3835
        %3837 = vmatmul.f32.gmra.mxu0 %v1380
        %v3838 = vpop.f32.mrf.mxu0
        %v3839 = vadd.f32 %v3750, %v3838
        %3840 = vmatmul.f32.gmra.mxu0 %v1382
        %v3841 = vpop.f32.mrf.mxu0
        %v3842 = vadd.f32 %v3753, %v3841
        %3843 = vmatmul.f32.gmra.mxu0 %v1384
        %v3844 = vpop.f32.mrf.mxu0
        %v3845 = vadd.f32 %v3756, %v3844
        %3846 = vmatmul.f32.gmra.mxu0 %v1386
        %v3847 = vpop.f32.mrf.mxu0
        %v3848 = vadd.f32 %v3759, %v3847
        %3849 = vmatmul.f32.gmra.mxu0 %v1388
        %v3850 = vpop.f32.mrf.mxu0
        %v3851 = vadd.f32 %v3762, %v3850
        %3852 = vmatmul.f32.gmra.mxu0 %v1390
        %v3853 = vpop.f32.mrf.mxu0
        %v3854 = vadd.f32 %v3765, %v3853
        %3855 = vmatmul.f32.gmra.mxu0 %v1392
        %v3856 = vpop.f32.mrf.mxu0
        %v3857 = vadd.f32 %v3768, %v3856
        %3858 = vmatmul.f32.gmra.mxu0 %v1394
        %v3859 = vpop.f32.mrf.mxu0
        %v3860 = vadd.f32 %v3771, %v3859
        %3861 = vmatmul.f32.gmra.mxu0 %v1396
        %v3862 = vpop.f32.mrf.mxu0
        %v3863 = vadd.f32 %v3774, %v3862
        %3864 = vmatmul.f32.gmra.mxu0 %v1398
        %v3865 = vpop.f32.mrf.mxu0
        %v3866 = vadd.f32 %v3777, %v3865
        %3867 = vmatmul.f32.gmra.mxu0 %v1400
        %v3868 = vpop.f32.mrf.mxu0
        %v3869 = vadd.f32 %v3780, %v3868
        %3870 = vdwg.mxu0
        %3871 = vmatpush.msra.mxu0 %v1652
        %3872 = vmatpush.msra.mxu0 %v1636
        %3873 = vmatpush.msra.mxu0 %v1620
        %3874 = vmatpush.msra.mxu0 %v1604
        %3875 = vmatpush.msra.mxu0 %v1588
        %3876 = vmatpush.msra.mxu0 %v1572
        %3877 = vmatpush.msra.mxu0 %v1556
        %3878 = vmatpush.msra.mxu0 %v1540
        %3879 = vmatpush.msra.mxu0 %v1524
        %3880 = vmatpush.msra.mxu0 %v1508
        %3881 = vmatpush.msra.mxu0 %v1492
        %3882 = vmatpush.msra.mxu0 %v1476
        %3883 = vmatpush.msra.mxu0 %v1460
        %3884 = vmatpush.msra.mxu0 %v1444
        %3885 = vmatpush.msra.mxu0 %v1428
        %3886 = vmatpush.msra.mxu0 %v1412
        %3887 = vmatmul.f32.gmra.mxu0 %v1353
        %v3888 = vpop.f32.mrf.mxu0
        %v3889 = vadd.f32 0.0, %v3888
        %3890 = vmatmul.f32.gmra.mxu0 %v1355
        %v3891 = vpop.f32.mrf.mxu0
        %v3892 = vadd.f32 0.0, %v3891
        %3893 = vmatmul.f32.gmra.mxu0 %v1357
        %v3894 = vpop.f32.mrf.mxu0
        %v3895 = vadd.f32 0.0, %v3894
        %3896 = vmatmul.f32.gmra.mxu0 %v1359
        %v3897 = vpop.f32.mrf.mxu0
        %v3898 = vadd.f32 0.0, %v3897
        %3899 = vmatmul.f32.gmra.mxu0 %v1361
        %v3900 = vpop.f32.mrf.mxu0
        %v3901 = vadd.f32 0.0, %v3900
        %3902 = vmatmul.f32.gmra.mxu0 %v1363
        %v3903 = vpop.f32.mrf.mxu0
        %v3904 = vadd.f32 0.0, %v3903
        %3905 = vmatmul.f32.gmra.mxu0 %v1365
        %v3906 = vpop.f32.mrf.mxu0
        %v3907 = vadd.f32 0.0, %v3906
        %3908 = vmatmul.f32.gmra.mxu0 %v1367
        %v3909 = vpop.f32.mrf.mxu0
        %v3910 = vadd.f32 0.0, %v3909
        %3911 = vmatmul.f32.gmra.mxu0 %v1369
        %v3912 = vpop.f32.mrf.mxu0
        %v3913 = vadd.f32 0.0, %v3912
        %3914 = vmatmul.f32.gmra.mxu0 %v1371
        %v3915 = vpop.f32.mrf.mxu0
        %v3916 = vadd.f32 0.0, %v3915
        %3917 = vmatmul.f32.gmra.mxu0 %v1373
        %v3918 = vpop.f32.mrf.mxu0
        %v3919 = vadd.f32 0.0, %v3918
        %3920 = vmatmul.f32.gmra.mxu0 %v1375
        %v3921 = vpop.f32.mrf.mxu0
        %v3922 = vadd.f32 0.0, %v3921
        %3923 = vmatmul.f32.gmra.mxu0 %v1377
        %v3924 = vpop.f32.mrf.mxu0
        %v3925 = vadd.f32 0.0, %v3924
        %3926 = vmatmul.f32.gmra.mxu0 %v1379
        %v3927 = vpop.f32.mrf.mxu0
        %v3928 = vadd.f32 0.0, %v3927
        %3929 = vmatmul.f32.gmra.mxu0 %v1381
        %v3930 = vpop.f32.mrf.mxu0
        %v3931 = vadd.f32 0.0, %v3930
        %3932 = vmatmul.f32.gmra.mxu0 %v1383
        %v3933 = vpop.f32.mrf.mxu0
        %v3934 = vadd.f32 0.0, %v3933
        %3935 = vmatmul.f32.gmra.mxu0 %v1385
        %v3936 = vpop.f32.mrf.mxu0
        %v3937 = vadd.f32 0.0, %v3936
        %3938 = vmatmul.f32.gmra.mxu0 %v1387
        %v3939 = vpop.f32.mrf.mxu0
        %v3940 = vadd.f32 0.0, %v3939
        %3941 = vmatmul.f32.gmra.mxu0 %v1389
        %v3942 = vpop.f32.mrf.mxu0
        %v3943 = vadd.f32 0.0, %v3942
        %3944 = vmatmul.f32.gmra.mxu0 %v1391
        %v3945 = vpop.f32.mrf.mxu0
        %v3946 = vadd.f32 0.0, %v3945
        %3947 = vmatmul.f32.gmra.mxu0 %v1393
        %v3948 = vpop.f32.mrf.mxu0
        %v3949 = vadd.f32 0.0, %v3948
        %3950 = vmatmul.f32.gmra.mxu0 %v1395
        %v3951 = vpop.f32.mrf.mxu0
        %v3952 = vadd.f32 0.0, %v3951
        %3953 = vmatmul.f32.gmra.mxu0 %v1397
        %v3954 = vpop.f32.mrf.mxu0
        %v3955 = vadd.f32 0.0, %v3954
        %3956 = vmatmul.f32.gmra.mxu0 %v1399
        %v3957 = vpop.f32.mrf.mxu0
        %v3958 = vadd.f32 0.0, %v3957
        %3959 = vdwg.mxu0
        %3960 = vmatpush.msra.mxu0 %v1908
        %3961 = vmatpush.msra.mxu0 %v1892
        %3962 = vmatpush.msra.mxu0 %v1876
        %3963 = vmatpush.msra.mxu0 %v1860
        %3964 = vmatpush.msra.mxu0 %v1844
        %3965 = vmatpush.msra.mxu0 %v1828
        %3966 = vmatpush.msra.mxu0 %v1812
        %3967 = vmatpush.msra.mxu0 %v1796
        %3968 = vmatpush.msra.mxu0 %v1780
        %3969 = vmatpush.msra.mxu0 %v1764
        %3970 = vmatpush.msra.mxu0 %v1748
        %3971 = vmatpush.msra.mxu0 %v1732
        %3972 = vmatpush.msra.mxu0 %v1716
        %3973 = vmatpush.msra.mxu0 %v1700
        %3974 = vmatpush.msra.mxu0 %v1684
        %3975 = vmatpush.msra.mxu0 %v1668
        %3976 = vmatmul.f32.gmra.mxu0 %v1354
        %v3977 = vpop.f32.mrf.mxu0
        %v3978 = vadd.f32 %v3889, %v3977
        %3979 = vmatmul.f32.gmra.mxu0 %v1356
        %v3980 = vpop.f32.mrf.mxu0
        %v3981 = vadd.f32 %v3892, %v3980
        %3982 = vmatmul.f32.gmra.mxu0 %v1358
        %v3983 = vpop.f32.mrf.mxu0
        %v3984 = vadd.f32 %v3895, %v3983
        %3985 = vmatmul.f32.gmra.mxu0 %v1360
        %v3986 = vpop.f32.mrf.mxu0
        %v3987 = vadd.f32 %v3898, %v3986
        %3988 = vmatmul.f32.gmra.mxu0 %v1362
        %v3989 = vpop.f32.mrf.mxu0
        %v3990 = vadd.f32 %v3901, %v3989
        %3991 = vmatmul.f32.gmra.mxu0 %v1364
        %v3992 = vpop.f32.mrf.mxu0
        %v3993 = vadd.f32 %v3904, %v3992
        %3994 = vmatmul.f32.gmra.mxu0 %v1366
        %v3995 = vpop.f32.mrf.mxu0
        %v3996 = vadd.f32 %v3907, %v3995
        %3997 = vmatmul.f32.gmra.mxu0 %v1368
        %v3998 = vpop.f32.mrf.mxu0
        %v3999 = vadd.f32 %v3910, %v3998
        %4000 = vmatmul.f32.gmra.mxu0 %v1370
        %v4001 = vpop.f32.mrf.mxu0
        %v4002 = vadd.f32 %v3913, %v4001
        %4003 = vmatmul.f32.gmra.mxu0 %v1372
        %v4004 = vpop.f32.mrf.mxu0
        %v4005 = vadd.f32 %v3916, %v4004
        %4006 = vmatmul.f32.gmra.mxu0 %v1374
        %v4007 = vpop.f32.mrf.mxu0
        %v4008 = vadd.f32 %v3919, %v4007
        %4009 = vmatmul.f32.gmra.mxu0 %v1376
        %v4010 = vpop.f32.mrf.mxu0
        %v4011 = vadd.f32 %v3922, %v4010
        %4012 = vmatmul.f32.gmra.mxu0 %v1378
        %v4013 = vpop.f32.mrf.mxu0
        %v4014 = vadd.f32 %v3925, %v4013
        %4015 = vmatmul.f32.gmra.mxu0 %v1380
        %v4016 = vpop.f32.mrf.mxu0
        %v4017 = vadd.f32 %v3928, %v4016
        %4018 = vmatmul.f32.gmra.mxu0 %v1382
        %v4019 = vpop.f32.mrf.mxu0
        %v4020 = vadd.f32 %v3931, %v4019
        %4021 = vmatmul.f32.gmra.mxu0 %v1384
        %v4022 = vpop.f32.mrf.mxu0
        %v4023 = vadd.f32 %v3934, %v4022
        %4024 = vmatmul.f32.gmra.mxu0 %v1386
        %v4025 = vpop.f32.mrf.mxu0
        %v4026 = vadd.f32 %v3937, %v4025
        %4027 = vmatmul.f32.gmra.mxu0 %v1388
        %v4028 = vpop.f32.mrf.mxu0
        %v4029 = vadd.f32 %v3940, %v4028
        %4030 = vmatmul.f32.gmra.mxu0 %v1390
        %v4031 = vpop.f32.mrf.mxu0
        %v4032 = vadd.f32 %v3943, %v4031
        %4033 = vmatmul.f32.gmra.mxu0 %v1392
        %v4034 = vpop.f32.mrf.mxu0
        %v4035 = vadd.f32 %v3946, %v4034
        %4036 = vmatmul.f32.gmra.mxu0 %v1394
        %v4037 = vpop.f32.mrf.mxu0
        %v4038 = vadd.f32 %v3949, %v4037
        %4039 = vmatmul.f32.gmra.mxu0 %v1396
        %v4040 = vpop.f32.mrf.mxu0
        %v4041 = vadd.f32 %v3952, %v4040
        %4042 = vmatmul.f32.gmra.mxu0 %v1398
        %v4043 = vpop.f32.mrf.mxu0
        %v4044 = vadd.f32 %v3955, %v4043
        %4045 = vmatmul.f32.gmra.mxu0 %v1400
        %v4046 = vpop.f32.mrf.mxu0
        %v4047 = vadd.f32 %v3958, %v4046
        %4048 = vdwg.mxu0
        %4049 = vmatpush.msra.mxu0 %v1653
        %4050 = vmatpush.msra.mxu0 %v1637
        %4051 = vmatpush.msra.mxu0 %v1621
        %4052 = vmatpush.msra.mxu0 %v1605
        %4053 = vmatpush.msra.mxu0 %v1589
        %4054 = vmatpush.msra.mxu0 %v1573
        %4055 = vmatpush.msra.mxu0 %v1557
        %4056 = vmatpush.msra.mxu0 %v1541
        %4057 = vmatpush.msra.mxu0 %v1525
        %4058 = vmatpush.msra.mxu0 %v1509
        %4059 = vmatpush.msra.mxu0 %v1493
        %4060 = vmatpush.msra.mxu0 %v1477
        %4061 = vmatpush.msra.mxu0 %v1461
        %4062 = vmatpush.msra.mxu0 %v1445
        %4063 = vmatpush.msra.mxu0 %v1429
        %4064 = vmatpush.msra.mxu0 %v1413
        %4065 = vmatmul.f32.gmra.mxu0 %v1353
        %v4066 = vpop.f32.mrf.mxu0
        %v4067 = vadd.f32 0.0, %v4066
        %4068 = vmatmul.f32.gmra.mxu0 %v1355
        %v4069 = vpop.f32.mrf.mxu0
        %v4070 = vadd.f32 0.0, %v4069
        %4071 = vmatmul.f32.gmra.mxu0 %v1357
        %v4072 = vpop.f32.mrf.mxu0
        %v4073 = vadd.f32 0.0, %v4072
        %4074 = vmatmul.f32.gmra.mxu0 %v1359
        %v4075 = vpop.f32.mrf.mxu0
        %v4076 = vadd.f32 0.0, %v4075
        %4077 = vmatmul.f32.gmra.mxu0 %v1361
        %v4078 = vpop.f32.mrf.mxu0
        %v4079 = vadd.f32 0.0, %v4078
        %4080 = vmatmul.f32.gmra.mxu0 %v1363
        %v4081 = vpop.f32.mrf.mxu0
        %v4082 = vadd.f32 0.0, %v4081
        %4083 = vmatmul.f32.gmra.mxu0 %v1365
        %v4084 = vpop.f32.mrf.mxu0
        %v4085 = vadd.f32 0.0, %v4084
        %4086 = vmatmul.f32.gmra.mxu0 %v1367
        %v4087 = vpop.f32.mrf.mxu0
        %v4088 = vadd.f32 0.0, %v4087
        %4089 = vmatmul.f32.gmra.mxu0 %v1369
        %v4090 = vpop.f32.mrf.mxu0
        %v4091 = vadd.f32 0.0, %v4090
        %4092 = vmatmul.f32.gmra.mxu0 %v1371
        %v4093 = vpop.f32.mrf.mxu0
        %v4094 = vadd.f32 0.0, %v4093
        %4095 = vmatmul.f32.gmra.mxu0 %v1373
        %v4096 = vpop.f32.mrf.mxu0
        %v4097 = vadd.f32 0.0, %v4096
        %4098 = vmatmul.f32.gmra.mxu0 %v1375
        %v4099 = vpop.f32.mrf.mxu0
        %v4100 = vadd.f32 0.0, %v4099
        %4101 = vmatmul.f32.gmra.mxu0 %v1377
        %v4102 = vpop.f32.mrf.mxu0
        %v4103 = vadd.f32 0.0, %v4102
        %4104 = vmatmul.f32.gmra.mxu0 %v1379
        %v4105 = vpop.f32.mrf.mxu0
        %v4106 = vadd.f32 0.0, %v4105
        %4107 = vmatmul.f32.gmra.mxu0 %v1381
        %v4108 = vpop.f32.mrf.mxu0
        %v4109 = vadd.f32 0.0, %v4108
        %4110 = vmatmul.f32.gmra.mxu0 %v1383
        %v4111 = vpop.f32.mrf.mxu0
        %v4112 = vadd.f32 0.0, %v4111
        %4113 = vmatmul.f32.gmra.mxu0 %v1385
        %v4114 = vpop.f32.mrf.mxu0
        %v4115 = vadd.f32 0.0, %v4114
        %4116 = vmatmul.f32.gmra.mxu0 %v1387
        %v4117 = vpop.f32.mrf.mxu0
        %v4118 = vadd.f32 0.0, %v4117
        %4119 = vmatmul.f32.gmra.mxu0 %v1389
        %v4120 = vpop.f32.mrf.mxu0
        %v4121 = vadd.f32 0.0, %v4120
        %4122 = vmatmul.f32.gmra.mxu0 %v1391
        %v4123 = vpop.f32.mrf.mxu0
        %v4124 = vadd.f32 0.0, %v4123
        %4125 = vmatmul.f32.gmra.mxu0 %v1393
        %v4126 = vpop.f32.mrf.mxu0
        %v4127 = vadd.f32 0.0, %v4126
        %4128 = vmatmul.f32.gmra.mxu0 %v1395
        %v4129 = vpop.f32.mrf.mxu0
        %v4130 = vadd.f32 0.0, %v4129
        %4131 = vmatmul.f32.gmra.mxu0 %v1397
        %v4132 = vpop.f32.mrf.mxu0
        %v4133 = vadd.f32 0.0, %v4132
        %4134 = vmatmul.f32.gmra.mxu0 %v1399
        %v4135 = vpop.f32.mrf.mxu0
        %v4136 = vadd.f32 0.0, %v4135
        %4137 = vdwg.mxu0
        %4138 = vmatpush.msra.mxu0 %v1909
        %4139 = vmatpush.msra.mxu0 %v1893
        %4140 = vmatpush.msra.mxu0 %v1877
        %4141 = vmatpush.msra.mxu0 %v1861
        %4142 = vmatpush.msra.mxu0 %v1845
        %4143 = vmatpush.msra.mxu0 %v1829
        %4144 = vmatpush.msra.mxu0 %v1813
        %4145 = vmatpush.msra.mxu0 %v1797
        %4146 = vmatpush.msra.mxu0 %v1781
        %4147 = vmatpush.msra.mxu0 %v1765
        %4148 = vmatpush.msra.mxu0 %v1749
        %4149 = vmatpush.msra.mxu0 %v1733
        %4150 = vmatpush.msra.mxu0 %v1717
        %4151 = vmatpush.msra.mxu0 %v1701
        %4152 = vmatpush.msra.mxu0 %v1685
        %4153 = vmatpush.msra.mxu0 %v1669
        %4154 = vmatmul.f32.gmra.mxu0 %v1354
        %v4155 = vpop.f32.mrf.mxu0
        %v4156 = vadd.f32 %v4067, %v4155
        %4157 = vmatmul.f32.gmra.mxu0 %v1356
        %v4158 = vpop.f32.mrf.mxu0
        %v4159 = vadd.f32 %v4070, %v4158
        %4160 = vmatmul.f32.gmra.mxu0 %v1358
        %v4161 = vpop.f32.mrf.mxu0
        %v4162 = vadd.f32 %v4073, %v4161
        %4163 = vmatmul.f32.gmra.mxu0 %v1360
        %v4164 = vpop.f32.mrf.mxu0
        %v4165 = vadd.f32 %v4076, %v4164
        %4166 = vmatmul.f32.gmra.mxu0 %v1362
        %v4167 = vpop.f32.mrf.mxu0
        %v4168 = vadd.f32 %v4079, %v4167
        %4169 = vmatmul.f32.gmra.mxu0 %v1364
        %v4170 = vpop.f32.mrf.mxu0
        %v4171 = vadd.f32 %v4082, %v4170
        %4172 = vmatmul.f32.gmra.mxu0 %v1366
        %v4173 = vpop.f32.mrf.mxu0
        %v4174 = vadd.f32 %v4085, %v4173
        %4175 = vmatmul.f32.gmra.mxu0 %v1368
        %v4176 = vpop.f32.mrf.mxu0
        %v4177 = vadd.f32 %v4088, %v4176
        %4178 = vmatmul.f32.gmra.mxu0 %v1370
        %v4179 = vpop.f32.mrf.mxu0
        %v4180 = vadd.f32 %v4091, %v4179
        %4181 = vmatmul.f32.gmra.mxu0 %v1372
        %v4182 = vpop.f32.mrf.mxu0
        %v4183 = vadd.f32 %v4094, %v4182
        %4184 = vmatmul.f32.gmra.mxu0 %v1374
        %v4185 = vpop.f32.mrf.mxu0
        %v4186 = vadd.f32 %v4097, %v4185
        %4187 = vmatmul.f32.gmra.mxu0 %v1376
        %v4188 = vpop.f32.mrf.mxu0
        %v4189 = vadd.f32 %v4100, %v4188
        %4190 = vmatmul.f32.gmra.mxu0 %v1378
        %v4191 = vpop.f32.mrf.mxu0
        %v4192 = vadd.f32 %v4103, %v4191
        %4193 = vmatmul.f32.gmra.mxu0 %v1380
        %v4194 = vpop.f32.mrf.mxu0
        %v4195 = vadd.f32 %v4106, %v4194
        %4196 = vmatmul.f32.gmra.mxu0 %v1382
        %v4197 = vpop.f32.mrf.mxu0
        %v4198 = vadd.f32 %v4109, %v4197
        %4199 = vmatmul.f32.gmra.mxu0 %v1384
        %v4200 = vpop.f32.mrf.mxu0
        %v4201 = vadd.f32 %v4112, %v4200
        %4202 = vmatmul.f32.gmra.mxu0 %v1386
        %v4203 = vpop.f32.mrf.mxu0
        %v4204 = vadd.f32 %v4115, %v4203
        %4205 = vmatmul.f32.gmra.mxu0 %v1388
        %v4206 = vpop.f32.mrf.mxu0
        %v4207 = vadd.f32 %v4118, %v4206
        %4208 = vmatmul.f32.gmra.mxu0 %v1390
        %v4209 = vpop.f32.mrf.mxu0
        %v4210 = vadd.f32 %v4121, %v4209
        %4211 = vmatmul.f32.gmra.mxu0 %v1392
        %v4212 = vpop.f32.mrf.mxu0
        %v4213 = vadd.f32 %v4124, %v4212
        %4214 = vmatmul.f32.gmra.mxu0 %v1394
        %v4215 = vpop.f32.mrf.mxu0
        %v4216 = vadd.f32 %v4127, %v4215
        %4217 = vmatmul.f32.gmra.mxu0 %v1396
        %v4218 = vpop.f32.mrf.mxu0
        %v4219 = vadd.f32 %v4130, %v4218
        %4220 = vmatmul.f32.gmra.mxu0 %v1398
        %v4221 = vpop.f32.mrf.mxu0
        %v4222 = vadd.f32 %v4133, %v4221
        %4223 = vmatmul.f32.gmra.mxu0 %v1400
        %v4224 = vpop.f32.mrf.mxu0
        %v4225 = vadd.f32 %v4136, %v4224
        %4226 = vdwg.mxu0
        %4227 = vmatpush.msra.mxu0 %v1654
        %4228 = vmatpush.msra.mxu0 %v1638
        %4229 = vmatpush.msra.mxu0 %v1622
        %4230 = vmatpush.msra.mxu0 %v1606
        %4231 = vmatpush.msra.mxu0 %v1590
        %4232 = vmatpush.msra.mxu0 %v1574
        %4233 = vmatpush.msra.mxu0 %v1558
        %4234 = vmatpush.msra.mxu0 %v1542
        %4235 = vmatpush.msra.mxu0 %v1526
        %4236 = vmatpush.msra.mxu0 %v1510
        %4237 = vmatpush.msra.mxu0 %v1494
        %4238 = vmatpush.msra.mxu0 %v1478
        %4239 = vmatpush.msra.mxu0 %v1462
        %4240 = vmatpush.msra.mxu0 %v1446
        %4241 = vmatpush.msra.mxu0 %v1430
        %4242 = vmatpush.msra.mxu0 %v1414
        %4243 = vmatmul.f32.gmra.mxu0 %v1353
        %v4244 = vpop.f32.mrf.mxu0
        %v4245 = vadd.f32 0.0, %v4244
        %4246 = vmatmul.f32.gmra.mxu0 %v1355
        %v4247 = vpop.f32.mrf.mxu0
        %v4248 = vadd.f32 0.0, %v4247
        %4249 = vmatmul.f32.gmra.mxu0 %v1357
        %v4250 = vpop.f32.mrf.mxu0
        %v4251 = vadd.f32 0.0, %v4250
        %4252 = vmatmul.f32.gmra.mxu0 %v1359
        %v4253 = vpop.f32.mrf.mxu0
        %v4254 = vadd.f32 0.0, %v4253
        %4255 = vmatmul.f32.gmra.mxu0 %v1361
        %v4256 = vpop.f32.mrf.mxu0
        %v4257 = vadd.f32 0.0, %v4256
        %4258 = vmatmul.f32.gmra.mxu0 %v1363
        %v4259 = vpop.f32.mrf.mxu0
        %v4260 = vadd.f32 0.0, %v4259
        %4261 = vmatmul.f32.gmra.mxu0 %v1365
        %v4262 = vpop.f32.mrf.mxu0
        %v4263 = vadd.f32 0.0, %v4262
        %4264 = vmatmul.f32.gmra.mxu0 %v1367
        %v4265 = vpop.f32.mrf.mxu0
        %v4266 = vadd.f32 0.0, %v4265
        %4267 = vmatmul.f32.gmra.mxu0 %v1369
        %v4268 = vpop.f32.mrf.mxu0
        %v4269 = vadd.f32 0.0, %v4268
        %4270 = vmatmul.f32.gmra.mxu0 %v1371
        %v4271 = vpop.f32.mrf.mxu0
        %v4272 = vadd.f32 0.0, %v4271
        %4273 = vmatmul.f32.gmra.mxu0 %v1373
        %v4274 = vpop.f32.mrf.mxu0
        %v4275 = vadd.f32 0.0, %v4274
        %4276 = vmatmul.f32.gmra.mxu0 %v1375
        %v4277 = vpop.f32.mrf.mxu0
        %v4278 = vadd.f32 0.0, %v4277
        %4279 = vmatmul.f32.gmra.mxu0 %v1377
        %v4280 = vpop.f32.mrf.mxu0
        %v4281 = vadd.f32 0.0, %v4280
        %4282 = vmatmul.f32.gmra.mxu0 %v1379
        %v4283 = vpop.f32.mrf.mxu0
        %v4284 = vadd.f32 0.0, %v4283
        %4285 = vmatmul.f32.gmra.mxu0 %v1381
        %v4286 = vpop.f32.mrf.mxu0
        %v4287 = vadd.f32 0.0, %v4286
        %4288 = vmatmul.f32.gmra.mxu0 %v1383
        %v4289 = vpop.f32.mrf.mxu0
        %v4290 = vadd.f32 0.0, %v4289
        %4291 = vmatmul.f32.gmra.mxu0 %v1385
        %v4292 = vpop.f32.mrf.mxu0
        %v4293 = vadd.f32 0.0, %v4292
        %4294 = vmatmul.f32.gmra.mxu0 %v1387
        %v4295 = vpop.f32.mrf.mxu0
        %v4296 = vadd.f32 0.0, %v4295
        %4297 = vmatmul.f32.gmra.mxu0 %v1389
        %v4298 = vpop.f32.mrf.mxu0
        %v4299 = vadd.f32 0.0, %v4298
        %4300 = vmatmul.f32.gmra.mxu0 %v1391
        %v4301 = vpop.f32.mrf.mxu0
        %v4302 = vadd.f32 0.0, %v4301
        %4303 = vmatmul.f32.gmra.mxu0 %v1393
        %v4304 = vpop.f32.mrf.mxu0
        %v4305 = vadd.f32 0.0, %v4304
        %4306 = vmatmul.f32.gmra.mxu0 %v1395
        %v4307 = vpop.f32.mrf.mxu0
        %v4308 = vadd.f32 0.0, %v4307
        %4309 = vmatmul.f32.gmra.mxu0 %v1397
        %v4310 = vpop.f32.mrf.mxu0
        %v4311 = vadd.f32 0.0, %v4310
        %4312 = vmatmul.f32.gmra.mxu0 %v1399
        %v4313 = vpop.f32.mrf.mxu0
        %v4314 = vadd.f32 0.0, %v4313
        %4315 = vdwg.mxu0
        %4316 = vmatpush.msra.mxu0 %v1910
        %4317 = vmatpush.msra.mxu0 %v1894
        %4318 = vmatpush.msra.mxu0 %v1878
        %4319 = vmatpush.msra.mxu0 %v1862
        %4320 = vmatpush.msra.mxu0 %v1846
        %4321 = vmatpush.msra.mxu0 %v1830
        %4322 = vmatpush.msra.mxu0 %v1814
        %4323 = vmatpush.msra.mxu0 %v1798
        %4324 = vmatpush.msra.mxu0 %v1782
        %4325 = vmatpush.msra.mxu0 %v1766
        %4326 = vmatpush.msra.mxu0 %v1750
        %4327 = vmatpush.msra.mxu0 %v1734
        %4328 = vmatpush.msra.mxu0 %v1718
        %4329 = vmatpush.msra.mxu0 %v1702
        %4330 = vmatpush.msra.mxu0 %v1686
        %4331 = vmatpush.msra.mxu0 %v1670
        %4332 = vmatmul.f32.gmra.mxu0 %v1354
        %v4333 = vpop.f32.mrf.mxu0
        %v4334 = vadd.f32 %v4245, %v4333
        %4335 = vmatmul.f32.gmra.mxu0 %v1356
        %v4336 = vpop.f32.mrf.mxu0
        %v4337 = vadd.f32 %v4248, %v4336
        %4338 = vmatmul.f32.gmra.mxu0 %v1358
        %v4339 = vpop.f32.mrf.mxu0
        %v4340 = vadd.f32 %v4251, %v4339
        %4341 = vmatmul.f32.gmra.mxu0 %v1360
        %v4342 = vpop.f32.mrf.mxu0
        %v4343 = vadd.f32 %v4254, %v4342
        %4344 = vmatmul.f32.gmra.mxu0 %v1362
        %v4345 = vpop.f32.mrf.mxu0
        %v4346 = vadd.f32 %v4257, %v4345
        %4347 = vmatmul.f32.gmra.mxu0 %v1364
        %v4348 = vpop.f32.mrf.mxu0
        %v4349 = vadd.f32 %v4260, %v4348
        %4350 = vmatmul.f32.gmra.mxu0 %v1366
        %v4351 = vpop.f32.mrf.mxu0
        %v4352 = vadd.f32 %v4263, %v4351
        %4353 = vmatmul.f32.gmra.mxu0 %v1368
        %v4354 = vpop.f32.mrf.mxu0
        %v4355 = vadd.f32 %v4266, %v4354
        %4356 = vmatmul.f32.gmra.mxu0 %v1370
        %v4357 = vpop.f32.mrf.mxu0
        %v4358 = vadd.f32 %v4269, %v4357
        %4359 = vmatmul.f32.gmra.mxu0 %v1372
        %v4360 = vpop.f32.mrf.mxu0
        %v4361 = vadd.f32 %v4272, %v4360
        %4362 = vmatmul.f32.gmra.mxu0 %v1374
        %v4363 = vpop.f32.mrf.mxu0
        %v4364 = vadd.f32 %v4275, %v4363
        %4365 = vmatmul.f32.gmra.mxu0 %v1376
        %v4366 = vpop.f32.mrf.mxu0
        %v4367 = vadd.f32 %v4278, %v4366
        %4368 = vmatmul.f32.gmra.mxu0 %v1378
        %v4369 = vpop.f32.mrf.mxu0
        %v4370 = vadd.f32 %v4281, %v4369
        %4371 = vmatmul.f32.gmra.mxu0 %v1380
        %v4372 = vpop.f32.mrf.mxu0
        %v4373 = vadd.f32 %v4284, %v4372
        %4374 = vmatmul.f32.gmra.mxu0 %v1382
        %v4375 = vpop.f32.mrf.mxu0
        %v4376 = vadd.f32 %v4287, %v4375
        %4377 = vmatmul.f32.gmra.mxu0 %v1384
        %v4378 = vpop.f32.mrf.mxu0
        %v4379 = vadd.f32 %v4290, %v4378
        %4380 = vmatmul.f32.gmra.mxu0 %v1386
        %v4381 = vpop.f32.mrf.mxu0
        %v4382 = vadd.f32 %v4293, %v4381
        %4383 = vmatmul.f32.gmra.mxu0 %v1388
        %v4384 = vpop.f32.mrf.mxu0
        %v4385 = vadd.f32 %v4296, %v4384
        %4386 = vmatmul.f32.gmra.mxu0 %v1390
        %v4387 = vpop.f32.mrf.mxu0
        %v4388 = vadd.f32 %v4299, %v4387
        %4389 = vmatmul.f32.gmra.mxu0 %v1392
        %v4390 = vpop.f32.mrf.mxu0
        %v4391 = vadd.f32 %v4302, %v4390
        %4392 = vmatmul.f32.gmra.mxu0 %v1394
        %v4393 = vpop.f32.mrf.mxu0
        %v4394 = vadd.f32 %v4305, %v4393
        %4395 = vmatmul.f32.gmra.mxu0 %v1396
        %v4396 = vpop.f32.mrf.mxu0
        %v4397 = vadd.f32 %v4308, %v4396
        %4398 = vmatmul.f32.gmra.mxu0 %v1398
        %v4399 = vpop.f32.mrf.mxu0
        %v4400 = vadd.f32 %v4311, %v4399
        %4401 = vmatmul.f32.gmra.mxu0 %v1400
        %v4402 = vpop.f32.mrf.mxu0
        %v4403 = vadd.f32 %v4314, %v4402
        %4404 = vdwg.mxu0
        %4405 = vmatpush.msra.mxu0 %v1655
        %4406 = vmatpush.msra.mxu0 %v1639
        %4407 = vmatpush.msra.mxu0 %v1623
        %4408 = vmatpush.msra.mxu0 %v1607
        %4409 = vmatpush.msra.mxu0 %v1591
        %4410 = vmatpush.msra.mxu0 %v1575
        %4411 = vmatpush.msra.mxu0 %v1559
        %4412 = vmatpush.msra.mxu0 %v1543
        %4413 = vmatpush.msra.mxu0 %v1527
        %4414 = vmatpush.msra.mxu0 %v1511
        %4415 = vmatpush.msra.mxu0 %v1495
        %4416 = vmatpush.msra.mxu0 %v1479
        %4417 = vmatpush.msra.mxu0 %v1463
        %4418 = vmatpush.msra.mxu0 %v1447
        %4419 = vmatpush.msra.mxu0 %v1431
        %4420 = vmatpush.msra.mxu0 %v1415
        %4421 = vmatmul.f32.gmra.mxu0 %v1353
        %v4422 = vpop.f32.mrf.mxu0
        %v4423 = vadd.f32 0.0, %v4422
        %4424 = vmatmul.f32.gmra.mxu0 %v1355
        %v4425 = vpop.f32.mrf.mxu0
        %v4426 = vadd.f32 0.0, %v4425
        %4427 = vmatmul.f32.gmra.mxu0 %v1357
        %v4428 = vpop.f32.mrf.mxu0
        %v4429 = vadd.f32 0.0, %v4428
        %4430 = vmatmul.f32.gmra.mxu0 %v1359
        %v4431 = vpop.f32.mrf.mxu0
        %v4432 = vadd.f32 0.0, %v4431
        %4433 = vmatmul.f32.gmra.mxu0 %v1361
        %v4434 = vpop.f32.mrf.mxu0
        %v4435 = vadd.f32 0.0, %v4434
        %4436 = vmatmul.f32.gmra.mxu0 %v1363
        %v4437 = vpop.f32.mrf.mxu0
        %v4438 = vadd.f32 0.0, %v4437
        %4439 = vmatmul.f32.gmra.mxu0 %v1365
        %v4440 = vpop.f32.mrf.mxu0
        %v4441 = vadd.f32 0.0, %v4440
        %4442 = vmatmul.f32.gmra.mxu0 %v1367
        %v4443 = vpop.f32.mrf.mxu0
        %v4444 = vadd.f32 0.0, %v4443
        %4445 = vmatmul.f32.gmra.mxu0 %v1369
        %v4446 = vpop.f32.mrf.mxu0
        %v4447 = vadd.f32 0.0, %v4446
        %4448 = vmatmul.f32.gmra.mxu0 %v1371
        %v4449 = vpop.f32.mrf.mxu0
        %v4450 = vadd.f32 0.0, %v4449
        %4451 = vmatmul.f32.gmra.mxu0 %v1373
        %v4452 = vpop.f32.mrf.mxu0
        %v4453 = vadd.f32 0.0, %v4452
        %4454 = vmatmul.f32.gmra.mxu0 %v1375
        %v4455 = vpop.f32.mrf.mxu0
        %v4456 = vadd.f32 0.0, %v4455
        %4457 = vmatmul.f32.gmra.mxu0 %v1377
        %v4458 = vpop.f32.mrf.mxu0
        %v4459 = vadd.f32 0.0, %v4458
        %4460 = vmatmul.f32.gmra.mxu0 %v1379
        %v4461 = vpop.f32.mrf.mxu0
        %v4462 = vadd.f32 0.0, %v4461
        %4463 = vmatmul.f32.gmra.mxu0 %v1381
        %v4464 = vpop.f32.mrf.mxu0
        %v4465 = vadd.f32 0.0, %v4464
        %4466 = vmatmul.f32.gmra.mxu0 %v1383
        %v4467 = vpop.f32.mrf.mxu0
        %v4468 = vadd.f32 0.0, %v4467
        %4469 = vmatmul.f32.gmra.mxu0 %v1385
        %v4470 = vpop.f32.mrf.mxu0
        %v4471 = vadd.f32 0.0, %v4470
        %4472 = vmatmul.f32.gmra.mxu0 %v1387
        %v4473 = vpop.f32.mrf.mxu0
        %v4474 = vadd.f32 0.0, %v4473
        %4475 = vmatmul.f32.gmra.mxu0 %v1389
        %v4476 = vpop.f32.mrf.mxu0
        %v4477 = vadd.f32 0.0, %v4476
        %4478 = vmatmul.f32.gmra.mxu0 %v1391
        %v4479 = vpop.f32.mrf.mxu0
        %v4480 = vadd.f32 0.0, %v4479
        %4481 = vmatmul.f32.gmra.mxu0 %v1393
        %v4482 = vpop.f32.mrf.mxu0
        %v4483 = vadd.f32 0.0, %v4482
        %4484 = vmatmul.f32.gmra.mxu0 %v1395
        %v4485 = vpop.f32.mrf.mxu0
        %v4486 = vadd.f32 0.0, %v4485
        %4487 = vmatmul.f32.gmra.mxu0 %v1397
        %v4488 = vpop.f32.mrf.mxu0
        %v4489 = vadd.f32 0.0, %v4488
        %4490 = vmatmul.f32.gmra.mxu0 %v1399
        %v4491 = vpop.f32.mrf.mxu0
        %v4492 = vadd.f32 0.0, %v4491
        %4493 = vdwg.mxu0
        %4494 = vmatpush.msra.mxu0 %v1911
        %4495 = vmatpush.msra.mxu0 %v1895
        %4496 = vmatpush.msra.mxu0 %v1879
        %4497 = vmatpush.msra.mxu0 %v1863
        %4498 = vmatpush.msra.mxu0 %v1847
        %4499 = vmatpush.msra.mxu0 %v1831
        %4500 = vmatpush.msra.mxu0 %v1815
        %4501 = vmatpush.msra.mxu0 %v1799
        %4502 = vmatpush.msra.mxu0 %v1783
        %4503 = vmatpush.msra.mxu0 %v1767
        %4504 = vmatpush.msra.mxu0 %v1751
        %4505 = vmatpush.msra.mxu0 %v1735
        %4506 = vmatpush.msra.mxu0 %v1719
        %4507 = vmatpush.msra.mxu0 %v1703
        %4508 = vmatpush.msra.mxu0 %v1687
        %4509 = vmatpush.msra.mxu0 %v1671
        %4510 = vmatmul.f32.gmra.mxu0 %v1354
        %v4511 = vpop.f32.mrf.mxu0
        %v4512 = vadd.f32 %v4423, %v4511
        %4513 = vmatmul.f32.gmra.mxu0 %v1356
        %v4514 = vpop.f32.mrf.mxu0
        %v4515 = vadd.f32 %v4426, %v4514
        %4516 = vmatmul.f32.gmra.mxu0 %v1358
        %v4517 = vpop.f32.mrf.mxu0
        %v4518 = vadd.f32 %v4429, %v4517
        %4519 = vmatmul.f32.gmra.mxu0 %v1360
        %v4520 = vpop.f32.mrf.mxu0
        %v4521 = vadd.f32 %v4432, %v4520
        %4522 = vmatmul.f32.gmra.mxu0 %v1362
        %v4523 = vpop.f32.mrf.mxu0
        %v4524 = vadd.f32 %v4435, %v4523
        %4525 = vmatmul.f32.gmra.mxu0 %v1364
        %v4526 = vpop.f32.mrf.mxu0
        %v4527 = vadd.f32 %v4438, %v4526
        %4528 = vmatmul.f32.gmra.mxu0 %v1366
        %v4529 = vpop.f32.mrf.mxu0
        %v4530 = vadd.f32 %v4441, %v4529
        %4531 = vmatmul.f32.gmra.mxu0 %v1368
        %v4532 = vpop.f32.mrf.mxu0
        %v4533 = vadd.f32 %v4444, %v4532
        %4534 = vmatmul.f32.gmra.mxu0 %v1370
        %v4535 = vpop.f32.mrf.mxu0
        %v4536 = vadd.f32 %v4447, %v4535
        %4537 = vmatmul.f32.gmra.mxu0 %v1372
        %v4538 = vpop.f32.mrf.mxu0
        %v4539 = vadd.f32 %v4450, %v4538
        %4540 = vmatmul.f32.gmra.mxu0 %v1374
        %v4541 = vpop.f32.mrf.mxu0
        %v4542 = vadd.f32 %v4453, %v4541
        %4543 = vmatmul.f32.gmra.mxu0 %v1376
        %v4544 = vpop.f32.mrf.mxu0
        %v4545 = vadd.f32 %v4456, %v4544
        %4546 = vmatmul.f32.gmra.mxu0 %v1378
        %v4547 = vpop.f32.mrf.mxu0
        %v4548 = vadd.f32 %v4459, %v4547
        %4549 = vmatmul.f32.gmra.mxu0 %v1380
        %v4550 = vpop.f32.mrf.mxu0
        %v4551 = vadd.f32 %v4462, %v4550
        %4552 = vmatmul.f32.gmra.mxu0 %v1382
        %v4553 = vpop.f32.mrf.mxu0
        %v4554 = vadd.f32 %v4465, %v4553
        %4555 = vmatmul.f32.gmra.mxu0 %v1384
        %v4556 = vpop.f32.mrf.mxu0
        %v4557 = vadd.f32 %v4468, %v4556
        %4558 = vmatmul.f32.gmra.mxu0 %v1386
        %v4559 = vpop.f32.mrf.mxu0
        %v4560 = vadd.f32 %v4471, %v4559
        %4561 = vmatmul.f32.gmra.mxu0 %v1388
        %v4562 = vpop.f32.mrf.mxu0
        %v4563 = vadd.f32 %v4474, %v4562
        %4564 = vmatmul.f32.gmra.mxu0 %v1390
        %v4565 = vpop.f32.mrf.mxu0
        %v4566 = vadd.f32 %v4477, %v4565
        %4567 = vmatmul.f32.gmra.mxu0 %v1392
        %v4568 = vpop.f32.mrf.mxu0
        %v4569 = vadd.f32 %v4480, %v4568
        %4570 = vmatmul.f32.gmra.mxu0 %v1394
        %v4571 = vpop.f32.mrf.mxu0
        %v4572 = vadd.f32 %v4483, %v4571
        %4573 = vmatmul.f32.gmra.mxu0 %v1396
        %v4574 = vpop.f32.mrf.mxu0
        %v4575 = vadd.f32 %v4486, %v4574
        %4576 = vmatmul.f32.gmra.mxu0 %v1398
        %v4577 = vpop.f32.mrf.mxu0
        %v4578 = vadd.f32 %v4489, %v4577
        %4579 = vmatmul.f32.gmra.mxu0 %v1400
        %v4580 = vpop.f32.mrf.mxu0
        %v4581 = vadd.f32 %v4492, %v4580
        %4582 = vdwg.mxu0
        %4583 = vmatpush.msra.mxu0 %v1656
        %4584 = vmatpush.msra.mxu0 %v1640
        %4585 = vmatpush.msra.mxu0 %v1624
        %4586 = vmatpush.msra.mxu0 %v1608
        %4587 = vmatpush.msra.mxu0 %v1592
        %4588 = vmatpush.msra.mxu0 %v1576
        %4589 = vmatpush.msra.mxu0 %v1560
        %4590 = vmatpush.msra.mxu0 %v1544
        %4591 = vmatpush.msra.mxu0 %v1528
        %4592 = vmatpush.msra.mxu0 %v1512
        %4593 = vmatpush.msra.mxu0 %v1496
        %4594 = vmatpush.msra.mxu0 %v1480
        %4595 = vmatpush.msra.mxu0 %v1464
        %4596 = vmatpush.msra.mxu0 %v1448
        %4597 = vmatpush.msra.mxu0 %v1432
        %4598 = vmatpush.msra.mxu0 %v1416
        %4599 = vmatmul.f32.gmra.mxu0 %v1353
        %v4600 = vpop.f32.mrf.mxu0
        %v4601 = vadd.f32 0.0, %v4600
        %4602 = vmatmul.f32.gmra.mxu0 %v1355
        %v4603 = vpop.f32.mrf.mxu0
        %v4604 = vadd.f32 0.0, %v4603
        %4605 = vmatmul.f32.gmra.mxu0 %v1357
        %v4606 = vpop.f32.mrf.mxu0
        %v4607 = vadd.f32 0.0, %v4606
        %4608 = vmatmul.f32.gmra.mxu0 %v1359
        %v4609 = vpop.f32.mrf.mxu0
        %v4610 = vadd.f32 0.0, %v4609
        %4611 = vmatmul.f32.gmra.mxu0 %v1361
        %v4612 = vpop.f32.mrf.mxu0
        %v4613 = vadd.f32 0.0, %v4612
        %4614 = vmatmul.f32.gmra.mxu0 %v1363
        %v4615 = vpop.f32.mrf.mxu0
        %v4616 = vadd.f32 0.0, %v4615
        %4617 = vmatmul.f32.gmra.mxu0 %v1365
        %v4618 = vpop.f32.mrf.mxu0
        %v4619 = vadd.f32 0.0, %v4618
        %4620 = vmatmul.f32.gmra.mxu0 %v1367
        %v4621 = vpop.f32.mrf.mxu0
        %v4622 = vadd.f32 0.0, %v4621
        %4623 = vmatmul.f32.gmra.mxu0 %v1369
        %v4624 = vpop.f32.mrf.mxu0
        %v4625 = vadd.f32 0.0, %v4624
        %4626 = vmatmul.f32.gmra.mxu0 %v1371
        %v4627 = vpop.f32.mrf.mxu0
        %v4628 = vadd.f32 0.0, %v4627
        %4629 = vmatmul.f32.gmra.mxu0 %v1373
        %v4630 = vpop.f32.mrf.mxu0
        %v4631 = vadd.f32 0.0, %v4630
        %4632 = vmatmul.f32.gmra.mxu0 %v1375
        %v4633 = vpop.f32.mrf.mxu0
        %v4634 = vadd.f32 0.0, %v4633
        %4635 = vmatmul.f32.gmra.mxu0 %v1377
        %v4636 = vpop.f32.mrf.mxu0
        %v4637 = vadd.f32 0.0, %v4636
        %4638 = vmatmul.f32.gmra.mxu0 %v1379
        %v4639 = vpop.f32.mrf.mxu0
        %v4640 = vadd.f32 0.0, %v4639
        %4641 = vmatmul.f32.gmra.mxu0 %v1381
        %v4642 = vpop.f32.mrf.mxu0
        %v4643 = vadd.f32 0.0, %v4642
        %4644 = vmatmul.f32.gmra.mxu0 %v1383
        %v4645 = vpop.f32.mrf.mxu0
        %v4646 = vadd.f32 0.0, %v4645
        %4647 = vmatmul.f32.gmra.mxu0 %v1385
        %v4648 = vpop.f32.mrf.mxu0
        %v4649 = vadd.f32 0.0, %v4648
        %4650 = vmatmul.f32.gmra.mxu0 %v1387
        %v4651 = vpop.f32.mrf.mxu0
        %v4652 = vadd.f32 0.0, %v4651
        %4653 = vmatmul.f32.gmra.mxu0 %v1389
        %v4654 = vpop.f32.mrf.mxu0
        %v4655 = vadd.f32 0.0, %v4654
        %4656 = vmatmul.f32.gmra.mxu0 %v1391
        %v4657 = vpop.f32.mrf.mxu0
        %v4658 = vadd.f32 0.0, %v4657
        %4659 = vmatmul.f32.gmra.mxu0 %v1393
        %v4660 = vpop.f32.mrf.mxu0
        %v4661 = vadd.f32 0.0, %v4660
        %4662 = vmatmul.f32.gmra.mxu0 %v1395
        %v4663 = vpop.f32.mrf.mxu0
        %v4664 = vadd.f32 0.0, %v4663
        %4665 = vmatmul.f32.gmra.mxu0 %v1397
        %v4666 = vpop.f32.mrf.mxu0
        %v4667 = vadd.f32 0.0, %v4666
        %4668 = vmatmul.f32.gmra.mxu0 %v1399
        %v4669 = vpop.f32.mrf.mxu0
        %v4670 = vadd.f32 0.0, %v4669
        %4671 = vdwg.mxu0
        %4672 = vmatpush.msra.mxu0 %v1912
        %4673 = vmatpush.msra.mxu0 %v1896
        %4674 = vmatpush.msra.mxu0 %v1880
        %4675 = vmatpush.msra.mxu0 %v1864
        %4676 = vmatpush.msra.mxu0 %v1848
        %4677 = vmatpush.msra.mxu0 %v1832
        %4678 = vmatpush.msra.mxu0 %v1816
        %4679 = vmatpush.msra.mxu0 %v1800
        %4680 = vmatpush.msra.mxu0 %v1784
        %4681 = vmatpush.msra.mxu0 %v1768
        %4682 = vmatpush.msra.mxu0 %v1752
        %4683 = vmatpush.msra.mxu0 %v1736
        %4684 = vmatpush.msra.mxu0 %v1720
        %4685 = vmatpush.msra.mxu0 %v1704
        %4686 = vmatpush.msra.mxu0 %v1688
        %4687 = vmatpush.msra.mxu0 %v1672
        %4688 = vmatmul.f32.gmra.mxu0 %v1354
        %v4689 = vpop.f32.mrf.mxu0
        %v4690 = vadd.f32 %v4601, %v4689
        %4691 = vmatmul.f32.gmra.mxu0 %v1356
        %v4692 = vpop.f32.mrf.mxu0
        %v4693 = vadd.f32 %v4604, %v4692
        %4694 = vmatmul.f32.gmra.mxu0 %v1358
        %v4695 = vpop.f32.mrf.mxu0
        %v4696 = vadd.f32 %v4607, %v4695
        %4697 = vmatmul.f32.gmra.mxu0 %v1360
        %v4698 = vpop.f32.mrf.mxu0
        %v4699 = vadd.f32 %v4610, %v4698
        %4700 = vmatmul.f32.gmra.mxu0 %v1362
        %v4701 = vpop.f32.mrf.mxu0
        %v4702 = vadd.f32 %v4613, %v4701
        %4703 = vmatmul.f32.gmra.mxu0 %v1364
        %v4704 = vpop.f32.mrf.mxu0
        %v4705 = vadd.f32 %v4616, %v4704
        %4706 = vmatmul.f32.gmra.mxu0 %v1366
        %v4707 = vpop.f32.mrf.mxu0
        %v4708 = vadd.f32 %v4619, %v4707
        %4709 = vmatmul.f32.gmra.mxu0 %v1368
        %v4710 = vpop.f32.mrf.mxu0
        %v4711 = vadd.f32 %v4622, %v4710
        %4712 = vmatmul.f32.gmra.mxu0 %v1370
        %v4713 = vpop.f32.mrf.mxu0
        %v4714 = vadd.f32 %v4625, %v4713
        %4715 = vmatmul.f32.gmra.mxu0 %v1372
        %v4716 = vpop.f32.mrf.mxu0
        %v4717 = vadd.f32 %v4628, %v4716
        %4718 = vmatmul.f32.gmra.mxu0 %v1374
        %v4719 = vpop.f32.mrf.mxu0
        %v4720 = vadd.f32 %v4631, %v4719
        %4721 = vmatmul.f32.gmra.mxu0 %v1376
        %v4722 = vpop.f32.mrf.mxu0
        %v4723 = vadd.f32 %v4634, %v4722
        %4724 = vmatmul.f32.gmra.mxu0 %v1378
        %v4725 = vpop.f32.mrf.mxu0
        %v4726 = vadd.f32 %v4637, %v4725
        %4727 = vmatmul.f32.gmra.mxu0 %v1380
        %v4728 = vpop.f32.mrf.mxu0
        %v4729 = vadd.f32 %v4640, %v4728
        %4730 = vmatmul.f32.gmra.mxu0 %v1382
        %v4731 = vpop.f32.mrf.mxu0
        %v4732 = vadd.f32 %v4643, %v4731
        %4733 = vmatmul.f32.gmra.mxu0 %v1384
        %v4734 = vpop.f32.mrf.mxu0
        %v4735 = vadd.f32 %v4646, %v4734
        %4736 = vmatmul.f32.gmra.mxu0 %v1386
        %v4737 = vpop.f32.mrf.mxu0
        %v4738 = vadd.f32 %v4649, %v4737
        %4739 = vmatmul.f32.gmra.mxu0 %v1388
        %v4740 = vpop.f32.mrf.mxu0
        %v4741 = vadd.f32 %v4652, %v4740
        %4742 = vmatmul.f32.gmra.mxu0 %v1390
        %v4743 = vpop.f32.mrf.mxu0
        %v4744 = vadd.f32 %v4655, %v4743
        %4745 = vmatmul.f32.gmra.mxu0 %v1392
        %v4746 = vpop.f32.mrf.mxu0
        %v4747 = vadd.f32 %v4658, %v4746
        %4748 = vmatmul.f32.gmra.mxu0 %v1394
        %v4749 = vpop.f32.mrf.mxu0
        %v4750 = vadd.f32 %v4661, %v4749
        %4751 = vmatmul.f32.gmra.mxu0 %v1396
        %v4752 = vpop.f32.mrf.mxu0
        %v4753 = vadd.f32 %v4664, %v4752
        %4754 = vmatmul.f32.gmra.mxu0 %v1398
        %v4755 = vpop.f32.mrf.mxu0
        %v4756 = vadd.f32 %v4667, %v4755
        %4757 = vmatmul.f32.gmra.mxu0 %v1400
        %v4758 = vpop.f32.mrf.mxu0
        %v4759 = vadd.f32 %v4670, %v4758
        %4760 = vdwg.mxu0
        %v4761 = vld [vmem:[%s1331] sm:$0xff]
        %v4762 = vld [vmem:[%s1331 + $0x8] sm:$0xff]
        %v4763 = vadd.f32 %v4761, 1.0
        %v4764 = vadd.f32 %v4762, 1.0
        %v4765 = vmul.f32 %v4763, 7.5
        %v4766 = vmul.f32 %v4764, 7.5
        %v4767 = vlaneseq
        %v4768 = vshrl.u32 %v4767, 7
        %v4769 = vadd.s32 %v4768, 8
        %v4770 = vcvt.s32.f32 %v4768
        %v4771 = vcvt.s32.f32 %v4769
        %v4774 = vperm.slane %v4765, 0
        %v4775 = vperm.slane %v4765, 1
        %v4776 = vperm.slane %v4765, 2
        %v4777 = vperm.slane %v4765, 3
        %v4778 = vperm.slane %v4765, 4
        %v4779 = vperm.slane %v4765, 5
        %v4780 = vperm.slane %v4765, 6
        %v4781 = vperm.slane %v4765, 7
        %v4782 = vperm.slane %v4766, 0
        %v4783 = vperm.slane %v4766, 1
        %v4784 = vperm.slane %v4766, 2
        %v4785 = vperm.slane %v4766, 3
        %v4786 = vperm.slane %v4766, 4
        %v4787 = vperm.slane %v4766, 5
        %v4788 = vperm.slane %v4766, 6
        %v4789 = vperm.slane %v4766, 7
        %v4806 = vsub.f32 %v4774, %v4770
        %v4807 = vsub.f32 %v4775, %v4770
        %v4808 = vsub.f32 %v4776, %v4770
        %v4809 = vsub.f32 %v4777, %v4770
        %v4810 = vsub.f32 %v4778, %v4770
        %v4811 = vsub.f32 %v4779, %v4770
        %v4812 = vsub.f32 %v4780, %v4770
        %v4813 = vsub.f32 %v4781, %v4770
        %v4814 = vsub.f32 %v4782, %v4770
        %v4815 = vsub.f32 %v4783, %v4770
        %v4816 = vsub.f32 %v4784, %v4770
        %v4817 = vsub.f32 %v4785, %v4770
        %v4818 = vsub.f32 %v4786, %v4770
        %v4819 = vsub.f32 %v4787, %v4770
        %v4820 = vsub.f32 %v4788, %v4770
        %v4821 = vsub.f32 %v4789, %v4770
        %v4822 = vsub.f32 %v4774, %v4771
        %v4823 = vsub.f32 %v4775, %v4771
        %v4824 = vsub.f32 %v4776, %v4771
        %v4825 = vsub.f32 %v4777, %v4771
        %v4826 = vsub.f32 %v4778, %v4771
        %v4827 = vsub.f32 %v4779, %v4771
        %v4828 = vsub.f32 %v4780, %v4771
        %v4829 = vsub.f32 %v4781, %v4771
        %v4830 = vsub.f32 %v4782, %v4771
        %v4831 = vsub.f32 %v4783, %v4771
        %v4832 = vsub.f32 %v4784, %v4771
        %v4833 = vsub.f32 %v4785, %v4771
        %v4834 = vsub.f32 %v4786, %v4771
        %v4835 = vsub.f32 %v4787, %v4771
        %v4836 = vsub.f32 %v4788, %v4771
        %v4837 = vsub.f32 %v4789, %v4771
        %v4838 = vand.u32 2147483647, %v4806
        %v4839 = vand.u32 2147483647, %v4807
        %v4840 = vand.u32 2147483647, %v4808
        %v4841 = vand.u32 2147483647, %v4809
        %v4842 = vand.u32 2147483647, %v4810
        %v4843 = vand.u32 2147483647, %v4811
        %v4844 = vand.u32 2147483647, %v4812
        %v4845 = vand.u32 2147483647, %v4813
        %v4846 = vand.u32 2147483647, %v4814
        %v4847 = vand.u32 2147483647, %v4815
        %v4848 = vand.u32 2147483647, %v4816
        %v4849 = vand.u32 2147483647, %v4817
        %v4850 = vand.u32 2147483647, %v4818
        %v4851 = vand.u32 2147483647, %v4819
        %v4852 = vand.u32 2147483647, %v4820
        %v4853 = vand.u32 2147483647, %v4821
        %v4854 = vand.u32 2147483647, %v4822
        %v4855 = vand.u32 2147483647, %v4823
        %v4856 = vand.u32 2147483647, %v4824
        %v4857 = vand.u32 2147483647, %v4825
        %v4858 = vand.u32 2147483647, %v4826
        %v4859 = vand.u32 2147483647, %v4827
        %v4860 = vand.u32 2147483647, %v4828
        %v4861 = vand.u32 2147483647, %v4829
        %v4862 = vand.u32 2147483647, %v4830
        %v4863 = vand.u32 2147483647, %v4831
        %v4864 = vand.u32 2147483647, %v4832
        %v4865 = vand.u32 2147483647, %v4833
        %v4866 = vand.u32 2147483647, %v4834
        %v4867 = vand.u32 2147483647, %v4835
        %v4868 = vand.u32 2147483647, %v4836
        %v4869 = vand.u32 2147483647, %v4837
        %v4870 = vsub.f32 1.0, %v4838
        %v4871 = vsub.f32 1.0, %v4839
        %v4872 = vsub.f32 1.0, %v4840
        %v4873 = vsub.f32 1.0, %v4841
        %v4874 = vsub.f32 1.0, %v4842
        %v4875 = vsub.f32 1.0, %v4843
        %v4876 = vsub.f32 1.0, %v4844
        %v4877 = vsub.f32 1.0, %v4845
        %v4878 = vsub.f32 1.0, %v4846
        %v4879 = vsub.f32 1.0, %v4847
        %v4880 = vsub.f32 1.0, %v4848
        %v4881 = vsub.f32 1.0, %v4849
        %v4882 = vsub.f32 1.0, %v4850
        %v4883 = vsub.f32 1.0, %v4851
        %v4884 = vsub.f32 1.0, %v4852
        %v4885 = vsub.f32 1.0, %v4853
        %v4886 = vsub.f32 1.0, %v4854
        %v4887 = vsub.f32 1.0, %v4855
        %v4888 = vsub.f32 1.0, %v4856
        %v4889 = vsub.f32 1.0, %v4857
        %v4890 = vsub.f32 1.0, %v4858
        %v4891 = vsub.f32 1.0, %v4859
        %v4892 = vsub.f32 1.0, %v4860
        %v4893 = vsub.f32 1.0, %v4861
        %v4894 = vsub.f32 1.0, %v4862
        %v4895 = vsub.f32 1.0, %v4863
        %v4896 = vsub.f32 1.0, %v4864
        %v4897 = vsub.f32 1.0, %v4865
        %v4898 = vsub.f32 1.0, %v4866
        %v4899 = vsub.f32 1.0, %v4867
        %v4900 = vsub.f32 1.0, %v4868
        %v4901 = vsub.f32 1.0, %v4869
        %v4902 = vmax.f32 %v4870, 0.0
        %v4903 = vmax.f32 %v4871, 0.0
        %v4904 = vmax.f32 %v4872, 0.0
        %v4905 = vmax.f32 %v4873, 0.0
        %v4906 = vmax.f32 %v4874, 0.0
        %v4907 = vmax.f32 %v4875, 0.0
        %v4908 = vmax.f32 %v4876, 0.0
        %v4909 = vmax.f32 %v4877, 0.0
        %v4910 = vmax.f32 %v4878, 0.0
        %v4911 = vmax.f32 %v4879, 0.0
        %v4912 = vmax.f32 %v4880, 0.0
        %v4913 = vmax.f32 %v4881, 0.0
        %v4914 = vmax.f32 %v4882, 0.0
        %v4915 = vmax.f32 %v4883, 0.0
        %v4916 = vmax.f32 %v4884, 0.0
        %v4917 = vmax.f32 %v4885, 0.0
        %v4918 = vmax.f32 %v4886, 0.0
        %v4919 = vmax.f32 %v4887, 0.0
        %v4920 = vmax.f32 %v4888, 0.0
        %v4921 = vmax.f32 %v4889, 0.0
        %v4922 = vmax.f32 %v4890, 0.0
        %v4923 = vmax.f32 %v4891, 0.0
        %v4924 = vmax.f32 %v4892, 0.0
        %v4925 = vmax.f32 %v4893, 0.0
        %v4926 = vmax.f32 %v4894, 0.0
        %v4927 = vmax.f32 %v4895, 0.0
        %v4928 = vmax.f32 %v4896, 0.0
        %v4929 = vmax.f32 %v4897, 0.0
        %v4930 = vmax.f32 %v4898, 0.0
        %v4931 = vmax.f32 %v4899, 0.0
        %v4932 = vmax.f32 %v4900, 0.0
        %v4933 = vmax.f32 %v4901, 0.0
        %v4934 = vld [vmem:[%s1341] sm:$0xff]
        %v4935 = vld [vmem:[%s1341 + $0x8] sm:$0xff]
        %v4936 = vld [vmem:[%s1341 + $0x10] sm:$0xff]
        %v4937 = vld [vmem:[%s1341 + $0x18] sm:$0xff]
        %v4938 = vld [vmem:[%s1341 + $0x20] sm:$0xff]
        %v4939 = vld [vmem:[%s1341 + $0x28] sm:$0xff]
        %v4940 = vld [vmem:[%s1341 + $0x30] sm:$0xff]
        %v4941 = vld [vmem:[%s1341 + $0x38] sm:$0xff]
        %v4950 = vperm.slane %v4934, 0
        %v4951 = vperm.slane %v4934, 4
        %v4952 = vperm.slane %v4935, 0
        %v4953 = vperm.slane %v4935, 4
        %v4954 = vperm.slane %v4936, 0
        %v4955 = vperm.slane %v4936, 4
        %v4956 = vperm.slane %v4937, 0
        %v4957 = vperm.slane %v4937, 4
        %v4958 = vperm.slane %v4938, 0
        %v4959 = vperm.slane %v4938, 4
        %v4960 = vperm.slane %v4939, 0
        %v4961 = vperm.slane %v4939, 4
        %v4962 = vperm.slane %v4940, 0
        %v4963 = vperm.slane %v4940, 4
        %v4964 = vperm.slane %v4941, 0
        %v4965 = vperm.slane %v4941, 4
        %v4982 = vperm.slane %v4950, 0
        %v4983 = vperm.slane %v4951, 0
        %v4984 = vperm.slane %v4952, 0
        %v4985 = vperm.slane %v4953, 0
        %v4986 = vperm.slane %v4954, 0
        %v4987 = vperm.slane %v4955, 0
        %v4988 = vperm.slane %v4956, 0
        %v4989 = vperm.slane %v4957, 0
        %v4990 = vperm.slane %v4958, 0
        %v4991 = vperm.slane %v4959, 0
        %v4992 = vperm.slane %v4960, 0
        %v4993 = vperm.slane %v4961, 0
        %v4994 = vperm.slane %v4962, 0
        %v4995 = vperm.slane %v4963, 0
        %v4996 = vperm.slane %v4964, 0
        %v4997 = vperm.slane %v4965, 0
        %v4998 = vmul.f32 %v4902, %v4982
        %v4999 = vmul.f32 %v4903, %v4983
        %v5000 = vmul.f32 %v4904, %v4984
        %v5001 = vmul.f32 %v4905, %v4985
        %v5002 = vmul.f32 %v4906, %v4986
        %v5003 = vmul.f32 %v4907, %v4987
        %v5004 = vmul.f32 %v4908, %v4988
        %v5005 = vmul.f32 %v4909, %v4989
        %v5006 = vmul.f32 %v4910, %v4990
        %v5007 = vmul.f32 %v4911, %v4991
        %v5008 = vmul.f32 %v4912, %v4992
        %v5009 = vmul.f32 %v4913, %v4993
        %v5010 = vmul.f32 %v4914, %v4994
        %v5011 = vmul.f32 %v4915, %v4995
        %v5012 = vmul.f32 %v4916, %v4996
        %v5013 = vmul.f32 %v4917, %v4997
        %v5014 = vmul.f32 %v4918, %v4982
        %v5015 = vmul.f32 %v4919, %v4983
        %v5016 = vmul.f32 %v4920, %v4984
        %v5017 = vmul.f32 %v4921, %v4985
        %v5018 = vmul.f32 %v4922, %v4986
        %v5019 = vmul.f32 %v4923, %v4987
        %v5020 = vmul.f32 %v4924, %v4988
        %v5021 = vmul.f32 %v4925, %v4989
        %v5022 = vmul.f32 %v4926, %v4990
        %v5023 = vmul.f32 %v4927, %v4991
        %v5024 = vmul.f32 %v4928, %v4992
        %v5025 = vmul.f32 %v4929, %v4993
        %v5026 = vmul.f32 %v4930, %v4994
        %v5027 = vmul.f32 %v4931, %v4995
        %v5028 = vmul.f32 %v4932, %v4996
        %v5029 = vmul.f32 %v4933, %v4997
        %v5030 = vperm.slane %v4934, 1
        %v5031 = vperm.slane %v4934, 5
        %v5032 = vperm.slane %v4935, 1
        %v5033 = vperm.slane %v4935, 5
        %v5034 = vperm.slane %v4936, 1
        %v5035 = vperm.slane %v4936, 5
        %v5036 = vperm.slane %v4937, 1
        %v5037 = vperm.slane %v4937, 5
        %v5038 = vperm.slane %v4938, 1
        %v5039 = vperm.slane %v4938, 5
        %v5040 = vperm.slane %v4939, 1
        %v5041 = vperm.slane %v4939, 5
        %v5042 = vperm.slane %v4940, 1
        %v5043 = vperm.slane %v4940, 5
        %v5044 = vperm.slane %v4941, 1
        %v5045 = vperm.slane %v4941, 5
        %v5062 = vperm.slane %v5030, 1
        %v5063 = vperm.slane %v5031, 1
        %v5064 = vperm.slane %v5032, 1
        %v5065 = vperm.slane %v5033, 1
        %v5066 = vperm.slane %v5034, 1
        %v5067 = vperm.slane %v5035, 1
        %v5068 = vperm.slane %v5036, 1
        %v5069 = vperm.slane %v5037, 1
        %v5070 = vperm.slane %v5038, 1
        %v5071 = vperm.slane %v5039, 1
        %v5072 = vperm.slane %v5040, 1
        %v5073 = vperm.slane %v5041, 1
        %v5074 = vperm.slane %v5042, 1
        %v5075 = vperm.slane %v5043, 1
        %v5076 = vperm.slane %v5044, 1
        %v5077 = vperm.slane %v5045, 1
        %v5078 = vmul.f32 %v4902, %v5062
        %v5079 = vmul.f32 %v4903, %v5063
        %v5080 = vmul.f32 %v4904, %v5064
        %v5081 = vmul.f32 %v4905, %v5065
        %v5082 = vmul.f32 %v4906, %v5066
        %v5083 = vmul.f32 %v4907, %v5067
        %v5084 = vmul.f32 %v4908, %v5068
        %v5085 = vmul.f32 %v4909, %v5069
        %v5086 = vmul.f32 %v4910, %v5070
        %v5087 = vmul.f32 %v4911, %v5071
        %v5088 = vmul.f32 %v4912, %v5072
        %v5089 = vmul.f32 %v4913, %v5073
        %v5090 = vmul.f32 %v4914, %v5074
        %v5091 = vmul.f32 %v4915, %v5075
        %v5092 = vmul.f32 %v4916, %v5076
        %v5093 = vmul.f32 %v4917, %v5077
        %v5094 = vmul.f32 %v4918, %v5062
        %v5095 = vmul.f32 %v4919, %v5063
        %v5096 = vmul.f32 %v4920, %v5064
        %v5097 = vmul.f32 %v4921, %v5065
        %v5098 = vmul.f32 %v4922, %v5066
        %v5099 = vmul.f32 %v4923, %v5067
        %v5100 = vmul.f32 %v4924, %v5068
        %v5101 = vmul.f32 %v4925, %v5069
        %v5102 = vmul.f32 %v4926, %v5070
        %v5103 = vmul.f32 %v4927, %v5071
        %v5104 = vmul.f32 %v4928, %v5072
        %v5105 = vmul.f32 %v4929, %v5073
        %v5106 = vmul.f32 %v4930, %v5074
        %v5107 = vmul.f32 %v4931, %v5075
        %v5108 = vmul.f32 %v4932, %v5076
        %v5109 = vmul.f32 %v4933, %v5077
        %v5110 = vperm.slane %v4934, 2
        %v5111 = vperm.slane %v4934, 6
        %v5112 = vperm.slane %v4935, 2
        %v5113 = vperm.slane %v4935, 6
        %v5114 = vperm.slane %v4936, 2
        %v5115 = vperm.slane %v4936, 6
        %v5116 = vperm.slane %v4937, 2
        %v5117 = vperm.slane %v4937, 6
        %v5118 = vperm.slane %v4938, 2
        %v5119 = vperm.slane %v4938, 6
        %v5120 = vperm.slane %v4939, 2
        %v5121 = vperm.slane %v4939, 6
        %v5122 = vperm.slane %v4940, 2
        %v5123 = vperm.slane %v4940, 6
        %v5124 = vperm.slane %v4941, 2
        %v5125 = vperm.slane %v4941, 6
        %v5142 = vperm.slane %v5110, 2
        %v5143 = vperm.slane %v5111, 2
        %v5144 = vperm.slane %v5112, 2
        %v5145 = vperm.slane %v5113, 2
        %v5146 = vperm.slane %v5114, 2
        %v5147 = vperm.slane %v5115, 2
        %v5148 = vperm.slane %v5116, 2
        %v5149 = vperm.slane %v5117, 2
        %v5150 = vperm.slane %v5118, 2
        %v5151 = vperm.slane %v5119, 2
        %v5152 = vperm.slane %v5120, 2
        %v5153 = vperm.slane %v5121, 2
        %v5154 = vperm.slane %v5122, 2
        %v5155 = vperm.slane %v5123, 2
        %v5156 = vperm.slane %v5124, 2
        %v5157 = vperm.slane %v5125, 2
        %v5158 = vmul.f32 %v4902, %v5142
        %v5159 = vmul.f32 %v4903, %v5143
        %v5160 = vmul.f32 %v4904, %v5144
        %v5161 = vmul.f32 %v4905, %v5145
        %v5162 = vmul.f32 %v4906, %v5146
        %v5163 = vmul.f32 %v4907, %v5147
        %v5164 = vmul.f32 %v4908, %v5148
        %v5165 = vmul.f32 %v4909, %v5149
        %v5166 = vmul.f32 %v4910, %v5150
        %v5167 = vmul.f32 %v4911, %v5151
        %v5168 = vmul.f32 %v4912, %v5152
        %v5169 = vmul.f32 %v4913, %v5153
        %v5170 = vmul.f32 %v4914, %v5154
        %v5171 = vmul.f32 %v4915, %v5155
        %v5172 = vmul.f32 %v4916, %v5156
        %v5173 = vmul.f32 %v4917, %v5157
        %v5174 = vmul.f32 %v4918, %v5142
        %v5175 = vmul.f32 %v4919, %v5143
        %v5176 = vmul.f32 %v4920, %v5144
        %v5177 = vmul.f32 %v4921, %v5145
        %v5178 = vmul.f32 %v4922, %v5146
        %v5179 = vmul.f32 %v4923, %v5147
        %v5180 = vmul.f32 %v4924, %v5148
        %v5181 = vmul.f32 %v4925, %v5149
        %v5182 = vmul.f32 %v4926, %v5150
        %v5183 = vmul.f32 %v4927, %v5151
        %v5184 = vmul.f32 %v4928, %v5152
        %v5185 = vmul.f32 %v4929, %v5153
        %v5186 = vmul.f32 %v4930, %v5154
        %v5187 = vmul.f32 %v4931, %v5155
        %v5188 = vmul.f32 %v4932, %v5156
        %v5189 = vmul.f32 %v4933, %v5157
        %v5190 = vperm.slane %v4934, 3
        %v5191 = vperm.slane %v4934, 7
        %v5192 = vperm.slane %v4935, 3
        %v5193 = vperm.slane %v4935, 7
        %v5194 = vperm.slane %v4936, 3
        %v5195 = vperm.slane %v4936, 7
        %v5196 = vperm.slane %v4937, 3
        %v5197 = vperm.slane %v4937, 7
        %v5198 = vperm.slane %v4938, 3
        %v5199 = vperm.slane %v4938, 7
        %v5200 = vperm.slane %v4939, 3
        %v5201 = vperm.slane %v4939, 7
        %v5202 = vperm.slane %v4940, 3
        %v5203 = vperm.slane %v4940, 7
        %v5204 = vperm.slane %v4941, 3
        %v5205 = vperm.slane %v4941, 7
        %v5222 = vperm.slane %v5190, 3
        %v5223 = vperm.slane %v5191, 3
        %v5224 = vperm.slane %v5192, 3
        %v5225 = vperm.slane %v5193, 3
        %v5226 = vperm.slane %v5194, 3
        %v5227 = vperm.slane %v5195, 3
        %v5228 = vperm.slane %v5196, 3
        %v5229 = vperm.slane %v5197, 3
        %v5230 = vperm.slane %v5198, 3
        %v5231 = vperm.slane %v5199, 3
        %v5232 = vperm.slane %v5200, 3
        %v5233 = vperm.slane %v5201, 3
        %v5234 = vperm.slane %v5202, 3
        %v5235 = vperm.slane %v5203, 3
        %v5236 = vperm.slane %v5204, 3
        %v5237 = vperm.slane %v5205, 3
        %v5238 = vmul.f32 %v4902, %v5222
        %v5239 = vmul.f32 %v4903, %v5223
        %v5240 = vmul.f32 %v4904, %v5224
        %v5241 = vmul.f32 %v4905, %v5225
        %v5242 = vmul.f32 %v4906, %v5226
        %v5243 = vmul.f32 %v4907, %v5227
        %v5244 = vmul.f32 %v4908, %v5228
        %v5245 = vmul.f32 %v4909, %v5229
        %v5246 = vmul.f32 %v4910, %v5230
        %v5247 = vmul.f32 %v4911, %v5231
        %v5248 = vmul.f32 %v4912, %v5232
        %v5249 = vmul.f32 %v4913, %v5233
        %v5250 = vmul.f32 %v4914, %v5234
        %v5251 = vmul.f32 %v4915, %v5235
        %v5252 = vmul.f32 %v4916, %v5236
        %v5253 = vmul.f32 %v4917, %v5237
        %v5254 = vmul.f32 %v4918, %v5222
        %v5255 = vmul.f32 %v4919, %v5223
        %v5256 = vmul.f32 %v4920, %v5224
        %v5257 = vmul.f32 %v4921, %v5225
        %v5258 = vmul.f32 %v4922, %v5226
        %v5259 = vmul.f32 %v4923, %v5227
        %v5260 = vmul.f32 %v4924, %v5228
        %v5261 = vmul.f32 %v4925, %v5229
        %v5262 = vmul.f32 %v4926, %v5230
        %v5263 = vmul.f32 %v4927, %v5231
        %v5264 = vmul.f32 %v4928, %v5232
        %v5265 = vmul.f32 %v4929, %v5233
        %v5266 = vmul.f32 %v4930, %v5234
        %v5267 = vmul.f32 %v4931, %v5235
        %v5268 = vmul.f32 %v4932, %v5236
        %v5269 = vmul.f32 %v4933, %v5237
        %v5270 = vmul.f32 %v4998, %v2020
        %v5271 = vmul.f32 %v4999, %v2198
        %v5272 = vmul.f32 %v5000, %v2376
        %v5273 = vmul.f32 %v5001, %v2554
        %v5274 = vmul.f32 %v5002, %v2732
        %v5275 = vmul.f32 %v5003, %v2910
        %v5276 = vmul.f32 %v5004, %v3088
        %v5277 = vmul.f32 %v5005, %v3266
        %v5278 = vmul.f32 %v5006, %v3444
        %v5279 = vmul.f32 %v5007, %v3622
        %v5280 = vmul.f32 %v5008, %v3800
        %v5281 = vmul.f32 %v5009, %v3978
        %v5282 = vmul.f32 %v5010, %v4156
        %v5283 = vmul.f32 %v5011, %v4334
        %v5284 = vmul.f32 %v5012, %v4512
        %v5285 = vmul.f32 %v5013, %v4690
        %v5286 = vmul.f32 %v5014, %v2023
        %v5287 = vmul.f32 %v5015, %v2201
        %v5288 = vmul.f32 %v5016, %v2379
        %v5289 = vmul.f32 %v5017, %v2557
        %v5290 = vmul.f32 %v5018, %v2735
        %v5291 = vmul.f32 %v5019, %v2913
        %v5292 = vmul.f32 %v5020, %v3091
        %v5293 = vmul.f32 %v5021, %v3269
        %v5294 = vmul.f32 %v5022, %v3447
        %v5295 = vmul.f32 %v5023, %v3625
        %v5296 = vmul.f32 %v5024, %v3803
        %v5297 = vmul.f32 %v5025, %v3981
        %v5298 = vmul.f32 %v5026, %v4159
        %v5299 = vmul.f32 %v5027, %v4337
        %v5300 = vmul.f32 %v5028, %v4515
        %v5301 = vmul.f32 %v5029, %v4693
        %v5302 = vmul.f32 %v5078, %v2026
        %v5303 = vmul.f32 %v5079, %v2204
        %v5304 = vmul.f32 %v5080, %v2382
        %v5305 = vmul.f32 %v5081, %v2560
        %v5306 = vmul.f32 %v5082, %v2738
        %v5307 = vmul.f32 %v5083, %v2916
        %v5308 = vmul.f32 %v5084, %v3094
        %v5309 = vmul.f32 %v5085, %v3272
        %v5310 = vmul.f32 %v5086, %v3450
        %v5311 = vmul.f32 %v5087, %v3628
        %v5312 = vmul.f32 %v5088, %v3806
        %v5313 = vmul.f32 %v5089, %v3984
        %v5314 = vmul.f32 %v5090, %v4162
        %v5315 = vmul.f32 %v5091, %v4340
        %v5316 = vmul.f32 %v5092, %v4518
        %v5317 = vmul.f32 %v5093, %v4696
        %v5318 = vmul.f32 %v5094, %v2029
        %v5319 = vmul.f32 %v5095, %v2207
        %v5320 = vmul.f32 %v5096, %v2385
        %v5321 = vmul.f32 %v5097, %v2563
        %v5322 = vmul.f32 %v5098, %v2741
        %v5323 = vmul.f32 %v5099, %v2919
        %v5324 = vmul.f32 %v5100, %v3097
        %v5325 = vmul.f32 %v5101, %v3275
        %v5326 = vmul.f32 %v5102, %v3453
        %v5327 = vmul.f32 %v5103, %v3631
        %v5328 = vmul.f32 %v5104, %v3809
        %v5329 = vmul.f32 %v5105, %v3987
        %v5330 = vmul.f32 %v5106, %v4165
        %v5331 = vmul.f32 %v5107, %v4343
        %v5332 = vmul.f32 %v5108, %v4521
        %v5333 = vmul.f32 %v5109, %v4699
        %v5334 = vmul.f32 %v5158, %v2032
        %v5335 = vmul.f32 %v5159, %v2210
        %v5336 = vmul.f32 %v5160, %v2388
        %v5337 = vmul.f32 %v5161, %v2566
        %v5338 = vmul.f32 %v5162, %v2744
        %v5339 = vmul.f32 %v5163, %v2922
        %v5340 = vmul.f32 %v5164, %v3100
        %v5341 = vmul.f32 %v5165, %v3278
        %v5342 = vmul.f32 %v5166, %v3456
        %v5343 = vmul.f32 %v5167, %v3634
        %v5344 = vmul.f32 %v5168, %v3812
        %v5345 = vmul.f32 %v5169, %v3990
        %v5346 = vmul.f32 %v5170, %v4168
        %v5347 = vmul.f32 %v5171, %v4346
        %v5348 = vmul.f32 %v5172, %v4524
        %v5349 = vmul.f32 %v5173, %v4702
        %v5350 = vmul.f32 %v5174, %v2035
        %v5351 = vmul.f32 %v5175, %v2213
        %v5352 = vmul.f32 %v5176, %v2391
        %v5353 = vmul.f32 %v5177, %v2569
        %v5354 = vmul.f32 %v5178, %v2747
        %v5355 = vmul.f32 %v5179, %v2925
        %v5356 = vmul.f32 %v5180, %v3103
        %v5357 = vmul.f32 %v5181, %v3281
        %v5358 = vmul.f32 %v5182, %v3459
        %v5359 = vmul.f32 %v5183, %v3637
        %v5360 = vmul.f32 %v5184, %v3815
        %v5361 = vmul.f32 %v5185, %v3993
        %v5362 = vmul.f32 %v5186, %v4171
        %v5363 = vmul.f32 %v5187, %v4349
        %v5364 = vmul.f32 %v5188, %v4527
        %v5365 = vmul.f32 %v5189, %v4705
        %v5366 = vmul.f32 %v5238, %v2038
        %v5367 = vmul.f32 %v5239, %v2216
        %v5368 = vmul.f32 %v5240, %v2394
        %v5369 = vmul.f32 %v5241, %v2572
        %v5370 = vmul.f32 %v5242, %v2750
        %v5371 = vmul.f32 %v5243, %v2928
        %v5372 = vmul.f32 %v5244, %v3106
        %v5373 = vmul.f32 %v5245, %v3284
        %v5374 = vmul.f32 %v5246, %v3462
        %v5375 = vmul.f32 %v5247, %v3640
        %v5376 = vmul.f32 %v5248, %v3818
        %v5377 = vmul.f32 %v5249, %v3996
        %v5378 = vmul.f32 %v5250, %v4174
        %v5379 = vmul.f32 %v5251, %v4352
        %v5380 = vmul.f32 %v5252, %v4530
        %v5381 = vmul.f32 %v5253, %v4708
        %v5382 = vmul.f32 %v5254, %v2041
        %v5383 = vmul.f32 %v5255, %v2219
        %v5384 = vmul.f32 %v5256, %v2397
        %v5385 = vmul.f32 %v5257, %v2575
        %v5386 = vmul.f32 %v5258, %v2753
        %v5387 = vmul.f32 %v5259, %v2931
        %v5388 = vmul.f32 %v5260, %v3109
        %v5389 = vmul.f32 %v5261, %v3287
        %v5390 = vmul.f32 %v5262, %v3465
        %v5391 = vmul.f32 %v5263, %v3643
        %v5392 = vmul.f32 %v5264, %v3821
        %v5393 = vmul.f32 %v5265, %v3999
        %v5394 = vmul.f32 %v5266, %v4177
        %v5395 = vmul.f32 %v5267, %v4355
        %v5396 = vmul.f32 %v5268, %v4533
        %v5397 = vmul.f32 %v5269, %v4711
        %v5398 = vadd.f32 %v5270, %v5286
        %v5399 = vadd.f32 %v5398, %v5302
        %v5400 = vadd.f32 %v5399, %v5318
        %v5401 = vadd.f32 %v5400, %v5334
        %v5402 = vadd.f32 %v5401, %v5350
        %v5403 = vadd.f32 %v5402, %v5366
        %v5404 = vadd.f32 %v5403, %v5382
        %v5405 = vrot.slane %v5404, 4
        %v5406 = vadd.f32 %v5404, %v5405
        %v5407 = vrot.slane %v5406, 2
        %v5408 = vadd.f32 %v5406, %v5407
        %v5409 = vrot.slane %v5408, 1
        %v5410 = vadd.f32 %v5408, %v5409
        %v5411 = vadd.f32 %v5271, %v5287
        %v5412 = vadd.f32 %v5411, %v5303
        %v5413 = vadd.f32 %v5412, %v5319
        %v5414 = vadd.f32 %v5413, %v5335
        %v5415 = vadd.f32 %v5414, %v5351
        %v5416 = vadd.f32 %v5415, %v5367
        %v5417 = vadd.f32 %v5416, %v5383
        %v5418 = vrot.slane %v5417, 4
        %v5419 = vadd.f32 %v5417, %v5418
        %v5420 = vrot.slane %v5419, 2
        %v5421 = vadd.f32 %v5419, %v5420
        %v5422 = vrot.slane %v5421, 1
        %v5423 = vadd.f32 %v5421, %v5422
        %v5424 = vadd.f32 %v5272, %v5288
        %v5425 = vadd.f32 %v5424, %v5304
        %v5426 = vadd.f32 %v5425, %v5320
        %v5427 = vadd.f32 %v5426, %v5336
        %v5428 = vadd.f32 %v5427, %v5352
        %v5429 = vadd.f32 %v5428, %v5368
        %v5430 = vadd.f32 %v5429, %v5384
        %v5431 = vrot.slane %v5430, 4
        %v5432 = vadd.f32 %v5430, %v5431
        %v5433 = vrot.slane %v5432, 2
        %v5434 = vadd.f32 %v5432, %v5433
        %v5435 = vrot.slane %v5434, 1
        %v5436 = vadd.f32 %v5434, %v5435
        %v5437 = vadd.f32 %v5273, %v5289
        %v5438 = vadd.f32 %v5437, %v5305
        %v5439 = vadd.f32 %v5438, %v5321
        %v5440 = vadd.f32 %v5439, %v5337
        %v5441 = vadd.f32 %v5440, %v5353
        %v5442 = vadd.f32 %v5441, %v5369
        %v5443 = vadd.f32 %v5442, %v5385
        %v5444 = vrot.slane %v5443, 4
        %v5445 = vadd.f32 %v5443, %v5444
        %v5446 = vrot.slane %v5445, 2
        %v5447 = vadd.f32 %v5445, %v5446
        %v5448 = vrot.slane %v5447, 1
        %v5449 = vadd.f32 %v5447, %v5448
        %v5450 = vadd.f32 %v5274, %v5290
        %v5451 = vadd.f32 %v5450, %v5306
        %v5452 = vadd.f32 %v5451, %v5322
        %v5453 = vadd.f32 %v5452, %v5338
        %v5454 = vadd.f32 %v5453, %v5354
        %v5455 = vadd.f32 %v5454, %v5370
        %v5456 = vadd.f32 %v5455, %v5386
        %v5457 = vrot.slane %v5456, 4
        %v5458 = vadd.f32 %v5456, %v5457
        %v5459 = vrot.slane %v5458, 2
        %v5460 = vadd.f32 %v5458, %v5459
        %v5461 = vrot.slane %v5460, 1
        %v5462 = vadd.f32 %v5460, %v5461
        %v5463 = vadd.f32 %v5275, %v5291
        %v5464 = vadd.f32 %v5463, %v5307
        %v5465 = vadd.f32 %v5464, %v5323
        %v5466 = vadd.f32 %v5465, %v5339
        %v5467 = vadd.f32 %v5466, %v5355
        %v5468 = vadd.f32 %v5467, %v5371
        %v5469 = vadd.f32 %v5468, %v5387
        %v5470 = vrot.slane %v5469, 4
        %v5471 = vadd.f32 %v5469, %v5470
        %v5472 = vrot.slane %v5471, 2
        %v5473 = vadd.f32 %v5471, %v5472
        %v5474 = vrot.slane %v5473, 1
        %v5475 = vadd.f32 %v5473, %v5474
        %v5476 = vadd.f32 %v5276, %v5292
        %v5477 = vadd.f32 %v5476, %v5308
        %v5478 = vadd.f32 %v5477, %v5324
        %v5479 = vadd.f32 %v5478, %v5340
        %v5480 = vadd.f32 %v5479, %v5356
        %v5481 = vadd.f32 %v5480, %v5372
        %v5482 = vadd.f32 %v5481, %v5388
        %v5483 = vrot.slane %v5482, 4
        %v5484 = vadd.f32 %v5482, %v5483
        %v5485 = vrot.slane %v5484, 2
        %v5486 = vadd.f32 %v5484, %v5485
        %v5487 = vrot.slane %v5486, 1
        %v5488 = vadd.f32 %v5486, %v5487
        %v5489 = vadd.f32 %v5277, %v5293
        %v5490 = vadd.f32 %v5489, %v5309
        %v5491 = vadd.f32 %v5490, %v5325
        %v5492 = vadd.f32 %v5491, %v5341
        %v5493 = vadd.f32 %v5492, %v5357
        %v5494 = vadd.f32 %v5493, %v5373
        %v5495 = vadd.f32 %v5494, %v5389
        %v5496 = vrot.slane %v5495, 4
        %v5497 = vadd.f32 %v5495, %v5496
        %v5498 = vrot.slane %v5497, 2
        %v5499 = vadd.f32 %v5497, %v5498
        %v5500 = vrot.slane %v5499, 1
        %v5501 = vadd.f32 %v5499, %v5500
        %v5502 = vadd.f32 %v5278, %v5294
        %v5503 = vadd.f32 %v5502, %v5310
        %v5504 = vadd.f32 %v5503, %v5326
        %v5505 = vadd.f32 %v5504, %v5342
        %v5506 = vadd.f32 %v5505, %v5358
        %v5507 = vadd.f32 %v5506, %v5374
        %v5508 = vadd.f32 %v5507, %v5390
        %v5509 = vrot.slane %v5508, 4
        %v5510 = vadd.f32 %v5508, %v5509
        %v5511 = vrot.slane %v5510, 2
        %v5512 = vadd.f32 %v5510, %v5511
        %v5513 = vrot.slane %v5512, 1
        %v5514 = vadd.f32 %v5512, %v5513
        %v5515 = vadd.f32 %v5279, %v5295
        %v5516 = vadd.f32 %v5515, %v5311
        %v5517 = vadd.f32 %v5516, %v5327
        %v5518 = vadd.f32 %v5517, %v5343
        %v5519 = vadd.f32 %v5518, %v5359
        %v5520 = vadd.f32 %v5519, %v5375
        %v5521 = vadd.f32 %v5520, %v5391
        %v5522 = vrot.slane %v5521, 4
        %v5523 = vadd.f32 %v5521, %v5522
        %v5524 = vrot.slane %v5523, 2
        %v5525 = vadd.f32 %v5523, %v5524
        %v5526 = vrot.slane %v5525, 1
        %v5527 = vadd.f32 %v5525, %v5526
        %v5528 = vadd.f32 %v5280, %v5296
        %v5529 = vadd.f32 %v5528, %v5312
        %v5530 = vadd.f32 %v5529, %v5328
        %v5531 = vadd.f32 %v5530, %v5344
        %v5532 = vadd.f32 %v5531, %v5360
        %v5533 = vadd.f32 %v5532, %v5376
        %v5534 = vadd.f32 %v5533, %v5392
        %v5535 = vrot.slane %v5534, 4
        %v5536 = vadd.f32 %v5534, %v5535
        %v5537 = vrot.slane %v5536, 2
        %v5538 = vadd.f32 %v5536, %v5537
        %v5539 = vrot.slane %v5538, 1
        %v5540 = vadd.f32 %v5538, %v5539
        %v5541 = vadd.f32 %v5281, %v5297
        %v5542 = vadd.f32 %v5541, %v5313
        %v5543 = vadd.f32 %v5542, %v5329
        %v5544 = vadd.f32 %v5543, %v5345
        %v5545 = vadd.f32 %v5544, %v5361
        %v5546 = vadd.f32 %v5545, %v5377
        %v5547 = vadd.f32 %v5546, %v5393
        %v5548 = vrot.slane %v5547, 4
        %v5549 = vadd.f32 %v5547, %v5548
        %v5550 = vrot.slane %v5549, 2
        %v5551 = vadd.f32 %v5549, %v5550
        %v5552 = vrot.slane %v5551, 1
        %v5553 = vadd.f32 %v5551, %v5552
        %v5554 = vadd.f32 %v5282, %v5298
        %v5555 = vadd.f32 %v5554, %v5314
        %v5556 = vadd.f32 %v5555, %v5330
        %v5557 = vadd.f32 %v5556, %v5346
        %v5558 = vadd.f32 %v5557, %v5362
        %v5559 = vadd.f32 %v5558, %v5378
        %v5560 = vadd.f32 %v5559, %v5394
        %v5561 = vrot.slane %v5560, 4
        %v5562 = vadd.f32 %v5560, %v5561
        %v5563 = vrot.slane %v5562, 2
        %v5564 = vadd.f32 %v5562, %v5563
        %v5565 = vrot.slane %v5564, 1
        %v5566 = vadd.f32 %v5564, %v5565
        %v5567 = vadd.f32 %v5283, %v5299
        %v5568 = vadd.f32 %v5567, %v5315
        %v5569 = vadd.f32 %v5568, %v5331
        %v5570 = vadd.f32 %v5569, %v5347
        %v5571 = vadd.f32 %v5570, %v5363
        %v5572 = vadd.f32 %v5571, %v5379
        %v5573 = vadd.f32 %v5572, %v5395
        %v5574 = vrot.slane %v5573, 4
        %v5575 = vadd.f32 %v5573, %v5574
        %v5576 = vrot.slane %v5575, 2
        %v5577 = vadd.f32 %v5575, %v5576
        %v5578 = vrot.slane %v5577, 1
        %v5579 = vadd.f32 %v5577, %v5578
        %v5580 = vadd.f32 %v5284, %v5300
        %v5581 = vadd.f32 %v5580, %v5316
        %v5582 = vadd.f32 %v5581, %v5332
        %v5583 = vadd.f32 %v5582, %v5348
        %v5584 = vadd.f32 %v5583, %v5364
        %v5585 = vadd.f32 %v5584, %v5380
        %v5586 = vadd.f32 %v5585, %v5396
        %v5587 = vrot.slane %v5586, 4
        %v5588 = vadd.f32 %v5586, %v5587
        %v5589 = vrot.slane %v5588, 2
        %v5590 = vadd.f32 %v5588, %v5589
        %v5591 = vrot.slane %v5590, 1
        %v5592 = vadd.f32 %v5590, %v5591
        %v5593 = vadd.f32 %v5285, %v5301
        %v5594 = vadd.f32 %v5593, %v5317
        %v5595 = vadd.f32 %v5594, %v5333
        %v5596 = vadd.f32 %v5595, %v5349
        %v5597 = vadd.f32 %v5596, %v5365
        %v5598 = vadd.f32 %v5597, %v5381
        %v5599 = vadd.f32 %v5598, %v5397
        %v5600 = vrot.slane %v5599, 4
        %v5601 = vadd.f32 %v5599, %v5600
        %v5602 = vrot.slane %v5601, 2
        %v5603 = vadd.f32 %v5601, %v5602
        %v5604 = vrot.slane %v5603, 1
        %v5605 = vadd.f32 %v5603, %v5604
        %v5622 = vrot.slane %v5423, 7
        %v5623 = vrot.slane %v5436, 6
        %v5624 = vrot.slane %v5449, 5
        %v5625 = vrot.slane %v5462, 4
        %v5626 = vrot.slane %v5475, 3
        %v5627 = vrot.slane %v5488, 2
        %v5628 = vrot.slane %v5501, 1
        %v5629 = vrot.slane %v5527, 7
        %v5630 = vrot.slane %v5540, 6
        %v5631 = vrot.slane %v5553, 5
        %v5632 = vrot.slane %v5566, 4
        %v5633 = vrot.slane %v5579, 3
        %v5634 = vrot.slane %v5592, 2
        %v5635 = vrot.slane %v5605, 1
        %vm5636 = vcmask 1040384
        %v5637 = vsel %vm5636, %v5410, %v5622
        %vm5638 = vcmask 1042434
        %v5639 = vsel %vm5638, %v5623, %v5624
        %vm5640 = vcmask 1041408
        %v5641 = vsel %vm5640, %v5637, %v5639
        %vm5642 = vcmask 1044484
        %v5643 = vsel %vm5642, %v5625, %v5626
        %vm5644 = vcmask 1046534
        %v5645 = vsel %vm5644, %v5627, %v5628
        %vm5646 = vcmask 1045508
        %v5647 = vsel %vm5646, %v5643, %v5645
        %vm5648 = vcmask 1043456
        %v5649 = vsel %vm5648, %v5641, %v5647
        %v5650 = vsel %vm5636, %v5514, %v5629
        %v5651 = vsel %vm5638, %v5630, %v5631
        %v5652 = vsel %vm5640, %v5650, %v5651
        %v5653 = vsel %vm5642, %v5632, %v5633
        %v5654 = vsel %vm5644, %v5634, %v5635
        %v5655 = vsel %vm5646, %v5653, %v5654
        %v5656 = vsel %vm5648, %v5652, %v5655
        %5659 = vst [vmem:[%s1351] ss:$4 sm:$0xff] %v5649
        %s5660 = scalar_lea.vmem %s1351, 32
        %5661 = vst [vmem:[%s5660] ss:$4 sm:$0xff] %v5656
        %v5662 = vmul.f32 %v4998, %v2044
        %v5663 = vmul.f32 %v4999, %v2222
        %v5664 = vmul.f32 %v5000, %v2400
        %v5665 = vmul.f32 %v5001, %v2578
        %v5666 = vmul.f32 %v5002, %v2756
        %v5667 = vmul.f32 %v5003, %v2934
        %v5668 = vmul.f32 %v5004, %v3112
        %v5669 = vmul.f32 %v5005, %v3290
        %v5670 = vmul.f32 %v5006, %v3468
        %v5671 = vmul.f32 %v5007, %v3646
        %v5672 = vmul.f32 %v5008, %v3824
        %v5673 = vmul.f32 %v5009, %v4002
        %v5674 = vmul.f32 %v5010, %v4180
        %v5675 = vmul.f32 %v5011, %v4358
        %v5676 = vmul.f32 %v5012, %v4536
        %v5677 = vmul.f32 %v5013, %v4714
        %v5678 = vmul.f32 %v5014, %v2047
        %v5679 = vmul.f32 %v5015, %v2225
        %v5680 = vmul.f32 %v5016, %v2403
        %v5681 = vmul.f32 %v5017, %v2581
        %v5682 = vmul.f32 %v5018, %v2759
        %v5683 = vmul.f32 %v5019, %v2937
        %v5684 = vmul.f32 %v5020, %v3115
        %v5685 = vmul.f32 %v5021, %v3293
        %v5686 = vmul.f32 %v5022, %v3471
        %v5687 = vmul.f32 %v5023, %v3649
        %v5688 = vmul.f32 %v5024, %v3827
        %v5689 = vmul.f32 %v5025, %v4005
        %v5690 = vmul.f32 %v5026, %v4183
        %v5691 = vmul.f32 %v5027, %v4361
        %v5692 = vmul.f32 %v5028, %v4539
        %v5693 = vmul.f32 %v5029, %v4717
        %v5694 = vmul.f32 %v5078, %v2050
        %v5695 = vmul.f32 %v5079, %v2228
        %v5696 = vmul.f32 %v5080, %v2406
        %v5697 = vmul.f32 %v5081, %v2584
        %v5698 = vmul.f32 %v5082, %v2762
        %v5699 = vmul.f32 %v5083, %v2940
        %v5700 = vmul.f32 %v5084, %v3118
        %v5701 = vmul.f32 %v5085, %v3296
        %v5702 = vmul.f32 %v5086, %v3474
        %v5703 = vmul.f32 %v5087, %v3652
        %v5704 = vmul.f32 %v5088, %v3830
        %v5705 = vmul.f32 %v5089, %v4008
        %v5706 = vmul.f32 %v5090, %v4186
        %v5707 = vmul.f32 %v5091, %v4364
        %v5708 = vmul.f32 %v5092, %v4542
        %v5709 = vmul.f32 %v5093, %v4720
        %v5710 = vmul.f32 %v5094, %v2053
        %v5711 = vmul.f32 %v5095, %v2231
        %v5712 = vmul.f32 %v5096, %v2409
        %v5713 = vmul.f32 %v5097, %v2587
        %v5714 = vmul.f32 %v5098, %v2765
        %v5715 = vmul.f32 %v5099, %v2943
        %v5716 = vmul.f32 %v5100, %v3121
        %v5717 = vmul.f32 %v5101, %v3299
        %v5718 = vmul.f32 %v5102, %v3477
        %v5719 = vmul.f32 %v5103, %v3655
        %v5720 = vmul.f32 %v5104, %v3833
        %v5721 = vmul.f32 %v5105, %v4011
        %v5722 = vmul.f32 %v5106, %v4189
        %v5723 = vmul.f32 %v5107, %v4367
        %v5724 = vmul.f32 %v5108, %v4545
        %v5725 = vmul.f32 %v5109, %v4723
        %v5726 = vmul.f32 %v5158, %v2056
        %v5727 = vmul.f32 %v5159, %v2234
        %v5728 = vmul.f32 %v5160, %v2412
        %v5729 = vmul.f32 %v5161, %v2590
        %v5730 = vmul.f32 %v5162, %v2768
        %v5731 = vmul.f32 %v5163, %v2946
        %v5732 = vmul.f32 %v5164, %v3124
        %v5733 = vmul.f32 %v5165, %v3302
        %v5734 = vmul.f32 %v5166, %v3480
        %v5735 = vmul.f32 %v5167, %v3658
        %v5736 = vmul.f32 %v5168, %v3836
        %v5737 = vmul.f32 %v5169, %v4014
        %v5738 = vmul.f32 %v5170, %v4192
        %v5739 = vmul.f32 %v5171, %v4370
        %v5740 = vmul.f32 %v5172, %v4548
        %v5741 = vmul.f32 %v5173, %v4726
        %v5742 = vmul.f32 %v5174, %v2059
        %v5743 = vmul.f32 %v5175, %v2237
        %v5744 = vmul.f32 %v5176, %v2415
        %v5745 = vmul.f32 %v5177, %v2593
        %v5746 = vmul.f32 %v5178, %v2771
        %v5747 = vmul.f32 %v5179, %v2949
        %v5748 = vmul.f32 %v5180, %v3127
        %v5749 = vmul.f32 %v5181, %v3305
        %v5750 = vmul.f32 %v5182, %v3483
        %v5751 = vmul.f32 %v5183, %v3661
        %v5752 = vmul.f32 %v5184, %v3839
        %v5753 = vmul.f32 %v5185, %v4017
        %v5754 = vmul.f32 %v5186, %v4195
        %v5755 = vmul.f32 %v5187, %v4373
        %v5756 = vmul.f32 %v5188, %v4551
        %v5757 = vmul.f32 %v5189, %v4729
        %v5758 = vmul.f32 %v5238, %v2062
        %v5759 = vmul.f32 %v5239, %v2240
        %v5760 = vmul.f32 %v5240, %v2418
        %v5761 = vmul.f32 %v5241, %v2596
        %v5762 = vmul.f32 %v5242, %v2774
        %v5763 = vmul.f32 %v5243, %v2952
        %v5764 = vmul.f32 %v5244, %v3130
        %v5765 = vmul.f32 %v5245, %v3308
        %v5766 = vmul.f32 %v5246, %v3486
        %v5767 = vmul.f32 %v5247, %v3664
        %v5768 = vmul.f32 %v5248, %v3842
        %v5769 = vmul.f32 %v5249, %v4020
        %v5770 = vmul.f32 %v5250, %v4198
        %v5771 = vmul.f32 %v5251, %v4376
        %v5772 = vmul.f32 %v5252, %v4554
        %v5773 = vmul.f32 %v5253, %v4732
        %v5774 = vmul.f32 %v5254, %v2065
        %v5775 = vmul.f32 %v5255, %v2243
        %v5776 = vmul.f32 %v5256, %v2421
        %v5777 = vmul.f32 %v5257, %v2599
        %v5778 = vmul.f32 %v5258, %v2777
        %v5779 = vmul.f32 %v5259, %v2955
        %v5780 = vmul.f32 %v5260, %v3133
        %v5781 = vmul.f32 %v5261, %v3311
        %v5782 = vmul.f32 %v5262, %v3489
        %v5783 = vmul.f32 %v5263, %v3667
        %v5784 = vmul.f32 %v5264, %v3845
        %v5785 = vmul.f32 %v5265, %v4023
        %v5786 = vmul.f32 %v5266, %v4201
        %v5787 = vmul.f32 %v5267, %v4379
        %v5788 = vmul.f32 %v5268, %v4557
        %v5789 = vmul.f32 %v5269, %v4735
        %v5790 = vadd.f32 %v5662, %v5678
        %v5791 = vadd.f32 %v5790, %v5694
        %v5792 = vadd.f32 %v5791, %v5710
        %v5793 = vadd.f32 %v5792, %v5726
        %v5794 = vadd.f32 %v5793, %v5742
        %v5795 = vadd.f32 %v5794, %v5758
        %v5796 = vadd.f32 %v5795, %v5774
        %v5797 = vrot.slane %v5796, 4
        %v5798 = vadd.f32 %v5796, %v5797
        %v5799 = vrot.slane %v5798, 2
        %v5800 = vadd.f32 %v5798, %v5799
        %v5801 = vrot.slane %v5800, 1
        %v5802 = vadd.f32 %v5800, %v5801
        %v5803 = vadd.f32 %v5663, %v5679
        %v5804 = vadd.f32 %v5803, %v5695
        %v5805 = vadd.f32 %v5804, %v5711
        %v5806 = vadd.f32 %v5805, %v5727
        %v5807 = vadd.f32 %v5806, %v5743
        %v5808 = vadd.f32 %v5807, %v5759
        %v5809 = vadd.f32 %v5808, %v5775
        %v5810 = vrot.slane %v5809, 4
        %v5811 = vadd.f32 %v5809, %v5810
        %v5812 = vrot.slane %v5811, 2
        %v5813 = vadd.f32 %v5811, %v5812
        %v5814 = vrot.slane %v5813, 1
        %v5815 = vadd.f32 %v5813, %v5814
        %v5816 = vadd.f32 %v5664, %v5680
        %v5817 = vadd.f32 %v5816, %v5696
        %v5818 = vadd.f32 %v5817, %v5712
        %v5819 = vadd.f32 %v5818, %v5728
        %v5820 = vadd.f32 %v5819, %v5744
        %v5821 = vadd.f32 %v5820, %v5760
        %v5822 = vadd.f32 %v5821, %v5776
        %v5823 = vrot.slane %v5822, 4
        %v5824 = vadd.f32 %v5822, %v5823
        %v5825 = vrot.slane %v5824, 2
        %v5826 = vadd.f32 %v5824, %v5825
        %v5827 = vrot.slane %v5826, 1
        %v5828 = vadd.f32 %v5826, %v5827
        %v5829 = vadd.f32 %v5665, %v5681
        %v5830 = vadd.f32 %v5829, %v5697
        %v5831 = vadd.f32 %v5830, %v5713
        %v5832 = vadd.f32 %v5831, %v5729
        %v5833 = vadd.f32 %v5832, %v5745
        %v5834 = vadd.f32 %v5833, %v5761
        %v5835 = vadd.f32 %v5834, %v5777
        %v5836 = vrot.slane %v5835, 4
        %v5837 = vadd.f32 %v5835, %v5836
        %v5838 = vrot.slane %v5837, 2
        %v5839 = vadd.f32 %v5837, %v5838
        %v5840 = vrot.slane %v5839, 1
        %v5841 = vadd.f32 %v5839, %v5840
        %v5842 = vadd.f32 %v5666, %v5682
        %v5843 = vadd.f32 %v5842, %v5698
        %v5844 = vadd.f32 %v5843, %v5714
        %v5845 = vadd.f32 %v5844, %v5730
        %v5846 = vadd.f32 %v5845, %v5746
        %v5847 = vadd.f32 %v5846, %v5762
        %v5848 = vadd.f32 %v5847, %v5778
        %v5849 = vrot.slane %v5848, 4
        %v5850 = vadd.f32 %v5848, %v5849
        %v5851 = vrot.slane %v5850, 2
        %v5852 = vadd.f32 %v5850, %v5851
        %v5853 = vrot.slane %v5852, 1
        %v5854 = vadd.f32 %v5852, %v5853
        %v5855 = vadd.f32 %v5667, %v5683
        %v5856 = vadd.f32 %v5855, %v5699
        %v5857 = vadd.f32 %v5856, %v5715
        %v5858 = vadd.f32 %v5857, %v5731
        %v5859 = vadd.f32 %v5858, %v5747
        %v5860 = vadd.f32 %v5859, %v5763
        %v5861 = vadd.f32 %v5860, %v5779
        %v5862 = vrot.slane %v5861, 4
        %v5863 = vadd.f32 %v5861, %v5862
        %v5864 = vrot.slane %v5863, 2
        %v5865 = vadd.f32 %v5863, %v5864
        %v5866 = vrot.slane %v5865, 1
        %v5867 = vadd.f32 %v5865, %v5866
        %v5868 = vadd.f32 %v5668, %v5684
        %v5869 = vadd.f32 %v5868, %v5700
        %v5870 = vadd.f32 %v5869, %v5716
        %v5871 = vadd.f32 %v5870, %v5732
        %v5872 = vadd.f32 %v5871, %v5748
        %v5873 = vadd.f32 %v5872, %v5764
        %v5874 = vadd.f32 %v5873, %v5780
        %v5875 = vrot.slane %v5874, 4
        %v5876 = vadd.f32 %v5874, %v5875
        %v5877 = vrot.slane %v5876, 2
        %v5878 = vadd.f32 %v5876, %v5877
        %v5879 = vrot.slane %v5878, 1
        %v5880 = vadd.f32 %v5878, %v5879
        %v5881 = vadd.f32 %v5669, %v5685
        %v5882 = vadd.f32 %v5881, %v5701
        %v5883 = vadd.f32 %v5882, %v5717
        %v5884 = vadd.f32 %v5883, %v5733
        %v5885 = vadd.f32 %v5884, %v5749
        %v5886 = vadd.f32 %v5885, %v5765
        %v5887 = vadd.f32 %v5886, %v5781
        %v5888 = vrot.slane %v5887, 4
        %v5889 = vadd.f32 %v5887, %v5888
        %v5890 = vrot.slane %v5889, 2
        %v5891 = vadd.f32 %v5889, %v5890
        %v5892 = vrot.slane %v5891, 1
        %v5893 = vadd.f32 %v5891, %v5892
        %v5894 = vadd.f32 %v5670, %v5686
        %v5895 = vadd.f32 %v5894, %v5702
        %v5896 = vadd.f32 %v5895, %v5718
        %v5897 = vadd.f32 %v5896, %v5734
        %v5898 = vadd.f32 %v5897, %v5750
        %v5899 = vadd.f32 %v5898, %v5766
        %v5900 = vadd.f32 %v5899, %v5782
        %v5901 = vrot.slane %v5900, 4
        %v5902 = vadd.f32 %v5900, %v5901
        %v5903 = vrot.slane %v5902, 2
        %v5904 = vadd.f32 %v5902, %v5903
        %v5905 = vrot.slane %v5904, 1
        %v5906 = vadd.f32 %v5904, %v5905
        %v5907 = vadd.f32 %v5671, %v5687
        %v5908 = vadd.f32 %v5907, %v5703
        %v5909 = vadd.f32 %v5908, %v5719
        %v5910 = vadd.f32 %v5909, %v5735
        %v5911 = vadd.f32 %v5910, %v5751
        %v5912 = vadd.f32 %v5911, %v5767
        %v5913 = vadd.f32 %v5912, %v5783
        %v5914 = vrot.slane %v5913, 4
        %v5915 = vadd.f32 %v5913, %v5914
        %v5916 = vrot.slane %v5915, 2
        %v5917 = vadd.f32 %v5915, %v5916
        %v5918 = vrot.slane %v5917, 1
        %v5919 = vadd.f32 %v5917, %v5918
        %v5920 = vadd.f32 %v5672, %v5688
        %v5921 = vadd.f32 %v5920, %v5704
        %v5922 = vadd.f32 %v5921, %v5720
        %v5923 = vadd.f32 %v5922, %v5736
        %v5924 = vadd.f32 %v5923, %v5752
        %v5925 = vadd.f32 %v5924, %v5768
        %v5926 = vadd.f32 %v5925, %v5784
        %v5927 = vrot.slane %v5926, 4
        %v5928 = vadd.f32 %v5926, %v5927
        %v5929 = vrot.slane %v5928, 2
        %v5930 = vadd.f32 %v5928, %v5929
        %v5931 = vrot.slane %v5930, 1
        %v5932 = vadd.f32 %v5930, %v5931
        %v5933 = vadd.f32 %v5673, %v5689
        %v5934 = vadd.f32 %v5933, %v5705
        %v5935 = vadd.f32 %v5934, %v5721
        %v5936 = vadd.f32 %v5935, %v5737
        %v5937 = vadd.f32 %v5936, %v5753
        %v5938 = vadd.f32 %v5937, %v5769
        %v5939 = vadd.f32 %v5938, %v5785
        %v5940 = vrot.slane %v5939, 4
        %v5941 = vadd.f32 %v5939, %v5940
        %v5942 = vrot.slane %v5941, 2
        %v5943 = vadd.f32 %v5941, %v5942
        %v5944 = vrot.slane %v5943, 1
        %v5945 = vadd.f32 %v5943, %v5944
        %v5946 = vadd.f32 %v5674, %v5690
        %v5947 = vadd.f32 %v5946, %v5706
        %v5948 = vadd.f32 %v5947, %v5722
        %v5949 = vadd.f32 %v5948, %v5738
        %v5950 = vadd.f32 %v5949, %v5754
        %v5951 = vadd.f32 %v5950, %v5770
        %v5952 = vadd.f32 %v5951, %v5786
        %v5953 = vrot.slane %v5952, 4
        %v5954 = vadd.f32 %v5952, %v5953
        %v5955 = vrot.slane %v5954, 2
        %v5956 = vadd.f32 %v5954, %v5955
        %v5957 = vrot.slane %v5956, 1
        %v5958 = vadd.f32 %v5956, %v5957
        %v5959 = vadd.f32 %v5675, %v5691
        %v5960 = vadd.f32 %v5959, %v5707
        %v5961 = vadd.f32 %v5960, %v5723
        %v5962 = vadd.f32 %v5961, %v5739
        %v5963 = vadd.f32 %v5962, %v5755
        %v5964 = vadd.f32 %v5963, %v5771
        %v5965 = vadd.f32 %v5964, %v5787
        %v5966 = vrot.slane %v5965, 4
        %v5967 = vadd.f32 %v5965, %v5966
        %v5968 = vrot.slane %v5967, 2
        %v5969 = vadd.f32 %v5967, %v5968
        %v5970 = vrot.slane %v5969, 1
        %v5971 = vadd.f32 %v5969, %v5970
        %v5972 = vadd.f32 %v5676, %v5692
        %v5973 = vadd.f32 %v5972, %v5708
        %v5974 = vadd.f32 %v5973, %v5724
        %v5975 = vadd.f32 %v5974, %v5740
        %v5976 = vadd.f32 %v5975, %v5756
        %v5977 = vadd.f32 %v5976, %v5772
        %v5978 = vadd.f32 %v5977, %v5788
        %v5979 = vrot.slane %v5978, 4
        %v5980 = vadd.f32 %v5978, %v5979
        %v5981 = vrot.slane %v5980, 2
        %v5982 = vadd.f32 %v5980, %v5981
        %v5983 = vrot.slane %v5982, 1
        %v5984 = vadd.f32 %v5982, %v5983
        %v5985 = vadd.f32 %v5677, %v5693
        %v5986 = vadd.f32 %v5985, %v5709
        %v5987 = vadd.f32 %v5986, %v5725
        %v5988 = vadd.f32 %v5987, %v5741
        %v5989 = vadd.f32 %v5988, %v5757
        %v5990 = vadd.f32 %v5989, %v5773
        %v5991 = vadd.f32 %v5990, %v5789
        %v5992 = vrot.slane %v5991, 4
        %v5993 = vadd.f32 %v5991, %v5992
        %v5994 = vrot.slane %v5993, 2
        %v5995 = vadd.f32 %v5993, %v5994
        %v5996 = vrot.slane %v5995, 1
        %v5997 = vadd.f32 %v5995, %v5996
        %v6014 = vrot.slane %v5815, 7
        %v6015 = vrot.slane %v5828, 6
        %v6016 = vrot.slane %v5841, 5
        %v6017 = vrot.slane %v5854, 4
        %v6018 = vrot.slane %v5867, 3
        %v6019 = vrot.slane %v5880, 2
        %v6020 = vrot.slane %v5893, 1
        %v6021 = vrot.slane %v5919, 7
        %v6022 = vrot.slane %v5932, 6
        %v6023 = vrot.slane %v5945, 5
        %v6024 = vrot.slane %v5958, 4
        %v6025 = vrot.slane %v5971, 3
        %v6026 = vrot.slane %v5984, 2
        %v6027 = vrot.slane %v5997, 1
        %v6028 = vsel %vm5636, %v5802, %v6014
        %v6029 = vsel %vm5638, %v6015, %v6016
        %v6030 = vsel %vm5640, %v6028, %v6029
        %v6031 = vsel %vm5642, %v6017, %v6018
        %v6032 = vsel %vm5644, %v6019, %v6020
        %v6033 = vsel %vm5646, %v6031, %v6032
        %v6034 = vsel %vm5648, %v6030, %v6033
        %v6035 = vsel %vm5636, %v5906, %v6021
        %v6036 = vsel %vm5638, %v6022, %v6023
        %v6037 = vsel %vm5640, %v6035, %v6036
        %v6038 = vsel %vm5642, %v6024, %v6025
        %v6039 = vsel %vm5644, %v6026, %v6027
        %v6040 = vsel %vm5646, %v6038, %v6039
        %v6041 = vsel %vm5648, %v6037, %v6040
        %s6044 = scalar_lea.vmem %s1351, 1
        %6045 = vst [vmem:[%s6044] ss:$4 sm:$0xff] %v6034
        %s6046 = scalar_lea.vmem %s1351, 33
        %6047 = vst [vmem:[%s6046] ss:$4 sm:$0xff] %v6041
        %v6048 = vmul.f32 %v4998, %v2068
        %v6049 = vmul.f32 %v4999, %v2246
        %v6050 = vmul.f32 %v5000, %v2424
        %v6051 = vmul.f32 %v5001, %v2602
        %v6052 = vmul.f32 %v5002, %v2780
        %v6053 = vmul.f32 %v5003, %v2958
        %v6054 = vmul.f32 %v5004, %v3136
        %v6055 = vmul.f32 %v5005, %v3314
        %v6056 = vmul.f32 %v5006, %v3492
        %v6057 = vmul.f32 %v5007, %v3670
        %v6058 = vmul.f32 %v5008, %v3848
        %v6059 = vmul.f32 %v5009, %v4026
        %v6060 = vmul.f32 %v5010, %v4204
        %v6061 = vmul.f32 %v5011, %v4382
        %v6062 = vmul.f32 %v5012, %v4560
        %v6063 = vmul.f32 %v5013, %v4738
        %v6064 = vmul.f32 %v5014, %v2071
        %v6065 = vmul.f32 %v5015, %v2249
        %v6066 = vmul.f32 %v5016, %v2427
        %v6067 = vmul.f32 %v5017, %v2605
        %v6068 = vmul.f32 %v5018, %v2783
        %v6069 = vmul.f32 %v5019, %v2961
        %v6070 = vmul.f32 %v5020, %v3139
        %v6071 = vmul.f32 %v5021, %v3317
        %v6072 = vmul.f32 %v5022, %v3495
        %v6073 = vmul.f32 %v5023, %v3673
        %v6074 = vmul.f32 %v5024, %v3851
        %v6075 = vmul.f32 %v5025, %v4029
        %v6076 = vmul.f32 %v5026, %v4207
        %v6077 = vmul.f32 %v5027, %v4385
        %v6078 = vmul.f32 %v5028, %v4563
        %v6079 = vmul.f32 %v5029, %v4741
        %v6080 = vmul.f32 %v5078, %v2074
        %v6081 = vmul.f32 %v5079, %v2252
        %v6082 = vmul.f32 %v5080, %v2430
        %v6083 = vmul.f32 %v5081, %v2608
        %v6084 = vmul.f32 %v5082, %v2786
        %v6085 = vmul.f32 %v5083, %v2964
        %v6086 = vmul.f32 %v5084, %v3142
        %v6087 = vmul.f32 %v5085, %v3320
        %v6088 = vmul.f32 %v5086, %v3498
        %v6089 = vmul.f32 %v5087, %v3676
        %v6090 = vmul.f32 %v5088, %v3854
        %v6091 = vmul.f32 %v5089, %v4032
        %v6092 = vmul.f32 %v5090, %v4210
        %v6093 = vmul.f32 %v5091, %v4388
        %v6094 = vmul.f32 %v5092, %v4566
        %v6095 = vmul.f32 %v5093, %v4744
        %v6096 = vmul.f32 %v5094, %v2077
        %v6097 = vmul.f32 %v5095, %v2255
        %v6098 = vmul.f32 %v5096, %v2433
        %v6099 = vmul.f32 %v5097, %v2611
        %v6100 = vmul.f32 %v5098, %v2789
        %v6101 = vmul.f32 %v5099, %v2967
        %v6102 = vmul.f32 %v5100, %v3145
        %v6103 = vmul.f32 %v5101, %v3323
        %v6104 = vmul.f32 %v5102, %v3501
        %v6105 = vmul.f32 %v5103, %v3679
        %v6106 = vmul.f32 %v5104, %v3857
        %v6107 = vmul.f32 %v5105, %v4035
        %v6108 = vmul.f32 %v5106, %v4213
        %v6109 = vmul.f32 %v5107, %v4391
        %v6110 = vmul.f32 %v5108, %v4569
        %v6111 = vmul.f32 %v5109, %v4747
        %v6112 = vmul.f32 %v5158, %v2080
        %v6113 = vmul.f32 %v5159, %v2258
        %v6114 = vmul.f32 %v5160, %v2436
        %v6115 = vmul.f32 %v5161, %v2614
        %v6116 = vmul.f32 %v5162, %v2792
        %v6117 = vmul.f32 %v5163, %v2970
        %v6118 = vmul.f32 %v5164, %v3148
        %v6119 = vmul.f32 %v5165, %v3326
        %v6120 = vmul.f32 %v5166, %v3504
        %v6121 = vmul.f32 %v5167, %v3682
        %v6122 = vmul.f32 %v5168, %v3860
        %v6123 = vmul.f32 %v5169, %v4038
        %v6124 = vmul.f32 %v5170, %v4216
        %v6125 = vmul.f32 %v5171, %v4394
        %v6126 = vmul.f32 %v5172, %v4572
        %v6127 = vmul.f32 %v5173, %v4750
        %v6128 = vmul.f32 %v5174, %v2083
        %v6129 = vmul.f32 %v5175, %v2261
        %v6130 = vmul.f32 %v5176, %v2439
        %v6131 = vmul.f32 %v5177, %v2617
        %v6132 = vmul.f32 %v5178, %v2795
        %v6133 = vmul.f32 %v5179, %v2973
        %v6134 = vmul.f32 %v5180, %v3151
        %v6135 = vmul.f32 %v5181, %v3329
        %v6136 = vmul.f32 %v5182, %v3507
        %v6137 = vmul.f32 %v5183, %v3685
        %v6138 = vmul.f32 %v5184, %v3863
        %v6139 = vmul.f32 %v5185, %v4041
        %v6140 = vmul.f32 %v5186, %v4219
        %v6141 = vmul.f32 %v5187, %v4397
        %v6142 = vmul.f32 %v5188, %v4575
        %v6143 = vmul.f32 %v5189, %v4753
        %v6144 = vmul.f32 %v5238, %v2086
        %v6145 = vmul.f32 %v5239, %v2264
        %v6146 = vmul.f32 %v5240, %v2442
        %v6147 = vmul.f32 %v5241, %v2620
        %v6148 = vmul.f32 %v5242, %v2798
        %v6149 = vmul.f32 %v5243, %v2976
        %v6150 = vmul.f32 %v5244, %v3154
        %v6151 = vmul.f32 %v5245, %v3332
        %v6152 = vmul.f32 %v5246, %v3510
        %v6153 = vmul.f32 %v5247, %v3688
        %v6154 = vmul.f32 %v5248, %v3866
        %v6155 = vmul.f32 %v5249, %v4044
        %v6156 = vmul.f32 %v5250, %v4222
        %v6157 = vmul.f32 %v5251, %v4400
        %v6158 = vmul.f32 %v5252, %v4578
        %v6159 = vmul.f32 %v5253, %v4756
        %v6160 = vmul.f32 %v5254, %v2089
        %v6161 = vmul.f32 %v5255, %v2267
        %v6162 = vmul.f32 %v5256, %v2445
        %v6163 = vmul.f32 %v5257, %v2623
        %v6164 = vmul.f32 %v5258, %v2801
        %v6165 = vmul.f32 %v5259, %v2979
        %v6166 = vmul.f32 %v5260, %v3157
        %v6167 = vmul.f32 %v5261, %v3335
        %v6168 = vmul.f32 %v5262, %v3513
        %v6169 = vmul.f32 %v5263, %v3691
        %v6170 = vmul.f32 %v5264, %v3869
        %v6171 = vmul.f32 %v5265, %v4047
        %v6172 = vmul.f32 %v5266, %v4225
        %v6173 = vmul.f32 %v5267, %v4403
        %v6174 = vmul.f32 %v5268, %v4581
        %v6175 = vmul.f32 %v5269, %v4759
        %v6176 = vadd.f32 %v6048, %v6064
        %v6177 = vadd.f32 %v6176, %v6080
        %v6178 = vadd.f32 %v6177, %v6096
        %v6179 = vadd.f32 %v6178, %v6112
        %v6180 = vadd.f32 %v6179, %v6128
        %v6181 = vadd.f32 %v6180, %v6144
        %v6182 = vadd.f32 %v6181, %v6160
        %v6183 = vrot.slane %v6182, 4
        %v6184 = vadd.f32 %v6182, %v6183
        %v6185 = vrot.slane %v6184, 2
        %v6186 = vadd.f32 %v6184, %v6185
        %v6187 = vrot.slane %v6186, 1
        %v6188 = vadd.f32 %v6186, %v6187
        %v6189 = vadd.f32 %v6049, %v6065
        %v6190 = vadd.f32 %v6189, %v6081
        %v6191 = vadd.f32 %v6190, %v6097
        %v6192 = vadd.f32 %v6191, %v6113
        %v6193 = vadd.f32 %v6192, %v6129
        %v6194 = vadd.f32 %v6193, %v6145
        %v6195 = vadd.f32 %v6194, %v6161
        %v6196 = vrot.slane %v6195, 4
        %v6197 = vadd.f32 %v6195, %v6196
        %v6198 = vrot.slane %v6197, 2
        %v6199 = vadd.f32 %v6197, %v6198
        %v6200 = vrot.slane %v6199, 1
        %v6201 = vadd.f32 %v6199, %v6200
        %v6202 = vadd.f32 %v6050, %v6066
        %v6203 = vadd.f32 %v6202, %v6082
        %v6204 = vadd.f32 %v6203, %v6098
        %v6205 = vadd.f32 %v6204, %v6114
        %v6206 = vadd.f32 %v6205, %v6130
        %v6207 = vadd.f32 %v6206, %v6146
        %v6208 = vadd.f32 %v6207, %v6162
        %v6209 = vrot.slane %v6208, 4
        %v6210 = vadd.f32 %v6208, %v6209
        %v6211 = vrot.slane %v6210, 2
        %v6212 = vadd.f32 %v6210, %v6211
        %v6213 = vrot.slane %v6212, 1
        %v6214 = vadd.f32 %v6212, %v6213
        %v6215 = vadd.f32 %v6051, %v6067
        %v6216 = vadd.f32 %v6215, %v6083
        %v6217 = vadd.f32 %v6216, %v6099
        %v6218 = vadd.f32 %v6217, %v6115
        %v6219 = vadd.f32 %v6218, %v6131
        %v6220 = vadd.f32 %v6219, %v6147
        %v6221 = vadd.f32 %v6220, %v6163
        %v6222 = vrot.slane %v6221, 4
        %v6223 = vadd.f32 %v6221, %v6222
        %v6224 = vrot.slane %v6223, 2
        %v6225 = vadd.f32 %v6223, %v6224
        %v6226 = vrot.slane %v6225, 1
        %v6227 = vadd.f32 %v6225, %v6226
        %v6228 = vadd.f32 %v6052, %v6068
        %v6229 = vadd.f32 %v6228, %v6084
        %v6230 = vadd.f32 %v6229, %v6100
        %v6231 = vadd.f32 %v6230, %v6116
        %v6232 = vadd.f32 %v6231, %v6132
        %v6233 = vadd.f32 %v6232, %v6148
        %v6234 = vadd.f32 %v6233, %v6164
        %v6235 = vrot.slane %v6234, 4
        %v6236 = vadd.f32 %v6234, %v6235
        %v6237 = vrot.slane %v6236, 2
        %v6238 = vadd.f32 %v6236, %v6237
        %v6239 = vrot.slane %v6238, 1
        %v6240 = vadd.f32 %v6238, %v6239
        %v6241 = vadd.f32 %v6053, %v6069
        %v6242 = vadd.f32 %v6241, %v6085
        %v6243 = vadd.f32 %v6242, %v6101
        %v6244 = vadd.f32 %v6243, %v6117
        %v6245 = vadd.f32 %v6244, %v6133
        %v6246 = vadd.f32 %v6245, %v6149
        %v6247 = vadd.f32 %v6246, %v6165
        %v6248 = vrot.slane %v6247, 4
        %v6249 = vadd.f32 %v6247, %v6248
        %v6250 = vrot.slane %v6249, 2
        %v6251 = vadd.f32 %v6249, %v6250
        %v6252 = vrot.slane %v6251, 1
        %v6253 = vadd.f32 %v6251, %v6252
        %v6254 = vadd.f32 %v6054, %v6070
        %v6255 = vadd.f32 %v6254, %v6086
        %v6256 = vadd.f32 %v6255, %v6102
        %v6257 = vadd.f32 %v6256, %v6118
        %v6258 = vadd.f32 %v6257, %v6134
        %v6259 = vadd.f32 %v6258, %v6150
        %v6260 = vadd.f32 %v6259, %v6166
        %v6261 = vrot.slane %v6260, 4
        %v6262 = vadd.f32 %v6260, %v6261
        %v6263 = vrot.slane %v6262, 2
        %v6264 = vadd.f32 %v6262, %v6263
        %v6265 = vrot.slane %v6264, 1
        %v6266 = vadd.f32 %v6264, %v6265
        %v6267 = vadd.f32 %v6055, %v6071
        %v6268 = vadd.f32 %v6267, %v6087
        %v6269 = vadd.f32 %v6268, %v6103
        %v6270 = vadd.f32 %v6269, %v6119
        %v6271 = vadd.f32 %v6270, %v6135
        %v6272 = vadd.f32 %v6271, %v6151
        %v6273 = vadd.f32 %v6272, %v6167
        %v6274 = vrot.slane %v6273, 4
        %v6275 = vadd.f32 %v6273, %v6274
        %v6276 = vrot.slane %v6275, 2
        %v6277 = vadd.f32 %v6275, %v6276
        %v6278 = vrot.slane %v6277, 1
        %v6279 = vadd.f32 %v6277, %v6278
        %v6280 = vadd.f32 %v6056, %v6072
        %v6281 = vadd.f32 %v6280, %v6088
        %v6282 = vadd.f32 %v6281, %v6104
        %v6283 = vadd.f32 %v6282, %v6120
        %v6284 = vadd.f32 %v6283, %v6136
        %v6285 = vadd.f32 %v6284, %v6152
        %v6286 = vadd.f32 %v6285, %v6168
        %v6287 = vrot.slane %v6286, 4
        %v6288 = vadd.f32 %v6286, %v6287
        %v6289 = vrot.slane %v6288, 2
        %v6290 = vadd.f32 %v6288, %v6289
        %v6291 = vrot.slane %v6290, 1
        %v6292 = vadd.f32 %v6290, %v6291
        %v6293 = vadd.f32 %v6057, %v6073
        %v6294 = vadd.f32 %v6293, %v6089
        %v6295 = vadd.f32 %v6294, %v6105
        %v6296 = vadd.f32 %v6295, %v6121
        %v6297 = vadd.f32 %v6296, %v6137
        %v6298 = vadd.f32 %v6297, %v6153
        %v6299 = vadd.f32 %v6298, %v6169
        %v6300 = vrot.slane %v6299, 4
        %v6301 = vadd.f32 %v6299, %v6300
        %v6302 = vrot.slane %v6301, 2
        %v6303 = vadd.f32 %v6301, %v6302
        %v6304 = vrot.slane %v6303, 1
        %v6305 = vadd.f32 %v6303, %v6304
        %v6306 = vadd.f32 %v6058, %v6074
        %v6307 = vadd.f32 %v6306, %v6090
        %v6308 = vadd.f32 %v6307, %v6106
        %v6309 = vadd.f32 %v6308, %v6122
        %v6310 = vadd.f32 %v6309, %v6138
        %v6311 = vadd.f32 %v6310, %v6154
        %v6312 = vadd.f32 %v6311, %v6170
        %v6313 = vrot.slane %v6312, 4
        %v6314 = vadd.f32 %v6312, %v6313
        %v6315 = vrot.slane %v6314, 2
        %v6316 = vadd.f32 %v6314, %v6315
        %v6317 = vrot.slane %v6316, 1
        %v6318 = vadd.f32 %v6316, %v6317
        %v6319 = vadd.f32 %v6059, %v6075
        %v6320 = vadd.f32 %v6319, %v6091
        %v6321 = vadd.f32 %v6320, %v6107
        %v6322 = vadd.f32 %v6321, %v6123
        %v6323 = vadd.f32 %v6322, %v6139
        %v6324 = vadd.f32 %v6323, %v6155
        %v6325 = vadd.f32 %v6324, %v6171
        %v6326 = vrot.slane %v6325, 4
        %v6327 = vadd.f32 %v6325, %v6326
        %v6328 = vrot.slane %v6327, 2
        %v6329 = vadd.f32 %v6327, %v6328
        %v6330 = vrot.slane %v6329, 1
        %v6331 = vadd.f32 %v6329, %v6330
        %v6332 = vadd.f32 %v6060, %v6076
        %v6333 = vadd.f32 %v6332, %v6092
        %v6334 = vadd.f32 %v6333, %v6108
        %v6335 = vadd.f32 %v6334, %v6124
        %v6336 = vadd.f32 %v6335, %v6140
        %v6337 = vadd.f32 %v6336, %v6156
        %v6338 = vadd.f32 %v6337, %v6172
        %v6339 = vrot.slane %v6338, 4
        %v6340 = vadd.f32 %v6338, %v6339
        %v6341 = vrot.slane %v6340, 2
        %v6342 = vadd.f32 %v6340, %v6341
        %v6343 = vrot.slane %v6342, 1
        %v6344 = vadd.f32 %v6342, %v6343
        %v6345 = vadd.f32 %v6061, %v6077
        %v6346 = vadd.f32 %v6345, %v6093
        %v6347 = vadd.f32 %v6346, %v6109
        %v6348 = vadd.f32 %v6347, %v6125
        %v6349 = vadd.f32 %v6348, %v6141
        %v6350 = vadd.f32 %v6349, %v6157
        %v6351 = vadd.f32 %v6350, %v6173
        %v6352 = vrot.slane %v6351, 4
        %v6353 = vadd.f32 %v6351, %v6352
        %v6354 = vrot.slane %v6353, 2
        %v6355 = vadd.f32 %v6353, %v6354
        %v6356 = vrot.slane %v6355, 1
        %v6357 = vadd.f32 %v6355, %v6356
        %v6358 = vadd.f32 %v6062, %v6078
        %v6359 = vadd.f32 %v6358, %v6094
        %v6360 = vadd.f32 %v6359, %v6110
        %v6361 = vadd.f32 %v6360, %v6126
        %v6362 = vadd.f32 %v6361, %v6142
        %v6363 = vadd.f32 %v6362, %v6158
        %v6364 = vadd.f32 %v6363, %v6174
        %v6365 = vrot.slane %v6364, 4
        %v6366 = vadd.f32 %v6364, %v6365
        %v6367 = vrot.slane %v6366, 2
        %v6368 = vadd.f32 %v6366, %v6367
        %v6369 = vrot.slane %v6368, 1
        %v6370 = vadd.f32 %v6368, %v6369
        %v6371 = vadd.f32 %v6063, %v6079
        %v6372 = vadd.f32 %v6371, %v6095
        %v6373 = vadd.f32 %v6372, %v6111
        %v6374 = vadd.f32 %v6373, %v6127
        %v6375 = vadd.f32 %v6374, %v6143
        %v6376 = vadd.f32 %v6375, %v6159
        %v6377 = vadd.f32 %v6376, %v6175
        %v6378 = vrot.slane %v6377, 4
        %v6379 = vadd.f32 %v6377, %v6378
        %v6380 = vrot.slane %v6379, 2
        %v6381 = vadd.f32 %v6379, %v6380
        %v6382 = vrot.slane %v6381, 1
        %v6383 = vadd.f32 %v6381, %v6382
        %v6400 = vrot.slane %v6201, 7
        %v6401 = vrot.slane %v6214, 6
        %v6402 = vrot.slane %v6227, 5
        %v6403 = vrot.slane %v6240, 4
        %v6404 = vrot.slane %v6253, 3
        %v6405 = vrot.slane %v6266, 2
        %v6406 = vrot.slane %v6279, 1
        %v6407 = vrot.slane %v6305, 7
        %v6408 = vrot.slane %v6318, 6
        %v6409 = vrot.slane %v6331, 5
        %v6410 = vrot.slane %v6344, 4
        %v6411 = vrot.slane %v6357, 3
        %v6412 = vrot.slane %v6370, 2
        %v6413 = vrot.slane %v6383, 1
        %v6414 = vsel %vm5636, %v6188, %v6400
        %v6415 = vsel %vm5638, %v6401, %v6402
        %v6416 = vsel %vm5640, %v6414, %v6415
        %v6417 = vsel %vm5642, %v6403, %v6404
        %v6418 = vsel %vm5644, %v6405, %v6406
        %v6419 = vsel %vm5646, %v6417, %v6418
        %v6420 = vsel %vm5648, %v6416, %v6419
        %v6421 = vsel %vm5636, %v6292, %v6407
        %v6422 = vsel %vm5638, %v6408, %v6409
        %v6423 = vsel %vm5640, %v6421, %v6422
        %v6424 = vsel %vm5642, %v6410, %v6411
        %v6425 = vsel %vm5644, %v6412, %v6413
        %v6426 = vsel %vm5646, %v6424, %v6425
        %v6427 = vsel %vm5648, %v6423, %v6426
        %s6430 = scalar_lea.vmem %s1351, 2
        %6431 = vst [vmem:[%s6430] ss:$4 sm:$0xff] %v6420
        %s6432 = scalar_lea.vmem %s1351, 34
        %6433 = vst [vmem:[%s6432] ss:$4 sm:$0xff] %v6427
        %s6434 = smul.u32 16, %s20
        %p6435 = scmp.lt.s32.totalorder %s19, 1
        %s6436 = scalar_select %p6435, %s19, 1
        %p6437 = scmp.lt.s32.totalorder %s6434, 31
        %s6438 = scalar_select %p6437, %s6434, 31
        %s6439 = smul.addr %s6436, 32
        %s6440 = sadd.s32 %s6438, %s6439
        %s6441 = smul.addr %s6440, 4
        %s6442 = scalar_lea.vmem %s4, %s6441
        // Predicated region
        $region60: #{bilateral_forward.1} parent=54 // pred_check
          %p6443 = pneg %p155
        $region61: #{bilateral_forward.1} parent=54 // pred_check_branch
          %6445 = sbr.rel (%p6443) target = $region63
        $region62: #{bilateral_forward.1} parent=54 // pred_region
          %s6446 = smul.u32 16, %s20
        $region63: #{bilateral_forward.1} parent=54 // pred_fallthru
          _
      $region55: #{bilateral_forward.1} parent=5 // pred_fallthru
        _
      %p6447 = scmp.le.s32.totalorder 2, %s10
      // Predicated region
      $region64: #{bilateral_forward.1} parent=5 // pred_check
        %p6448 = pneg %p6447
      $region65: #{bilateral_forward.1} parent=5 // pred_check_branch
        %6450 = sbr.rel (%p6448) target = $region67
      $region66: #{bilateral_forward.1} parent=5 // pred_region
        %s6451 = ssub.s32 %s10, 2
        // Predicated region
        $region68: #{bilateral_forward.1} parent=66 // pred_check
          %p6452 = pneg %p161
        $region69: #{bilateral_forward.1} parent=66 // pred_check_branch
          %6454 = sbr.rel (%p6452) target = $region71
        $region70: #{bilateral_forward.1} parent=66 // pred_region
          %s6455 = smul.u32 16, %s22
          %p6456 = scmp.lt.s32.totalorder %s21, 1
          %s6457 = scalar_select %p6456, %s21, 1
          %p6458 = scmp.lt.s32.totalorder %s6455, 31
          %s6459 = scalar_select %p6458, %s6455, 31
          %s6460 = smul.addr %s6457, 32
          %s6461 = sadd.s32 %s6459, %s6460
          %s6462 = smul.addr %s6461, 4
          %s6463 = scalar_lea.vmem %s4, %s6462
        $region71: #{bilateral_forward.1} parent=66 // pred_fallthru
          _
      $region67: #{bilateral_forward.1} parent=5 // pred_fallthru
        _
    $region6: #{bilateral_forward.1} parent=1 // loop_footer
      %s14 = sadd.s32 1, %s10
    $region7: #{bilateral_forward.1} parent=1 // loop_footer_branch
      %9 = sbr.rel target = $region3
    $region8: #{bilateral_forward.1} parent=1 // loop_exit
      _

</llo_original>
